<compile_context>
chip_gen: v7x
topology: tpu7x:2x2x1
jax: 0.10.0
libtpu: 0.0.40
codegen_flags: <defaults>
</compile_context>

<pallas_src>
import jax
import jax.numpy as jnp
from jax.experimental import pallas as pl
from jax.experimental.pallas import tpu as pltpu

IN_FEATURES = 4096          # `in_features` in the PyTorch module
NUM_CLASSES = 16
NUM_MAKES = 8
NUM_MODELS = 8
NUM_SUBMODELS = 8
NUM_GENERATION = 8

HEAD_TOTAL = NUM_CLASSES + NUM_MAKES + NUM_MODELS + NUM_SUBMODELS + NUM_GENERATION  # 48
HEAD_PAD = 128              # lane-dense output slab width

# K tile for the base matmul.  bf16 weight tile = TK*4096*2 B = 4 MiB, double
# buffered 8 MiB -> comfortably inside every generation's scoped VMEM.
TK = 512


def _vmem_limit_bytes():
    """Per-chip scoped-VMEM limit with headroom (v7x: 64 MiB phys, v5e/v6e: 128 MiB)."""
    mib = 1024 * 1024
    try:
        cap = int(getattr(pltpu.get_tpu_info(), "vmem_capacity_bytes", 64 * mib))
    except Exception:  # pragma: no cover - conservative fallback
        cap = 64 * mib
    return max(32 * mib, min((cap * 3) // 4, 96 * mib))


def _aux_ab_kernel(x_ref, wb_ref, wh_ref, bh_ref, out_ref, feat_acc):
    k = pl.program_id(0)

    @pl.when(k == 0)
    def _init():
        feat_acc[...] = jnp.zeros_like(feat_acc)

    # Base stand-in matmul, K-tiled: bf16 operands, f32 accumulation on the MXU.
    feat_acc[...] += jnp.dot(
        x_ref[...].astype(jnp.bfloat16), wb_ref[...],
        preferred_element_type=jnp.float32)

    @pl.when(k == pl.num_programs(0) - 1)
    def _finalize():
        # Dropout(0.5) in the replaced classifier slot is identity in eval mode.
        # b_base is pre-folded into bh on the host, so one fused matmul + bias add
        # produces all five head outputs in a single lane-dense slab.
        out_ref[...] = (
            jnp.dot(feat_acc[...], wh_ref[...], preferred_element_type=jnp.float32)
            + bh_ref[...])


def auxillary_learning_ab_forward(x, fused):
    """x: [B, C, H, W] float32.  Returns (fc, make, model, submodel, generation)."""
    B = x.shape[0]
    x_flat = x.reshape(B, -1).astype(jnp.float32)

    K = fused["w_base"].shape[0]                 # already padded to a multiple of TK
    if x_flat.shape[1] < K:
        x_flat = jnp.pad(x_flat, ((0, 0), (0, K - x_flat.shape[1])))
    nk = K // TK

    grid_spec = pltpu.PrefetchScalarGridSpec(
        num_scalar_prefetch=0,
        grid=(nk,),
        in_specs=[
            pl.BlockSpec((B, TK), lambda k: (0, k)),                  # x tile
            pl.BlockSpec((TK, IN_FEATURES), lambda k: (k, 0)),        # w_base tile (bf16)
            pl.BlockSpec((IN_FEATURES, HEAD_PAD), lambda k: (0, 0)),  # fused head weights
            pl.BlockSpec((1, HEAD_PAD), lambda k: (0, 0)),            # fused head bias
        ],
        out_specs=pl.BlockSpec((B, HEAD_PAD), lambda k: (0, 0)),
        scratch_shapes=[pltpu.VMEM((B, IN_FEATURES), jnp.float32)],   # feat accumulator
    )

    slab = pl.pallas_call(
        _aux_ab_kernel,
        out_shape=jax.ShapeDtypeStruct((B, HEAD_PAD), jnp.float32),
        grid_spec=grid_spec,
        compiler_params=pltpu.CompilerParams(
            dimension_semantics=("arbitrary",),      # K reduction axis
            vmem_limit_bytes=_vmem_limit_bytes(),
        ),
    )(x_flat, fused["w_base"], fused["w_heads"], fused["b_heads"])

    # Split the lane-padded slab back into the five module outputs.
    o0 = NUM_CLASSES
    o1 = o0 + NUM_MAKES
    o2 = o1 + NUM_MODELS
    o3 = o2 + NUM_SUBMODELS
    o4 = o3 + NUM_GENERATION
    fc = slab[:, :o0]
    mk = slab[:, o0:o1]
    md = slab[:, o1:o2]
    sm = slab[:, o2:o3]
    gn = slab[:, o3:o4]
    return fc, mk, md, sm, gn


def init_raw_params(key, flat_in):
    """Per-layer params mirroring the PyTorch module, stored [in, out]."""
    ks = jax.random.split(key, 8)

    def lin(k, fan_in, fan_out):
        w = jax.random.normal(k, (fan_in, fan_out), jnp.float32) / jnp.sqrt(
            jnp.float32(fan_in))
        b = jnp.full((1, fan_out), 0.01, jnp.float32)
        return w, b

    p = {}
    wb, p["b_base"] = lin(ks[0], flat_in, IN_FEATURES)
    p["w_base"] = wb.astype(jnp.bfloat16)                       # streamed in bf16
    p["w_class_one"], p["b_class_one"] = lin(ks[1], IN_FEATURES, NUM_CLASSES)
    p["w_make"], p["b_make"] = lin(ks[2], IN_FEATURES, NUM_MAKES)
    p["w_model"], p["b_model"] = lin(ks[3], IN_FEATURES + NUM_MAKES, NUM_MODELS)
    p["w_submodel"], p["b_submodel"] = lin(ks[4], IN_FEATURES + NUM_MODELS, NUM_SUBMODELS)
    p["w_generation"], p["b_generation"] = lin(
        ks[5], IN_FEATURES + NUM_SUBMODELS, NUM_GENERATION)
    p["w_class"], p["b_class"] = lin(ks[6], HEAD_TOTAL, NUM_CLASSES)
    return p


def prepare_fused_params(raw):
    """Fold the affine head cascade (and b_base) into effective weights (done once)."""
    F = IN_FEATURES

    # class_fc_one(feat) and make_fc(feat) are already affine in feat.
    a_c1, c_c1 = raw["w_class_one"], raw["b_class_one"]
    a_mk, c_mk = raw["w_make"], raw["b_make"]

    # model_fc(cat([feat, make])) -> affine in feat.
    w_md_f, w_md_mk = raw["w_model"][:F], raw["w_model"][F:]
    a_md = w_md_f + a_mk @ w_md_mk
    c_md = c_mk @ w_md_mk + raw["b_model"]

    # submodel_fc(cat([feat, model])) -> affine in feat.
    w_sm_f, w_sm_md = raw["w_submodel"][:F], raw["w_submodel"][F:]
    a_sm = w_sm_f + a_md @ w_sm_md
    c_sm = c_md @ w_sm_md + raw["b_submodel"]

    # generation_fc(cat([feat, submodel])) -> affine in feat.
    w_gn_f, w_gn_sm = raw["w_generation"][:F], raw["w_generation"][F:]
    a_gn = w_gn_f + a_sm @ w_gn_sm
    c_gn = c_sm @ w_gn_sm + raw["b_generation"]

    # class_fc(cat([c1, make, model, submodel, generation])) -> affine in feat.
    wc = raw["w_class"]
    o0 = NUM_CLASSES
    o1 = o0 + NUM_MAKES
    o2 = o1 + NUM_MODELS
    o3 = o2 + NUM_SUBMODELS
    wc_c1, wc_mk, wc_md = wc[:o0], wc[o0:o1], wc[o1:o2]
    wc_sm, wc_gn = wc[o2:o3], wc[o3:]
    a_fc = a_c1 @ wc_c1 + a_mk @ wc_mk + a_md @ wc_md + a_sm @ wc_sm + a_gn @ wc_gn
    c_fc = (c_c1 @ wc_c1 + c_mk @ wc_mk + c_md @ wc_md + c_sm @ wc_sm
            + c_gn @ wc_gn + raw["b_class"])

    # One fused [4096, 48] head weight (output order: fc | make | model | submodel
    # | generation, matching the module's return), with b_base folded into the bias:
    #   (acc + b_base) @ A + C  ==  acc @ A + (b_base @ A + C)
    w_heads = jnp.concatenate([a_fc, a_mk, a_md, a_sm, a_gn], axis=1)
    b_heads = jnp.concatenate([c_fc, c_mk, c_md, c_sm, c_gn], axis=1)
    b_heads = raw["b_base"] @ w_heads + b_heads

    pad = HEAD_PAD - w_heads.shape[1]
    w_heads = jnp.pad(w_heads, ((0, 0), (0, pad))).astype(jnp.float32)
    b_heads = jnp.pad(b_heads, ((0, 0), (0, pad))).astype(jnp.float32)

    # Pad flat_in (K) to a multiple of the K tile so the grid divides evenly.
    wb = raw["w_base"]
    k = wb.shape[0]
    k_pad = ((k + TK - 1) // TK) * TK
    if k_pad != k:
        wb = jnp.pad(wb, ((0, k_pad - k), (0, 0)))

    return {"w_base": wb, "w_heads": w_heads, "b_heads": b_heads}


def reference_forward(x, raw):
    """Plain-JAX reference mirroring the PyTorch cascade exactly (eval mode)."""
    B = x.shape[0]
    xf = x.reshape(B, -1)
    feat = jnp.dot(xf.astype(jnp.bfloat16), raw["w_base"],
                   preferred_element_type=jnp.float32) + raw["b_base"]
    c1 = feat @ raw["w_class_one"] + raw["b_class_one"]
    mk = feat @ raw["w_make"] + raw["b_make"]
    md = jnp.concatenate([feat, mk], axis=1) @ raw["w_model"] + raw["b_model"]
    sm = jnp.concatenate([feat, md], axis=1) @ raw["w_submodel"] + raw["b_submodel"]
    gn = jnp.concatenate([feat, sm], axis=1) @ raw["w_generation"] + raw["b_generation"]
    cat = jnp.concatenate([c1, mk, md, sm, gn], axis=1)
    fc = cat @ raw["w_class"] + raw["b_class"]
    return fc, mk, md, sm, gn


if __name__ == "__main__":
    key = jax.random.PRNGKey(0)
    kx, kp = jax.random.split(key)

    B, C, H, W = 2, 4, 16, 16        # small NCHW input consistent with an image backbone
    x = jax.random.normal(kx, (B, C, H, W), jnp.float32)

    raw = init_raw_params(kp, C * H * W)
    fused = prepare_fused_params(raw)

    outs = jax.block_until_ready(auxillary_learning_ab_forward(x, fused))
    refs = reference_forward(x, raw)

    names = ("fc", "make", "model", "submodel", "generation")
    for name, o, r in zip(names, outs, refs):
        assert o.shape == r.shape and o.dtype == r.dtype, f"{name} shape/dtype mismatch"
        assert jnp.allclose(o, r, atol=1e-3, rtol=1e-3), f"{name} mismatch vs reference"

    print("KERNEL_OK")
</pallas_src>

<mosaic_0001>
module attributes {stable_mosaic.version = 11 : i64} {
  func.func @_aux_ab_kernel(%arg0: i32, %arg1: memref<2x512xf32, #tpu.memory_space<vmem>>, %arg2: memref<512x4096xbf16, #tpu.memory_space<vmem>>, %arg3: memref<4096x128xf32, #tpu.memory_space<vmem>>, %arg4: memref<1x128xf32, #tpu.memory_space<vmem>>, %arg5: memref<2x128xf32, #tpu.memory_space<vmem>>, %arg6: memref<2x4096xf32, #tpu.memory_space<vmem>>) attributes {dimension_semantics = [#tpu.dimension_semantics<arbitrary>], iteration_bounds = array<i64: 2>, scalar_prefetch = 0 : i64, scratch_operands = 1 : i64, tpu.core_type = #tpu.core_type<tc>, window_params = [{transform_indices = @transform_0, window_bounds = array<i64: 2, 512>}, {transform_indices = @transform_1, window_bounds = array<i64: 512, 4096>}, {pipeline_mode = #tpu.pipeline_mode<synchronous>, transform_indices = @transform_2, window_bounds = array<i64: 4096, 128>}, {pipeline_mode = #tpu.pipeline_mode<synchronous>, transform_indices = @transform_3, window_bounds = array<i64: 1, 128>}, {pipeline_mode = #tpu.pipeline_mode<synchronous>, transform_indices = @transform_4, window_bounds = array<i64: 2, 128>}]} {
    %c0_i32 = arith.constant 0 : i32
    %0 = arith.cmpi eq, %arg0, %c0_i32 : i32
    %1 = arith.extui %0 : i1 to i32
    %c0_i32_0 = arith.constant 0 : i32
    %2 = arith.cmpi ne, %1, %c0_i32_0 : i32
    scf.if %2 {
      %cst_9 = arith.constant 0.000000e+00 : f32
      %13 = vector.broadcast %cst_9 : f32 to vector<2x4096xf32>
      %c0_10 = arith.constant 0 : index
      %c0_11 = arith.constant 0 : index
      %14 = vector.load %arg6[%c0_10, %c0_11] : memref<2x4096xf32, #tpu.memory_space<vmem>>, vector<2x4096xf32>
      tpu.vector_store %arg6[%c0_10, %c0_11], %13 {strides = array<i32>} : memref<2x4096xf32, #tpu.memory_space<vmem>>, vector<2x4096xf32>,
    } else {
    }
    %c0 = arith.constant 0 : index
    %c0_1 = arith.constant 0 : index
    %3 = vector.load %arg6[%c0, %c0_1] : memref<2x4096xf32, #tpu.memory_space<vmem>>, vector<2x4096xf32>
    %c0_2 = arith.constant 0 : index
    %c0_3 = arith.constant 0 : index
    %4 = vector.load %arg1[%c0_2, %c0_3] : memref<2x512xf32, #tpu.memory_space<vmem>>, vector<2x512xf32>
    %5 = arith.truncf %4 : vector<2x512xf32> to vector<2x512xbf16>
    %c0_4 = arith.constant 0 : index
    %c0_5 = arith.constant 0 : index
    %6 = vector.load %arg2[%c0_4, %c0_5] : memref<512x4096xbf16, #tpu.memory_space<vmem>>, vector<512x4096xbf16>
    %cst = arith.constant dense<0.000000e+00> : vector<2x4096xf32>
    %7 = tpu.matmul %5, %6, %cst {dimension_numbers = #tpu.dot_dimension_numbers<[1], [0], [0], [1], [0, 0, 1, 1], [], []>} : vector<2x512xbf16>, vector<512x4096xbf16>, vector<2x4096xf32> -> vector<2x4096xf32>
    %8 = arith.addf %3, %7 : vector<2x4096xf32>
    %c0_6 = arith.constant 0 : index
    %c0_7 = arith.constant 0 : index
    %9 = vector.load %arg6[%c0_6, %c0_7] : memref<2x4096xf32, #tpu.memory_space<vmem>>, vector<2x4096xf32>
    tpu.vector_store %arg6[%c0_6, %c0_7], %8 {strides = array<i32>} : memref<2x4096xf32, #tpu.memory_space<vmem>>, vector<2x4096xf32>,
    %c1_i32 = arith.constant 1 : i32
    %10 = arith.cmpi eq, %arg0, %c1_i32 : i32
    %11 = arith.extui %10 : i1 to i32
    %c0_i32_8 = arith.constant 0 : i32
    %12 = arith.cmpi ne, %11, %c0_i32_8 : i32
    scf.if %12 {
      %c0_9 = arith.constant 0 : index
      %c0_10 = arith.constant 0 : index
      %13 = vector.load %arg6[%c0_9, %c0_10] : memref<2x4096xf32, #tpu.memory_space<vmem>>, vector<2x4096xf32>
      %c0_11 = arith.constant 0 : index
      %c0_12 = arith.constant 0 : index
      %14 = vector.load %arg3[%c0_11, %c0_12] : memref<4096x128xf32, #tpu.memory_space<vmem>>, vector<4096x128xf32>
      %cst_13 = arith.constant dense<0.000000e+00> : vector<2x128xf32>
      %15 = tpu.matmul %13, %14, %cst_13 {dimension_numbers = #tpu.dot_dimension_numbers<[1], [0], [0], [1], [0, 0, 1, 1], [], []>} : vector<2x4096xf32>, vector<4096x128xf32>, vector<2x128xf32> -> vector<2x128xf32>
      %c0_14 = arith.constant 0 : index
      %c0_15 = arith.constant 0 : index
      %16 = vector.load %arg4[%c0_14, %c0_15] : memref<1x128xf32, #tpu.memory_space<vmem>>, vector<1x128xf32>
      %17 = vector.broadcast %16 : vector<1x128xf32> to vector<2x128xf32>
      %18 = arith.addf %15, %17 : vector<2x128xf32>
      %c0_16 = arith.constant 0 : index
      %c0_17 = arith.constant 0 : index
      %19 = vector.load %arg5[%c0_16, %c0_17] : memref<2x128xf32, #tpu.memory_space<vmem>>, vector<2x128xf32>
      tpu.vector_store %arg5[%c0_16, %c0_17], %18 {strides = array<i32>} : memref<2x128xf32, #tpu.memory_space<vmem>>, vector<2x128xf32>,
    } else {
    }
    return
  }
  func.func @transform_0(%arg0: i32) -> (i32, i32) {
    %c0_i32 = arith.constant 0 : i32
    %c0_i32_0 = arith.constant 0 : i32
    return %c0_i32, %arg0 : i32, i32
  }
  func.func @transform_1(%arg0: i32) -> (i32, i32) {
    %c0_i32 = arith.constant 0 : i32
    %c0_i32_0 = arith.constant 0 : i32
    return %arg0, %c0_i32 : i32, i32
  }
  func.func @transform_2(%arg0: i32) -> (i32, i32) {
    %c0_i32 = arith.constant 0 : i32
    %c0_i32_0 = arith.constant 0 : i32
    %c0_i32_1 = arith.constant 0 : i32
    return %c0_i32, %c0_i32_0 : i32, i32
  }
  func.func @transform_3(%arg0: i32) -> (i32, i32) {
    %c0_i32 = arith.constant 0 : i32
    %c0_i32_0 = arith.constant 0 : i32
    %c0_i32_1 = arith.constant 0 : i32
    return %c0_i32, %c0_i32_0 : i32, i32
  }
  func.func @transform_4(%arg0: i32) -> (i32, i32) {
    %c0_i32 = arith.constant 0 : i32
    %c0_i32_0 = arith.constant 0 : i32
    %c0_i32_1 = arith.constant 0 : i32
    return %c0_i32, %c0_i32_0 : i32, i32
  }
}

</mosaic_0001>

<llo_original>
// kernel: tpu_custom_call.1
$region0: #{tpu_custom_call.1}
  #allocation0 [shape = 'u32[]', space=smem, size = 0x4, offset = 0x4, fixed_abs, tag = 'smem constant byte address 0x4 - core index']
  #allocation1 [shape = 'u32[144,128]{1,0:T(1,128)}', space=vmem, size = 0x12000, scoped, tag = 'internal scratch']
  #allocation2 [shape = 'f32[2,4096]{1,0:T(2,128)}', space=vmem, size = 0x8000, scoped, tag = 'scratch operand']
  %s0 = inlined_call_operand.hbm [shape: f32[2,1024], index: 0, kind: input, shape index: {}]
  %s1 = inlined_call_operand.hbm [shape: bf16[1024,4096], index: 1, kind: input, shape index: {}]
  %s2 = inlined_call_operand.hbm [shape: f32[4096,128], index: 2, kind: input, shape index: {}]
  %s3 = inlined_call_operand.hbm [shape: f32[1,128], index: 3, kind: input, shape index: {}]
  %s4 = inlined_call_operand.hbm [shape: f32[2,128], index: 4, kind: output, shape index: {}]
  %s5 = sld [smem:[#allocation0]]
  $region73: #{tpu_custom_call.1} parent=0
    _
  %s7 = ssub.s32 1, %s5
  %s8 = scalar_select 0, %s7, %s5
  $region1: #{tpu_custom_call.1} parent=0
    #allocation3 [shape = 'u8[8192]{0}', space=vmem, size = 0x2000, scoped, tag = 'input window, operand 0']
    #allocation4 [shape = 's32[2]{0}', space=sflag, size = 0x8, scoped, tag = 'scoped memory for tpu_custom_call.1']
    #allocation5 [shape = 's32[2]{0}', space=sflag, size = 0x8, scoped, tag = 'scoped memory for tpu_custom_call.1']
    #allocation6 [shape = 'u8[8388608]{0}', space=vmem, size = 0x800000, scoped, tag = 'input window, operand 1']
    #allocation7 [shape = 's32[2]{0}', space=sflag, size = 0x8, scoped, tag = 'scoped memory for tpu_custom_call.1']
    #allocation8 [shape = 'u8[2097152]{0}', space=vmem, size = 0x200000, scoped, tag = 'input window, operand 2, single buffered']
    #allocation9 [shape = 'u8[512]{0}', space=vmem, size = 0x400, scoped, tag = 'input window, operand 3, single buffered']
    #allocation10 [shape = 's32[1]{0}', space=sflag, size = 0x4, scoped, tag = 'scoped memory for tpu_custom_call.1']
    #allocation11 [shape = 'u8[1024]{0}', space=vmem, size = 0x400, scoped, tag = 'output window, operand 0, single buffered']
    %9 = vsyncpa [#allocation4], 0
    %s10 = scalar_lea.sflag [#allocation4], 1
    %11 = vsyncpa %s10, 0
    %12 = vsyncpa [#allocation7], 0
    %s13 = scalar_lea.sflag [#allocation7], 1
    %14 = vsyncpa %s13, 0
    %15 = vsyncpa [#allocation10], 0
    %16 = vsyncpa [#allocation5], 0
    loop: start=0, step=1, limit=4
    $region2: #{tpu_custom_call.1} parent=1 // loop_pre_header
      _
    $region3: #{tpu_custom_call.1} parent=1 // loop_header
      %s18 = sphi 0, %s22
      %p19 = scmp.ge.s32.totalorder %s18, 4
      %s28 = sphi 0, %s30
      %s31 = sphi 0, %s28
      %s32 = sphi 0, %s31
      %s48 = sphi 0, %s32
      %s54 = sphi 0, %s56
      %s57 = sphi 0, %s54
      %s58 = sphi 0, %s57
      %s74 = sphi 0, %s58
      %s78 = sphi 0, %s78
      %s80 = sphi 0, %s78
      %s81 = sphi 0, %s80
      %s95 = sphi 0, %s81
      %s99 = sphi 0, %s99
      %s101 = sphi 0, %s99
      %s102 = sphi 0, %s101
      %s116 = sphi 0, %s102
      %s120 = sphi 0, %s120
      %s122 = sphi 0, %s120
      %s123 = sphi 0, %s122
      %s137 = sphi 0, %s123
    $region4: #{tpu_custom_call.1} parent=1 // loop_header_branch
      %21 = sbr.rel (%p19) target = $region8
    $region5: #{tpu_custom_call.1} parent=1 // loop_body
      %s23 = ssub.s32 %s18, 1
      %s24 = ssub.s32 %s18, 2
      %s25 = sadd.s32 %s18, 1
      %s26 = ssub.s32 %s18, %s25
      %p27 = scmp.eq.s32.totalorder %s26, 0
      %s29 = sadd.s32 %s28, 1
      %s30 = scalar_select %p27, %s28, %s29
      %p33 = pneg %p27
      %p34 = scmp.eq.s32.totalorder %s18, 1
      %p35 = por %p33, %p34
      %p36 = scmp.ne.s32.totalorder %s28, %s31
      %p37 = scmp.eq.s32.totalorder %s18, 0
      %p38 = por %p36, %p37
      %p39 = scmp.ne.s32.totalorder %s28, %s31
      %p40 = scmp.eq.s32.totalorder %s23, 1
      %p41 = por %p39, %p40
      %p42 = scmp.ne.s32.totalorder %s31, %s32
      %p43 = scmp.eq.s32.totalorder %s23, 0
      %p44 = por %p42, %p43
      %p45 = scmp.ne.s32.totalorder %s31, %s32
      %p46 = scmp.eq.s32.totalorder %s24, 1
      %p47 = por %p45, %p46
      %p49 = scmp.ne.s32.totalorder %s32, %s48
      %p50 = scmp.eq.s32.totalorder %s24, 0
      %p51 = por %p49, %p50
      %s52 = ssub.s32 %s18, %s25
      %p53 = scmp.eq.s32.totalorder %s52, 0
      %s55 = sadd.s32 %s54, 1
      %s56 = scalar_select %p53, %s54, %s55
      %p59 = pneg %p53
      %p60 = scmp.eq.s32.totalorder %s18, 1
      %p61 = por %p59, %p60
      %p62 = scmp.ne.s32.totalorder %s54, %s57
      %p63 = scmp.eq.s32.totalorder %s18, 0
      %p64 = por %p62, %p63
      %p65 = scmp.ne.s32.totalorder %s54, %s57
      %p66 = scmp.eq.s32.totalorder %s23, 1
      %p67 = por %p65, %p66
      %p68 = scmp.ne.s32.totalorder %s57, %s58
      %p69 = scmp.eq.s32.totalorder %s23, 0
      %p70 = por %p68, %p69
      %p71 = scmp.ne.s32.totalorder %s57, %s58
      %p72 = scmp.eq.s32.totalorder %s24, 1
      %p73 = por %p71, %p72
      %p75 = scmp.ne.s32.totalorder %s58, %s74
      %p76 = scmp.eq.s32.totalorder %s24, 0
      %p77 = por %p75, %p76
      %s79 = sadd.s32 %s78, 1
      %p82 = scmp.eq.s32.totalorder %s18, 1
      %p83 = scmp.ne.s32.totalorder %s78, %s80
      %p84 = scmp.eq.s32.totalorder %s18, 0
      %p85 = por %p83, %p84
      %p86 = scmp.ne.s32.totalorder %s78, %s80
      %p87 = scmp.eq.s32.totalorder %s23, 1
      %p88 = por %p86, %p87
      %p89 = scmp.ne.s32.totalorder %s80, %s81
      %p90 = scmp.eq.s32.totalorder %s23, 0
      %p91 = por %p89, %p90
      %p92 = scmp.ne.s32.totalorder %s80, %s81
      %p93 = scmp.eq.s32.totalorder %s24, 1
      %p94 = por %p92, %p93
      %p96 = scmp.ne.s32.totalorder %s81, %s95
      %p97 = scmp.eq.s32.totalorder %s24, 0
      %p98 = por %p96, %p97
      %s100 = sadd.s32 %s99, 1
      %p103 = scmp.eq.s32.totalorder %s18, 1
      %p104 = scmp.ne.s32.totalorder %s99, %s101
      %p105 = scmp.eq.s32.totalorder %s18, 0
      %p106 = por %p104, %p105
      %p107 = scmp.ne.s32.totalorder %s99, %s101
      %p108 = scmp.eq.s32.totalorder %s23, 1
      %p109 = por %p107, %p108
      %p110 = scmp.ne.s32.totalorder %s101, %s102
      %p111 = scmp.eq.s32.totalorder %s23, 0
      %p112 = por %p110, %p111
      %p113 = scmp.ne.s32.totalorder %s101, %s102
      %p114 = scmp.eq.s32.totalorder %s24, 1
      %p115 = por %p113, %p114
      %p117 = scmp.ne.s32.totalorder %s102, %s116
      %p118 = scmp.eq.s32.totalorder %s24, 0
      %p119 = por %p117, %p118
      %s121 = sadd.s32 %s120, 1
      %p124 = scmp.eq.s32.totalorder %s18, 1
      %p125 = scmp.ne.s32.totalorder %s120, %s122
      %p126 = scmp.eq.s32.totalorder %s18, 0
      %p127 = por %p125, %p126
      %p128 = scmp.ne.s32.totalorder %s120, %s122
      %p129 = scmp.eq.s32.totalorder %s23, 1
      %p130 = por %p128, %p129
      %p131 = scmp.ne.s32.totalorder %s122, %s123
      %p132 = scmp.eq.s32.totalorder %s23, 0
      %p133 = por %p131, %p132
      %p134 = scmp.ne.s32.totalorder %s122, %s123
      %p135 = scmp.eq.s32.totalorder %s24, 1
      %p136 = por %p134, %p135
      %p138 = scmp.ne.s32.totalorder %s123, %s137
      %p139 = scmp.eq.s32.totalorder %s24, 0
      %p140 = por %p138, %p139
      %p141 = scmp.le.s32.totalorder 1, %s18
      %p142 = scmp.lt.s32.totalorder %s18, 3
      %p143 = pnand %p141, %p142
      %p144 = pneg %p143
      // Predicated region
      $region9: #{tpu_custom_call.1} parent=5 // pred_check
        _
      $region10: #{tpu_custom_call.1} parent=5 // pred_check_branch
        %146 = sbr.rel (%p143) target = $region12
      $region11: #{tpu_custom_call.1} parent=5 // pred_region
        %s147 = ssub.s32 %s18, 1
        // Predicated region
        $region13: #{tpu_custom_call.1} parent=11 // pred_check
          %p148 = pneg %p91
        $region14: #{tpu_custom_call.1} parent=11 // pred_check_branch
          %150 = sbr.rel (%p148) target = $region16
        $region15: #{tpu_custom_call.1} parent=11 // pred_region
          %s152 = ssub.s32 65536, 65536
          %153 = vsyncadd [#allocation7], %s152
          %s154 = sshll.u32 [#allocation8], 4
          %s155 = int_to_ptr.vmem [resolvable:$true] %s154
          %160 = dma.hbm_to_vmem [thread:$0]  %s2, 65536, %s155, [#allocation7], 128, 128, 8
        $region16: #{tpu_custom_call.1} parent=11 // pred_fallthru
          _
        // Predicated region
        $region17: #{tpu_custom_call.1} parent=11 // pred_check
          %p161 = pneg %p112
        $region18: #{tpu_custom_call.1} parent=11 // pred_check_branch
          %163 = sbr.rel (%p161) target = $region20
        $region19: #{tpu_custom_call.1} parent=11 // pred_region
          %s165 = ssub.s32 16, 16
          %166 = vsyncadd [#allocation10], %s165
          %s168 = sshll.u32 [#allocation9], 4
          %s169 = int_to_ptr.vmem [resolvable:$true] %s168
          %171 = dma.hbm_to_vmem [thread:$0]  %s3, 16, %s169, [#allocation10]
        $region20: #{tpu_custom_call.1} parent=11 // pred_fallthru
          _
      $region12: #{tpu_custom_call.1} parent=5 // pred_fallthru
        _
      %p172 = scmp.lt.s32.totalorder %s18, 2
      // Predicated region
      $region21: #{tpu_custom_call.1} parent=5 // pred_check
        %p173 = pneg %p172
      $region22: #{tpu_custom_call.1} parent=5 // pred_check_branch
        %175 = sbr.rel (%p173) target = $region24
      $region23: #{tpu_custom_call.1} parent=5 // pred_region
        // Predicated region
        $region25: #{tpu_custom_call.1} parent=23 // pred_check
          %p176 = pneg %p38
        $region26: #{tpu_custom_call.1} parent=23 // pred_check_branch
          %178 = sbr.rel (%p176) target = $region28
        $region27: #{tpu_custom_call.1} parent=23 // pred_region
          %s179 = sand.u32 %s28, 1
          %s180 = scalar_lea.sflag [#allocation4], %s179
          %s181 = sand.u32 %s28, 1
          %s182 = smul.addr %s181, 8
          %s183 = scalar_lea.vmem [#allocation3], %s182
          %s184 = smul.u32 4, %s18
          %s186 = ssub.s32 128, 128
          %187 = vsyncadd %s180, %s186
          %s188 = smul.addr %s184, 32
          %s189 = scalar_lea.hbm %s0, %s188
          %s191 = sshll.u32 %s183, 4
          %s192 = int_to_ptr.vmem [resolvable:$true] %s191
          %194 = dma.hbm_to_vmem [thread:$0]  %s189, 128, %s192, %s180
        $region28: #{tpu_custom_call.1} parent=23 // pred_fallthru
          _
        // Predicated region
        $region29: #{tpu_custom_call.1} parent=23 // pred_check
          %p195 = pneg %p64
        $region30: #{tpu_custom_call.1} parent=23 // pred_check_branch
          %197 = sbr.rel (%p195) target = $region32
        $region31: #{tpu_custom_call.1} parent=23 // pred_region
          %s198 = sand.u32 %s18, 1
          %s199 = scalar_lea.sflag [#allocation7], %s198
          %s200 = sand.u32 %s54, 1
          %s201 = smul.addr %s200, 8192
          %s202 = scalar_lea.vmem [#allocation6], %s201
          %s203 = smul.u32 64, %s18
          %s205 = ssub.s32 131072, 131072
          %206 = vsyncadd %s199, %s205
          %s207 = smul.addr %s203, 32
          %s208 = smul.addr %s207, 64
          %s209 = scalar_lea.hbm %s1, %s208
          %s210 = sshll.u32 %s202, 4
          %s211 = int_to_ptr.vmem [resolvable:$true] %s210
          %216 = dma.hbm_to_vmem [thread:$0]  %s209, 131072, %s211, %s199, 2048, 2048, 128
        $region32: #{tpu_custom_call.1} parent=23 // pred_fallthru
          _
      $region24: #{tpu_custom_call.1} parent=5 // pred_fallthru
        _
      %p217 = scmp.le.s32.totalorder 1, %s18
      %p218 = scmp.lt.s32.totalorder %s18, 3
      %p219 = pnand %p217, %p218
      %p220 = pneg %p219
      // Predicated region
      $region33: #{tpu_custom_call.1} parent=5 // pred_check
        _
      $region34: #{tpu_custom_call.1} parent=5 // pred_check_branch
        %222 = sbr.rel (%p219) target = $region36
      $region35: #{tpu_custom_call.1} parent=5 // pred_region
        %s223 = ssub.s32 %s18, 1
        %s224 = sand.u32 %s31, 1
        %s225 = scalar_lea.sflag [#allocation4], %s224
        %s226 = sand.u32 %s31, 1
        %s227 = smul.addr %s226, 8
        %s228 = scalar_lea.vmem [#allocation3], %s227
        // Predicated region
        $region37: #{tpu_custom_call.1} parent=35 // pred_check
          %p229 = pneg %p44
        $region38: #{tpu_custom_call.1} parent=35 // pred_check_branch
          %231 = sbr.rel (%p229) target = $region40
        $region39: #{tpu_custom_call.1} parent=35 // pred_region
          %232 = dma.done %s225, 128
        $region40: #{tpu_custom_call.1} parent=35 // pred_fallthru
          _
        %s233 = sand.u32 %s23, 1
        %s234 = scalar_lea.sflag [#allocation7], %s233
        %s235 = sand.u32 %s57, 1
        %s236 = smul.addr %s235, 8192
        %s237 = scalar_lea.vmem [#allocation6], %s236
        // Predicated region
        $region41: #{tpu_custom_call.1} parent=35 // pred_check
          %p238 = pneg %p70
        $region42: #{tpu_custom_call.1} parent=35 // pred_check_branch
          %240 = sbr.rel (%p238) target = $region44
        $region43: #{tpu_custom_call.1} parent=35 // pred_region
          %241 = dma.done %s234, 131072
        $region44: #{tpu_custom_call.1} parent=35 // pred_fallthru
          _
        // Predicated region
        $region45: #{tpu_custom_call.1} parent=35 // pred_check
          %p242 = pneg %p91
        $region46: #{tpu_custom_call.1} parent=35 // pred_check_branch
          %244 = sbr.rel (%p242) target = $region48
        $region47: #{tpu_custom_call.1} parent=35 // pred_region
          %245 = dma.done [#allocation7], 65536
        $region48: #{tpu_custom_call.1} parent=35 // pred_fallthru
          _
        // Predicated region
        $region49: #{tpu_custom_call.1} parent=35 // pred_check
          %p246 = pneg %p112
        $region50: #{tpu_custom_call.1} parent=35 // pred_check_branch
          %248 = sbr.rel (%p246) target = $region52
        $region51: #{tpu_custom_call.1} parent=35 // pred_region
          %249 = dma.done [#allocation10], 16
        $region52: #{tpu_custom_call.1} parent=35 // pred_fallthru
          _
        %s250 = sand.u32 %s31, 1
        %s251 = scalar_lea.sflag [#allocation4], %s250
        %s252 = sand.u32 %s31, 1
        %s253 = smul.addr %s252, 8
        %s254 = scalar_lea.vmem [#allocation3], %s253
        %p255 = pneg %p44
        %p256 = pneg %p41
        %s257 = sand.u32 %s23, 1
        %s258 = scalar_lea.sflag [#allocation7], %s257
        %s259 = sand.u32 %s57, 1
        %s260 = smul.addr %s259, 8192
        %s261 = scalar_lea.vmem [#allocation6], %s260
        %p262 = pneg %p70
        %p263 = pneg %p67
        %p264 = pneg %p91
        %p265 = pneg %p88
        %p266 = pneg %p112
        %p267 = pneg %p109
        %p268 = pneg %p133
        %p269 = pneg %p130
        %s270 = smul.u32 4, %s23
        %s271 = smul.u32 64, %s23
        %p272 = scmp.eq.s32.totalorder %s23, 0
        // Predicated region
        $region53: #{tpu_custom_call.1} parent=35 // pred_check
          %p273 = pneg %p272
        $region54: #{tpu_custom_call.1} parent=35 // pred_check_branch
          %275 = sbr.rel (%p273) target = $region56
        $region55: #{tpu_custom_call.1} parent=35 // pred_region
          %276 = vst [vmem:[#allocation2] sm:$0xff] 0.0
          %277 = vst [vmem:[#allocation2 + $0x8] sm:$0xff] 0.0
          %278 = vst [vmem:[#allocation2 + $0x10] sm:$0xff] 0.0
          %279 = vst [vmem:[#allocation2 + $0x18] sm:$0xff] 0.0
          %280 = vst [vmem:[#allocation2 + $0x20] sm:$0xff] 0.0
          %281 = vst [vmem:[#allocation2 + $0x28] sm:$0xff] 0.0
          %282 = vst [vmem:[#allocation2 + $0x30] sm:$0xff] 0.0
          %283 = vst [vmem:[#allocation2 + $0x38] sm:$0xff] 0.0
        $region56: #{tpu_custom_call.1} parent=35 // pred_fallthru
          _
        %v284 = vld [vmem:[#allocation2] sm:$0xff]
        %v285 = vld [vmem:[#allocation2 + $0x8] sm:$0xff]
        %v286 = vld [vmem:[#allocation2 + $0x10] sm:$0xff]
        %v287 = vld [vmem:[#allocation2 + $0x18] sm:$0xff]
        %v288 = vld [vmem:[#allocation2 + $0x20] sm:$0xff]
        %v289 = vld [vmem:[#allocation2 + $0x28] sm:$0xff]
        %v290 = vld [vmem:[#allocation2 + $0x30] sm:$0xff]
        %v291 = vld [vmem:[#allocation2 + $0x38] sm:$0xff]
        %v292 = vld [vmem:[%s228] sm:$0xff]
        %v294 = vcombine.high %v292, %v292
        %v296 = vunpack.c.l.s4 1983009808
        %v297 = vunpack.c.0.s8 %v296
        %v298 = vlaneseq
        %v299 = vshrl.u32 %v298, 7
        %v300 = vsub.s32 %v297, %v299
        %v301 = vrot.slane %v292, %v300
        %v303 = vunpack.c.l.s4 1983009808
        %v304 = vunpack.c.0.s8 %v303
        %v305 = vlaneseq
        %v306 = vshrl.u32 %v305, 7
        %v307 = vsub.s32 %v304, %v306
        %v308 = vrot.slane %v294, %v307
        %v309 = vcombine.high %v301, %v301
        %v310 = vcombine.high %v308, %v308
        %v315 = vpack.c.bf16 %v301, %v301
        %v316 = vpack.c.bf16 %v309, %v309
        %v317 = vpack.c.bf16 %v308, %v308
        %v318 = vpack.c.bf16 %v310, %v310
        %v319 = vld [vmem:[%s237] sm:$0xff]
        %v320 = vld [vmem:[%s237 + $0x8] sm:$0xff]
        %v321 = vld [vmem:[%s237 + $0x10] sm:$0xff]
        %v322 = vld [vmem:[%s237 + $0x18] sm:$0xff]
        %v323 = vld [vmem:[%s237 + $0x20] sm:$0xff]
        %v324 = vld [vmem:[%s237 + $0x28] sm:$0xff]
        %v325 = vld [vmem:[%s237 + $0x30] sm:$0xff]
        %v326 = vld [vmem:[%s237 + $0x38] sm:$0xff]
        %v327 = vld [vmem:[%s237 + $0x40] sm:$0xff]
        %v328 = vld [vmem:[%s237 + $0x48] sm:$0xff]
        %v329 = vld [vmem:[%s237 + $0x50] sm:$0xff]
        %v330 = vld [vmem:[%s237 + $0x58] sm:$0xff]
        %v331 = vld [vmem:[%s237 + $0x60] sm:$0xff]
        %v332 = vld [vmem:[%s237 + $0x68] sm:$0xff]
        %v333 = vld [vmem:[%s237 + $0x70] sm:$0xff]
        %v334 = vld [vmem:[%s237 + $0x78] sm:$0xff]
        %v335 = vld [vmem:[%s237 + $0x80] sm:$0xff]
        %v336 = vld [vmem:[%s237 + $0x88] sm:$0xff]
        %v337 = vld [vmem:[%s237 + $0x90] sm:$0xff]
        %v338 = vld [vmem:[%s237 + $0x98] sm:$0xff]
        %v339 = vld [vmem:[%s237 + $0xa0] sm:$0xff]
        %v340 = vld [vmem:[%s237 + $0xa8] sm:$0xff]
        %v341 = vld [vmem:[%s237 + $0xb0] sm:$0xff]
        %v342 = vld [vmem:[%s237 + $0xb8] sm:$0xff]
        %v343 = vld [vmem:[%s237 + $0xc0] sm:$0xff]
        %v344 = vld [vmem:[%s237 + $0xc8] sm:$0xff]
        %v345 = vld [vmem:[%s237 + $0xd0] sm:$0xff]
        %v346 = vld [vmem:[%s237 + $0xd8] sm:$0xff]
        %v347 = vld [vmem:[%s237 + $0xe0] sm:$0xff]
        %v348 = vld [vmem:[%s237 + $0xe8] sm:$0xff]
        %v349 = vld [vmem:[%s237 + $0xf0] sm:$0xff]
        %v350 = vld [vmem:[%s237 + $0xf8] sm:$0xff]
        %v351 = vld [vmem:[%s237 + $0x100] sm:$0xff]
        %v352 = vld [vmem:[%s237 + $0x108] sm:$0xff]
        %v353 = vld [vmem:[%s237 + $0x110] sm:$0xff]
        %v354 = vld [vmem:[%s237 + $0x118] sm:$0xff]
        %v355 = vld [vmem:[%s237 + $0x120] sm:$0xff]
        %v356 = vld [vmem:[%s237 + $0x128] sm:$0xff]
        %v357 = vld [vmem:[%s237 + $0x130] sm:$0xff]
        %v358 = vld [vmem:[%s237 + $0x138] sm:$0xff]
        %v359 = vld [vmem:[%s237 + $0x140] sm:$0xff]
        %v360 = vld [vmem:[%s237 + $0x148] sm:$0xff]
        %v361 = vld [vmem:[%s237 + $0x150] sm:$0xff]
        %v362 = vld [vmem:[%s237 + $0x158] sm:$0xff]
        %v363 = vld [vmem:[%s237 + $0x160] sm:$0xff]
        %v364 = vld [vmem:[%s237 + $0x168] sm:$0xff]
        %v365 = vld [vmem:[%s237 + $0x170] sm:$0xff]
        %v366 = vld [vmem:[%s237 + $0x178] sm:$0xff]
        %v367 = vld [vmem:[%s237 + $0x180] sm:$0xff]
        %v368 = vld [vmem:[%s237 + $0x188] sm:$0xff]
        %v369 = vld [vmem:[%s237 + $0x190] sm:$0xff]
        %v370 = vld [vmem:[%s237 + $0x198] sm:$0xff]
        %v371 = vld [vmem:[%s237 + $0x1a0] sm:$0xff]
        %v372 = vld [vmem:[%s237 + $0x1a8] sm:$0xff]
        %v373 = vld [vmem:[%s237 + $0x1b0] sm:$0xff]
        %v374 = vld [vmem:[%s237 + $0x1b8] sm:$0xff]
        %v375 = vld [vmem:[%s237 + $0x1c0] sm:$0xff]
        %v376 = vld [vmem:[%s237 + $0x1c8] sm:$0xff]
        %v377 = vld [vmem:[%s237 + $0x1d0] sm:$0xff]
        %v378 = vld [vmem:[%s237 + $0x1d8] sm:$0xff]
        %v379 = vld [vmem:[%s237 + $0x1e0] sm:$0xff]
        %v380 = vld [vmem:[%s237 + $0x1e8] sm:$0xff]
        %v381 = vld [vmem:[%s237 + $0x1f0] sm:$0xff]
        %v382 = vld [vmem:[%s237 + $0x1f8] sm:$0xff]
        %v383 = vld [vmem:[%s237 + $0x200] sm:$0xff]
        %v384 = vld [vmem:[%s237 + $0x208] sm:$0xff]
        %v385 = vld [vmem:[%s237 + $0x210] sm:$0xff]
        %v386 = vld [vmem:[%s237 + $0x218] sm:$0xff]
        %v387 = vld [vmem:[%s237 + $0x220] sm:$0xff]
        %v388 = vld [vmem:[%s237 + $0x228] sm:$0xff]
        %v389 = vld [vmem:[%s237 + $0x230] sm:$0xff]
        %v390 = vld [vmem:[%s237 + $0x238] sm:$0xff]
        %v391 = vld [vmem:[%s237 + $0x240] sm:$0xff]
        %v392 = vld [vmem:[%s237 + $0x248] sm:$0xff]
        %v393 = vld [vmem:[%s237 + $0x250] sm:$0xff]
        %v394 = vld [vmem:[%s237 + $0x258] sm:$0xff]
        %v395 = vld [vmem:[%s237 + $0x260] sm:$0xff]
        %v396 = vld [vmem:[%s237 + $0x268] sm:$0xff]
        %v397 = vld [vmem:[%s237 + $0x270] sm:$0xff]
        %v398 = vld [vmem:[%s237 + $0x278] sm:$0xff]
        %v399 = vld [vmem:[%s237 + $0x280] sm:$0xff]
        %v400 = vld [vmem:[%s237 + $0x288] sm:$0xff]
        %v401 = vld [vmem:[%s237 + $0x290] sm:$0xff]
        %v402 = vld [vmem:[%s237 + $0x298] sm:$0xff]
        %v403 = vld [vmem:[%s237 + $0x2a0] sm:$0xff]
        %v404 = vld [vmem:[%s237 + $0x2a8] sm:$0xff]
        %v405 = vld [vmem:[%s237 + $0x2b0] sm:$0xff]
        %v406 = vld [vmem:[%s237 + $0x2b8] sm:$0xff]
        %v407 = vld [vmem:[%s237 + $0x2c0] sm:$0xff]
        %v408 = vld [vmem:[%s237 + $0x2c8] sm:$0xff]
        %v409 = vld [vmem:[%s237 + $0x2d0] sm:$0xff]
        %v410 = vld [vmem:[%s237 + $0x2d8] sm:$0xff]
        %v411 = vld [vmem:[%s237 + $0x2e0] sm:$0xff]
        %v412 = vld [vmem:[%s237 + $0x2e8] sm:$0xff]
        %v413 = vld [vmem:[%s237 + $0x2f0] sm:$0xff]
        %v414 = vld [vmem:[%s237 + $0x2f8] sm:$0xff]
        %v415 = vld [vmem:[%s237 + $0x300] sm:$0xff]
        %v416 = vld [vmem:[%s237 + $0x308] sm:$0xff]
        %v417 = vld [vmem:[%s237 + $0x310] sm:$0xff]
        %v418 = vld [vmem:[%s237 + $0x318] sm:$0xff]
        %v419 = vld [vmem:[%s237 + $0x320] sm:$0xff]
        %v420 = vld [vmem:[%s237 + $0x328] sm:$0xff]
        %v421 = vld [vmem:[%s237 + $0x330] sm:$0xff]
        %v422 = vld [vmem:[%s237 + $0x338] sm:$0xff]
        %v423 = vld [vmem:[%s237 + $0x340] sm:$0xff]
        %v424 = vld [vmem:[%s237 + $0x348] sm:$0xff]
        %v425 = vld [vmem:[%s237 + $0x350] sm:$0xff]
        %v426 = vld [vmem:[%s237 + $0x358] sm:$0xff]
        %v427 = vld [vmem:[%s237 + $0x360] sm:$0xff]
        %v428 = vld [vmem:[%s237 + $0x368] sm:$0xff]
        %v429 = vld [vmem:[%s237 + $0x370] sm:$0xff]
        %v430 = vld [vmem:[%s237 + $0x378] sm:$0xff]
        %v431 = vld [vmem:[%s237 + $0x380] sm:$0xff]
        %v432 = vld [vmem:[%s237 + $0x388] sm:$0xff]
        %v433 = vld [vmem:[%s237 + $0x390] sm:$0xff]
        %v434 = vld [vmem:[%s237 + $0x398] sm:$0xff]
        %v435 = vld [vmem:[%s237 + $0x3a0] sm:$0xff]
        %v436 = vld [vmem:[%s237 + $0x3a8] sm:$0xff]
        %v437 = vld [vmem:[%s237 + $0x3b0] sm:$0xff]
        %v438 = vld [vmem:[%s237 + $0x3b8] sm:$0xff]
        %v439 = vld [vmem:[%s237 + $0x3c0] sm:$0xff]
        %v440 = vld [vmem:[%s237 + $0x3c8] sm:$0xff]
        %v441 = vld [vmem:[%s237 + $0x3d0] sm:$0xff]
        %v442 = vld [vmem:[%s237 + $0x3d8] sm:$0xff]
        %v443 = vld [vmem:[%s237 + $0x3e0] sm:$0xff]
        %v444 = vld [vmem:[%s237 + $0x3e8] sm:$0xff]
        %v445 = vld [vmem:[%s237 + $0x3f0] sm:$0xff]
        %v446 = vld [vmem:[%s237 + $0x3f8] sm:$0xff]
        %v447 = vld [vmem:[%s237 + $0x400] sm:$0xff]
        %v448 = vld [vmem:[%s237 + $0x408] sm:$0xff]
        %v449 = vld [vmem:[%s237 + $0x410] sm:$0xff]
        %v450 = vld [vmem:[%s237 + $0x418] sm:$0xff]
        %v451 = vld [vmem:[%s237 + $0x420] sm:$0xff]
        %v452 = vld [vmem:[%s237 + $0x428] sm:$0xff]
        %v453 = vld [vmem:[%s237 + $0x430] sm:$0xff]
        %v454 = vld [vmem:[%s237 + $0x438] sm:$0xff]
        %v455 = vld [vmem:[%s237 + $0x440] sm:$0xff]
        %v456 = vld [vmem:[%s237 + $0x448] sm:$0xff]
        %v457 = vld [vmem:[%s237 + $0x450] sm:$0xff]
        %v458 = vld [vmem:[%s237 + $0x458] sm:$0xff]
        %v459 = vld [vmem:[%s237 + $0x460] sm:$0xff]
        %v460 = vld [vmem:[%s237 + $0x468] sm:$0xff]
        %v461 = vld [vmem:[%s237 + $0x470] sm:$0xff]
        %v462 = vld [vmem:[%s237 + $0x478] sm:$0xff]
        %v463 = vld [vmem:[%s237 + $0x480] sm:$0xff]
        %v464 = vld [vmem:[%s237 + $0x488] sm:$0xff]
        %v465 = vld [vmem:[%s237 + $0x490] sm:$0xff]
        %v466 = vld [vmem:[%s237 + $0x498] sm:$0xff]
        %v467 = vld [vmem:[%s237 + $0x4a0] sm:$0xff]
        %v468 = vld [vmem:[%s237 + $0x4a8] sm:$0xff]
        %v469 = vld [vmem:[%s237 + $0x4b0] sm:$0xff]
        %v470 = vld [vmem:[%s237 + $0x4b8] sm:$0xff]
        %v471 = vld [vmem:[%s237 + $0x4c0] sm:$0xff]
        %v472 = vld [vmem:[%s237 + $0x4c8] sm:$0xff]
        %v473 = vld [vmem:[%s237 + $0x4d0] sm:$0xff]
        %v474 = vld [vmem:[%s237 + $0x4d8] sm:$0xff]
        %v475 = vld [vmem:[%s237 + $0x4e0] sm:$0xff]
        %v476 = vld [vmem:[%s237 + $0x4e8] sm:$0xff]
        %v477 = vld [vmem:[%s237 + $0x4f0] sm:$0xff]
        %v478 = vld [vmem:[%s237 + $0x4f8] sm:$0xff]
        %v479 = vld [vmem:[%s237 + $0x500] sm:$0xff]
        %v480 = vld [vmem:[%s237 + $0x508] sm:$0xff]
        %v481 = vld [vmem:[%s237 + $0x510] sm:$0xff]
        %v482 = vld [vmem:[%s237 + $0x518] sm:$0xff]
        %v483 = vld [vmem:[%s237 + $0x520] sm:$0xff]
        %v484 = vld [vmem:[%s237 + $0x528] sm:$0xff]
        %v485 = vld [vmem:[%s237 + $0x530] sm:$0xff]
        %v486 = vld [vmem:[%s237 + $0x538] sm:$0xff]
        %v487 = vld [vmem:[%s237 + $0x540] sm:$0xff]
        %v488 = vld [vmem:[%s237 + $0x548] sm:$0xff]
        %v489 = vld [vmem:[%s237 + $0x550] sm:$0xff]
        %v490 = vld [vmem:[%s237 + $0x558] sm:$0xff]
        %v491 = vld [vmem:[%s237 + $0x560] sm:$0xff]
        %v492 = vld [vmem:[%s237 + $0x568] sm:$0xff]
        %v493 = vld [vmem:[%s237 + $0x570] sm:$0xff]
        %v494 = vld [vmem:[%s237 + $0x578] sm:$0xff]
        %v495 = vld [vmem:[%s237 + $0x580] sm:$0xff]
        %v496 = vld [vmem:[%s237 + $0x588] sm:$0xff]
        %v497 = vld [vmem:[%s237 + $0x590] sm:$0xff]
        %v498 = vld [vmem:[%s237 + $0x598] sm:$0xff]
        %v499 = vld [vmem:[%s237 + $0x5a0] sm:$0xff]
        %v500 = vld [vmem:[%s237 + $0x5a8] sm:$0xff]
        %v501 = vld [vmem:[%s237 + $0x5b0] sm:$0xff]
        %v502 = vld [vmem:[%s237 + $0x5b8] sm:$0xff]
        %v503 = vld [vmem:[%s237 + $0x5c0] sm:$0xff]
        %v504 = vld [vmem:[%s237 + $0x5c8] sm:$0xff]
        %v505 = vld [vmem:[%s237 + $0x5d0] sm:$0xff]
        %v506 = vld [vmem:[%s237 + $0x5d8] sm:$0xff]
        %v507 = vld [vmem:[%s237 + $0x5e0] sm:$0xff]
        %v508 = vld [vmem:[%s237 + $0x5e8] sm:$0xff]
        %v509 = vld [vmem:[%s237 + $0x5f0] sm:$0xff]
        %v510 = vld [vmem:[%s237 + $0x5f8] sm:$0xff]
        %v511 = vld [vmem:[%s237 + $0x600] sm:$0xff]
        %v512 = vld [vmem:[%s237 + $0x608] sm:$0xff]
        %v513 = vld [vmem:[%s237 + $0x610] sm:$0xff]
        %v514 = vld [vmem:[%s237 + $0x618] sm:$0xff]
        %v515 = vld [vmem:[%s237 + $0x620] sm:$0xff]
        %v516 = vld [vmem:[%s237 + $0x628] sm:$0xff]
        %v517 = vld [vmem:[%s237 + $0x630] sm:$0xff]
        %v518 = vld [vmem:[%s237 + $0x638] sm:$0xff]
        %v519 = vld [vmem:[%s237 + $0x640] sm:$0xff]
        %v520 = vld [vmem:[%s237 + $0x648] sm:$0xff]
        %v521 = vld [vmem:[%s237 + $0x650] sm:$0xff]
        %v522 = vld [vmem:[%s237 + $0x658] sm:$0xff]
        %v523 = vld [vmem:[%s237 + $0x660] sm:$0xff]
        %v524 = vld [vmem:[%s237 + $0x668] sm:$0xff]
        %v525 = vld [vmem:[%s237 + $0x670] sm:$0xff]
        %v526 = vld [vmem:[%s237 + $0x678] sm:$0xff]
        %v527 = vld [vmem:[%s237 + $0x680] sm:$0xff]
        %v528 = vld [vmem:[%s237 + $0x688] sm:$0xff]
        %v529 = vld [vmem:[%s237 + $0x690] sm:$0xff]
        %v530 = vld [vmem:[%s237 + $0x698] sm:$0xff]
        %v531 = vld [vmem:[%s237 + $0x6a0] sm:$0xff]
        %v532 = vld [vmem:[%s237 + $0x6a8] sm:$0xff]
        %v533 = vld [vmem:[%s237 + $0x6b0] sm:$0xff]
        %v534 = vld [vmem:[%s237 + $0x6b8] sm:$0xff]
        %v535 = vld [vmem:[%s237 + $0x6c0] sm:$0xff]
        %v536 = vld [vmem:[%s237 + $0x6c8] sm:$0xff]
        %v537 = vld [vmem:[%s237 + $0x6d0] sm:$0xff]
        %v538 = vld [vmem:[%s237 + $0x6d8] sm:$0xff]
        %v539 = vld [vmem:[%s237 + $0x6e0] sm:$0xff]
        %v540 = vld [vmem:[%s237 + $0x6e8] sm:$0xff]
        %v541 = vld [vmem:[%s237 + $0x6f0] sm:$0xff]
        %v542 = vld [vmem:[%s237 + $0x6f8] sm:$0xff]
        %v543 = vld [vmem:[%s237 + $0x700] sm:$0xff]
        %v544 = vld [vmem:[%s237 + $0x708] sm:$0xff]
        %v545 = vld [vmem:[%s237 + $0x710] sm:$0xff]
        %v546 = vld [vmem:[%s237 + $0x718] sm:$0xff]
        %v547 = vld [vmem:[%s237 + $0x720] sm:$0xff]
        %v548 = vld [vmem:[%s237 + $0x728] sm:$0xff]
        %v549 = vld [vmem:[%s237 + $0x730] sm:$0xff]
        %v550 = vld [vmem:[%s237 + $0x738] sm:$0xff]
        %v551 = vld [vmem:[%s237 + $0x740] sm:$0xff]
        %v552 = vld [vmem:[%s237 + $0x748] sm:$0xff]
        %v553 = vld [vmem:[%s237 + $0x750] sm:$0xff]
        %v554 = vld [vmem:[%s237 + $0x758] sm:$0xff]
        %v555 = vld [vmem:[%s237 + $0x760] sm:$0xff]
        %v556 = vld [vmem:[%s237 + $0x768] sm:$0xff]
        %v557 = vld [vmem:[%s237 + $0x770] sm:$0xff]
        %v558 = vld [vmem:[%s237 + $0x778] sm:$0xff]
        %v559 = vld [vmem:[%s237 + $0x780] sm:$0xff]
        %v560 = vld [vmem:[%s237 + $0x788] sm:$0xff]
        %v561 = vld [vmem:[%s237 + $0x790] sm:$0xff]
        %v562 = vld [vmem:[%s237 + $0x798] sm:$0xff]
        %v563 = vld [vmem:[%s237 + $0x7a0] sm:$0xff]
        %v564 = vld [vmem:[%s237 + $0x7a8] sm:$0xff]
        %v565 = vld [vmem:[%s237 + $0x7b0] sm:$0xff]
        %v566 = vld [vmem:[%s237 + $0x7b8] sm:$0xff]
        %v567 = vld [vmem:[%s237 + $0x7c0] sm:$0xff]
        %v568 = vld [vmem:[%s237 + $0x7c8] sm:$0xff]
        %v569 = vld [vmem:[%s237 + $0x7d0] sm:$0xff]
        %v570 = vld [vmem:[%s237 + $0x7d8] sm:$0xff]
        %v571 = vld [vmem:[%s237 + $0x7e0] sm:$0xff]
        %v572 = vld [vmem:[%s237 + $0x7e8] sm:$0xff]
        %v573 = vld [vmem:[%s237 + $0x7f0] sm:$0xff]
        %v574 = vld [vmem:[%s237 + $0x7f8] sm:$0xff]
        %v575 = vld [vmem:[%s237 + $0x800] sm:$0xff]
        %v576 = vld [vmem:[%s237 + $0x808] sm:$0xff]
        %v577 = vld [vmem:[%s237 + $0x810] sm:$0xff]
        %v578 = vld [vmem:[%s237 + $0x818] sm:$0xff]
        %v579 = vld [vmem:[%s237 + $0x820] sm:$0xff]
        %v580 = vld [vmem:[%s237 + $0x828] sm:$0xff]
        %v581 = vld [vmem:[%s237 + $0x830] sm:$0xff]
        %v582 = vld [vmem:[%s237 + $0x838] sm:$0xff]
        %v583 = vld [vmem:[%s237 + $0x840] sm:$0xff]
        %v584 = vld [vmem:[%s237 + $0x848] sm:$0xff]
        %v585 = vld [vmem:[%s237 + $0x850] sm:$0xff]
        %v586 = vld [vmem:[%s237 + $0x858] sm:$0xff]
        %v587 = vld [vmem:[%s237 + $0x860] sm:$0xff]
        %v588 = vld [vmem:[%s237 + $0x868] sm:$0xff]
        %v589 = vld [vmem:[%s237 + $0x870] sm:$0xff]
        %v590 = vld [vmem:[%s237 + $0x878] sm:$0xff]
        %v591 = vld [vmem:[%s237 + $0x880] sm:$0xff]
        %v592 = vld [vmem:[%s237 + $0x888] sm:$0xff]
        %v593 = vld [vmem:[%s237 + $0x890] sm:$0xff]
        %v594 = vld [vmem:[%s237 + $0x898] sm:$0xff]
        %v595 = vld [vmem:[%s237 + $0x8a0] sm:$0xff]
        %v596 = vld [vmem:[%s237 + $0x8a8] sm:$0xff]
        %v597 = vld [vmem:[%s237 + $0x8b0] sm:$0xff]
        %v598 = vld [vmem:[%s237 + $0x8b8] sm:$0xff]
        %v599 = vld [vmem:[%s237 + $0x8c0] sm:$0xff]
        %v600 = vld [vmem:[%s237 + $0x8c8] sm:$0xff]
        %v601 = vld [vmem:[%s237 + $0x8d0] sm:$0xff]
        %v602 = vld [vmem:[%s237 + $0x8d8] sm:$0xff]
        %v603 = vld [vmem:[%s237 + $0x8e0] sm:$0xff]
        %v604 = vld [vmem:[%s237 + $0x8e8] sm:$0xff]
        %v605 = vld [vmem:[%s237 + $0x8f0] sm:$0xff]
        %v606 = vld [vmem:[%s237 + $0x8f8] sm:$0xff]
        %v607 = vld [vmem:[%s237 + $0x900] sm:$0xff]
        %v608 = vld [vmem:[%s237 + $0x908] sm:$0xff]
        %v609 = vld [vmem:[%s237 + $0x910] sm:$0xff]
        %v610 = vld [vmem:[%s237 + $0x918] sm:$0xff]
        %v611 = vld [vmem:[%s237 + $0x920] sm:$0xff]
        %v612 = vld [vmem:[%s237 + $0x928] sm:$0xff]
        %v613 = vld [vmem:[%s237 + $0x930] sm:$0xff]
        %v614 = vld [vmem:[%s237 + $0x938] sm:$0xff]
        %v615 = vld [vmem:[%s237 + $0x940] sm:$0xff]
        %v616 = vld [vmem:[%s237 + $0x948] sm:$0xff]
        %v617 = vld [vmem:[%s237 + $0x950] sm:$0xff]
        %v618 = vld [vmem:[%s237 + $0x958] sm:$0xff]
        %v619 = vld [vmem:[%s237 + $0x960] sm:$0xff]
        %v620 = vld [vmem:[%s237 + $0x968] sm:$0xff]
        %v621 = vld [vmem:[%s237 + $0x970] sm:$0xff]
        %v622 = vld [vmem:[%s237 + $0x978] sm:$0xff]
        %v623 = vld [vmem:[%s237 + $0x980] sm:$0xff]
        %v624 = vld [vmem:[%s237 + $0x988] sm:$0xff]
        %v625 = vld [vmem:[%s237 + $0x990] sm:$0xff]
        %v626 = vld [vmem:[%s237 + $0x998] sm:$0xff]
        %v627 = vld [vmem:[%s237 + $0x9a0] sm:$0xff]
        %v628 = vld [vmem:[%s237 + $0x9a8] sm:$0xff]
        %v629 = vld [vmem:[%s237 + $0x9b0] sm:$0xff]
        %v630 = vld [vmem:[%s237 + $0x9b8] sm:$0xff]
        %v631 = vld [vmem:[%s237 + $0x9c0] sm:$0xff]
        %v632 = vld [vmem:[%s237 + $0x9c8] sm:$0xff]
        %v633 = vld [vmem:[%s237 + $0x9d0] sm:$0xff]
        %v634 = vld [vmem:[%s237 + $0x9d8] sm:$0xff]
        %v635 = vld [vmem:[%s237 + $0x9e0] sm:$0xff]
        %v636 = vld [vmem:[%s237 + $0x9e8] sm:$0xff]
        %v637 = vld [vmem:[%s237 + $0x9f0] sm:$0xff]
        %v638 = vld [vmem:[%s237 + $0x9f8] sm:$0xff]
        %v639 = vld [vmem:[%s237 + $0xa00] sm:$0xff]
        %v640 = vld [vmem:[%s237 + $0xa08] sm:$0xff]
        %v641 = vld [vmem:[%s237 + $0xa10] sm:$0xff]
        %v642 = vld [vmem:[%s237 + $0xa18] sm:$0xff]
        %v643 = vld [vmem:[%s237 + $0xa20] sm:$0xff]
        %v644 = vld [vmem:[%s237 + $0xa28] sm:$0xff]
        %v645 = vld [vmem:[%s237 + $0xa30] sm:$0xff]
        %v646 = vld [vmem:[%s237 + $0xa38] sm:$0xff]
        %v647 = vld [vmem:[%s237 + $0xa40] sm:$0xff]
        %v648 = vld [vmem:[%s237 + $0xa48] sm:$0xff]
        %v649 = vld [vmem:[%s237 + $0xa50] sm:$0xff]
        %v650 = vld [vmem:[%s237 + $0xa58] sm:$0xff]
        %v651 = vld [vmem:[%s237 + $0xa60] sm:$0xff]
        %v652 = vld [vmem:[%s237 + $0xa68] sm:$0xff]
        %v653 = vld [vmem:[%s237 + $0xa70] sm:$0xff]
        %v654 = vld [vmem:[%s237 + $0xa78] sm:$0xff]
        %v655 = vld [vmem:[%s237 + $0xa80] sm:$0xff]
        %v656 = vld [vmem:[%s237 + $0xa88] sm:$0xff]
        %v657 = vld [vmem:[%s237 + $0xa90] sm:$0xff]
        %v658 = vld [vmem:[%s237 + $0xa98] sm:$0xff]
        %v659 = vld [vmem:[%s237 + $0xaa0] sm:$0xff]
        %v660 = vld [vmem:[%s237 + $0xaa8] sm:$0xff]
        %v661 = vld [vmem:[%s237 + $0xab0] sm:$0xff]
        %v662 = vld [vmem:[%s237 + $0xab8] sm:$0xff]
        %v663 = vld [vmem:[%s237 + $0xac0] sm:$0xff]
        %v664 = vld [vmem:[%s237 + $0xac8] sm:$0xff]
        %v665 = vld [vmem:[%s237 + $0xad0] sm:$0xff]
        %v666 = vld [vmem:[%s237 + $0xad8] sm:$0xff]
        %v667 = vld [vmem:[%s237 + $0xae0] sm:$0xff]
        %v668 = vld [vmem:[%s237 + $0xae8] sm:$0xff]
        %v669 = vld [vmem:[%s237 + $0xaf0] sm:$0xff]
        %v670 = vld [vmem:[%s237 + $0xaf8] sm:$0xff]
        %v671 = vld [vmem:[%s237 + $0xb00] sm:$0xff]
        %v672 = vld [vmem:[%s237 + $0xb08] sm:$0xff]
        %v673 = vld [vmem:[%s237 + $0xb10] sm:$0xff]
        %v674 = vld [vmem:[%s237 + $0xb18] sm:$0xff]
        %v675 = vld [vmem:[%s237 + $0xb20] sm:$0xff]
        %v676 = vld [vmem:[%s237 + $0xb28] sm:$0xff]
        %v677 = vld [vmem:[%s237 + $0xb30] sm:$0xff]
        %v678 = vld [vmem:[%s237 + $0xb38] sm:$0xff]
        %v679 = vld [vmem:[%s237 + $0xb40] sm:$0xff]
        %v680 = vld [vmem:[%s237 + $0xb48] sm:$0xff]
        %v681 = vld [vmem:[%s237 + $0xb50] sm:$0xff]
        %v682 = vld [vmem:[%s237 + $0xb58] sm:$0xff]
        %v683 = vld [vmem:[%s237 + $0xb60] sm:$0xff]
        %v684 = vld [vmem:[%s237 + $0xb68] sm:$0xff]
        %v685 = vld [vmem:[%s237 + $0xb70] sm:$0xff]
        %v686 = vld [vmem:[%s237 + $0xb78] sm:$0xff]
        %v687 = vld [vmem:[%s237 + $0xb80] sm:$0xff]
        %v688 = vld [vmem:[%s237 + $0xb88] sm:$0xff]
        %v689 = vld [vmem:[%s237 + $0xb90] sm:$0xff]
        %v690 = vld [vmem:[%s237 + $0xb98] sm:$0xff]
        %v691 = vld [vmem:[%s237 + $0xba0] sm:$0xff]
        %v692 = vld [vmem:[%s237 + $0xba8] sm:$0xff]
        %v693 = vld [vmem:[%s237 + $0xbb0] sm:$0xff]
        %v694 = vld [vmem:[%s237 + $0xbb8] sm:$0xff]
        %v695 = vld [vmem:[%s237 + $0xbc0] sm:$0xff]
        %v696 = vld [vmem:[%s237 + $0xbc8] sm:$0xff]
        %v697 = vld [vmem:[%s237 + $0xbd0] sm:$0xff]
        %v698 = vld [vmem:[%s237 + $0xbd8] sm:$0xff]
        %v699 = vld [vmem:[%s237 + $0xbe0] sm:$0xff]
        %v700 = vld [vmem:[%s237 + $0xbe8] sm:$0xff]
        %v701 = vld [vmem:[%s237 + $0xbf0] sm:$0xff]
        %v702 = vld [vmem:[%s237 + $0xbf8] sm:$0xff]
        %v703 = vld [vmem:[%s237 + $0xc00] sm:$0xff]
        %v704 = vld [vmem:[%s237 + $0xc08] sm:$0xff]
        %v705 = vld [vmem:[%s237 + $0xc10] sm:$0xff]
        %v706 = vld [vmem:[%s237 + $0xc18] sm:$0xff]
        %v707 = vld [vmem:[%s237 + $0xc20] sm:$0xff]
        %v708 = vld [vmem:[%s237 + $0xc28] sm:$0xff]
        %v709 = vld [vmem:[%s237 + $0xc30] sm:$0xff]
        %v710 = vld [vmem:[%s237 + $0xc38] sm:$0xff]
        %v711 = vld [vmem:[%s237 + $0xc40] sm:$0xff]
        %v712 = vld [vmem:[%s237 + $0xc48] sm:$0xff]
        %v713 = vld [vmem:[%s237 + $0xc50] sm:$0xff]
        %v714 = vld [vmem:[%s237 + $0xc58] sm:$0xff]
        %v715 = vld [vmem:[%s237 + $0xc60] sm:$0xff]
        %v716 = vld [vmem:[%s237 + $0xc68] sm:$0xff]
        %v717 = vld [vmem:[%s237 + $0xc70] sm:$0xff]
        %v718 = vld [vmem:[%s237 + $0xc78] sm:$0xff]
        %v719 = vld [vmem:[%s237 + $0xc80] sm:$0xff]
        %v720 = vld [vmem:[%s237 + $0xc88] sm:$0xff]
        %v721 = vld [vmem:[%s237 + $0xc90] sm:$0xff]
        %v722 = vld [vmem:[%s237 + $0xc98] sm:$0xff]
        %v723 = vld [vmem:[%s237 + $0xca0] sm:$0xff]
        %v724 = vld [vmem:[%s237 + $0xca8] sm:$0xff]
        %v725 = vld [vmem:[%s237 + $0xcb0] sm:$0xff]
        %v726 = vld [vmem:[%s237 + $0xcb8] sm:$0xff]
        %v727 = vld [vmem:[%s237 + $0xcc0] sm:$0xff]
        %v728 = vld [vmem:[%s237 + $0xcc8] sm:$0xff]
        %v729 = vld [vmem:[%s237 + $0xcd0] sm:$0xff]
        %v730 = vld [vmem:[%s237 + $0xcd8] sm:$0xff]
        %v731 = vld [vmem:[%s237 + $0xce0] sm:$0xff]
        %v732 = vld [vmem:[%s237 + $0xce8] sm:$0xff]
        %v733 = vld [vmem:[%s237 + $0xcf0] sm:$0xff]
        %v734 = vld [vmem:[%s237 + $0xcf8] sm:$0xff]
        %v735 = vld [vmem:[%s237 + $0xd00] sm:$0xff]
        %v736 = vld [vmem:[%s237 + $0xd08] sm:$0xff]
        %v737 = vld [vmem:[%s237 + $0xd10] sm:$0xff]
        %v738 = vld [vmem:[%s237 + $0xd18] sm:$0xff]
        %v739 = vld [vmem:[%s237 + $0xd20] sm:$0xff]
        %v740 = vld [vmem:[%s237 + $0xd28] sm:$0xff]
        %v741 = vld [vmem:[%s237 + $0xd30] sm:$0xff]
        %v742 = vld [vmem:[%s237 + $0xd38] sm:$0xff]
        %v743 = vld [vmem:[%s237 + $0xd40] sm:$0xff]
        %v744 = vld [vmem:[%s237 + $0xd48] sm:$0xff]
        %v745 = vld [vmem:[%s237 + $0xd50] sm:$0xff]
        %v746 = vld [vmem:[%s237 + $0xd58] sm:$0xff]
        %v747 = vld [vmem:[%s237 + $0xd60] sm:$0xff]
        %v748 = vld [vmem:[%s237 + $0xd68] sm:$0xff]
        %v749 = vld [vmem:[%s237 + $0xd70] sm:$0xff]
        %v750 = vld [vmem:[%s237 + $0xd78] sm:$0xff]
        %v751 = vld [vmem:[%s237 + $0xd80] sm:$0xff]
        %v752 = vld [vmem:[%s237 + $0xd88] sm:$0xff]
        %v753 = vld [vmem:[%s237 + $0xd90] sm:$0xff]
        %v754 = vld [vmem:[%s237 + $0xd98] sm:$0xff]
        %v755 = vld [vmem:[%s237 + $0xda0] sm:$0xff]
        %v756 = vld [vmem:[%s237 + $0xda8] sm:$0xff]
        %v757 = vld [vmem:[%s237 + $0xdb0] sm:$0xff]
        %v758 = vld [vmem:[%s237 + $0xdb8] sm:$0xff]
        %v759 = vld [vmem:[%s237 + $0xdc0] sm:$0xff]
        %v760 = vld [vmem:[%s237 + $0xdc8] sm:$0xff]
        %v761 = vld [vmem:[%s237 + $0xdd0] sm:$0xff]
        %v762 = vld [vmem:[%s237 + $0xdd8] sm:$0xff]
        %v763 = vld [vmem:[%s237 + $0xde0] sm:$0xff]
        %v764 = vld [vmem:[%s237 + $0xde8] sm:$0xff]
        %v765 = vld [vmem:[%s237 + $0xdf0] sm:$0xff]
        %v766 = vld [vmem:[%s237 + $0xdf8] sm:$0xff]
        %v767 = vld [vmem:[%s237 + $0xe00] sm:$0xff]
        %v768 = vld [vmem:[%s237 + $0xe08] sm:$0xff]
        %v769 = vld [vmem:[%s237 + $0xe10] sm:$0xff]
        %v770 = vld [vmem:[%s237 + $0xe18] sm:$0xff]
        %v771 = vld [vmem:[%s237 + $0xe20] sm:$0xff]
        %v772 = vld [vmem:[%s237 + $0xe28] sm:$0xff]
        %v773 = vld [vmem:[%s237 + $0xe30] sm:$0xff]
        %v774 = vld [vmem:[%s237 + $0xe38] sm:$0xff]
        %v775 = vld [vmem:[%s237 + $0xe40] sm:$0xff]
        %v776 = vld [vmem:[%s237 + $0xe48] sm:$0xff]
        %v777 = vld [vmem:[%s237 + $0xe50] sm:$0xff]
        %v778 = vld [vmem:[%s237 + $0xe58] sm:$0xff]
        %v779 = vld [vmem:[%s237 + $0xe60] sm:$0xff]
        %v780 = vld [vmem:[%s237 + $0xe68] sm:$0xff]
        %v781 = vld [vmem:[%s237 + $0xe70] sm:$0xff]
        %v782 = vld [vmem:[%s237 + $0xe78] sm:$0xff]
        %v783 = vld [vmem:[%s237 + $0xe80] sm:$0xff]
        %v784 = vld [vmem:[%s237 + $0xe88] sm:$0xff]
        %v785 = vld [vmem:[%s237 + $0xe90] sm:$0xff]
        %v786 = vld [vmem:[%s237 + $0xe98] sm:$0xff]
        %v787 = vld [vmem:[%s237 + $0xea0] sm:$0xff]
        %v788 = vld [vmem:[%s237 + $0xea8] sm:$0xff]
        %v789 = vld [vmem:[%s237 + $0xeb0] sm:$0xff]
        %v790 = vld [vmem:[%s237 + $0xeb8] sm:$0xff]
        %v791 = vld [vmem:[%s237 + $0xec0] sm:$0xff]
        %v792 = vld [vmem:[%s237 + $0xec8] sm:$0xff]
        %v793 = vld [vmem:[%s237 + $0xed0] sm:$0xff]
        %v794 = vld [vmem:[%s237 + $0xed8] sm:$0xff]
        %v795 = vld [vmem:[%s237 + $0xee0] sm:$0xff]
        %v796 = vld [vmem:[%s237 + $0xee8] sm:$0xff]
        %v797 = vld [vmem:[%s237 + $0xef0] sm:$0xff]
        %v798 = vld [vmem:[%s237 + $0xef8] sm:$0xff]
        %v799 = vld [vmem:[%s237 + $0xf00] sm:$0xff]
        %v800 = vld [vmem:[%s237 + $0xf08] sm:$0xff]
        %v801 = vld [vmem:[%s237 + $0xf10] sm:$0xff]
        %v802 = vld [vmem:[%s237 + $0xf18] sm:$0xff]
        %v803 = vld [vmem:[%s237 + $0xf20] sm:$0xff]
        %v804 = vld [vmem:[%s237 + $0xf28] sm:$0xff]
        %v805 = vld [vmem:[%s237 + $0xf30] sm:$0xff]
        %v806 = vld [vmem:[%s237 + $0xf38] sm:$0xff]
        %v807 = vld [vmem:[%s237 + $0xf40] sm:$0xff]
        %v808 = vld [vmem:[%s237 + $0xf48] sm:$0xff]
        %v809 = vld [vmem:[%s237 + $0xf50] sm:$0xff]
        %v810 = vld [vmem:[%s237 + $0xf58] sm:$0xff]
        %v811 = vld [vmem:[%s237 + $0xf60] sm:$0xff]
        %v812 = vld [vmem:[%s237 + $0xf68] sm:$0xff]
        %v813 = vld [vmem:[%s237 + $0xf70] sm:$0xff]
        %v814 = vld [vmem:[%s237 + $0xf78] sm:$0xff]
        %v815 = vld [vmem:[%s237 + $0xf80] sm:$0xff]
        %v816 = vld [vmem:[%s237 + $0xf88] sm:$0xff]
        %v817 = vld [vmem:[%s237 + $0xf90] sm:$0xff]
        %v818 = vld [vmem:[%s237 + $0xf98] sm:$0xff]
        %v819 = vld [vmem:[%s237 + $0xfa0] sm:$0xff]
        %v820 = vld [vmem:[%s237 + $0xfa8] sm:$0xff]
        %v821 = vld [vmem:[%s237 + $0xfb0] sm:$0xff]
        %v822 = vld [vmem:[%s237 + $0xfb8] sm:$0xff]
        %v823 = vld [vmem:[%s237 + $0xfc0] sm:$0xff]
        %v824 = vld [vmem:[%s237 + $0xfc8] sm:$0xff]
        %v825 = vld [vmem:[%s237 + $0xfd0] sm:$0xff]
        %v826 = vld [vmem:[%s237 + $0xfd8] sm:$0xff]
        %v827 = vld [vmem:[%s237 + $0xfe0] sm:$0xff]
        %v828 = vld [vmem:[%s237 + $0xfe8] sm:$0xff]
        %v829 = vld [vmem:[%s237 + $0xff0] sm:$0xff]
        %v830 = vld [vmem:[%s237 + $0xff8] sm:$0xff]
        %v831 = vld [vmem:[%s237 + $0x1000] sm:$0xff]
        %v832 = vld [vmem:[%s237 + $0x1008] sm:$0xff]
        %v833 = vld [vmem:[%s237 + $0x1010] sm:$0xff]
        %v834 = vld [vmem:[%s237 + $0x1018] sm:$0xff]
        %v835 = vld [vmem:[%s237 + $0x1020] sm:$0xff]
        %v836 = vld [vmem:[%s237 + $0x1028] sm:$0xff]
        %v837 = vld [vmem:[%s237 + $0x1030] sm:$0xff]
        %v838 = vld [vmem:[%s237 + $0x1038] sm:$0xff]
        %v839 = vld [vmem:[%s237 + $0x1040] sm:$0xff]
        %v840 = vld [vmem:[%s237 + $0x1048] sm:$0xff]
        %v841 = vld [vmem:[%s237 + $0x1050] sm:$0xff]
        %v842 = vld [vmem:[%s237 + $0x1058] sm:$0xff]
        %v843 = vld [vmem:[%s237 + $0x1060] sm:$0xff]
        %v844 = vld [vmem:[%s237 + $0x1068] sm:$0xff]
        %v845 = vld [vmem:[%s237 + $0x1070] sm:$0xff]
        %v846 = vld [vmem:[%s237 + $0x1078] sm:$0xff]
        %v847 = vld [vmem:[%s237 + $0x1080] sm:$0xff]
        %v848 = vld [vmem:[%s237 + $0x1088] sm:$0xff]
        %v849 = vld [vmem:[%s237 + $0x1090] sm:$0xff]
        %v850 = vld [vmem:[%s237 + $0x1098] sm:$0xff]
        %v851 = vld [vmem:[%s237 + $0x10a0] sm:$0xff]
        %v852 = vld [vmem:[%s237 + $0x10a8] sm:$0xff]
        %v853 = vld [vmem:[%s237 + $0x10b0] sm:$0xff]
        %v854 = vld [vmem:[%s237 + $0x10b8] sm:$0xff]
        %v855 = vld [vmem:[%s237 + $0x10c0] sm:$0xff]
        %v856 = vld [vmem:[%s237 + $0x10c8] sm:$0xff]
        %v857 = vld [vmem:[%s237 + $0x10d0] sm:$0xff]
        %v858 = vld [vmem:[%s237 + $0x10d8] sm:$0xff]
        %v859 = vld [vmem:[%s237 + $0x10e0] sm:$0xff]
        %v860 = vld [vmem:[%s237 + $0x10e8] sm:$0xff]
        %v861 = vld [vmem:[%s237 + $0x10f0] sm:$0xff]
        %v862 = vld [vmem:[%s237 + $0x10f8] sm:$0xff]
        %v863 = vld [vmem:[%s237 + $0x1100] sm:$0xff]
        %v864 = vld [vmem:[%s237 + $0x1108] sm:$0xff]
        %v865 = vld [vmem:[%s237 + $0x1110] sm:$0xff]
        %v866 = vld [vmem:[%s237 + $0x1118] sm:$0xff]
        %v867 = vld [vmem:[%s237 + $0x1120] sm:$0xff]
        %v868 = vld [vmem:[%s237 + $0x1128] sm:$0xff]
        %v869 = vld [vmem:[%s237 + $0x1130] sm:$0xff]
        %v870 = vld [vmem:[%s237 + $0x1138] sm:$0xff]
        %v871 = vld [vmem:[%s237 + $0x1140] sm:$0xff]
        %v872 = vld [vmem:[%s237 + $0x1148] sm:$0xff]
        %v873 = vld [vmem:[%s237 + $0x1150] sm:$0xff]
        %v874 = vld [vmem:[%s237 + $0x1158] sm:$0xff]
        %v875 = vld [vmem:[%s237 + $0x1160] sm:$0xff]
        %v876 = vld [vmem:[%s237 + $0x1168] sm:$0xff]
        %v877 = vld [vmem:[%s237 + $0x1170] sm:$0xff]
        %v878 = vld [vmem:[%s237 + $0x1178] sm:$0xff]
        %v879 = vld [vmem:[%s237 + $0x1180] sm:$0xff]
        %v880 = vld [vmem:[%s237 + $0x1188] sm:$0xff]
        %v881 = vld [vmem:[%s237 + $0x1190] sm:$0xff]
        %v882 = vld [vmem:[%s237 + $0x1198] sm:$0xff]
        %v883 = vld [vmem:[%s237 + $0x11a0] sm:$0xff]
        %v884 = vld [vmem:[%s237 + $0x11a8] sm:$0xff]
        %v885 = vld [vmem:[%s237 + $0x11b0] sm:$0xff]
        %v886 = vld [vmem:[%s237 + $0x11b8] sm:$0xff]
        %v887 = vld [vmem:[%s237 + $0x11c0] sm:$0xff]
        %v888 = vld [vmem:[%s237 + $0x11c8] sm:$0xff]
        %v889 = vld [vmem:[%s237 + $0x11d0] sm:$0xff]
        %v890 = vld [vmem:[%s237 + $0x11d8] sm:$0xff]
        %v891 = vld [vmem:[%s237 + $0x11e0] sm:$0xff]
        %v892 = vld [vmem:[%s237 + $0x11e8] sm:$0xff]
        %v893 = vld [vmem:[%s237 + $0x11f0] sm:$0xff]
        %v894 = vld [vmem:[%s237 + $0x11f8] sm:$0xff]
        %v895 = vld [vmem:[%s237 + $0x1200] sm:$0xff]
        %v896 = vld [vmem:[%s237 + $0x1208] sm:$0xff]
        %v897 = vld [vmem:[%s237 + $0x1210] sm:$0xff]
        %v898 = vld [vmem:[%s237 + $0x1218] sm:$0xff]
        %v899 = vld [vmem:[%s237 + $0x1220] sm:$0xff]
        %v900 = vld [vmem:[%s237 + $0x1228] sm:$0xff]
        %v901 = vld [vmem:[%s237 + $0x1230] sm:$0xff]
        %v902 = vld [vmem:[%s237 + $0x1238] sm:$0xff]
        %v903 = vld [vmem:[%s237 + $0x1240] sm:$0xff]
        %v904 = vld [vmem:[%s237 + $0x1248] sm:$0xff]
        %v905 = vld [vmem:[%s237 + $0x1250] sm:$0xff]
        %v906 = vld [vmem:[%s237 + $0x1258] sm:$0xff]
        %v907 = vld [vmem:[%s237 + $0x1260] sm:$0xff]
        %v908 = vld [vmem:[%s237 + $0x1268] sm:$0xff]
        %v909 = vld [vmem:[%s237 + $0x1270] sm:$0xff]
        %v910 = vld [vmem:[%s237 + $0x1278] sm:$0xff]
        %v911 = vld [vmem:[%s237 + $0x1280] sm:$0xff]
        %v912 = vld [vmem:[%s237 + $0x1288] sm:$0xff]
        %v913 = vld [vmem:[%s237 + $0x1290] sm:$0xff]
        %v914 = vld [vmem:[%s237 + $0x1298] sm:$0xff]
        %v915 = vld [vmem:[%s237 + $0x12a0] sm:$0xff]
        %v916 = vld [vmem:[%s237 + $0x12a8] sm:$0xff]
        %v917 = vld [vmem:[%s237 + $0x12b0] sm:$0xff]
        %v918 = vld [vmem:[%s237 + $0x12b8] sm:$0xff]
        %v919 = vld [vmem:[%s237 + $0x12c0] sm:$0xff]
        %v920 = vld [vmem:[%s237 + $0x12c8] sm:$0xff]
        %v921 = vld [vmem:[%s237 + $0x12d0] sm:$0xff]
        %v922 = vld [vmem:[%s237 + $0x12d8] sm:$0xff]
        %v923 = vld [vmem:[%s237 + $0x12e0] sm:$0xff]
        %v924 = vld [vmem:[%s237 + $0x12e8] sm:$0xff]
        %v925 = vld [vmem:[%s237 + $0x12f0] sm:$0xff]
        %v926 = vld [vmem:[%s237 + $0x12f8] sm:$0xff]
        %v927 = vld [vmem:[%s237 + $0x1300] sm:$0xff]
        %v928 = vld [vmem:[%s237 + $0x1308] sm:$0xff]
        %v929 = vld [vmem:[%s237 + $0x1310] sm:$0xff]
        %v930 = vld [vmem:[%s237 + $0x1318] sm:$0xff]
        %v931 = vld [vmem:[%s237 + $0x1320] sm:$0xff]
        %v932 = vld [vmem:[%s237 + $0x1328] sm:$0xff]
        %v933 = vld [vmem:[%s237 + $0x1330] sm:$0xff]
        %v934 = vld [vmem:[%s237 + $0x1338] sm:$0xff]
        %v935 = vld [vmem:[%s237 + $0x1340] sm:$0xff]
        %v936 = vld [vmem:[%s237 + $0x1348] sm:$0xff]
        %v937 = vld [vmem:[%s237 + $0x1350] sm:$0xff]
        %v938 = vld [vmem:[%s237 + $0x1358] sm:$0xff]
        %v939 = vld [vmem:[%s237 + $0x1360] sm:$0xff]
        %v940 = vld [vmem:[%s237 + $0x1368] sm:$0xff]
        %v941 = vld [vmem:[%s237 + $0x1370] sm:$0xff]
        %v942 = vld [vmem:[%s237 + $0x1378] sm:$0xff]
        %v943 = vld [vmem:[%s237 + $0x1380] sm:$0xff]
        %v944 = vld [vmem:[%s237 + $0x1388] sm:$0xff]
        %v945 = vld [vmem:[%s237 + $0x1390] sm:$0xff]
        %v946 = vld [vmem:[%s237 + $0x1398] sm:$0xff]
        %v947 = vld [vmem:[%s237 + $0x13a0] sm:$0xff]
        %v948 = vld [vmem:[%s237 + $0x13a8] sm:$0xff]
        %v949 = vld [vmem:[%s237 + $0x13b0] sm:$0xff]
        %v950 = vld [vmem:[%s237 + $0x13b8] sm:$0xff]
        %v951 = vld [vmem:[%s237 + $0x13c0] sm:$0xff]
        %v952 = vld [vmem:[%s237 + $0x13c8] sm:$0xff]
        %v953 = vld [vmem:[%s237 + $0x13d0] sm:$0xff]
        %v954 = vld [vmem:[%s237 + $0x13d8] sm:$0xff]
        %v955 = vld [vmem:[%s237 + $0x13e0] sm:$0xff]
        %v956 = vld [vmem:[%s237 + $0x13e8] sm:$0xff]
        %v957 = vld [vmem:[%s237 + $0x13f0] sm:$0xff]
        %v958 = vld [vmem:[%s237 + $0x13f8] sm:$0xff]
        %v959 = vld [vmem:[%s237 + $0x1400] sm:$0xff]
        %v960 = vld [vmem:[%s237 + $0x1408] sm:$0xff]
        %v961 = vld [vmem:[%s237 + $0x1410] sm:$0xff]
        %v962 = vld [vmem:[%s237 + $0x1418] sm:$0xff]
        %v963 = vld [vmem:[%s237 + $0x1420] sm:$0xff]
        %v964 = vld [vmem:[%s237 + $0x1428] sm:$0xff]
        %v965 = vld [vmem:[%s237 + $0x1430] sm:$0xff]
        %v966 = vld [vmem:[%s237 + $0x1438] sm:$0xff]
        %v967 = vld [vmem:[%s237 + $0x1440] sm:$0xff]
        %v968 = vld [vmem:[%s237 + $0x1448] sm:$0xff]
        %v969 = vld [vmem:[%s237 + $0x1450] sm:$0xff]
        %v970 = vld [vmem:[%s237 + $0x1458] sm:$0xff]
        %v971 = vld [vmem:[%s237 + $0x1460] sm:$0xff]
        %v972 = vld [vmem:[%s237 + $0x1468] sm:$0xff]
        %v973 = vld [vmem:[%s237 + $0x1470] sm:$0xff]
        %v974 = vld [vmem:[%s237 + $0x1478] sm:$0xff]
        %v975 = vld [vmem:[%s237 + $0x1480] sm:$0xff]
        %v976 = vld [vmem:[%s237 + $0x1488] sm:$0xff]
        %v977 = vld [vmem:[%s237 + $0x1490] sm:$0xff]
        %v978 = vld [vmem:[%s237 + $0x1498] sm:$0xff]
        %v979 = vld [vmem:[%s237 + $0x14a0] sm:$0xff]
        %v980 = vld [vmem:[%s237 + $0x14a8] sm:$0xff]
        %v981 = vld [vmem:[%s237 + $0x14b0] sm:$0xff]
        %v982 = vld [vmem:[%s237 + $0x14b8] sm:$0xff]
        %v983 = vld [vmem:[%s237 + $0x14c0] sm:$0xff]
        %v984 = vld [vmem:[%s237 + $0x14c8] sm:$0xff]
        %v985 = vld [vmem:[%s237 + $0x14d0] sm:$0xff]
        %v986 = vld [vmem:[%s237 + $0x14d8] sm:$0xff]
        %v987 = vld [vmem:[%s237 + $0x14e0] sm:$0xff]
        %v988 = vld [vmem:[%s237 + $0x14e8] sm:$0xff]
        %v989 = vld [vmem:[%s237 + $0x14f0] sm:$0xff]
        %v990 = vld [vmem:[%s237 + $0x14f8] sm:$0xff]
        %v991 = vld [vmem:[%s237 + $0x1500] sm:$0xff]
        %v992 = vld [vmem:[%s237 + $0x1508] sm:$0xff]
        %v993 = vld [vmem:[%s237 + $0x1510] sm:$0xff]
        %v994 = vld [vmem:[%s237 + $0x1518] sm:$0xff]
        %v995 = vld [vmem:[%s237 + $0x1520] sm:$0xff]
        %v996 = vld [vmem:[%s237 + $0x1528] sm:$0xff]
        %v997 = vld [vmem:[%s237 + $0x1530] sm:$0xff]
        %v998 = vld [vmem:[%s237 + $0x1538] sm:$0xff]
        %v999 = vld [vmem:[%s237 + $0x1540] sm:$0xff]
        %v1000 = vld [vmem:[%s237 + $0x1548] sm:$0xff]
        %v1001 = vld [vmem:[%s237 + $0x1550] sm:$0xff]
        %v1002 = vld [vmem:[%s237 + $0x1558] sm:$0xff]
        %v1003 = vld [vmem:[%s237 + $0x1560] sm:$0xff]
        %v1004 = vld [vmem:[%s237 + $0x1568] sm:$0xff]
        %v1005 = vld [vmem:[%s237 + $0x1570] sm:$0xff]
        %v1006 = vld [vmem:[%s237 + $0x1578] sm:$0xff]
        %v1007 = vld [vmem:[%s237 + $0x1580] sm:$0xff]
        %v1008 = vld [vmem:[%s237 + $0x1588] sm:$0xff]
        %v1009 = vld [vmem:[%s237 + $0x1590] sm:$0xff]
        %v1010 = vld [vmem:[%s237 + $0x1598] sm:$0xff]
        %v1011 = vld [vmem:[%s237 + $0x15a0] sm:$0xff]
        %v1012 = vld [vmem:[%s237 + $0x15a8] sm:$0xff]
        %v1013 = vld [vmem:[%s237 + $0x15b0] sm:$0xff]
        %v1014 = vld [vmem:[%s237 + $0x15b8] sm:$0xff]
        %v1015 = vld [vmem:[%s237 + $0x15c0] sm:$0xff]
        %v1016 = vld [vmem:[%s237 + $0x15c8] sm:$0xff]
        %v1017 = vld [vmem:[%s237 + $0x15d0] sm:$0xff]
        %v1018 = vld [vmem:[%s237 + $0x15d8] sm:$0xff]
        %v1019 = vld [vmem:[%s237 + $0x15e0] sm:$0xff]
        %v1020 = vld [vmem:[%s237 + $0x15e8] sm:$0xff]
        %v1021 = vld [vmem:[%s237 + $0x15f0] sm:$0xff]
        %v1022 = vld [vmem:[%s237 + $0x15f8] sm:$0xff]
        %v1023 = vld [vmem:[%s237 + $0x1600] sm:$0xff]
        %v1024 = vld [vmem:[%s237 + $0x1608] sm:$0xff]
        %v1025 = vld [vmem:[%s237 + $0x1610] sm:$0xff]
        %v1026 = vld [vmem:[%s237 + $0x1618] sm:$0xff]
        %v1027 = vld [vmem:[%s237 + $0x1620] sm:$0xff]
        %v1028 = vld [vmem:[%s237 + $0x1628] sm:$0xff]
        %v1029 = vld [vmem:[%s237 + $0x1630] sm:$0xff]
        %v1030 = vld [vmem:[%s237 + $0x1638] sm:$0xff]
        %v1031 = vld [vmem:[%s237 + $0x1640] sm:$0xff]
        %v1032 = vld [vmem:[%s237 + $0x1648] sm:$0xff]
        %v1033 = vld [vmem:[%s237 + $0x1650] sm:$0xff]
        %v1034 = vld [vmem:[%s237 + $0x1658] sm:$0xff]
        %v1035 = vld [vmem:[%s237 + $0x1660] sm:$0xff]
        %v1036 = vld [vmem:[%s237 + $0x1668] sm:$0xff]
        %v1037 = vld [vmem:[%s237 + $0x1670] sm:$0xff]
        %v1038 = vld [vmem:[%s237 + $0x1678] sm:$0xff]
        %v1039 = vld [vmem:[%s237 + $0x1680] sm:$0xff]
        %v1040 = vld [vmem:[%s237 + $0x1688] sm:$0xff]
        %v1041 = vld [vmem:[%s237 + $0x1690] sm:$0xff]
        %v1042 = vld [vmem:[%s237 + $0x1698] sm:$0xff]
        %v1043 = vld [vmem:[%s237 + $0x16a0] sm:$0xff]
        %v1044 = vld [vmem:[%s237 + $0x16a8] sm:$0xff]
        %v1045 = vld [vmem:[%s237 + $0x16b0] sm:$0xff]
        %v1046 = vld [vmem:[%s237 + $0x16b8] sm:$0xff]
        %v1047 = vld [vmem:[%s237 + $0x16c0] sm:$0xff]
        %v1048 = vld [vmem:[%s237 + $0x16c8] sm:$0xff]
        %v1049 = vld [vmem:[%s237 + $0x16d0] sm:$0xff]
        %v1050 = vld [vmem:[%s237 + $0x16d8] sm:$0xff]
        %v1051 = vld [vmem:[%s237 + $0x16e0] sm:$0xff]
        %v1052 = vld [vmem:[%s237 + $0x16e8] sm:$0xff]
        %v1053 = vld [vmem:[%s237 + $0x16f0] sm:$0xff]
        %v1054 = vld [vmem:[%s237 + $0x16f8] sm:$0xff]
        %v1055 = vld [vmem:[%s237 + $0x1700] sm:$0xff]
        %v1056 = vld [vmem:[%s237 + $0x1708] sm:$0xff]
        %v1057 = vld [vmem:[%s237 + $0x1710] sm:$0xff]
        %v1058 = vld [vmem:[%s237 + $0x1718] sm:$0xff]
        %v1059 = vld [vmem:[%s237 + $0x1720] sm:$0xff]
        %v1060 = vld [vmem:[%s237 + $0x1728] sm:$0xff]
        %v1061 = vld [vmem:[%s237 + $0x1730] sm:$0xff]
        %v1062 = vld [vmem:[%s237 + $0x1738] sm:$0xff]
        %v1063 = vld [vmem:[%s237 + $0x1740] sm:$0xff]
        %v1064 = vld [vmem:[%s237 + $0x1748] sm:$0xff]
        %v1065 = vld [vmem:[%s237 + $0x1750] sm:$0xff]
        %v1066 = vld [vmem:[%s237 + $0x1758] sm:$0xff]
        %v1067 = vld [vmem:[%s237 + $0x1760] sm:$0xff]
        %v1068 = vld [vmem:[%s237 + $0x1768] sm:$0xff]
        %v1069 = vld [vmem:[%s237 + $0x1770] sm:$0xff]
        %v1070 = vld [vmem:[%s237 + $0x1778] sm:$0xff]
        %v1071 = vld [vmem:[%s237 + $0x1780] sm:$0xff]
        %v1072 = vld [vmem:[%s237 + $0x1788] sm:$0xff]
        %v1073 = vld [vmem:[%s237 + $0x1790] sm:$0xff]
        %v1074 = vld [vmem:[%s237 + $0x1798] sm:$0xff]
        %v1075 = vld [vmem:[%s237 + $0x17a0] sm:$0xff]
        %v1076 = vld [vmem:[%s237 + $0x17a8] sm:$0xff]
        %v1077 = vld [vmem:[%s237 + $0x17b0] sm:$0xff]
        %v1078 = vld [vmem:[%s237 + $0x17b8] sm:$0xff]
        %v1079 = vld [vmem:[%s237 + $0x17c0] sm:$0xff]
        %v1080 = vld [vmem:[%s237 + $0x17c8] sm:$0xff]
        %v1081 = vld [vmem:[%s237 + $0x17d0] sm:$0xff]
        %v1082 = vld [vmem:[%s237 + $0x17d8] sm:$0xff]
        %v1083 = vld [vmem:[%s237 + $0x17e0] sm:$0xff]
        %v1084 = vld [vmem:[%s237 + $0x17e8] sm:$0xff]
        %v1085 = vld [vmem:[%s237 + $0x17f0] sm:$0xff]
        %v1086 = vld [vmem:[%s237 + $0x17f8] sm:$0xff]
        %v1087 = vld [vmem:[%s237 + $0x1800] sm:$0xff]
        %v1088 = vld [vmem:[%s237 + $0x1808] sm:$0xff]
        %v1089 = vld [vmem:[%s237 + $0x1810] sm:$0xff]
        %v1090 = vld [vmem:[%s237 + $0x1818] sm:$0xff]
        %v1091 = vld [vmem:[%s237 + $0x1820] sm:$0xff]
        %v1092 = vld [vmem:[%s237 + $0x1828] sm:$0xff]
        %v1093 = vld [vmem:[%s237 + $0x1830] sm:$0xff]
        %v1094 = vld [vmem:[%s237 + $0x1838] sm:$0xff]
        %v1095 = vld [vmem:[%s237 + $0x1840] sm:$0xff]
        %v1096 = vld [vmem:[%s237 + $0x1848] sm:$0xff]
        %v1097 = vld [vmem:[%s237 + $0x1850] sm:$0xff]
        %v1098 = vld [vmem:[%s237 + $0x1858] sm:$0xff]
        %v1099 = vld [vmem:[%s237 + $0x1860] sm:$0xff]
        %v1100 = vld [vmem:[%s237 + $0x1868] sm:$0xff]
        %v1101 = vld [vmem:[%s237 + $0x1870] sm:$0xff]
        %v1102 = vld [vmem:[%s237 + $0x1878] sm:$0xff]
        %v1103 = vld [vmem:[%s237 + $0x1880] sm:$0xff]
        %v1104 = vld [vmem:[%s237 + $0x1888] sm:$0xff]
        %v1105 = vld [vmem:[%s237 + $0x1890] sm:$0xff]
        %v1106 = vld [vmem:[%s237 + $0x1898] sm:$0xff]
        %v1107 = vld [vmem:[%s237 + $0x18a0] sm:$0xff]
        %v1108 = vld [vmem:[%s237 + $0x18a8] sm:$0xff]
        %v1109 = vld [vmem:[%s237 + $0x18b0] sm:$0xff]
        %v1110 = vld [vmem:[%s237 + $0x18b8] sm:$0xff]
        %v1111 = vld [vmem:[%s237 + $0x18c0] sm:$0xff]
        %v1112 = vld [vmem:[%s237 + $0x18c8] sm:$0xff]
        %v1113 = vld [vmem:[%s237 + $0x18d0] sm:$0xff]
        %v1114 = vld [vmem:[%s237 + $0x18d8] sm:$0xff]
        %v1115 = vld [vmem:[%s237 + $0x18e0] sm:$0xff]
        %v1116 = vld [vmem:[%s237 + $0x18e8] sm:$0xff]
        %v1117 = vld [vmem:[%s237 + $0x18f0] sm:$0xff]
        %v1118 = vld [vmem:[%s237 + $0x18f8] sm:$0xff]
        %v1119 = vld [vmem:[%s237 + $0x1900] sm:$0xff]
        %v1120 = vld [vmem:[%s237 + $0x1908] sm:$0xff]
        %v1121 = vld [vmem:[%s237 + $0x1910] sm:$0xff]
        %v1122 = vld [vmem:[%s237 + $0x1918] sm:$0xff]
        %v1123 = vld [vmem:[%s237 + $0x1920] sm:$0xff]
        %v1124 = vld [vmem:[%s237 + $0x1928] sm:$0xff]
        %v1125 = vld [vmem:[%s237 + $0x1930] sm:$0xff]
        %v1126 = vld [vmem:[%s237 + $0x1938] sm:$0xff]
        %v1127 = vld [vmem:[%s237 + $0x1940] sm:$0xff]
        %v1128 = vld [vmem:[%s237 + $0x1948] sm:$0xff]
        %v1129 = vld [vmem:[%s237 + $0x1950] sm:$0xff]
        %v1130 = vld [vmem:[%s237 + $0x1958] sm:$0xff]
        %v1131 = vld [vmem:[%s237 + $0x1960] sm:$0xff]
        %v1132 = vld [vmem:[%s237 + $0x1968] sm:$0xff]
        %v1133 = vld [vmem:[%s237 + $0x1970] sm:$0xff]
        %v1134 = vld [vmem:[%s237 + $0x1978] sm:$0xff]
        %v1135 = vld [vmem:[%s237 + $0x1980] sm:$0xff]
        %v1136 = vld [vmem:[%s237 + $0x1988] sm:$0xff]
        %v1137 = vld [vmem:[%s237 + $0x1990] sm:$0xff]
        %v1138 = vld [vmem:[%s237 + $0x1998] sm:$0xff]
        %v1139 = vld [vmem:[%s237 + $0x19a0] sm:$0xff]
        %v1140 = vld [vmem:[%s237 + $0x19a8] sm:$0xff]
        %v1141 = vld [vmem:[%s237 + $0x19b0] sm:$0xff]
        %v1142 = vld [vmem:[%s237 + $0x19b8] sm:$0xff]
        %v1143 = vld [vmem:[%s237 + $0x19c0] sm:$0xff]
        %v1144 = vld [vmem:[%s237 + $0x19c8] sm:$0xff]
        %v1145 = vld [vmem:[%s237 + $0x19d0] sm:$0xff]
        %v1146 = vld [vmem:[%s237 + $0x19d8] sm:$0xff]
        %v1147 = vld [vmem:[%s237 + $0x19e0] sm:$0xff]
        %v1148 = vld [vmem:[%s237 + $0x19e8] sm:$0xff]
        %v1149 = vld [vmem:[%s237 + $0x19f0] sm:$0xff]
        %v1150 = vld [vmem:[%s237 + $0x19f8] sm:$0xff]
        %v1151 = vld [vmem:[%s237 + $0x1a00] sm:$0xff]
        %v1152 = vld [vmem:[%s237 + $0x1a08] sm:$0xff]
        %v1153 = vld [vmem:[%s237 + $0x1a10] sm:$0xff]
        %v1154 = vld [vmem:[%s237 + $0x1a18] sm:$0xff]
        %v1155 = vld [vmem:[%s237 + $0x1a20] sm:$0xff]
        %v1156 = vld [vmem:[%s237 + $0x1a28] sm:$0xff]
        %v1157 = vld [vmem:[%s237 + $0x1a30] sm:$0xff]
        %v1158 = vld [vmem:[%s237 + $0x1a38] sm:$0xff]
        %v1159 = vld [vmem:[%s237 + $0x1a40] sm:$0xff]
        %v1160 = vld [vmem:[%s237 + $0x1a48] sm:$0xff]
        %v1161 = vld [vmem:[%s237 + $0x1a50] sm:$0xff]
        %v1162 = vld [vmem:[%s237 + $0x1a58] sm:$0xff]
        %v1163 = vld [vmem:[%s237 + $0x1a60] sm:$0xff]
        %v1164 = vld [vmem:[%s237 + $0x1a68] sm:$0xff]
        %v1165 = vld [vmem:[%s237 + $0x1a70] sm:$0xff]
        %v1166 = vld [vmem:[%s237 + $0x1a78] sm:$0xff]
        %v1167 = vld [vmem:[%s237 + $0x1a80] sm:$0xff]
        %v1168 = vld [vmem:[%s237 + $0x1a88] sm:$0xff]
        %v1169 = vld [vmem:[%s237 + $0x1a90] sm:$0xff]
        %v1170 = vld [vmem:[%s237 + $0x1a98] sm:$0xff]
        %v1171 = vld [vmem:[%s237 + $0x1aa0] sm:$0xff]
        %v1172 = vld [vmem:[%s237 + $0x1aa8] sm:$0xff]
        %v1173 = vld [vmem:[%s237 + $0x1ab0] sm:$0xff]
        %v1174 = vld [vmem:[%s237 + $0x1ab8] sm:$0xff]
        %v1175 = vld [vmem:[%s237 + $0x1ac0] sm:$0xff]
        %v1176 = vld [vmem:[%s237 + $0x1ac8] sm:$0xff]
        %v1177 = vld [vmem:[%s237 + $0x1ad0] sm:$0xff]
        %v1178 = vld [vmem:[%s237 + $0x1ad8] sm:$0xff]
        %v1179 = vld [vmem:[%s237 + $0x1ae0] sm:$0xff]
        %v1180 = vld [vmem:[%s237 + $0x1ae8] sm:$0xff]
        %v1181 = vld [vmem:[%s237 + $0x1af0] sm:$0xff]
        %v1182 = vld [vmem:[%s237 + $0x1af8] sm:$0xff]
        %v1183 = vld [vmem:[%s237 + $0x1b00] sm:$0xff]
        %v1184 = vld [vmem:[%s237 + $0x1b08] sm:$0xff]
        %v1185 = vld [vmem:[%s237 + $0x1b10] sm:$0xff]
        %v1186 = vld [vmem:[%s237 + $0x1b18] sm:$0xff]
        %v1187 = vld [vmem:[%s237 + $0x1b20] sm:$0xff]
        %v1188 = vld [vmem:[%s237 + $0x1b28] sm:$0xff]
        %v1189 = vld [vmem:[%s237 + $0x1b30] sm:$0xff]
        %v1190 = vld [vmem:[%s237 + $0x1b38] sm:$0xff]
        %v1191 = vld [vmem:[%s237 + $0x1b40] sm:$0xff]
        %v1192 = vld [vmem:[%s237 + $0x1b48] sm:$0xff]
        %v1193 = vld [vmem:[%s237 + $0x1b50] sm:$0xff]
        %v1194 = vld [vmem:[%s237 + $0x1b58] sm:$0xff]
        %v1195 = vld [vmem:[%s237 + $0x1b60] sm:$0xff]
        %v1196 = vld [vmem:[%s237 + $0x1b68] sm:$0xff]
        %v1197 = vld [vmem:[%s237 + $0x1b70] sm:$0xff]
        %v1198 = vld [vmem:[%s237 + $0x1b78] sm:$0xff]
        %v1199 = vld [vmem:[%s237 + $0x1b80] sm:$0xff]
        %v1200 = vld [vmem:[%s237 + $0x1b88] sm:$0xff]
        %v1201 = vld [vmem:[%s237 + $0x1b90] sm:$0xff]
        %v1202 = vld [vmem:[%s237 + $0x1b98] sm:$0xff]
        %v1203 = vld [vmem:[%s237 + $0x1ba0] sm:$0xff]
        %v1204 = vld [vmem:[%s237 + $0x1ba8] sm:$0xff]
        %v1205 = vld [vmem:[%s237 + $0x1bb0] sm:$0xff]
        %v1206 = vld [vmem:[%s237 + $0x1bb8] sm:$0xff]
        %v1207 = vld [vmem:[%s237 + $0x1bc0] sm:$0xff]
        %v1208 = vld [vmem:[%s237 + $0x1bc8] sm:$0xff]
        %v1209 = vld [vmem:[%s237 + $0x1bd0] sm:$0xff]
        %v1210 = vld [vmem:[%s237 + $0x1bd8] sm:$0xff]
        %v1211 = vld [vmem:[%s237 + $0x1be0] sm:$0xff]
        %v1212 = vld [vmem:[%s237 + $0x1be8] sm:$0xff]
        %v1213 = vld [vmem:[%s237 + $0x1bf0] sm:$0xff]
        %v1214 = vld [vmem:[%s237 + $0x1bf8] sm:$0xff]
        %v1215 = vld [vmem:[%s237 + $0x1c00] sm:$0xff]
        %v1216 = vld [vmem:[%s237 + $0x1c08] sm:$0xff]
        %v1217 = vld [vmem:[%s237 + $0x1c10] sm:$0xff]
        %v1218 = vld [vmem:[%s237 + $0x1c18] sm:$0xff]
        %v1219 = vld [vmem:[%s237 + $0x1c20] sm:$0xff]
        %v1220 = vld [vmem:[%s237 + $0x1c28] sm:$0xff]
        %v1221 = vld [vmem:[%s237 + $0x1c30] sm:$0xff]
        %v1222 = vld [vmem:[%s237 + $0x1c38] sm:$0xff]
        %v1223 = vld [vmem:[%s237 + $0x1c40] sm:$0xff]
        %v1224 = vld [vmem:[%s237 + $0x1c48] sm:$0xff]
        %v1225 = vld [vmem:[%s237 + $0x1c50] sm:$0xff]
        %v1226 = vld [vmem:[%s237 + $0x1c58] sm:$0xff]
        %v1227 = vld [vmem:[%s237 + $0x1c60] sm:$0xff]
        %v1228 = vld [vmem:[%s237 + $0x1c68] sm:$0xff]
        %v1229 = vld [vmem:[%s237 + $0x1c70] sm:$0xff]
        %v1230 = vld [vmem:[%s237 + $0x1c78] sm:$0xff]
        %v1231 = vld [vmem:[%s237 + $0x1c80] sm:$0xff]
        %v1232 = vld [vmem:[%s237 + $0x1c88] sm:$0xff]
        %v1233 = vld [vmem:[%s237 + $0x1c90] sm:$0xff]
        %v1234 = vld [vmem:[%s237 + $0x1c98] sm:$0xff]
        %v1235 = vld [vmem:[%s237 + $0x1ca0] sm:$0xff]
        %v1236 = vld [vmem:[%s237 + $0x1ca8] sm:$0xff]
        %v1237 = vld [vmem:[%s237 + $0x1cb0] sm:$0xff]
        %v1238 = vld [vmem:[%s237 + $0x1cb8] sm:$0xff]
        %v1239 = vld [vmem:[%s237 + $0x1cc0] sm:$0xff]
        %v1240 = vld [vmem:[%s237 + $0x1cc8] sm:$0xff]
        %v1241 = vld [vmem:[%s237 + $0x1cd0] sm:$0xff]
        %v1242 = vld [vmem:[%s237 + $0x1cd8] sm:$0xff]
        %v1243 = vld [vmem:[%s237 + $0x1ce0] sm:$0xff]
        %v1244 = vld [vmem:[%s237 + $0x1ce8] sm:$0xff]
        %v1245 = vld [vmem:[%s237 + $0x1cf0] sm:$0xff]
        %v1246 = vld [vmem:[%s237 + $0x1cf8] sm:$0xff]
        %v1247 = vld [vmem:[%s237 + $0x1d00] sm:$0xff]
        %v1248 = vld [vmem:[%s237 + $0x1d08] sm:$0xff]
        %v1249 = vld [vmem:[%s237 + $0x1d10] sm:$0xff]
        %v1250 = vld [vmem:[%s237 + $0x1d18] sm:$0xff]
        %v1251 = vld [vmem:[%s237 + $0x1d20] sm:$0xff]
        %v1252 = vld [vmem:[%s237 + $0x1d28] sm:$0xff]
        %v1253 = vld [vmem:[%s237 + $0x1d30] sm:$0xff]
        %v1254 = vld [vmem:[%s237 + $0x1d38] sm:$0xff]
        %v1255 = vld [vmem:[%s237 + $0x1d40] sm:$0xff]
        %v1256 = vld [vmem:[%s237 + $0x1d48] sm:$0xff]
        %v1257 = vld [vmem:[%s237 + $0x1d50] sm:$0xff]
        %v1258 = vld [vmem:[%s237 + $0x1d58] sm:$0xff]
        %v1259 = vld [vmem:[%s237 + $0x1d60] sm:$0xff]
        %v1260 = vld [vmem:[%s237 + $0x1d68] sm:$0xff]
        %v1261 = vld [vmem:[%s237 + $0x1d70] sm:$0xff]
        %v1262 = vld [vmem:[%s237 + $0x1d78] sm:$0xff]
        %v1263 = vld [vmem:[%s237 + $0x1d80] sm:$0xff]
        %v1264 = vld [vmem:[%s237 + $0x1d88] sm:$0xff]
        %v1265 = vld [vmem:[%s237 + $0x1d90] sm:$0xff]
        %v1266 = vld [vmem:[%s237 + $0x1d98] sm:$0xff]
        %v1267 = vld [vmem:[%s237 + $0x1da0] sm:$0xff]
        %v1268 = vld [vmem:[%s237 + $0x1da8] sm:$0xff]
        %v1269 = vld [vmem:[%s237 + $0x1db0] sm:$0xff]
        %v1270 = vld [vmem:[%s237 + $0x1db8] sm:$0xff]
        %v1271 = vld [vmem:[%s237 + $0x1dc0] sm:$0xff]
        %v1272 = vld [vmem:[%s237 + $0x1dc8] sm:$0xff]
        %v1273 = vld [vmem:[%s237 + $0x1dd0] sm:$0xff]
        %v1274 = vld [vmem:[%s237 + $0x1dd8] sm:$0xff]
        %v1275 = vld [vmem:[%s237 + $0x1de0] sm:$0xff]
        %v1276 = vld [vmem:[%s237 + $0x1de8] sm:$0xff]
        %v1277 = vld [vmem:[%s237 + $0x1df0] sm:$0xff]
        %v1278 = vld [vmem:[%s237 + $0x1df8] sm:$0xff]
        %v1279 = vld [vmem:[%s237 + $0x1e00] sm:$0xff]
        %v1280 = vld [vmem:[%s237 + $0x1e08] sm:$0xff]
        %v1281 = vld [vmem:[%s237 + $0x1e10] sm:$0xff]
        %v1282 = vld [vmem:[%s237 + $0x1e18] sm:$0xff]
        %v1283 = vld [vmem:[%s237 + $0x1e20] sm:$0xff]
        %v1284 = vld [vmem:[%s237 + $0x1e28] sm:$0xff]
        %v1285 = vld [vmem:[%s237 + $0x1e30] sm:$0xff]
        %v1286 = vld [vmem:[%s237 + $0x1e38] sm:$0xff]
        %v1287 = vld [vmem:[%s237 + $0x1e40] sm:$0xff]
        %v1288 = vld [vmem:[%s237 + $0x1e48] sm:$0xff]
        %v1289 = vld [vmem:[%s237 + $0x1e50] sm:$0xff]
        %v1290 = vld [vmem:[%s237 + $0x1e58] sm:$0xff]
        %v1291 = vld [vmem:[%s237 + $0x1e60] sm:$0xff]
        %v1292 = vld [vmem:[%s237 + $0x1e68] sm:$0xff]
        %v1293 = vld [vmem:[%s237 + $0x1e70] sm:$0xff]
        %v1294 = vld [vmem:[%s237 + $0x1e78] sm:$0xff]
        %v1295 = vld [vmem:[%s237 + $0x1e80] sm:$0xff]
        %v1296 = vld [vmem:[%s237 + $0x1e88] sm:$0xff]
        %v1297 = vld [vmem:[%s237 + $0x1e90] sm:$0xff]
        %v1298 = vld [vmem:[%s237 + $0x1e98] sm:$0xff]
        %v1299 = vld [vmem:[%s237 + $0x1ea0] sm:$0xff]
        %v1300 = vld [vmem:[%s237 + $0x1ea8] sm:$0xff]
        %v1301 = vld [vmem:[%s237 + $0x1eb0] sm:$0xff]
        %v1302 = vld [vmem:[%s237 + $0x1eb8] sm:$0xff]
        %v1303 = vld [vmem:[%s237 + $0x1ec0] sm:$0xff]
        %v1304 = vld [vmem:[%s237 + $0x1ec8] sm:$0xff]
        %v1305 = vld [vmem:[%s237 + $0x1ed0] sm:$0xff]
        %v1306 = vld [vmem:[%s237 + $0x1ed8] sm:$0xff]
        %v1307 = vld [vmem:[%s237 + $0x1ee0] sm:$0xff]
        %v1308 = vld [vmem:[%s237 + $0x1ee8] sm:$0xff]
        %v1309 = vld [vmem:[%s237 + $0x1ef0] sm:$0xff]
        %v1310 = vld [vmem:[%s237 + $0x1ef8] sm:$0xff]
        %v1311 = vld [vmem:[%s237 + $0x1f00] sm:$0xff]
        %v1312 = vld [vmem:[%s237 + $0x1f08] sm:$0xff]
        %v1313 = vld [vmem:[%s237 + $0x1f10] sm:$0xff]
        %v1314 = vld [vmem:[%s237 + $0x1f18] sm:$0xff]
        %v1315 = vld [vmem:[%s237 + $0x1f20] sm:$0xff]
        %v1316 = vld [vmem:[%s237 + $0x1f28] sm:$0xff]
        %v1317 = vld [vmem:[%s237 + $0x1f30] sm:$0xff]
        %v1318 = vld [vmem:[%s237 + $0x1f38] sm:$0xff]
        %v1319 = vld [vmem:[%s237 + $0x1f40] sm:$0xff]
        %v1320 = vld [vmem:[%s237 + $0x1f48] sm:$0xff]
        %v1321 = vld [vmem:[%s237 + $0x1f50] sm:$0xff]
        %v1322 = vld [vmem:[%s237 + $0x1f58] sm:$0xff]
        %v1323 = vld [vmem:[%s237 + $0x1f60] sm:$0xff]
        %v1324 = vld [vmem:[%s237 + $0x1f68] sm:$0xff]
        %v1325 = vld [vmem:[%s237 + $0x1f70] sm:$0xff]
        %v1326 = vld [vmem:[%s237 + $0x1f78] sm:$0xff]
        %v1327 = vld [vmem:[%s237 + $0x1f80] sm:$0xff]
        %v1328 = vld [vmem:[%s237 + $0x1f88] sm:$0xff]
        %v1329 = vld [vmem:[%s237 + $0x1f90] sm:$0xff]
        %v1330 = vld [vmem:[%s237 + $0x1f98] sm:$0xff]
        %v1331 = vld [vmem:[%s237 + $0x1fa0] sm:$0xff]
        %v1332 = vld [vmem:[%s237 + $0x1fa8] sm:$0xff]
        %v1333 = vld [vmem:[%s237 + $0x1fb0] sm:$0xff]
        %v1334 = vld [vmem:[%s237 + $0x1fb8] sm:$0xff]
        %v1335 = vld [vmem:[%s237 + $0x1fc0] sm:$0xff]
        %v1336 = vld [vmem:[%s237 + $0x1fc8] sm:$0xff]
        %v1337 = vld [vmem:[%s237 + $0x1fd0] sm:$0xff]
        %v1338 = vld [vmem:[%s237 + $0x1fd8] sm:$0xff]
        %v1339 = vld [vmem:[%s237 + $0x1fe0] sm:$0xff]
        %v1340 = vld [vmem:[%s237 + $0x1fe8] sm:$0xff]
        %v1341 = vld [vmem:[%s237 + $0x1ff0] sm:$0xff]
        %v1342 = vld [vmem:[%s237 + $0x1ff8] sm:$0xff]
        %v2367 = vunpack.c.l.b16 %v319
        %v2368 = vunpack.c.h.b16 %v319
        %v2369 = vunpack.c.l.b16 %v320
        %v2370 = vunpack.c.h.b16 %v320
        %v2371 = vunpack.c.l.b16 %v321
        %v2372 = vunpack.c.h.b16 %v321
        %v2373 = vunpack.c.l.b16 %v322
        %v2374 = vunpack.c.h.b16 %v322
        %v2375 = vunpack.c.l.b16 %v323
        %v2376 = vunpack.c.h.b16 %v323
        %v2377 = vunpack.c.l.b16 %v324
        %v2378 = vunpack.c.h.b16 %v324
        %v2379 = vunpack.c.l.b16 %v325
        %v2380 = vunpack.c.h.b16 %v325
        %v2381 = vunpack.c.l.b16 %v326
        %v2382 = vunpack.c.h.b16 %v326
        %v2383 = vunpack.c.l.b16 %v327
        %v2384 = vunpack.c.h.b16 %v327
        %v2385 = vunpack.c.l.b16 %v328
        %v2386 = vunpack.c.h.b16 %v328
        %v2387 = vunpack.c.l.b16 %v329
        %v2388 = vunpack.c.h.b16 %v329
        %v2389 = vunpack.c.l.b16 %v330
        %v2390 = vunpack.c.h.b16 %v330
        %v2391 = vunpack.c.l.b16 %v331
        %v2392 = vunpack.c.h.b16 %v331
        %v2393 = vunpack.c.l.b16 %v332
        %v2394 = vunpack.c.h.b16 %v332
        %v2395 = vunpack.c.l.b16 %v333
        %v2396 = vunpack.c.h.b16 %v333
        %v2397 = vunpack.c.l.b16 %v334
        %v2398 = vunpack.c.h.b16 %v334
        %v2399 = vunpack.c.l.b16 %v335
        %v2400 = vunpack.c.h.b16 %v335
        %v2401 = vunpack.c.l.b16 %v336
        %v2402 = vunpack.c.h.b16 %v336
        %v2403 = vunpack.c.l.b16 %v337
        %v2404 = vunpack.c.h.b16 %v337
        %v2405 = vunpack.c.l.b16 %v338
        %v2406 = vunpack.c.h.b16 %v338
        %v2407 = vunpack.c.l.b16 %v339
        %v2408 = vunpack.c.h.b16 %v339
        %v2409 = vunpack.c.l.b16 %v340
        %v2410 = vunpack.c.h.b16 %v340
        %v2411 = vunpack.c.l.b16 %v341
        %v2412 = vunpack.c.h.b16 %v341
        %v2413 = vunpack.c.l.b16 %v342
        %v2414 = vunpack.c.h.b16 %v342
        %v2415 = vunpack.c.l.b16 %v343
        %v2416 = vunpack.c.h.b16 %v343
        %v2417 = vunpack.c.l.b16 %v344
        %v2418 = vunpack.c.h.b16 %v344
        %v2419 = vunpack.c.l.b16 %v345
        %v2420 = vunpack.c.h.b16 %v345
        %v2421 = vunpack.c.l.b16 %v346
        %v2422 = vunpack.c.h.b16 %v346
        %v2423 = vunpack.c.l.b16 %v347
        %v2424 = vunpack.c.h.b16 %v347
        %v2425 = vunpack.c.l.b16 %v348
        %v2426 = vunpack.c.h.b16 %v348
        %v2427 = vunpack.c.l.b16 %v349
        %v2428 = vunpack.c.h.b16 %v349
        %v2429 = vunpack.c.l.b16 %v350
        %v2430 = vunpack.c.h.b16 %v350
        %v2431 = vunpack.c.l.b16 %v351
        %v2432 = vunpack.c.h.b16 %v351
        %v2433 = vunpack.c.l.b16 %v352
        %v2434 = vunpack.c.h.b16 %v352
        %v2435 = vunpack.c.l.b16 %v353
        %v2436 = vunpack.c.h.b16 %v353
        %v2437 = vunpack.c.l.b16 %v354
        %v2438 = vunpack.c.h.b16 %v354
        %v2439 = vunpack.c.l.b16 %v355
        %v2440 = vunpack.c.h.b16 %v355
        %v2441 = vunpack.c.l.b16 %v356
        %v2442 = vunpack.c.h.b16 %v356
        %v2443 = vunpack.c.l.b16 %v357
        %v2444 = vunpack.c.h.b16 %v357
        %v2445 = vunpack.c.l.b16 %v358
        %v2446 = vunpack.c.h.b16 %v358
        %v2447 = vunpack.c.l.b16 %v359
        %v2448 = vunpack.c.h.b16 %v359
        %v2449 = vunpack.c.l.b16 %v360
        %v2450 = vunpack.c.h.b16 %v360
        %v2451 = vunpack.c.l.b16 %v361
        %v2452 = vunpack.c.h.b16 %v361
        %v2453 = vunpack.c.l.b16 %v362
        %v2454 = vunpack.c.h.b16 %v362
        %v2455 = vunpack.c.l.b16 %v363
        %v2456 = vunpack.c.h.b16 %v363
        %v2457 = vunpack.c.l.b16 %v364
        %v2458 = vunpack.c.h.b16 %v364
        %v2459 = vunpack.c.l.b16 %v365
        %v2460 = vunpack.c.h.b16 %v365
        %v2461 = vunpack.c.l.b16 %v366
        %v2462 = vunpack.c.h.b16 %v366
        %v2463 = vunpack.c.l.b16 %v367
        %v2464 = vunpack.c.h.b16 %v367
        %v2465 = vunpack.c.l.b16 %v368
        %v2466 = vunpack.c.h.b16 %v368
        %v2467 = vunpack.c.l.b16 %v369
        %v2468 = vunpack.c.h.b16 %v369
        %v2469 = vunpack.c.l.b16 %v370
        %v2470 = vunpack.c.h.b16 %v370
        %v2471 = vunpack.c.l.b16 %v371
        %v2472 = vunpack.c.h.b16 %v371
        %v2473 = vunpack.c.l.b16 %v372
        %v2474 = vunpack.c.h.b16 %v372
        %v2475 = vunpack.c.l.b16 %v373
        %v2476 = vunpack.c.h.b16 %v373
        %v2477 = vunpack.c.l.b16 %v374
        %v2478 = vunpack.c.h.b16 %v374
        %v2479 = vunpack.c.l.b16 %v375
        %v2480 = vunpack.c.h.b16 %v375
        %v2481 = vunpack.c.l.b16 %v376
        %v2482 = vunpack.c.h.b16 %v376
        %v2483 = vunpack.c.l.b16 %v377
        %v2484 = vunpack.c.h.b16 %v377
        %v2485 = vunpack.c.l.b16 %v378
        %v2486 = vunpack.c.h.b16 %v378
        %v2487 = vunpack.c.l.b16 %v379
        %v2488 = vunpack.c.h.b16 %v379
        %v2489 = vunpack.c.l.b16 %v380
        %v2490 = vunpack.c.h.b16 %v380
        %v2491 = vunpack.c.l.b16 %v381
        %v2492 = vunpack.c.h.b16 %v381
        %v2493 = vunpack.c.l.b16 %v382
        %v2494 = vunpack.c.h.b16 %v382
        %v2495 = vunpack.c.l.b16 %v383
        %v2496 = vunpack.c.h.b16 %v383
        %v2497 = vunpack.c.l.b16 %v384
        %v2498 = vunpack.c.h.b16 %v384
        %v2499 = vunpack.c.l.b16 %v385
        %v2500 = vunpack.c.h.b16 %v385
        %v2501 = vunpack.c.l.b16 %v386
        %v2502 = vunpack.c.h.b16 %v386
        %v2503 = vunpack.c.l.b16 %v387
        %v2504 = vunpack.c.h.b16 %v387
        %v2505 = vunpack.c.l.b16 %v388
        %v2506 = vunpack.c.h.b16 %v388
        %v2507 = vunpack.c.l.b16 %v389
        %v2508 = vunpack.c.h.b16 %v389
        %v2509 = vunpack.c.l.b16 %v390
        %v2510 = vunpack.c.h.b16 %v390
        %v2511 = vunpack.c.l.b16 %v391
        %v2512 = vunpack.c.h.b16 %v391
        %v2513 = vunpack.c.l.b16 %v392
        %v2514 = vunpack.c.h.b16 %v392
        %v2515 = vunpack.c.l.b16 %v393
        %v2516 = vunpack.c.h.b16 %v393
        %v2517 = vunpack.c.l.b16 %v394
        %v2518 = vunpack.c.h.b16 %v394
        %v2519 = vunpack.c.l.b16 %v395
        %v2520 = vunpack.c.h.b16 %v395
        %v2521 = vunpack.c.l.b16 %v396
        %v2522 = vunpack.c.h.b16 %v396
        %v2523 = vunpack.c.l.b16 %v397
        %v2524 = vunpack.c.h.b16 %v397
        %v2525 = vunpack.c.l.b16 %v398
        %v2526 = vunpack.c.h.b16 %v398
        %v2527 = vunpack.c.l.b16 %v399
        %v2528 = vunpack.c.h.b16 %v399
        %v2529 = vunpack.c.l.b16 %v400
        %v2530 = vunpack.c.h.b16 %v400
        %v2531 = vunpack.c.l.b16 %v401
        %v2532 = vunpack.c.h.b16 %v401
        %v2533 = vunpack.c.l.b16 %v402
        %v2534 = vunpack.c.h.b16 %v402
        %v2535 = vunpack.c.l.b16 %v403
        %v2536 = vunpack.c.h.b16 %v403
        %v2537 = vunpack.c.l.b16 %v404
        %v2538 = vunpack.c.h.b16 %v404
        %v2539 = vunpack.c.l.b16 %v405
        %v2540 = vunpack.c.h.b16 %v405
        %v2541 = vunpack.c.l.b16 %v406
        %v2542 = vunpack.c.h.b16 %v406
        %v2543 = vunpack.c.l.b16 %v407
        %v2544 = vunpack.c.h.b16 %v407
        %v2545 = vunpack.c.l.b16 %v408
        %v2546 = vunpack.c.h.b16 %v408
        %v2547 = vunpack.c.l.b16 %v409
        %v2548 = vunpack.c.h.b16 %v409
        %v2549 = vunpack.c.l.b16 %v410
        %v2550 = vunpack.c.h.b16 %v410
        %v2551 = vunpack.c.l.b16 %v411
        %v2552 = vunpack.c.h.b16 %v411
        %v2553 = vunpack.c.l.b16 %v412
        %v2554 = vunpack.c.h.b16 %v412
        %v2555 = vunpack.c.l.b16 %v413
        %v2556 = vunpack.c.h.b16 %v413
        %v2557 = vunpack.c.l.b16 %v414
        %v2558 = vunpack.c.h.b16 %v414
        %v2559 = vunpack.c.l.b16 %v415
        %v2560 = vunpack.c.h.b16 %v415
        %v2561 = vunpack.c.l.b16 %v416
        %v2562 = vunpack.c.h.b16 %v416
        %v2563 = vunpack.c.l.b16 %v417
        %v2564 = vunpack.c.h.b16 %v417
        %v2565 = vunpack.c.l.b16 %v418
        %v2566 = vunpack.c.h.b16 %v418
        %v2567 = vunpack.c.l.b16 %v419
        %v2568 = vunpack.c.h.b16 %v419
        %v2569 = vunpack.c.l.b16 %v420
        %v2570 = vunpack.c.h.b16 %v420
        %v2571 = vunpack.c.l.b16 %v421
        %v2572 = vunpack.c.h.b16 %v421
        %v2573 = vunpack.c.l.b16 %v422
        %v2574 = vunpack.c.h.b16 %v422
        %v2575 = vunpack.c.l.b16 %v423
        %v2576 = vunpack.c.h.b16 %v423
        %v2577 = vunpack.c.l.b16 %v424
        %v2578 = vunpack.c.h.b16 %v424
        %v2579 = vunpack.c.l.b16 %v425
        %v2580 = vunpack.c.h.b16 %v425
        %v2581 = vunpack.c.l.b16 %v426
        %v2582 = vunpack.c.h.b16 %v426
        %v2583 = vunpack.c.l.b16 %v427
        %v2584 = vunpack.c.h.b16 %v427
        %v2585 = vunpack.c.l.b16 %v428
        %v2586 = vunpack.c.h.b16 %v428
        %v2587 = vunpack.c.l.b16 %v429
        %v2588 = vunpack.c.h.b16 %v429
        %v2589 = vunpack.c.l.b16 %v430
        %v2590 = vunpack.c.h.b16 %v430
        %v2591 = vunpack.c.l.b16 %v431
        %v2592 = vunpack.c.h.b16 %v431
        %v2593 = vunpack.c.l.b16 %v432
        %v2594 = vunpack.c.h.b16 %v432
        %v2595 = vunpack.c.l.b16 %v433
        %v2596 = vunpack.c.h.b16 %v433
        %v2597 = vunpack.c.l.b16 %v434
        %v2598 = vunpack.c.h.b16 %v434
        %v2599 = vunpack.c.l.b16 %v435
        %v2600 = vunpack.c.h.b16 %v435
        %v2601 = vunpack.c.l.b16 %v436
        %v2602 = vunpack.c.h.b16 %v436
        %v2603 = vunpack.c.l.b16 %v437
        %v2604 = vunpack.c.h.b16 %v437
        %v2605 = vunpack.c.l.b16 %v438
        %v2606 = vunpack.c.h.b16 %v438
        %v2607 = vunpack.c.l.b16 %v439
        %v2608 = vunpack.c.h.b16 %v439
        %v2609 = vunpack.c.l.b16 %v440
        %v2610 = vunpack.c.h.b16 %v440
        %v2611 = vunpack.c.l.b16 %v441
        %v2612 = vunpack.c.h.b16 %v441
        %v2613 = vunpack.c.l.b16 %v442
        %v2614 = vunpack.c.h.b16 %v442
        %v2615 = vunpack.c.l.b16 %v443
        %v2616 = vunpack.c.h.b16 %v443
        %v2617 = vunpack.c.l.b16 %v444
        %v2618 = vunpack.c.h.b16 %v444
        %v2619 = vunpack.c.l.b16 %v445
        %v2620 = vunpack.c.h.b16 %v445
        %v2621 = vunpack.c.l.b16 %v446
        %v2622 = vunpack.c.h.b16 %v446
        %v2623 = vunpack.c.l.b16 %v447
        %v2624 = vunpack.c.h.b16 %v447
        %v2625 = vunpack.c.l.b16 %v448
        %v2626 = vunpack.c.h.b16 %v448
        %v2627 = vunpack.c.l.b16 %v449
        %v2628 = vunpack.c.h.b16 %v449
        %v2629 = vunpack.c.l.b16 %v450
        %v2630 = vunpack.c.h.b16 %v450
        %v2631 = vunpack.c.l.b16 %v451
        %v2632 = vunpack.c.h.b16 %v451
        %v2633 = vunpack.c.l.b16 %v452
        %v2634 = vunpack.c.h.b16 %v452
        %v2635 = vunpack.c.l.b16 %v453
        %v2636 = vunpack.c.h.b16 %v453
        %v2637 = vunpack.c.l.b16 %v454
        %v2638 = vunpack.c.h.b16 %v454
        %v2639 = vunpack.c.l.b16 %v455
        %v2640 = vunpack.c.h.b16 %v455
        %v2641 = vunpack.c.l.b16 %v456
        %v2642 = vunpack.c.h.b16 %v456
        %v2643 = vunpack.c.l.b16 %v457
        %v2644 = vunpack.c.h.b16 %v457
        %v2645 = vunpack.c.l.b16 %v458
        %v2646 = vunpack.c.h.b16 %v458
        %v2647 = vunpack.c.l.b16 %v459
        %v2648 = vunpack.c.h.b16 %v459
        %v2649 = vunpack.c.l.b16 %v460
        %v2650 = vunpack.c.h.b16 %v460
        %v2651 = vunpack.c.l.b16 %v461
        %v2652 = vunpack.c.h.b16 %v461
        %v2653 = vunpack.c.l.b16 %v462
        %v2654 = vunpack.c.h.b16 %v462
        %v2655 = vunpack.c.l.b16 %v463
        %v2656 = vunpack.c.h.b16 %v463
        %v2657 = vunpack.c.l.b16 %v464
        %v2658 = vunpack.c.h.b16 %v464
        %v2659 = vunpack.c.l.b16 %v465
        %v2660 = vunpack.c.h.b16 %v465
        %v2661 = vunpack.c.l.b16 %v466
        %v2662 = vunpack.c.h.b16 %v466
        %v2663 = vunpack.c.l.b16 %v467
        %v2664 = vunpack.c.h.b16 %v467
        %v2665 = vunpack.c.l.b16 %v468
        %v2666 = vunpack.c.h.b16 %v468
        %v2667 = vunpack.c.l.b16 %v469
        %v2668 = vunpack.c.h.b16 %v469
        %v2669 = vunpack.c.l.b16 %v470
        %v2670 = vunpack.c.h.b16 %v470
        %v2671 = vunpack.c.l.b16 %v471
        %v2672 = vunpack.c.h.b16 %v471
        %v2673 = vunpack.c.l.b16 %v472
        %v2674 = vunpack.c.h.b16 %v472
        %v2675 = vunpack.c.l.b16 %v473
        %v2676 = vunpack.c.h.b16 %v473
        %v2677 = vunpack.c.l.b16 %v474
        %v2678 = vunpack.c.h.b16 %v474
        %v2679 = vunpack.c.l.b16 %v475
        %v2680 = vunpack.c.h.b16 %v475
        %v2681 = vunpack.c.l.b16 %v476
        %v2682 = vunpack.c.h.b16 %v476
        %v2683 = vunpack.c.l.b16 %v477
        %v2684 = vunpack.c.h.b16 %v477
        %v2685 = vunpack.c.l.b16 %v478
        %v2686 = vunpack.c.h.b16 %v478
        %v2687 = vunpack.c.l.b16 %v479
        %v2688 = vunpack.c.h.b16 %v479
        %v2689 = vunpack.c.l.b16 %v480
        %v2690 = vunpack.c.h.b16 %v480
        %v2691 = vunpack.c.l.b16 %v481
        %v2692 = vunpack.c.h.b16 %v481
        %v2693 = vunpack.c.l.b16 %v482
        %v2694 = vunpack.c.h.b16 %v482
        %v2695 = vunpack.c.l.b16 %v483
        %v2696 = vunpack.c.h.b16 %v483
        %v2697 = vunpack.c.l.b16 %v484
        %v2698 = vunpack.c.h.b16 %v484
        %v2699 = vunpack.c.l.b16 %v485
        %v2700 = vunpack.c.h.b16 %v485
        %v2701 = vunpack.c.l.b16 %v486
        %v2702 = vunpack.c.h.b16 %v486
        %v2703 = vunpack.c.l.b16 %v487
        %v2704 = vunpack.c.h.b16 %v487
        %v2705 = vunpack.c.l.b16 %v488
        %v2706 = vunpack.c.h.b16 %v488
        %v2707 = vunpack.c.l.b16 %v489
        %v2708 = vunpack.c.h.b16 %v489
        %v2709 = vunpack.c.l.b16 %v490
        %v2710 = vunpack.c.h.b16 %v490
        %v2711 = vunpack.c.l.b16 %v491
        %v2712 = vunpack.c.h.b16 %v491
        %v2713 = vunpack.c.l.b16 %v492
        %v2714 = vunpack.c.h.b16 %v492
        %v2715 = vunpack.c.l.b16 %v493
        %v2716 = vunpack.c.h.b16 %v493
        %v2717 = vunpack.c.l.b16 %v494
        %v2718 = vunpack.c.h.b16 %v494
        %v2719 = vunpack.c.l.b16 %v495
        %v2720 = vunpack.c.h.b16 %v495
        %v2721 = vunpack.c.l.b16 %v496
        %v2722 = vunpack.c.h.b16 %v496
        %v2723 = vunpack.c.l.b16 %v497
        %v2724 = vunpack.c.h.b16 %v497
        %v2725 = vunpack.c.l.b16 %v498
        %v2726 = vunpack.c.h.b16 %v498
        %v2727 = vunpack.c.l.b16 %v499
        %v2728 = vunpack.c.h.b16 %v499
        %v2729 = vunpack.c.l.b16 %v500
        %v2730 = vunpack.c.h.b16 %v500
        %v2731 = vunpack.c.l.b16 %v501
        %v2732 = vunpack.c.h.b16 %v501
        %v2733 = vunpack.c.l.b16 %v502
        %v2734 = vunpack.c.h.b16 %v502
        %v2735 = vunpack.c.l.b16 %v503
        %v2736 = vunpack.c.h.b16 %v503
        %v2737 = vunpack.c.l.b16 %v504
        %v2738 = vunpack.c.h.b16 %v504
        %v2739 = vunpack.c.l.b16 %v505
        %v2740 = vunpack.c.h.b16 %v505
        %v2741 = vunpack.c.l.b16 %v506
        %v2742 = vunpack.c.h.b16 %v506
        %v2743 = vunpack.c.l.b16 %v507
        %v2744 = vunpack.c.h.b16 %v507
        %v2745 = vunpack.c.l.b16 %v508
        %v2746 = vunpack.c.h.b16 %v508
        %v2747 = vunpack.c.l.b16 %v509
        %v2748 = vunpack.c.h.b16 %v509
        %v2749 = vunpack.c.l.b16 %v510
        %v2750 = vunpack.c.h.b16 %v510
        %v2751 = vunpack.c.l.b16 %v511
        %v2752 = vunpack.c.h.b16 %v511
        %v2753 = vunpack.c.l.b16 %v512
        %v2754 = vunpack.c.h.b16 %v512
        %v2755 = vunpack.c.l.b16 %v513
        %v2756 = vunpack.c.h.b16 %v513
        %v2757 = vunpack.c.l.b16 %v514
        %v2758 = vunpack.c.h.b16 %v514
        %v2759 = vunpack.c.l.b16 %v515
        %v2760 = vunpack.c.h.b16 %v515
        %v2761 = vunpack.c.l.b16 %v516
        %v2762 = vunpack.c.h.b16 %v516
        %v2763 = vunpack.c.l.b16 %v517
        %v2764 = vunpack.c.h.b16 %v517
        %v2765 = vunpack.c.l.b16 %v518
        %v2766 = vunpack.c.h.b16 %v518
        %v2767 = vunpack.c.l.b16 %v519
        %v2768 = vunpack.c.h.b16 %v519
        %v2769 = vunpack.c.l.b16 %v520
        %v2770 = vunpack.c.h.b16 %v520
        %v2771 = vunpack.c.l.b16 %v521
        %v2772 = vunpack.c.h.b16 %v521
        %v2773 = vunpack.c.l.b16 %v522
        %v2774 = vunpack.c.h.b16 %v522
        %v2775 = vunpack.c.l.b16 %v523
        %v2776 = vunpack.c.h.b16 %v523
        %v2777 = vunpack.c.l.b16 %v524
        %v2778 = vunpack.c.h.b16 %v524
        %v2779 = vunpack.c.l.b16 %v525
        %v2780 = vunpack.c.h.b16 %v525
        %v2781 = vunpack.c.l.b16 %v526
        %v2782 = vunpack.c.h.b16 %v526
        %v2783 = vunpack.c.l.b16 %v527
        %v2784 = vunpack.c.h.b16 %v527
        %v2785 = vunpack.c.l.b16 %v528
        %v2786 = vunpack.c.h.b16 %v528
        %v2787 = vunpack.c.l.b16 %v529
        %v2788 = vunpack.c.h.b16 %v529
        %v2789 = vunpack.c.l.b16 %v530
        %v2790 = vunpack.c.h.b16 %v530
        %v2791 = vunpack.c.l.b16 %v531
        %v2792 = vunpack.c.h.b16 %v531
        %v2793 = vunpack.c.l.b16 %v532
        %v2794 = vunpack.c.h.b16 %v532
        %v2795 = vunpack.c.l.b16 %v533
        %v2796 = vunpack.c.h.b16 %v533
        %v2797 = vunpack.c.l.b16 %v534
        %v2798 = vunpack.c.h.b16 %v534
        %v2799 = vunpack.c.l.b16 %v535
        %v2800 = vunpack.c.h.b16 %v535
        %v2801 = vunpack.c.l.b16 %v536
        %v2802 = vunpack.c.h.b16 %v536
        %v2803 = vunpack.c.l.b16 %v537
        %v2804 = vunpack.c.h.b16 %v537
        %v2805 = vunpack.c.l.b16 %v538
        %v2806 = vunpack.c.h.b16 %v538
        %v2807 = vunpack.c.l.b16 %v539
        %v2808 = vunpack.c.h.b16 %v539
        %v2809 = vunpack.c.l.b16 %v540
        %v2810 = vunpack.c.h.b16 %v540
        %v2811 = vunpack.c.l.b16 %v541
        %v2812 = vunpack.c.h.b16 %v541
        %v2813 = vunpack.c.l.b16 %v542
        %v2814 = vunpack.c.h.b16 %v542
        %v2815 = vunpack.c.l.b16 %v543
        %v2816 = vunpack.c.h.b16 %v543
        %v2817 = vunpack.c.l.b16 %v544
        %v2818 = vunpack.c.h.b16 %v544
        %v2819 = vunpack.c.l.b16 %v545
        %v2820 = vunpack.c.h.b16 %v545
        %v2821 = vunpack.c.l.b16 %v546
        %v2822 = vunpack.c.h.b16 %v546
        %v2823 = vunpack.c.l.b16 %v547
        %v2824 = vunpack.c.h.b16 %v547
        %v2825 = vunpack.c.l.b16 %v548
        %v2826 = vunpack.c.h.b16 %v548
        %v2827 = vunpack.c.l.b16 %v549
        %v2828 = vunpack.c.h.b16 %v549
        %v2829 = vunpack.c.l.b16 %v550
        %v2830 = vunpack.c.h.b16 %v550
        %v2831 = vunpack.c.l.b16 %v551
        %v2832 = vunpack.c.h.b16 %v551
        %v2833 = vunpack.c.l.b16 %v552
        %v2834 = vunpack.c.h.b16 %v552
        %v2835 = vunpack.c.l.b16 %v553
        %v2836 = vunpack.c.h.b16 %v553
        %v2837 = vunpack.c.l.b16 %v554
        %v2838 = vunpack.c.h.b16 %v554
        %v2839 = vunpack.c.l.b16 %v555
        %v2840 = vunpack.c.h.b16 %v555
        %v2841 = vunpack.c.l.b16 %v556
        %v2842 = vunpack.c.h.b16 %v556
        %v2843 = vunpack.c.l.b16 %v557
        %v2844 = vunpack.c.h.b16 %v557
        %v2845 = vunpack.c.l.b16 %v558
        %v2846 = vunpack.c.h.b16 %v558
        %v2847 = vunpack.c.l.b16 %v559
        %v2848 = vunpack.c.h.b16 %v559
        %v2849 = vunpack.c.l.b16 %v560
        %v2850 = vunpack.c.h.b16 %v560
        %v2851 = vunpack.c.l.b16 %v561
        %v2852 = vunpack.c.h.b16 %v561
        %v2853 = vunpack.c.l.b16 %v562
        %v2854 = vunpack.c.h.b16 %v562
        %v2855 = vunpack.c.l.b16 %v563
        %v2856 = vunpack.c.h.b16 %v563
        %v2857 = vunpack.c.l.b16 %v564
        %v2858 = vunpack.c.h.b16 %v564
        %v2859 = vunpack.c.l.b16 %v565
        %v2860 = vunpack.c.h.b16 %v565
        %v2861 = vunpack.c.l.b16 %v566
        %v2862 = vunpack.c.h.b16 %v566
        %v2863 = vunpack.c.l.b16 %v567
        %v2864 = vunpack.c.h.b16 %v567
        %v2865 = vunpack.c.l.b16 %v568
        %v2866 = vunpack.c.h.b16 %v568
        %v2867 = vunpack.c.l.b16 %v569
        %v2868 = vunpack.c.h.b16 %v569
        %v2869 = vunpack.c.l.b16 %v570
        %v2870 = vunpack.c.h.b16 %v570
        %v2871 = vunpack.c.l.b16 %v571
        %v2872 = vunpack.c.h.b16 %v571
        %v2873 = vunpack.c.l.b16 %v572
        %v2874 = vunpack.c.h.b16 %v572
        %v2875 = vunpack.c.l.b16 %v573
        %v2876 = vunpack.c.h.b16 %v573
        %v2877 = vunpack.c.l.b16 %v574
        %v2878 = vunpack.c.h.b16 %v574
        %v2879 = vunpack.c.l.b16 %v575
        %v2880 = vunpack.c.h.b16 %v575
        %v2881 = vunpack.c.l.b16 %v576
        %v2882 = vunpack.c.h.b16 %v576
        %v2883 = vunpack.c.l.b16 %v577
        %v2884 = vunpack.c.h.b16 %v577
        %v2885 = vunpack.c.l.b16 %v578
        %v2886 = vunpack.c.h.b16 %v578
        %v2887 = vunpack.c.l.b16 %v579
        %v2888 = vunpack.c.h.b16 %v579
        %v2889 = vunpack.c.l.b16 %v580
        %v2890 = vunpack.c.h.b16 %v580
        %v2891 = vunpack.c.l.b16 %v581
        %v2892 = vunpack.c.h.b16 %v581
        %v2893 = vunpack.c.l.b16 %v582
        %v2894 = vunpack.c.h.b16 %v582
        %v2895 = vunpack.c.l.b16 %v583
        %v2896 = vunpack.c.h.b16 %v583
        %v2897 = vunpack.c.l.b16 %v584
        %v2898 = vunpack.c.h.b16 %v584
        %v2899 = vunpack.c.l.b16 %v585
        %v2900 = vunpack.c.h.b16 %v585
        %v2901 = vunpack.c.l.b16 %v586
        %v2902 = vunpack.c.h.b16 %v586
        %v2903 = vunpack.c.l.b16 %v587
        %v2904 = vunpack.c.h.b16 %v587
        %v2905 = vunpack.c.l.b16 %v588
        %v2906 = vunpack.c.h.b16 %v588
        %v2907 = vunpack.c.l.b16 %v589
        %v2908 = vunpack.c.h.b16 %v589
        %v2909 = vunpack.c.l.b16 %v590
        %v2910 = vunpack.c.h.b16 %v590
        %v2911 = vunpack.c.l.b16 %v591
        %v2912 = vunpack.c.h.b16 %v591
        %v2913 = vunpack.c.l.b16 %v592
        %v2914 = vunpack.c.h.b16 %v592
        %v2915 = vunpack.c.l.b16 %v593
        %v2916 = vunpack.c.h.b16 %v593
        %v2917 = vunpack.c.l.b16 %v594
        %v2918 = vunpack.c.h.b16 %v594
        %v2919 = vunpack.c.l.b16 %v595
        %v2920 = vunpack.c.h.b16 %v595
        %v2921 = vunpack.c.l.b16 %v596
        %v2922 = vunpack.c.h.b16 %v596
        %v2923 = vunpack.c.l.b16 %v597
        %v2924 = vunpack.c.h.b16 %v597
        %v2925 = vunpack.c.l.b16 %v598
        %v2926 = vunpack.c.h.b16 %v598
        %v2927 = vunpack.c.l.b16 %v599
        %v2928 = vunpack.c.h.b16 %v599
        %v2929 = vunpack.c.l.b16 %v600
        %v2930 = vunpack.c.h.b16 %v600
        %v2931 = vunpack.c.l.b16 %v601
        %v2932 = vunpack.c.h.b16 %v601
        %v2933 = vunpack.c.l.b16 %v602
        %v2934 = vunpack.c.h.b16 %v602
        %v2935 = vunpack.c.l.b16 %v603
        %v2936 = vunpack.c.h.b16 %v603
        %v2937 = vunpack.c.l.b16 %v604
        %v2938 = vunpack.c.h.b16 %v604
        %v2939 = vunpack.c.l.b16 %v605
        %v2940 = vunpack.c.h.b16 %v605
        %v2941 = vunpack.c.l.b16 %v606
        %v2942 = vunpack.c.h.b16 %v606
        %v2943 = vunpack.c.l.b16 %v607
        %v2944 = vunpack.c.h.b16 %v607
        %v2945 = vunpack.c.l.b16 %v608
        %v2946 = vunpack.c.h.b16 %v608
        %v2947 = vunpack.c.l.b16 %v609
        %v2948 = vunpack.c.h.b16 %v609
        %v2949 = vunpack.c.l.b16 %v610
        %v2950 = vunpack.c.h.b16 %v610
        %v2951 = vunpack.c.l.b16 %v611
        %v2952 = vunpack.c.h.b16 %v611
        %v2953 = vunpack.c.l.b16 %v612
        %v2954 = vunpack.c.h.b16 %v612
        %v2955 = vunpack.c.l.b16 %v613
        %v2956 = vunpack.c.h.b16 %v613
        %v2957 = vunpack.c.l.b16 %v614
        %v2958 = vunpack.c.h.b16 %v614
        %v2959 = vunpack.c.l.b16 %v615
        %v2960 = vunpack.c.h.b16 %v615
        %v2961 = vunpack.c.l.b16 %v616
        %v2962 = vunpack.c.h.b16 %v616
        %v2963 = vunpack.c.l.b16 %v617
        %v2964 = vunpack.c.h.b16 %v617
        %v2965 = vunpack.c.l.b16 %v618
        %v2966 = vunpack.c.h.b16 %v618
        %v2967 = vunpack.c.l.b16 %v619
        %v2968 = vunpack.c.h.b16 %v619
        %v2969 = vunpack.c.l.b16 %v620
        %v2970 = vunpack.c.h.b16 %v620
        %v2971 = vunpack.c.l.b16 %v621
        %v2972 = vunpack.c.h.b16 %v621
        %v2973 = vunpack.c.l.b16 %v622
        %v2974 = vunpack.c.h.b16 %v622
        %v2975 = vunpack.c.l.b16 %v623
        %v2976 = vunpack.c.h.b16 %v623
        %v2977 = vunpack.c.l.b16 %v624
        %v2978 = vunpack.c.h.b16 %v624
        %v2979 = vunpack.c.l.b16 %v625
        %v2980 = vunpack.c.h.b16 %v625
        %v2981 = vunpack.c.l.b16 %v626
        %v2982 = vunpack.c.h.b16 %v626
        %v2983 = vunpack.c.l.b16 %v627
        %v2984 = vunpack.c.h.b16 %v627
        %v2985 = vunpack.c.l.b16 %v628
        %v2986 = vunpack.c.h.b16 %v628
        %v2987 = vunpack.c.l.b16 %v629
        %v2988 = vunpack.c.h.b16 %v629
        %v2989 = vunpack.c.l.b16 %v630
        %v2990 = vunpack.c.h.b16 %v630
        %v2991 = vunpack.c.l.b16 %v631
        %v2992 = vunpack.c.h.b16 %v631
        %v2993 = vunpack.c.l.b16 %v632
        %v2994 = vunpack.c.h.b16 %v632
        %v2995 = vunpack.c.l.b16 %v633
        %v2996 = vunpack.c.h.b16 %v633
        %v2997 = vunpack.c.l.b16 %v634
        %v2998 = vunpack.c.h.b16 %v634
        %v2999 = vunpack.c.l.b16 %v635
        %v3000 = vunpack.c.h.b16 %v635
        %v3001 = vunpack.c.l.b16 %v636
        %v3002 = vunpack.c.h.b16 %v636
        %v3003 = vunpack.c.l.b16 %v637
        %v3004 = vunpack.c.h.b16 %v637
        %v3005 = vunpack.c.l.b16 %v638
        %v3006 = vunpack.c.h.b16 %v638
        %v3007 = vunpack.c.l.b16 %v639
        %v3008 = vunpack.c.h.b16 %v639
        %v3009 = vunpack.c.l.b16 %v640
        %v3010 = vunpack.c.h.b16 %v640
        %v3011 = vunpack.c.l.b16 %v641
        %v3012 = vunpack.c.h.b16 %v641
        %v3013 = vunpack.c.l.b16 %v642
        %v3014 = vunpack.c.h.b16 %v642
        %v3015 = vunpack.c.l.b16 %v643
        %v3016 = vunpack.c.h.b16 %v643
        %v3017 = vunpack.c.l.b16 %v644
        %v3018 = vunpack.c.h.b16 %v644
        %v3019 = vunpack.c.l.b16 %v645
        %v3020 = vunpack.c.h.b16 %v645
        %v3021 = vunpack.c.l.b16 %v646
        %v3022 = vunpack.c.h.b16 %v646
        %v3023 = vunpack.c.l.b16 %v647
        %v3024 = vunpack.c.h.b16 %v647
        %v3025 = vunpack.c.l.b16 %v648
        %v3026 = vunpack.c.h.b16 %v648
        %v3027 = vunpack.c.l.b16 %v649
        %v3028 = vunpack.c.h.b16 %v649
        %v3029 = vunpack.c.l.b16 %v650
        %v3030 = vunpack.c.h.b16 %v650
        %v3031 = vunpack.c.l.b16 %v651
        %v3032 = vunpack.c.h.b16 %v651
        %v3033 = vunpack.c.l.b16 %v652
        %v3034 = vunpack.c.h.b16 %v652
        %v3035 = vunpack.c.l.b16 %v653
        %v3036 = vunpack.c.h.b16 %v653
        %v3037 = vunpack.c.l.b16 %v654
        %v3038 = vunpack.c.h.b16 %v654
        %v3039 = vunpack.c.l.b16 %v655
        %v3040 = vunpack.c.h.b16 %v655
        %v3041 = vunpack.c.l.b16 %v656
        %v3042 = vunpack.c.h.b16 %v656
        %v3043 = vunpack.c.l.b16 %v657
        %v3044 = vunpack.c.h.b16 %v657
        %v3045 = vunpack.c.l.b16 %v658
        %v3046 = vunpack.c.h.b16 %v658
        %v3047 = vunpack.c.l.b16 %v659
        %v3048 = vunpack.c.h.b16 %v659
        %v3049 = vunpack.c.l.b16 %v660
        %v3050 = vunpack.c.h.b16 %v660
        %v3051 = vunpack.c.l.b16 %v661
        %v3052 = vunpack.c.h.b16 %v661
        %v3053 = vunpack.c.l.b16 %v662
        %v3054 = vunpack.c.h.b16 %v662
        %v3055 = vunpack.c.l.b16 %v663
        %v3056 = vunpack.c.h.b16 %v663
        %v3057 = vunpack.c.l.b16 %v664
        %v3058 = vunpack.c.h.b16 %v664
        %v3059 = vunpack.c.l.b16 %v665
        %v3060 = vunpack.c.h.b16 %v665
        %v3061 = vunpack.c.l.b16 %v666
        %v3062 = vunpack.c.h.b16 %v666
        %v3063 = vunpack.c.l.b16 %v667
        %v3064 = vunpack.c.h.b16 %v667
        %v3065 = vunpack.c.l.b16 %v668
        %v3066 = vunpack.c.h.b16 %v668
        %v3067 = vunpack.c.l.b16 %v669
        %v3068 = vunpack.c.h.b16 %v669
        %v3069 = vunpack.c.l.b16 %v670
        %v3070 = vunpack.c.h.b16 %v670
        %v3071 = vunpack.c.l.b16 %v671
        %v3072 = vunpack.c.h.b16 %v671
        %v3073 = vunpack.c.l.b16 %v672
        %v3074 = vunpack.c.h.b16 %v672
        %v3075 = vunpack.c.l.b16 %v673
        %v3076 = vunpack.c.h.b16 %v673
        %v3077 = vunpack.c.l.b16 %v674
        %v3078 = vunpack.c.h.b16 %v674
        %v3079 = vunpack.c.l.b16 %v675
        %v3080 = vunpack.c.h.b16 %v675
        %v3081 = vunpack.c.l.b16 %v676
        %v3082 = vunpack.c.h.b16 %v676
        %v3083 = vunpack.c.l.b16 %v677
        %v3084 = vunpack.c.h.b16 %v677
        %v3085 = vunpack.c.l.b16 %v678
        %v3086 = vunpack.c.h.b16 %v678
        %v3087 = vunpack.c.l.b16 %v679
        %v3088 = vunpack.c.h.b16 %v679
        %v3089 = vunpack.c.l.b16 %v680
        %v3090 = vunpack.c.h.b16 %v680
        %v3091 = vunpack.c.l.b16 %v681
        %v3092 = vunpack.c.h.b16 %v681
        %v3093 = vunpack.c.l.b16 %v682
        %v3094 = vunpack.c.h.b16 %v682
        %v3095 = vunpack.c.l.b16 %v683
        %v3096 = vunpack.c.h.b16 %v683
        %v3097 = vunpack.c.l.b16 %v684
        %v3098 = vunpack.c.h.b16 %v684
        %v3099 = vunpack.c.l.b16 %v685
        %v3100 = vunpack.c.h.b16 %v685
        %v3101 = vunpack.c.l.b16 %v686
        %v3102 = vunpack.c.h.b16 %v686
        %v3103 = vunpack.c.l.b16 %v687
        %v3104 = vunpack.c.h.b16 %v687
        %v3105 = vunpack.c.l.b16 %v688
        %v3106 = vunpack.c.h.b16 %v688
        %v3107 = vunpack.c.l.b16 %v689
        %v3108 = vunpack.c.h.b16 %v689
        %v3109 = vunpack.c.l.b16 %v690
        %v3110 = vunpack.c.h.b16 %v690
        %v3111 = vunpack.c.l.b16 %v691
        %v3112 = vunpack.c.h.b16 %v691
        %v3113 = vunpack.c.l.b16 %v692
        %v3114 = vunpack.c.h.b16 %v692
        %v3115 = vunpack.c.l.b16 %v693
        %v3116 = vunpack.c.h.b16 %v693
        %v3117 = vunpack.c.l.b16 %v694
        %v3118 = vunpack.c.h.b16 %v694
        %v3119 = vunpack.c.l.b16 %v695
        %v3120 = vunpack.c.h.b16 %v695
        %v3121 = vunpack.c.l.b16 %v696
        %v3122 = vunpack.c.h.b16 %v696
        %v3123 = vunpack.c.l.b16 %v697
        %v3124 = vunpack.c.h.b16 %v697
        %v3125 = vunpack.c.l.b16 %v698
        %v3126 = vunpack.c.h.b16 %v698
        %v3127 = vunpack.c.l.b16 %v699
        %v3128 = vunpack.c.h.b16 %v699
        %v3129 = vunpack.c.l.b16 %v700
        %v3130 = vunpack.c.h.b16 %v700
        %v3131 = vunpack.c.l.b16 %v701
        %v3132 = vunpack.c.h.b16 %v701
        %v3133 = vunpack.c.l.b16 %v702
        %v3134 = vunpack.c.h.b16 %v702
        %v3135 = vunpack.c.l.b16 %v703
        %v3136 = vunpack.c.h.b16 %v703
        %v3137 = vunpack.c.l.b16 %v704
        %v3138 = vunpack.c.h.b16 %v704
        %v3139 = vunpack.c.l.b16 %v705
        %v3140 = vunpack.c.h.b16 %v705
        %v3141 = vunpack.c.l.b16 %v706
        %v3142 = vunpack.c.h.b16 %v706
        %v3143 = vunpack.c.l.b16 %v707
        %v3144 = vunpack.c.h.b16 %v707
        %v3145 = vunpack.c.l.b16 %v708
        %v3146 = vunpack.c.h.b16 %v708
        %v3147 = vunpack.c.l.b16 %v709
        %v3148 = vunpack.c.h.b16 %v709
        %v3149 = vunpack.c.l.b16 %v710
        %v3150 = vunpack.c.h.b16 %v710
        %v3151 = vunpack.c.l.b16 %v711
        %v3152 = vunpack.c.h.b16 %v711
        %v3153 = vunpack.c.l.b16 %v712
        %v3154 = vunpack.c.h.b16 %v712
        %v3155 = vunpack.c.l.b16 %v713
        %v3156 = vunpack.c.h.b16 %v713
        %v3157 = vunpack.c.l.b16 %v714
        %v3158 = vunpack.c.h.b16 %v714
        %v3159 = vunpack.c.l.b16 %v715
        %v3160 = vunpack.c.h.b16 %v715
        %v3161 = vunpack.c.l.b16 %v716
        %v3162 = vunpack.c.h.b16 %v716
        %v3163 = vunpack.c.l.b16 %v717
        %v3164 = vunpack.c.h.b16 %v717
        %v3165 = vunpack.c.l.b16 %v718
        %v3166 = vunpack.c.h.b16 %v718
        %v3167 = vunpack.c.l.b16 %v719
        %v3168 = vunpack.c.h.b16 %v719
        %v3169 = vunpack.c.l.b16 %v720
        %v3170 = vunpack.c.h.b16 %v720
        %v3171 = vunpack.c.l.b16 %v721
        %v3172 = vunpack.c.h.b16 %v721
        %v3173 = vunpack.c.l.b16 %v722
        %v3174 = vunpack.c.h.b16 %v722
        %v3175 = vunpack.c.l.b16 %v723
        %v3176 = vunpack.c.h.b16 %v723
        %v3177 = vunpack.c.l.b16 %v724
        %v3178 = vunpack.c.h.b16 %v724
        %v3179 = vunpack.c.l.b16 %v725
        %v3180 = vunpack.c.h.b16 %v725
        %v3181 = vunpack.c.l.b16 %v726
        %v3182 = vunpack.c.h.b16 %v726
        %v3183 = vunpack.c.l.b16 %v727
        %v3184 = vunpack.c.h.b16 %v727
        %v3185 = vunpack.c.l.b16 %v728
        %v3186 = vunpack.c.h.b16 %v728
        %v3187 = vunpack.c.l.b16 %v729
        %v3188 = vunpack.c.h.b16 %v729
        %v3189 = vunpack.c.l.b16 %v730
        %v3190 = vunpack.c.h.b16 %v730
        %v3191 = vunpack.c.l.b16 %v731
        %v3192 = vunpack.c.h.b16 %v731
        %v3193 = vunpack.c.l.b16 %v732
        %v3194 = vunpack.c.h.b16 %v732
        %v3195 = vunpack.c.l.b16 %v733
        %v3196 = vunpack.c.h.b16 %v733
        %v3197 = vunpack.c.l.b16 %v734
        %v3198 = vunpack.c.h.b16 %v734
        %v3199 = vunpack.c.l.b16 %v735
        %v3200 = vunpack.c.h.b16 %v735
        %v3201 = vunpack.c.l.b16 %v736
        %v3202 = vunpack.c.h.b16 %v736
        %v3203 = vunpack.c.l.b16 %v737
        %v3204 = vunpack.c.h.b16 %v737
        %v3205 = vunpack.c.l.b16 %v738
        %v3206 = vunpack.c.h.b16 %v738
        %v3207 = vunpack.c.l.b16 %v739
        %v3208 = vunpack.c.h.b16 %v739
        %v3209 = vunpack.c.l.b16 %v740
        %v3210 = vunpack.c.h.b16 %v740
        %v3211 = vunpack.c.l.b16 %v741
        %v3212 = vunpack.c.h.b16 %v741
        %v3213 = vunpack.c.l.b16 %v742
        %v3214 = vunpack.c.h.b16 %v742
        %v3215 = vunpack.c.l.b16 %v743
        %v3216 = vunpack.c.h.b16 %v743
        %v3217 = vunpack.c.l.b16 %v744
        %v3218 = vunpack.c.h.b16 %v744
        %v3219 = vunpack.c.l.b16 %v745
        %v3220 = vunpack.c.h.b16 %v745
        %v3221 = vunpack.c.l.b16 %v746
        %v3222 = vunpack.c.h.b16 %v746
        %v3223 = vunpack.c.l.b16 %v747
        %v3224 = vunpack.c.h.b16 %v747
        %v3225 = vunpack.c.l.b16 %v748
        %v3226 = vunpack.c.h.b16 %v748
        %v3227 = vunpack.c.l.b16 %v749
        %v3228 = vunpack.c.h.b16 %v749
        %v3229 = vunpack.c.l.b16 %v750
        %v3230 = vunpack.c.h.b16 %v750
        %v3231 = vunpack.c.l.b16 %v751
        %v3232 = vunpack.c.h.b16 %v751
        %v3233 = vunpack.c.l.b16 %v752
        %v3234 = vunpack.c.h.b16 %v752
        %v3235 = vunpack.c.l.b16 %v753
        %v3236 = vunpack.c.h.b16 %v753
        %v3237 = vunpack.c.l.b16 %v754
        %v3238 = vunpack.c.h.b16 %v754
        %v3239 = vunpack.c.l.b16 %v755
        %v3240 = vunpack.c.h.b16 %v755
        %v3241 = vunpack.c.l.b16 %v756
        %v3242 = vunpack.c.h.b16 %v756
        %v3243 = vunpack.c.l.b16 %v757
        %v3244 = vunpack.c.h.b16 %v757
        %v3245 = vunpack.c.l.b16 %v758
        %v3246 = vunpack.c.h.b16 %v758
        %v3247 = vunpack.c.l.b16 %v759
        %v3248 = vunpack.c.h.b16 %v759
        %v3249 = vunpack.c.l.b16 %v760
        %v3250 = vunpack.c.h.b16 %v760
        %v3251 = vunpack.c.l.b16 %v761
        %v3252 = vunpack.c.h.b16 %v761
        %v3253 = vunpack.c.l.b16 %v762
        %v3254 = vunpack.c.h.b16 %v762
        %v3255 = vunpack.c.l.b16 %v763
        %v3256 = vunpack.c.h.b16 %v763
        %v3257 = vunpack.c.l.b16 %v764
        %v3258 = vunpack.c.h.b16 %v764
        %v3259 = vunpack.c.l.b16 %v765
        %v3260 = vunpack.c.h.b16 %v765
        %v3261 = vunpack.c.l.b16 %v766
        %v3262 = vunpack.c.h.b16 %v766
        %v3263 = vunpack.c.l.b16 %v767
        %v3264 = vunpack.c.h.b16 %v767
        %v3265 = vunpack.c.l.b16 %v768
        %v3266 = vunpack.c.h.b16 %v768
        %v3267 = vunpack.c.l.b16 %v769
        %v3268 = vunpack.c.h.b16 %v769
        %v3269 = vunpack.c.l.b16 %v770
        %v3270 = vunpack.c.h.b16 %v770
        %v3271 = vunpack.c.l.b16 %v771
        %v3272 = vunpack.c.h.b16 %v771
        %v3273 = vunpack.c.l.b16 %v772
        %v3274 = vunpack.c.h.b16 %v772
        %v3275 = vunpack.c.l.b16 %v773
        %v3276 = vunpack.c.h.b16 %v773
        %v3277 = vunpack.c.l.b16 %v774
        %v3278 = vunpack.c.h.b16 %v774
        %v3279 = vunpack.c.l.b16 %v775
        %v3280 = vunpack.c.h.b16 %v775
        %v3281 = vunpack.c.l.b16 %v776
        %v3282 = vunpack.c.h.b16 %v776
        %v3283 = vunpack.c.l.b16 %v777
        %v3284 = vunpack.c.h.b16 %v777
        %v3285 = vunpack.c.l.b16 %v778
        %v3286 = vunpack.c.h.b16 %v778
        %v3287 = vunpack.c.l.b16 %v779
        %v3288 = vunpack.c.h.b16 %v779
        %v3289 = vunpack.c.l.b16 %v780
        %v3290 = vunpack.c.h.b16 %v780
        %v3291 = vunpack.c.l.b16 %v781
        %v3292 = vunpack.c.h.b16 %v781
        %v3293 = vunpack.c.l.b16 %v782
        %v3294 = vunpack.c.h.b16 %v782
        %v3295 = vunpack.c.l.b16 %v783
        %v3296 = vunpack.c.h.b16 %v783
        %v3297 = vunpack.c.l.b16 %v784
        %v3298 = vunpack.c.h.b16 %v784
        %v3299 = vunpack.c.l.b16 %v785
        %v3300 = vunpack.c.h.b16 %v785
        %v3301 = vunpack.c.l.b16 %v786
        %v3302 = vunpack.c.h.b16 %v786
        %v3303 = vunpack.c.l.b16 %v787
        %v3304 = vunpack.c.h.b16 %v787
        %v3305 = vunpack.c.l.b16 %v788
        %v3306 = vunpack.c.h.b16 %v788
        %v3307 = vunpack.c.l.b16 %v789
        %v3308 = vunpack.c.h.b16 %v789
        %v3309 = vunpack.c.l.b16 %v790
        %v3310 = vunpack.c.h.b16 %v790
        %v3311 = vunpack.c.l.b16 %v791
        %v3312 = vunpack.c.h.b16 %v791
        %v3313 = vunpack.c.l.b16 %v792
        %v3314 = vunpack.c.h.b16 %v792
        %v3315 = vunpack.c.l.b16 %v793
        %v3316 = vunpack.c.h.b16 %v793
        %v3317 = vunpack.c.l.b16 %v794
        %v3318 = vunpack.c.h.b16 %v794
        %v3319 = vunpack.c.l.b16 %v795
        %v3320 = vunpack.c.h.b16 %v795
        %v3321 = vunpack.c.l.b16 %v796
        %v3322 = vunpack.c.h.b16 %v796
        %v3323 = vunpack.c.l.b16 %v797
        %v3324 = vunpack.c.h.b16 %v797
        %v3325 = vunpack.c.l.b16 %v798
        %v3326 = vunpack.c.h.b16 %v798
        %v3327 = vunpack.c.l.b16 %v799
        %v3328 = vunpack.c.h.b16 %v799
        %v3329 = vunpack.c.l.b16 %v800
        %v3330 = vunpack.c.h.b16 %v800
        %v3331 = vunpack.c.l.b16 %v801
        %v3332 = vunpack.c.h.b16 %v801
        %v3333 = vunpack.c.l.b16 %v802
        %v3334 = vunpack.c.h.b16 %v802
        %v3335 = vunpack.c.l.b16 %v803
        %v3336 = vunpack.c.h.b16 %v803
        %v3337 = vunpack.c.l.b16 %v804
        %v3338 = vunpack.c.h.b16 %v804
        %v3339 = vunpack.c.l.b16 %v805
        %v3340 = vunpack.c.h.b16 %v805
        %v3341 = vunpack.c.l.b16 %v806
        %v3342 = vunpack.c.h.b16 %v806
        %v3343 = vunpack.c.l.b16 %v807
        %v3344 = vunpack.c.h.b16 %v807
        %v3345 = vunpack.c.l.b16 %v808
        %v3346 = vunpack.c.h.b16 %v808
        %v3347 = vunpack.c.l.b16 %v809
        %v3348 = vunpack.c.h.b16 %v809
        %v3349 = vunpack.c.l.b16 %v810
        %v3350 = vunpack.c.h.b16 %v810
        %v3351 = vunpack.c.l.b16 %v811
        %v3352 = vunpack.c.h.b16 %v811
        %v3353 = vunpack.c.l.b16 %v812
        %v3354 = vunpack.c.h.b16 %v812
        %v3355 = vunpack.c.l.b16 %v813
        %v3356 = vunpack.c.h.b16 %v813
        %v3357 = vunpack.c.l.b16 %v814
        %v3358 = vunpack.c.h.b16 %v814
        %v3359 = vunpack.c.l.b16 %v815
        %v3360 = vunpack.c.h.b16 %v815
        %v3361 = vunpack.c.l.b16 %v816
        %v3362 = vunpack.c.h.b16 %v816
        %v3363 = vunpack.c.l.b16 %v817
        %v3364 = vunpack.c.h.b16 %v817
        %v3365 = vunpack.c.l.b16 %v818
        %v3366 = vunpack.c.h.b16 %v818
        %v3367 = vunpack.c.l.b16 %v819
        %v3368 = vunpack.c.h.b16 %v819
        %v3369 = vunpack.c.l.b16 %v820
        %v3370 = vunpack.c.h.b16 %v820
        %v3371 = vunpack.c.l.b16 %v821
        %v3372 = vunpack.c.h.b16 %v821
        %v3373 = vunpack.c.l.b16 %v822
        %v3374 = vunpack.c.h.b16 %v822
        %v3375 = vunpack.c.l.b16 %v823
        %v3376 = vunpack.c.h.b16 %v823
        %v3377 = vunpack.c.l.b16 %v824
        %v3378 = vunpack.c.h.b16 %v824
        %v3379 = vunpack.c.l.b16 %v825
        %v3380 = vunpack.c.h.b16 %v825
        %v3381 = vunpack.c.l.b16 %v826
        %v3382 = vunpack.c.h.b16 %v826
        %v3383 = vunpack.c.l.b16 %v827
        %v3384 = vunpack.c.h.b16 %v827
        %v3385 = vunpack.c.l.b16 %v828
        %v3386 = vunpack.c.h.b16 %v828
        %v3387 = vunpack.c.l.b16 %v829
        %v3388 = vunpack.c.h.b16 %v829
        %v3389 = vunpack.c.l.b16 %v830
        %v3390 = vunpack.c.h.b16 %v830
        %v3391 = vunpack.c.l.b16 %v831
        %v3392 = vunpack.c.h.b16 %v831
        %v3393 = vunpack.c.l.b16 %v832
        %v3394 = vunpack.c.h.b16 %v832
        %v3395 = vunpack.c.l.b16 %v833
        %v3396 = vunpack.c.h.b16 %v833
        %v3397 = vunpack.c.l.b16 %v834
        %v3398 = vunpack.c.h.b16 %v834
        %v3399 = vunpack.c.l.b16 %v835
        %v3400 = vunpack.c.h.b16 %v835
        %v3401 = vunpack.c.l.b16 %v836
        %v3402 = vunpack.c.h.b16 %v836
        %v3403 = vunpack.c.l.b16 %v837
        %v3404 = vunpack.c.h.b16 %v837
        %v3405 = vunpack.c.l.b16 %v838
        %v3406 = vunpack.c.h.b16 %v838
        %v3407 = vunpack.c.l.b16 %v839
        %v3408 = vunpack.c.h.b16 %v839
        %v3409 = vunpack.c.l.b16 %v840
        %v3410 = vunpack.c.h.b16 %v840
        %v3411 = vunpack.c.l.b16 %v841
        %v3412 = vunpack.c.h.b16 %v841
        %v3413 = vunpack.c.l.b16 %v842
        %v3414 = vunpack.c.h.b16 %v842
        %v3415 = vunpack.c.l.b16 %v843
        %v3416 = vunpack.c.h.b16 %v843
        %v3417 = vunpack.c.l.b16 %v844
        %v3418 = vunpack.c.h.b16 %v844
        %v3419 = vunpack.c.l.b16 %v845
        %v3420 = vunpack.c.h.b16 %v845
        %v3421 = vunpack.c.l.b16 %v846
        %v3422 = vunpack.c.h.b16 %v846
        %v3423 = vunpack.c.l.b16 %v847
        %v3424 = vunpack.c.h.b16 %v847
        %v3425 = vunpack.c.l.b16 %v848
        %v3426 = vunpack.c.h.b16 %v848
        %v3427 = vunpack.c.l.b16 %v849
        %v3428 = vunpack.c.h.b16 %v849
        %v3429 = vunpack.c.l.b16 %v850
        %v3430 = vunpack.c.h.b16 %v850
        %v3431 = vunpack.c.l.b16 %v851
        %v3432 = vunpack.c.h.b16 %v851
        %v3433 = vunpack.c.l.b16 %v852
        %v3434 = vunpack.c.h.b16 %v852
        %v3435 = vunpack.c.l.b16 %v853
        %v3436 = vunpack.c.h.b16 %v853
        %v3437 = vunpack.c.l.b16 %v854
        %v3438 = vunpack.c.h.b16 %v854
        %v3439 = vunpack.c.l.b16 %v855
        %v3440 = vunpack.c.h.b16 %v855
        %v3441 = vunpack.c.l.b16 %v856
        %v3442 = vunpack.c.h.b16 %v856
        %v3443 = vunpack.c.l.b16 %v857
        %v3444 = vunpack.c.h.b16 %v857
        %v3445 = vunpack.c.l.b16 %v858
        %v3446 = vunpack.c.h.b16 %v858
        %v3447 = vunpack.c.l.b16 %v859
        %v3448 = vunpack.c.h.b16 %v859
        %v3449 = vunpack.c.l.b16 %v860
        %v3450 = vunpack.c.h.b16 %v860
        %v3451 = vunpack.c.l.b16 %v861
        %v3452 = vunpack.c.h.b16 %v861
        %v3453 = vunpack.c.l.b16 %v862
        %v3454 = vunpack.c.h.b16 %v862
        %v3455 = vunpack.c.l.b16 %v863
        %v3456 = vunpack.c.h.b16 %v863
        %v3457 = vunpack.c.l.b16 %v864
        %v3458 = vunpack.c.h.b16 %v864
        %v3459 = vunpack.c.l.b16 %v865
        %v3460 = vunpack.c.h.b16 %v865
        %v3461 = vunpack.c.l.b16 %v866
        %v3462 = vunpack.c.h.b16 %v866
        %v3463 = vunpack.c.l.b16 %v867
        %v3464 = vunpack.c.h.b16 %v867
        %v3465 = vunpack.c.l.b16 %v868
        %v3466 = vunpack.c.h.b16 %v868
        %v3467 = vunpack.c.l.b16 %v869
        %v3468 = vunpack.c.h.b16 %v869
        %v3469 = vunpack.c.l.b16 %v870
        %v3470 = vunpack.c.h.b16 %v870
        %v3471 = vunpack.c.l.b16 %v871
        %v3472 = vunpack.c.h.b16 %v871
        %v3473 = vunpack.c.l.b16 %v872
        %v3474 = vunpack.c.h.b16 %v872
        %v3475 = vunpack.c.l.b16 %v873
        %v3476 = vunpack.c.h.b16 %v873
        %v3477 = vunpack.c.l.b16 %v874
        %v3478 = vunpack.c.h.b16 %v874
        %v3479 = vunpack.c.l.b16 %v875
        %v3480 = vunpack.c.h.b16 %v875
        %v3481 = vunpack.c.l.b16 %v876
        %v3482 = vunpack.c.h.b16 %v876
        %v3483 = vunpack.c.l.b16 %v877
        %v3484 = vunpack.c.h.b16 %v877
        %v3485 = vunpack.c.l.b16 %v878
        %v3486 = vunpack.c.h.b16 %v878
        %v3487 = vunpack.c.l.b16 %v879
        %v3488 = vunpack.c.h.b16 %v879
        %v3489 = vunpack.c.l.b16 %v880
        %v3490 = vunpack.c.h.b16 %v880
        %v3491 = vunpack.c.l.b16 %v881
        %v3492 = vunpack.c.h.b16 %v881
        %v3493 = vunpack.c.l.b16 %v882
        %v3494 = vunpack.c.h.b16 %v882
        %v3495 = vunpack.c.l.b16 %v883
        %v3496 = vunpack.c.h.b16 %v883
        %v3497 = vunpack.c.l.b16 %v884
        %v3498 = vunpack.c.h.b16 %v884
        %v3499 = vunpack.c.l.b16 %v885
        %v3500 = vunpack.c.h.b16 %v885
        %v3501 = vunpack.c.l.b16 %v886
        %v3502 = vunpack.c.h.b16 %v886
        %v3503 = vunpack.c.l.b16 %v887
        %v3504 = vunpack.c.h.b16 %v887
        %v3505 = vunpack.c.l.b16 %v888
        %v3506 = vunpack.c.h.b16 %v888
        %v3507 = vunpack.c.l.b16 %v889
        %v3508 = vunpack.c.h.b16 %v889
        %v3509 = vunpack.c.l.b16 %v890
        %v3510 = vunpack.c.h.b16 %v890
        %v3511 = vunpack.c.l.b16 %v891
        %v3512 = vunpack.c.h.b16 %v891
        %v3513 = vunpack.c.l.b16 %v892
        %v3514 = vunpack.c.h.b16 %v892
        %v3515 = vunpack.c.l.b16 %v893
        %v3516 = vunpack.c.h.b16 %v893
        %v3517 = vunpack.c.l.b16 %v894
        %v3518 = vunpack.c.h.b16 %v894
        %v3519 = vunpack.c.l.b16 %v895
        %v3520 = vunpack.c.h.b16 %v895
        %v3521 = vunpack.c.l.b16 %v896
        %v3522 = vunpack.c.h.b16 %v896
        %v3523 = vunpack.c.l.b16 %v897
        %v3524 = vunpack.c.h.b16 %v897
        %v3525 = vunpack.c.l.b16 %v898
        %v3526 = vunpack.c.h.b16 %v898
        %v3527 = vunpack.c.l.b16 %v899
        %v3528 = vunpack.c.h.b16 %v899
        %v3529 = vunpack.c.l.b16 %v900
        %v3530 = vunpack.c.h.b16 %v900
        %v3531 = vunpack.c.l.b16 %v901
        %v3532 = vunpack.c.h.b16 %v901
        %v3533 = vunpack.c.l.b16 %v902
        %v3534 = vunpack.c.h.b16 %v902
        %v3535 = vunpack.c.l.b16 %v903
        %v3536 = vunpack.c.h.b16 %v903
        %v3537 = vunpack.c.l.b16 %v904
        %v3538 = vunpack.c.h.b16 %v904
        %v3539 = vunpack.c.l.b16 %v905
        %v3540 = vunpack.c.h.b16 %v905
        %v3541 = vunpack.c.l.b16 %v906
        %v3542 = vunpack.c.h.b16 %v906
        %v3543 = vunpack.c.l.b16 %v907
        %v3544 = vunpack.c.h.b16 %v907
        %v3545 = vunpack.c.l.b16 %v908
        %v3546 = vunpack.c.h.b16 %v908
        %v3547 = vunpack.c.l.b16 %v909
        %v3548 = vunpack.c.h.b16 %v909
        %v3549 = vunpack.c.l.b16 %v910
        %v3550 = vunpack.c.h.b16 %v910
        %v3551 = vunpack.c.l.b16 %v911
        %v3552 = vunpack.c.h.b16 %v911
        %v3553 = vunpack.c.l.b16 %v912
        %v3554 = vunpack.c.h.b16 %v912
        %v3555 = vunpack.c.l.b16 %v913
        %v3556 = vunpack.c.h.b16 %v913
        %v3557 = vunpack.c.l.b16 %v914
        %v3558 = vunpack.c.h.b16 %v914
        %v3559 = vunpack.c.l.b16 %v915
        %v3560 = vunpack.c.h.b16 %v915
        %v3561 = vunpack.c.l.b16 %v916
        %v3562 = vunpack.c.h.b16 %v916
        %v3563 = vunpack.c.l.b16 %v917
        %v3564 = vunpack.c.h.b16 %v917
        %v3565 = vunpack.c.l.b16 %v918
        %v3566 = vunpack.c.h.b16 %v918
        %v3567 = vunpack.c.l.b16 %v919
        %v3568 = vunpack.c.h.b16 %v919
        %v3569 = vunpack.c.l.b16 %v920
        %v3570 = vunpack.c.h.b16 %v920
        %v3571 = vunpack.c.l.b16 %v921
        %v3572 = vunpack.c.h.b16 %v921
        %v3573 = vunpack.c.l.b16 %v922
        %v3574 = vunpack.c.h.b16 %v922
        %v3575 = vunpack.c.l.b16 %v923
        %v3576 = vunpack.c.h.b16 %v923
        %v3577 = vunpack.c.l.b16 %v924
        %v3578 = vunpack.c.h.b16 %v924
        %v3579 = vunpack.c.l.b16 %v925
        %v3580 = vunpack.c.h.b16 %v925
        %v3581 = vunpack.c.l.b16 %v926
        %v3582 = vunpack.c.h.b16 %v926
        %v3583 = vunpack.c.l.b16 %v927
        %v3584 = vunpack.c.h.b16 %v927
        %v3585 = vunpack.c.l.b16 %v928
        %v3586 = vunpack.c.h.b16 %v928
        %v3587 = vunpack.c.l.b16 %v929
        %v3588 = vunpack.c.h.b16 %v929
        %v3589 = vunpack.c.l.b16 %v930
        %v3590 = vunpack.c.h.b16 %v930
        %v3591 = vunpack.c.l.b16 %v931
        %v3592 = vunpack.c.h.b16 %v931
        %v3593 = vunpack.c.l.b16 %v932
        %v3594 = vunpack.c.h.b16 %v932
        %v3595 = vunpack.c.l.b16 %v933
        %v3596 = vunpack.c.h.b16 %v933
        %v3597 = vunpack.c.l.b16 %v934
        %v3598 = vunpack.c.h.b16 %v934
        %v3599 = vunpack.c.l.b16 %v935
        %v3600 = vunpack.c.h.b16 %v935
        %v3601 = vunpack.c.l.b16 %v936
        %v3602 = vunpack.c.h.b16 %v936
        %v3603 = vunpack.c.l.b16 %v937
        %v3604 = vunpack.c.h.b16 %v937
        %v3605 = vunpack.c.l.b16 %v938
        %v3606 = vunpack.c.h.b16 %v938
        %v3607 = vunpack.c.l.b16 %v939
        %v3608 = vunpack.c.h.b16 %v939
        %v3609 = vunpack.c.l.b16 %v940
        %v3610 = vunpack.c.h.b16 %v940
        %v3611 = vunpack.c.l.b16 %v941
        %v3612 = vunpack.c.h.b16 %v941
        %v3613 = vunpack.c.l.b16 %v942
        %v3614 = vunpack.c.h.b16 %v942
        %v3615 = vunpack.c.l.b16 %v943
        %v3616 = vunpack.c.h.b16 %v943
        %v3617 = vunpack.c.l.b16 %v944
        %v3618 = vunpack.c.h.b16 %v944
        %v3619 = vunpack.c.l.b16 %v945
        %v3620 = vunpack.c.h.b16 %v945
        %v3621 = vunpack.c.l.b16 %v946
        %v3622 = vunpack.c.h.b16 %v946
        %v3623 = vunpack.c.l.b16 %v947
        %v3624 = vunpack.c.h.b16 %v947
        %v3625 = vunpack.c.l.b16 %v948
        %v3626 = vunpack.c.h.b16 %v948
        %v3627 = vunpack.c.l.b16 %v949
        %v3628 = vunpack.c.h.b16 %v949
        %v3629 = vunpack.c.l.b16 %v950
        %v3630 = vunpack.c.h.b16 %v950
        %v3631 = vunpack.c.l.b16 %v951
        %v3632 = vunpack.c.h.b16 %v951
        %v3633 = vunpack.c.l.b16 %v952
        %v3634 = vunpack.c.h.b16 %v952
        %v3635 = vunpack.c.l.b16 %v953
        %v3636 = vunpack.c.h.b16 %v953
        %v3637 = vunpack.c.l.b16 %v954
        %v3638 = vunpack.c.h.b16 %v954
        %v3639 = vunpack.c.l.b16 %v955
        %v3640 = vunpack.c.h.b16 %v955
        %v3641 = vunpack.c.l.b16 %v956
        %v3642 = vunpack.c.h.b16 %v956
        %v3643 = vunpack.c.l.b16 %v957
        %v3644 = vunpack.c.h.b16 %v957
        %v3645 = vunpack.c.l.b16 %v958
        %v3646 = vunpack.c.h.b16 %v958
        %v3647 = vunpack.c.l.b16 %v959
        %v3648 = vunpack.c.h.b16 %v959
        %v3649 = vunpack.c.l.b16 %v960
        %v3650 = vunpack.c.h.b16 %v960
        %v3651 = vunpack.c.l.b16 %v961
        %v3652 = vunpack.c.h.b16 %v961
        %v3653 = vunpack.c.l.b16 %v962
        %v3654 = vunpack.c.h.b16 %v962
        %v3655 = vunpack.c.l.b16 %v963
        %v3656 = vunpack.c.h.b16 %v963
        %v3657 = vunpack.c.l.b16 %v964
        %v3658 = vunpack.c.h.b16 %v964
        %v3659 = vunpack.c.l.b16 %v965
        %v3660 = vunpack.c.h.b16 %v965
        %v3661 = vunpack.c.l.b16 %v966
        %v3662 = vunpack.c.h.b16 %v966
        %v3663 = vunpack.c.l.b16 %v967
        %v3664 = vunpack.c.h.b16 %v967
        %v3665 = vunpack.c.l.b16 %v968
        %v3666 = vunpack.c.h.b16 %v968
        %v3667 = vunpack.c.l.b16 %v969
        %v3668 = vunpack.c.h.b16 %v969
        %v3669 = vunpack.c.l.b16 %v970
        %v3670 = vunpack.c.h.b16 %v970
        %v3671 = vunpack.c.l.b16 %v971
        %v3672 = vunpack.c.h.b16 %v971
        %v3673 = vunpack.c.l.b16 %v972
        %v3674 = vunpack.c.h.b16 %v972
        %v3675 = vunpack.c.l.b16 %v973
        %v3676 = vunpack.c.h.b16 %v973
        %v3677 = vunpack.c.l.b16 %v974
        %v3678 = vunpack.c.h.b16 %v974
        %v3679 = vunpack.c.l.b16 %v975
        %v3680 = vunpack.c.h.b16 %v975
        %v3681 = vunpack.c.l.b16 %v976
        %v3682 = vunpack.c.h.b16 %v976
        %v3683 = vunpack.c.l.b16 %v977
        %v3684 = vunpack.c.h.b16 %v977
        %v3685 = vunpack.c.l.b16 %v978
        %v3686 = vunpack.c.h.b16 %v978
        %v3687 = vunpack.c.l.b16 %v979
        %v3688 = vunpack.c.h.b16 %v979
        %v3689 = vunpack.c.l.b16 %v980
        %v3690 = vunpack.c.h.b16 %v980
        %v3691 = vunpack.c.l.b16 %v981
        %v3692 = vunpack.c.h.b16 %v981
        %v3693 = vunpack.c.l.b16 %v982
        %v3694 = vunpack.c.h.b16 %v982
        %v3695 = vunpack.c.l.b16 %v983
        %v3696 = vunpack.c.h.b16 %v983
        %v3697 = vunpack.c.l.b16 %v984
        %v3698 = vunpack.c.h.b16 %v984
        %v3699 = vunpack.c.l.b16 %v985
        %v3700 = vunpack.c.h.b16 %v985
        %v3701 = vunpack.c.l.b16 %v986
        %v3702 = vunpack.c.h.b16 %v986
        %v3703 = vunpack.c.l.b16 %v987
        %v3704 = vunpack.c.h.b16 %v987
        %v3705 = vunpack.c.l.b16 %v988
        %v3706 = vunpack.c.h.b16 %v988
        %v3707 = vunpack.c.l.b16 %v989
        %v3708 = vunpack.c.h.b16 %v989
        %v3709 = vunpack.c.l.b16 %v990
        %v3710 = vunpack.c.h.b16 %v990
        %v3711 = vunpack.c.l.b16 %v991
        %v3712 = vunpack.c.h.b16 %v991
        %v3713 = vunpack.c.l.b16 %v992
        %v3714 = vunpack.c.h.b16 %v992
        %v3715 = vunpack.c.l.b16 %v993
        %v3716 = vunpack.c.h.b16 %v993
        %v3717 = vunpack.c.l.b16 %v994
        %v3718 = vunpack.c.h.b16 %v994
        %v3719 = vunpack.c.l.b16 %v995
        %v3720 = vunpack.c.h.b16 %v995
        %v3721 = vunpack.c.l.b16 %v996
        %v3722 = vunpack.c.h.b16 %v996
        %v3723 = vunpack.c.l.b16 %v997
        %v3724 = vunpack.c.h.b16 %v997
        %v3725 = vunpack.c.l.b16 %v998
        %v3726 = vunpack.c.h.b16 %v998
        %v3727 = vunpack.c.l.b16 %v999
        %v3728 = vunpack.c.h.b16 %v999
        %v3729 = vunpack.c.l.b16 %v1000
        %v3730 = vunpack.c.h.b16 %v1000
        %v3731 = vunpack.c.l.b16 %v1001
        %v3732 = vunpack.c.h.b16 %v1001
        %v3733 = vunpack.c.l.b16 %v1002
        %v3734 = vunpack.c.h.b16 %v1002
        %v3735 = vunpack.c.l.b16 %v1003
        %v3736 = vunpack.c.h.b16 %v1003
        %v3737 = vunpack.c.l.b16 %v1004
        %v3738 = vunpack.c.h.b16 %v1004
        %v3739 = vunpack.c.l.b16 %v1005
        %v3740 = vunpack.c.h.b16 %v1005
        %v3741 = vunpack.c.l.b16 %v1006
        %v3742 = vunpack.c.h.b16 %v1006
        %v3743 = vunpack.c.l.b16 %v1007
        %v3744 = vunpack.c.h.b16 %v1007
        %v3745 = vunpack.c.l.b16 %v1008
        %v3746 = vunpack.c.h.b16 %v1008
        %v3747 = vunpack.c.l.b16 %v1009
        %v3748 = vunpack.c.h.b16 %v1009
        %v3749 = vunpack.c.l.b16 %v1010
        %v3750 = vunpack.c.h.b16 %v1010
        %v3751 = vunpack.c.l.b16 %v1011
        %v3752 = vunpack.c.h.b16 %v1011
        %v3753 = vunpack.c.l.b16 %v1012
        %v3754 = vunpack.c.h.b16 %v1012
        %v3755 = vunpack.c.l.b16 %v1013
        %v3756 = vunpack.c.h.b16 %v1013
        %v3757 = vunpack.c.l.b16 %v1014
        %v3758 = vunpack.c.h.b16 %v1014
        %v3759 = vunpack.c.l.b16 %v1015
        %v3760 = vunpack.c.h.b16 %v1015
        %v3761 = vunpack.c.l.b16 %v1016
        %v3762 = vunpack.c.h.b16 %v1016
        %v3763 = vunpack.c.l.b16 %v1017
        %v3764 = vunpack.c.h.b16 %v1017
        %v3765 = vunpack.c.l.b16 %v1018
        %v3766 = vunpack.c.h.b16 %v1018
        %v3767 = vunpack.c.l.b16 %v1019
        %v3768 = vunpack.c.h.b16 %v1019
        %v3769 = vunpack.c.l.b16 %v1020
        %v3770 = vunpack.c.h.b16 %v1020
        %v3771 = vunpack.c.l.b16 %v1021
        %v3772 = vunpack.c.h.b16 %v1021
        %v3773 = vunpack.c.l.b16 %v1022
        %v3774 = vunpack.c.h.b16 %v1022
        %v3775 = vunpack.c.l.b16 %v1023
        %v3776 = vunpack.c.h.b16 %v1023
        %v3777 = vunpack.c.l.b16 %v1024
        %v3778 = vunpack.c.h.b16 %v1024
        %v3779 = vunpack.c.l.b16 %v1025
        %v3780 = vunpack.c.h.b16 %v1025
        %v3781 = vunpack.c.l.b16 %v1026
        %v3782 = vunpack.c.h.b16 %v1026
        %v3783 = vunpack.c.l.b16 %v1027
        %v3784 = vunpack.c.h.b16 %v1027
        %v3785 = vunpack.c.l.b16 %v1028
        %v3786 = vunpack.c.h.b16 %v1028
        %v3787 = vunpack.c.l.b16 %v1029
        %v3788 = vunpack.c.h.b16 %v1029
        %v3789 = vunpack.c.l.b16 %v1030
        %v3790 = vunpack.c.h.b16 %v1030
        %v3791 = vunpack.c.l.b16 %v1031
        %v3792 = vunpack.c.h.b16 %v1031
        %v3793 = vunpack.c.l.b16 %v1032
        %v3794 = vunpack.c.h.b16 %v1032
        %v3795 = vunpack.c.l.b16 %v1033
        %v3796 = vunpack.c.h.b16 %v1033
        %v3797 = vunpack.c.l.b16 %v1034
        %v3798 = vunpack.c.h.b16 %v1034
        %v3799 = vunpack.c.l.b16 %v1035
        %v3800 = vunpack.c.h.b16 %v1035
        %v3801 = vunpack.c.l.b16 %v1036
        %v3802 = vunpack.c.h.b16 %v1036
        %v3803 = vunpack.c.l.b16 %v1037
        %v3804 = vunpack.c.h.b16 %v1037
        %v3805 = vunpack.c.l.b16 %v1038
        %v3806 = vunpack.c.h.b16 %v1038
        %v3807 = vunpack.c.l.b16 %v1039
        %v3808 = vunpack.c.h.b16 %v1039
        %v3809 = vunpack.c.l.b16 %v1040
        %v3810 = vunpack.c.h.b16 %v1040
        %v3811 = vunpack.c.l.b16 %v1041
        %v3812 = vunpack.c.h.b16 %v1041
        %v3813 = vunpack.c.l.b16 %v1042
        %v3814 = vunpack.c.h.b16 %v1042
        %v3815 = vunpack.c.l.b16 %v1043
        %v3816 = vunpack.c.h.b16 %v1043
        %v3817 = vunpack.c.l.b16 %v1044
        %v3818 = vunpack.c.h.b16 %v1044
        %v3819 = vunpack.c.l.b16 %v1045
        %v3820 = vunpack.c.h.b16 %v1045
        %v3821 = vunpack.c.l.b16 %v1046
        %v3822 = vunpack.c.h.b16 %v1046
        %v3823 = vunpack.c.l.b16 %v1047
        %v3824 = vunpack.c.h.b16 %v1047
        %v3825 = vunpack.c.l.b16 %v1048
        %v3826 = vunpack.c.h.b16 %v1048
        %v3827 = vunpack.c.l.b16 %v1049
        %v3828 = vunpack.c.h.b16 %v1049
        %v3829 = vunpack.c.l.b16 %v1050
        %v3830 = vunpack.c.h.b16 %v1050
        %v3831 = vunpack.c.l.b16 %v1051
        %v3832 = vunpack.c.h.b16 %v1051
        %v3833 = vunpack.c.l.b16 %v1052
        %v3834 = vunpack.c.h.b16 %v1052
        %v3835 = vunpack.c.l.b16 %v1053
        %v3836 = vunpack.c.h.b16 %v1053
        %v3837 = vunpack.c.l.b16 %v1054
        %v3838 = vunpack.c.h.b16 %v1054
        %v3839 = vunpack.c.l.b16 %v1055
        %v3840 = vunpack.c.h.b16 %v1055
        %v3841 = vunpack.c.l.b16 %v1056
        %v3842 = vunpack.c.h.b16 %v1056
        %v3843 = vunpack.c.l.b16 %v1057
        %v3844 = vunpack.c.h.b16 %v1057
        %v3845 = vunpack.c.l.b16 %v1058
        %v3846 = vunpack.c.h.b16 %v1058
        %v3847 = vunpack.c.l.b16 %v1059
        %v3848 = vunpack.c.h.b16 %v1059
        %v3849 = vunpack.c.l.b16 %v1060
        %v3850 = vunpack.c.h.b16 %v1060
        %v3851 = vunpack.c.l.b16 %v1061
        %v3852 = vunpack.c.h.b16 %v1061
        %v3853 = vunpack.c.l.b16 %v1062
        %v3854 = vunpack.c.h.b16 %v1062
        %v3855 = vunpack.c.l.b16 %v1063
        %v3856 = vunpack.c.h.b16 %v1063
        %v3857 = vunpack.c.l.b16 %v1064
        %v3858 = vunpack.c.h.b16 %v1064
        %v3859 = vunpack.c.l.b16 %v1065
        %v3860 = vunpack.c.h.b16 %v1065
        %v3861 = vunpack.c.l.b16 %v1066
        %v3862 = vunpack.c.h.b16 %v1066
        %v3863 = vunpack.c.l.b16 %v1067
        %v3864 = vunpack.c.h.b16 %v1067
        %v3865 = vunpack.c.l.b16 %v1068
        %v3866 = vunpack.c.h.b16 %v1068
        %v3867 = vunpack.c.l.b16 %v1069
        %v3868 = vunpack.c.h.b16 %v1069
        %v3869 = vunpack.c.l.b16 %v1070
        %v3870 = vunpack.c.h.b16 %v1070
        %v3871 = vunpack.c.l.b16 %v1071
        %v3872 = vunpack.c.h.b16 %v1071
        %v3873 = vunpack.c.l.b16 %v1072
        %v3874 = vunpack.c.h.b16 %v1072
        %v3875 = vunpack.c.l.b16 %v1073
        %v3876 = vunpack.c.h.b16 %v1073
        %v3877 = vunpack.c.l.b16 %v1074
        %v3878 = vunpack.c.h.b16 %v1074
        %v3879 = vunpack.c.l.b16 %v1075
        %v3880 = vunpack.c.h.b16 %v1075
        %v3881 = vunpack.c.l.b16 %v1076
        %v3882 = vunpack.c.h.b16 %v1076
        %v3883 = vunpack.c.l.b16 %v1077
        %v3884 = vunpack.c.h.b16 %v1077
        %v3885 = vunpack.c.l.b16 %v1078
        %v3886 = vunpack.c.h.b16 %v1078
        %v3887 = vunpack.c.l.b16 %v1079
        %v3888 = vunpack.c.h.b16 %v1079
        %v3889 = vunpack.c.l.b16 %v1080
        %v3890 = vunpack.c.h.b16 %v1080
        %v3891 = vunpack.c.l.b16 %v1081
        %v3892 = vunpack.c.h.b16 %v1081
        %v3893 = vunpack.c.l.b16 %v1082
        %v3894 = vunpack.c.h.b16 %v1082
        %v3895 = vunpack.c.l.b16 %v1083
        %v3896 = vunpack.c.h.b16 %v1083
        %v3897 = vunpack.c.l.b16 %v1084
        %v3898 = vunpack.c.h.b16 %v1084
        %v3899 = vunpack.c.l.b16 %v1085
        %v3900 = vunpack.c.h.b16 %v1085
        %v3901 = vunpack.c.l.b16 %v1086
        %v3902 = vunpack.c.h.b16 %v1086
        %v3903 = vunpack.c.l.b16 %v1087
        %v3904 = vunpack.c.h.b16 %v1087
        %v3905 = vunpack.c.l.b16 %v1088
        %v3906 = vunpack.c.h.b16 %v1088
        %v3907 = vunpack.c.l.b16 %v1089
        %v3908 = vunpack.c.h.b16 %v1089
        %v3909 = vunpack.c.l.b16 %v1090
        %v3910 = vunpack.c.h.b16 %v1090
        %v3911 = vunpack.c.l.b16 %v1091
        %v3912 = vunpack.c.h.b16 %v1091
        %v3913 = vunpack.c.l.b16 %v1092
        %v3914 = vunpack.c.h.b16 %v1092
        %v3915 = vunpack.c.l.b16 %v1093
        %v3916 = vunpack.c.h.b16 %v1093
        %v3917 = vunpack.c.l.b16 %v1094
        %v3918 = vunpack.c.h.b16 %v1094
        %v3919 = vunpack.c.l.b16 %v1095
        %v3920 = vunpack.c.h.b16 %v1095
        %v3921 = vunpack.c.l.b16 %v1096
        %v3922 = vunpack.c.h.b16 %v1096
        %v3923 = vunpack.c.l.b16 %v1097
        %v3924 = vunpack.c.h.b16 %v1097
        %v3925 = vunpack.c.l.b16 %v1098
        %v3926 = vunpack.c.h.b16 %v1098
        %v3927 = vunpack.c.l.b16 %v1099
        %v3928 = vunpack.c.h.b16 %v1099
        %v3929 = vunpack.c.l.b16 %v1100
        %v3930 = vunpack.c.h.b16 %v1100
        %v3931 = vunpack.c.l.b16 %v1101
        %v3932 = vunpack.c.h.b16 %v1101
        %v3933 = vunpack.c.l.b16 %v1102
        %v3934 = vunpack.c.h.b16 %v1102
        %v3935 = vunpack.c.l.b16 %v1103
        %v3936 = vunpack.c.h.b16 %v1103
        %v3937 = vunpack.c.l.b16 %v1104
        %v3938 = vunpack.c.h.b16 %v1104
        %v3939 = vunpack.c.l.b16 %v1105
        %v3940 = vunpack.c.h.b16 %v1105
        %v3941 = vunpack.c.l.b16 %v1106
        %v3942 = vunpack.c.h.b16 %v1106
        %v3943 = vunpack.c.l.b16 %v1107
        %v3944 = vunpack.c.h.b16 %v1107
        %v3945 = vunpack.c.l.b16 %v1108
        %v3946 = vunpack.c.h.b16 %v1108
        %v3947 = vunpack.c.l.b16 %v1109
        %v3948 = vunpack.c.h.b16 %v1109
        %v3949 = vunpack.c.l.b16 %v1110
        %v3950 = vunpack.c.h.b16 %v1110
        %v3951 = vunpack.c.l.b16 %v1111
        %v3952 = vunpack.c.h.b16 %v1111
        %v3953 = vunpack.c.l.b16 %v1112
        %v3954 = vunpack.c.h.b16 %v1112
        %v3955 = vunpack.c.l.b16 %v1113
        %v3956 = vunpack.c.h.b16 %v1113
        %v3957 = vunpack.c.l.b16 %v1114
        %v3958 = vunpack.c.h.b16 %v1114
        %v3959 = vunpack.c.l.b16 %v1115
        %v3960 = vunpack.c.h.b16 %v1115
        %v3961 = vunpack.c.l.b16 %v1116
        %v3962 = vunpack.c.h.b16 %v1116
        %v3963 = vunpack.c.l.b16 %v1117
        %v3964 = vunpack.c.h.b16 %v1117
        %v3965 = vunpack.c.l.b16 %v1118
        %v3966 = vunpack.c.h.b16 %v1118
        %v3967 = vunpack.c.l.b16 %v1119
        %v3968 = vunpack.c.h.b16 %v1119
        %v3969 = vunpack.c.l.b16 %v1120
        %v3970 = vunpack.c.h.b16 %v1120
        %v3971 = vunpack.c.l.b16 %v1121
        %v3972 = vunpack.c.h.b16 %v1121
        %v3973 = vunpack.c.l.b16 %v1122
        %v3974 = vunpack.c.h.b16 %v1122
        %v3975 = vunpack.c.l.b16 %v1123
        %v3976 = vunpack.c.h.b16 %v1123
        %v3977 = vunpack.c.l.b16 %v1124
        %v3978 = vunpack.c.h.b16 %v1124
        %v3979 = vunpack.c.l.b16 %v1125
        %v3980 = vunpack.c.h.b16 %v1125
        %v3981 = vunpack.c.l.b16 %v1126
        %v3982 = vunpack.c.h.b16 %v1126
        %v3983 = vunpack.c.l.b16 %v1127
        %v3984 = vunpack.c.h.b16 %v1127
        %v3985 = vunpack.c.l.b16 %v1128
        %v3986 = vunpack.c.h.b16 %v1128
        %v3987 = vunpack.c.l.b16 %v1129
        %v3988 = vunpack.c.h.b16 %v1129
        %v3989 = vunpack.c.l.b16 %v1130
        %v3990 = vunpack.c.h.b16 %v1130
        %v3991 = vunpack.c.l.b16 %v1131
        %v3992 = vunpack.c.h.b16 %v1131
        %v3993 = vunpack.c.l.b16 %v1132
        %v3994 = vunpack.c.h.b16 %v1132
        %v3995 = vunpack.c.l.b16 %v1133
        %v3996 = vunpack.c.h.b16 %v1133
        %v3997 = vunpack.c.l.b16 %v1134
        %v3998 = vunpack.c.h.b16 %v1134
        %v3999 = vunpack.c.l.b16 %v1135
        %v4000 = vunpack.c.h.b16 %v1135
        %v4001 = vunpack.c.l.b16 %v1136
        %v4002 = vunpack.c.h.b16 %v1136
        %v4003 = vunpack.c.l.b16 %v1137
        %v4004 = vunpack.c.h.b16 %v1137
        %v4005 = vunpack.c.l.b16 %v1138
        %v4006 = vunpack.c.h.b16 %v1138
        %v4007 = vunpack.c.l.b16 %v1139
        %v4008 = vunpack.c.h.b16 %v1139
        %v4009 = vunpack.c.l.b16 %v1140
        %v4010 = vunpack.c.h.b16 %v1140
        %v4011 = vunpack.c.l.b16 %v1141
        %v4012 = vunpack.c.h.b16 %v1141
        %v4013 = vunpack.c.l.b16 %v1142
        %v4014 = vunpack.c.h.b16 %v1142
        %v4015 = vunpack.c.l.b16 %v1143
        %v4016 = vunpack.c.h.b16 %v1143
        %v4017 = vunpack.c.l.b16 %v1144
        %v4018 = vunpack.c.h.b16 %v1144
        %v4019 = vunpack.c.l.b16 %v1145
        %v4020 = vunpack.c.h.b16 %v1145
        %v4021 = vunpack.c.l.b16 %v1146
        %v4022 = vunpack.c.h.b16 %v1146
        %v4023 = vunpack.c.l.b16 %v1147
        %v4024 = vunpack.c.h.b16 %v1147
        %v4025 = vunpack.c.l.b16 %v1148
        %v4026 = vunpack.c.h.b16 %v1148
        %v4027 = vunpack.c.l.b16 %v1149
        %v4028 = vunpack.c.h.b16 %v1149
        %v4029 = vunpack.c.l.b16 %v1150
        %v4030 = vunpack.c.h.b16 %v1150
        %v4031 = vunpack.c.l.b16 %v1151
        %v4032 = vunpack.c.h.b16 %v1151
        %v4033 = vunpack.c.l.b16 %v1152
        %v4034 = vunpack.c.h.b16 %v1152
        %v4035 = vunpack.c.l.b16 %v1153
        %v4036 = vunpack.c.h.b16 %v1153
        %v4037 = vunpack.c.l.b16 %v1154
        %v4038 = vunpack.c.h.b16 %v1154
        %v4039 = vunpack.c.l.b16 %v1155
        %v4040 = vunpack.c.h.b16 %v1155
        %v4041 = vunpack.c.l.b16 %v1156
        %v4042 = vunpack.c.h.b16 %v1156
        %v4043 = vunpack.c.l.b16 %v1157
        %v4044 = vunpack.c.h.b16 %v1157
        %v4045 = vunpack.c.l.b16 %v1158
        %v4046 = vunpack.c.h.b16 %v1158
        %v4047 = vunpack.c.l.b16 %v1159
        %v4048 = vunpack.c.h.b16 %v1159
        %v4049 = vunpack.c.l.b16 %v1160
        %v4050 = vunpack.c.h.b16 %v1160
        %v4051 = vunpack.c.l.b16 %v1161
        %v4052 = vunpack.c.h.b16 %v1161
        %v4053 = vunpack.c.l.b16 %v1162
        %v4054 = vunpack.c.h.b16 %v1162
        %v4055 = vunpack.c.l.b16 %v1163
        %v4056 = vunpack.c.h.b16 %v1163
        %v4057 = vunpack.c.l.b16 %v1164
        %v4058 = vunpack.c.h.b16 %v1164
        %v4059 = vunpack.c.l.b16 %v1165
        %v4060 = vunpack.c.h.b16 %v1165
        %v4061 = vunpack.c.l.b16 %v1166
        %v4062 = vunpack.c.h.b16 %v1166
        %v4063 = vunpack.c.l.b16 %v1167
        %v4064 = vunpack.c.h.b16 %v1167
        %v4065 = vunpack.c.l.b16 %v1168
        %v4066 = vunpack.c.h.b16 %v1168
        %v4067 = vunpack.c.l.b16 %v1169
        %v4068 = vunpack.c.h.b16 %v1169
        %v4069 = vunpack.c.l.b16 %v1170
        %v4070 = vunpack.c.h.b16 %v1170
        %v4071 = vunpack.c.l.b16 %v1171
        %v4072 = vunpack.c.h.b16 %v1171
        %v4073 = vunpack.c.l.b16 %v1172
        %v4074 = vunpack.c.h.b16 %v1172
        %v4075 = vunpack.c.l.b16 %v1173
        %v4076 = vunpack.c.h.b16 %v1173
        %v4077 = vunpack.c.l.b16 %v1174
        %v4078 = vunpack.c.h.b16 %v1174
        %v4079 = vunpack.c.l.b16 %v1175
        %v4080 = vunpack.c.h.b16 %v1175
        %v4081 = vunpack.c.l.b16 %v1176
        %v4082 = vunpack.c.h.b16 %v1176
        %v4083 = vunpack.c.l.b16 %v1177
        %v4084 = vunpack.c.h.b16 %v1177
        %v4085 = vunpack.c.l.b16 %v1178
        %v4086 = vunpack.c.h.b16 %v1178
        %v4087 = vunpack.c.l.b16 %v1179
        %v4088 = vunpack.c.h.b16 %v1179
        %v4089 = vunpack.c.l.b16 %v1180
        %v4090 = vunpack.c.h.b16 %v1180
        %v4091 = vunpack.c.l.b16 %v1181
        %v4092 = vunpack.c.h.b16 %v1181
        %v4093 = vunpack.c.l.b16 %v1182
        %v4094 = vunpack.c.h.b16 %v1182
        %v4095 = vunpack.c.l.b16 %v1183
        %v4096 = vunpack.c.h.b16 %v1183
        %v4097 = vunpack.c.l.b16 %v1184
        %v4098 = vunpack.c.h.b16 %v1184
        %v4099 = vunpack.c.l.b16 %v1185
        %v4100 = vunpack.c.h.b16 %v1185
        %v4101 = vunpack.c.l.b16 %v1186
        %v4102 = vunpack.c.h.b16 %v1186
        %v4103 = vunpack.c.l.b16 %v1187
        %v4104 = vunpack.c.h.b16 %v1187
        %v4105 = vunpack.c.l.b16 %v1188
        %v4106 = vunpack.c.h.b16 %v1188
        %v4107 = vunpack.c.l.b16 %v1189
        %v4108 = vunpack.c.h.b16 %v1189
        %v4109 = vunpack.c.l.b16 %v1190
        %v4110 = vunpack.c.h.b16 %v1190
        %v4111 = vunpack.c.l.b16 %v1191
        %v4112 = vunpack.c.h.b16 %v1191
        %v4113 = vunpack.c.l.b16 %v1192
        %v4114 = vunpack.c.h.b16 %v1192
        %v4115 = vunpack.c.l.b16 %v1193
        %v4116 = vunpack.c.h.b16 %v1193
        %v4117 = vunpack.c.l.b16 %v1194
        %v4118 = vunpack.c.h.b16 %v1194
        %v4119 = vunpack.c.l.b16 %v1195
        %v4120 = vunpack.c.h.b16 %v1195
        %v4121 = vunpack.c.l.b16 %v1196
        %v4122 = vunpack.c.h.b16 %v1196
        %v4123 = vunpack.c.l.b16 %v1197
        %v4124 = vunpack.c.h.b16 %v1197
        %v4125 = vunpack.c.l.b16 %v1198
        %v4126 = vunpack.c.h.b16 %v1198
        %v4127 = vunpack.c.l.b16 %v1199
        %v4128 = vunpack.c.h.b16 %v1199
        %v4129 = vunpack.c.l.b16 %v1200
        %v4130 = vunpack.c.h.b16 %v1200
        %v4131 = vunpack.c.l.b16 %v1201
        %v4132 = vunpack.c.h.b16 %v1201
        %v4133 = vunpack.c.l.b16 %v1202
        %v4134 = vunpack.c.h.b16 %v1202
        %v4135 = vunpack.c.l.b16 %v1203
        %v4136 = vunpack.c.h.b16 %v1203
        %v4137 = vunpack.c.l.b16 %v1204
        %v4138 = vunpack.c.h.b16 %v1204
        %v4139 = vunpack.c.l.b16 %v1205
        %v4140 = vunpack.c.h.b16 %v1205
        %v4141 = vunpack.c.l.b16 %v1206
        %v4142 = vunpack.c.h.b16 %v1206
        %v4143 = vunpack.c.l.b16 %v1207
        %v4144 = vunpack.c.h.b16 %v1207
        %v4145 = vunpack.c.l.b16 %v1208
        %v4146 = vunpack.c.h.b16 %v1208
        %v4147 = vunpack.c.l.b16 %v1209
        %v4148 = vunpack.c.h.b16 %v1209
        %v4149 = vunpack.c.l.b16 %v1210
        %v4150 = vunpack.c.h.b16 %v1210
        %v4151 = vunpack.c.l.b16 %v1211
        %v4152 = vunpack.c.h.b16 %v1211
        %v4153 = vunpack.c.l.b16 %v1212
        %v4154 = vunpack.c.h.b16 %v1212
        %v4155 = vunpack.c.l.b16 %v1213
        %v4156 = vunpack.c.h.b16 %v1213
        %v4157 = vunpack.c.l.b16 %v1214
        %v4158 = vunpack.c.h.b16 %v1214
        %v4159 = vunpack.c.l.b16 %v1215
        %v4160 = vunpack.c.h.b16 %v1215
        %v4161 = vunpack.c.l.b16 %v1216
        %v4162 = vunpack.c.h.b16 %v1216
        %v4163 = vunpack.c.l.b16 %v1217
        %v4164 = vunpack.c.h.b16 %v1217
        %v4165 = vunpack.c.l.b16 %v1218
        %v4166 = vunpack.c.h.b16 %v1218
        %v4167 = vunpack.c.l.b16 %v1219
        %v4168 = vunpack.c.h.b16 %v1219
        %v4169 = vunpack.c.l.b16 %v1220
        %v4170 = vunpack.c.h.b16 %v1220
        %v4171 = vunpack.c.l.b16 %v1221
        %v4172 = vunpack.c.h.b16 %v1221
        %v4173 = vunpack.c.l.b16 %v1222
        %v4174 = vunpack.c.h.b16 %v1222
        %v4175 = vunpack.c.l.b16 %v1223
        %v4176 = vunpack.c.h.b16 %v1223
        %v4177 = vunpack.c.l.b16 %v1224
        %v4178 = vunpack.c.h.b16 %v1224
        %v4179 = vunpack.c.l.b16 %v1225
        %v4180 = vunpack.c.h.b16 %v1225
        %v4181 = vunpack.c.l.b16 %v1226
        %v4182 = vunpack.c.h.b16 %v1226
        %v4183 = vunpack.c.l.b16 %v1227
        %v4184 = vunpack.c.h.b16 %v1227
        %v4185 = vunpack.c.l.b16 %v1228
        %v4186 = vunpack.c.h.b16 %v1228
        %v4187 = vunpack.c.l.b16 %v1229
        %v4188 = vunpack.c.h.b16 %v1229
        %v4189 = vunpack.c.l.b16 %v1230
        %v4190 = vunpack.c.h.b16 %v1230
        %v4191 = vunpack.c.l.b16 %v1231
        %v4192 = vunpack.c.h.b16 %v1231
        %v4193 = vunpack.c.l.b16 %v1232
        %v4194 = vunpack.c.h.b16 %v1232
        %v4195 = vunpack.c.l.b16 %v1233
        %v4196 = vunpack.c.h.b16 %v1233
        %v4197 = vunpack.c.l.b16 %v1234
        %v4198 = vunpack.c.h.b16 %v1234
        %v4199 = vunpack.c.l.b16 %v1235
        %v4200 = vunpack.c.h.b16 %v1235
        %v4201 = vunpack.c.l.b16 %v1236
        %v4202 = vunpack.c.h.b16 %v1236
        %v4203 = vunpack.c.l.b16 %v1237
        %v4204 = vunpack.c.h.b16 %v1237
        %v4205 = vunpack.c.l.b16 %v1238
        %v4206 = vunpack.c.h.b16 %v1238
        %v4207 = vunpack.c.l.b16 %v1239
        %v4208 = vunpack.c.h.b16 %v1239
        %v4209 = vunpack.c.l.b16 %v1240
        %v4210 = vunpack.c.h.b16 %v1240
        %v4211 = vunpack.c.l.b16 %v1241
        %v4212 = vunpack.c.h.b16 %v1241
        %v4213 = vunpack.c.l.b16 %v1242
        %v4214 = vunpack.c.h.b16 %v1242
        %v4215 = vunpack.c.l.b16 %v1243
        %v4216 = vunpack.c.h.b16 %v1243
        %v4217 = vunpack.c.l.b16 %v1244
        %v4218 = vunpack.c.h.b16 %v1244
        %v4219 = vunpack.c.l.b16 %v1245
        %v4220 = vunpack.c.h.b16 %v1245
        %v4221 = vunpack.c.l.b16 %v1246
        %v4222 = vunpack.c.h.b16 %v1246
        %v4223 = vunpack.c.l.b16 %v1247
        %v4224 = vunpack.c.h.b16 %v1247
        %v4225 = vunpack.c.l.b16 %v1248
        %v4226 = vunpack.c.h.b16 %v1248
        %v4227 = vunpack.c.l.b16 %v1249
        %v4228 = vunpack.c.h.b16 %v1249
        %v4229 = vunpack.c.l.b16 %v1250
        %v4230 = vunpack.c.h.b16 %v1250
        %v4231 = vunpack.c.l.b16 %v1251
        %v4232 = vunpack.c.h.b16 %v1251
        %v4233 = vunpack.c.l.b16 %v1252
        %v4234 = vunpack.c.h.b16 %v1252
        %v4235 = vunpack.c.l.b16 %v1253
        %v4236 = vunpack.c.h.b16 %v1253
        %v4237 = vunpack.c.l.b16 %v1254
        %v4238 = vunpack.c.h.b16 %v1254
        %v4239 = vunpack.c.l.b16 %v1255
        %v4240 = vunpack.c.h.b16 %v1255
        %v4241 = vunpack.c.l.b16 %v1256
        %v4242 = vunpack.c.h.b16 %v1256
        %v4243 = vunpack.c.l.b16 %v1257
        %v4244 = vunpack.c.h.b16 %v1257
        %v4245 = vunpack.c.l.b16 %v1258
        %v4246 = vunpack.c.h.b16 %v1258
        %v4247 = vunpack.c.l.b16 %v1259
        %v4248 = vunpack.c.h.b16 %v1259
        %v4249 = vunpack.c.l.b16 %v1260
        %v4250 = vunpack.c.h.b16 %v1260
        %v4251 = vunpack.c.l.b16 %v1261
        %v4252 = vunpack.c.h.b16 %v1261
        %v4253 = vunpack.c.l.b16 %v1262
        %v4254 = vunpack.c.h.b16 %v1262
        %v4255 = vunpack.c.l.b16 %v1263
        %v4256 = vunpack.c.h.b16 %v1263
        %v4257 = vunpack.c.l.b16 %v1264
        %v4258 = vunpack.c.h.b16 %v1264
        %v4259 = vunpack.c.l.b16 %v1265
        %v4260 = vunpack.c.h.b16 %v1265
        %v4261 = vunpack.c.l.b16 %v1266
        %v4262 = vunpack.c.h.b16 %v1266
        %v4263 = vunpack.c.l.b16 %v1267
        %v4264 = vunpack.c.h.b16 %v1267
        %v4265 = vunpack.c.l.b16 %v1268
        %v4266 = vunpack.c.h.b16 %v1268
        %v4267 = vunpack.c.l.b16 %v1269
        %v4268 = vunpack.c.h.b16 %v1269
        %v4269 = vunpack.c.l.b16 %v1270
        %v4270 = vunpack.c.h.b16 %v1270
        %v4271 = vunpack.c.l.b16 %v1271
        %v4272 = vunpack.c.h.b16 %v1271
        %v4273 = vunpack.c.l.b16 %v1272
        %v4274 = vunpack.c.h.b16 %v1272
        %v4275 = vunpack.c.l.b16 %v1273
        %v4276 = vunpack.c.h.b16 %v1273
        %v4277 = vunpack.c.l.b16 %v1274
        %v4278 = vunpack.c.h.b16 %v1274
        %v4279 = vunpack.c.l.b16 %v1275
        %v4280 = vunpack.c.h.b16 %v1275
        %v4281 = vunpack.c.l.b16 %v1276
        %v4282 = vunpack.c.h.b16 %v1276
        %v4283 = vunpack.c.l.b16 %v1277
        %v4284 = vunpack.c.h.b16 %v1277
        %v4285 = vunpack.c.l.b16 %v1278
        %v4286 = vunpack.c.h.b16 %v1278
        %v4287 = vunpack.c.l.b16 %v1279
        %v4288 = vunpack.c.h.b16 %v1279
        %v4289 = vunpack.c.l.b16 %v1280
        %v4290 = vunpack.c.h.b16 %v1280
        %v4291 = vunpack.c.l.b16 %v1281
        %v4292 = vunpack.c.h.b16 %v1281
        %v4293 = vunpack.c.l.b16 %v1282
        %v4294 = vunpack.c.h.b16 %v1282
        %v4295 = vunpack.c.l.b16 %v1283
        %v4296 = vunpack.c.h.b16 %v1283
        %v4297 = vunpack.c.l.b16 %v1284
        %v4298 = vunpack.c.h.b16 %v1284
        %v4299 = vunpack.c.l.b16 %v1285
        %v4300 = vunpack.c.h.b16 %v1285
        %v4301 = vunpack.c.l.b16 %v1286
        %v4302 = vunpack.c.h.b16 %v1286
        %v4303 = vunpack.c.l.b16 %v1287
        %v4304 = vunpack.c.h.b16 %v1287
        %v4305 = vunpack.c.l.b16 %v1288
        %v4306 = vunpack.c.h.b16 %v1288
        %v4307 = vunpack.c.l.b16 %v1289
        %v4308 = vunpack.c.h.b16 %v1289
        %v4309 = vunpack.c.l.b16 %v1290
        %v4310 = vunpack.c.h.b16 %v1290
        %v4311 = vunpack.c.l.b16 %v1291
        %v4312 = vunpack.c.h.b16 %v1291
        %v4313 = vunpack.c.l.b16 %v1292
        %v4314 = vunpack.c.h.b16 %v1292
        %v4315 = vunpack.c.l.b16 %v1293
        %v4316 = vunpack.c.h.b16 %v1293
        %v4317 = vunpack.c.l.b16 %v1294
        %v4318 = vunpack.c.h.b16 %v1294
        %v4319 = vunpack.c.l.b16 %v1295
        %v4320 = vunpack.c.h.b16 %v1295
        %v4321 = vunpack.c.l.b16 %v1296
        %v4322 = vunpack.c.h.b16 %v1296
        %v4323 = vunpack.c.l.b16 %v1297
        %v4324 = vunpack.c.h.b16 %v1297
        %v4325 = vunpack.c.l.b16 %v1298
        %v4326 = vunpack.c.h.b16 %v1298
        %v4327 = vunpack.c.l.b16 %v1299
        %v4328 = vunpack.c.h.b16 %v1299
        %v4329 = vunpack.c.l.b16 %v1300
        %v4330 = vunpack.c.h.b16 %v1300
        %v4331 = vunpack.c.l.b16 %v1301
        %v4332 = vunpack.c.h.b16 %v1301
        %v4333 = vunpack.c.l.b16 %v1302
        %v4334 = vunpack.c.h.b16 %v1302
        %v4335 = vunpack.c.l.b16 %v1303
        %v4336 = vunpack.c.h.b16 %v1303
        %v4337 = vunpack.c.l.b16 %v1304
        %v4338 = vunpack.c.h.b16 %v1304
        %v4339 = vunpack.c.l.b16 %v1305
        %v4340 = vunpack.c.h.b16 %v1305
        %v4341 = vunpack.c.l.b16 %v1306
        %v4342 = vunpack.c.h.b16 %v1306
        %v4343 = vunpack.c.l.b16 %v1307
        %v4344 = vunpack.c.h.b16 %v1307
        %v4345 = vunpack.c.l.b16 %v1308
        %v4346 = vunpack.c.h.b16 %v1308
        %v4347 = vunpack.c.l.b16 %v1309
        %v4348 = vunpack.c.h.b16 %v1309
        %v4349 = vunpack.c.l.b16 %v1310
        %v4350 = vunpack.c.h.b16 %v1310
        %v4351 = vunpack.c.l.b16 %v1311
        %v4352 = vunpack.c.h.b16 %v1311
        %v4353 = vunpack.c.l.b16 %v1312
        %v4354 = vunpack.c.h.b16 %v1312
        %v4355 = vunpack.c.l.b16 %v1313
        %v4356 = vunpack.c.h.b16 %v1313
        %v4357 = vunpack.c.l.b16 %v1314
        %v4358 = vunpack.c.h.b16 %v1314
        %v4359 = vunpack.c.l.b16 %v1315
        %v4360 = vunpack.c.h.b16 %v1315
        %v4361 = vunpack.c.l.b16 %v1316
        %v4362 = vunpack.c.h.b16 %v1316
        %v4363 = vunpack.c.l.b16 %v1317
        %v4364 = vunpack.c.h.b16 %v1317
        %v4365 = vunpack.c.l.b16 %v1318
        %v4366 = vunpack.c.h.b16 %v1318
        %v4367 = vunpack.c.l.b16 %v1319
        %v4368 = vunpack.c.h.b16 %v1319
        %v4369 = vunpack.c.l.b16 %v1320
        %v4370 = vunpack.c.h.b16 %v1320
        %v4371 = vunpack.c.l.b16 %v1321
        %v4372 = vunpack.c.h.b16 %v1321
        %v4373 = vunpack.c.l.b16 %v1322
        %v4374 = vunpack.c.h.b16 %v1322
        %v4375 = vunpack.c.l.b16 %v1323
        %v4376 = vunpack.c.h.b16 %v1323
        %v4377 = vunpack.c.l.b16 %v1324
        %v4378 = vunpack.c.h.b16 %v1324
        %v4379 = vunpack.c.l.b16 %v1325
        %v4380 = vunpack.c.h.b16 %v1325
        %v4381 = vunpack.c.l.b16 %v1326
        %v4382 = vunpack.c.h.b16 %v1326
        %v4383 = vunpack.c.l.b16 %v1327
        %v4384 = vunpack.c.h.b16 %v1327
        %v4385 = vunpack.c.l.b16 %v1328
        %v4386 = vunpack.c.h.b16 %v1328
        %v4387 = vunpack.c.l.b16 %v1329
        %v4388 = vunpack.c.h.b16 %v1329
        %v4389 = vunpack.c.l.b16 %v1330
        %v4390 = vunpack.c.h.b16 %v1330
        %v4391 = vunpack.c.l.b16 %v1331
        %v4392 = vunpack.c.h.b16 %v1331
        %v4393 = vunpack.c.l.b16 %v1332
        %v4394 = vunpack.c.h.b16 %v1332
        %v4395 = vunpack.c.l.b16 %v1333
        %v4396 = vunpack.c.h.b16 %v1333
        %v4397 = vunpack.c.l.b16 %v1334
        %v4398 = vunpack.c.h.b16 %v1334
        %v4399 = vunpack.c.l.b16 %v1335
        %v4400 = vunpack.c.h.b16 %v1335
        %v4401 = vunpack.c.l.b16 %v1336
        %v4402 = vunpack.c.h.b16 %v1336
        %v4403 = vunpack.c.l.b16 %v1337
        %v4404 = vunpack.c.h.b16 %v1337
        %v4405 = vunpack.c.l.b16 %v1338
        %v4406 = vunpack.c.h.b16 %v1338
        %v4407 = vunpack.c.l.b16 %v1339
        %v4408 = vunpack.c.h.b16 %v1339
        %v4409 = vunpack.c.l.b16 %v1340
        %v4410 = vunpack.c.h.b16 %v1340
        %v4411 = vunpack.c.l.b16 %v1341
        %v4412 = vunpack.c.h.b16 %v1341
        %v4413 = vunpack.c.l.b16 %v1342
        %v4414 = vunpack.c.h.b16 %v1342
        %v4415 = vpack.c.b16 %v2399, %v2367
        %v4416 = vpack.c.b16 %v2400, %v2368
        %v4417 = vpack.c.b16 %v2401, %v2369
        %v4418 = vpack.c.b16 %v2402, %v2370
        %v4419 = vpack.c.b16 %v2403, %v2371
        %v4420 = vpack.c.b16 %v2404, %v2372
        %v4421 = vpack.c.b16 %v2405, %v2373
        %v4422 = vpack.c.b16 %v2406, %v2374
        %v4423 = vpack.c.b16 %v2407, %v2375
        %v4424 = vpack.c.b16 %v2408, %v2376
        %v4425 = vpack.c.b16 %v2409, %v2377
        %v4426 = vpack.c.b16 %v2410, %v2378
        %v4427 = vpack.c.b16 %v2411, %v2379
        %v4428 = vpack.c.b16 %v2412, %v2380
        %v4429 = vpack.c.b16 %v2413, %v2381
        %v4430 = vpack.c.b16 %v2414, %v2382
        %v4431 = vpack.c.b16 %v2415, %v2383
        %v4432 = vpack.c.b16 %v2416, %v2384
        %v4433 = vpack.c.b16 %v2417, %v2385
        %v4434 = vpack.c.b16 %v2418, %v2386
        %v4435 = vpack.c.b16 %v2419, %v2387
        %v4436 = vpack.c.b16 %v2420, %v2388
        %v4437 = vpack.c.b16 %v2421, %v2389
        %v4438 = vpack.c.b16 %v2422, %v2390
        %v4439 = vpack.c.b16 %v2423, %v2391
        %v4440 = vpack.c.b16 %v2424, %v2392
        %v4441 = vpack.c.b16 %v2425, %v2393
        %v4442 = vpack.c.b16 %v2426, %v2394
        %v4443 = vpack.c.b16 %v2427, %v2395
        %v4444 = vpack.c.b16 %v2428, %v2396
        %v4445 = vpack.c.b16 %v2429, %v2397
        %v4446 = vpack.c.b16 %v2430, %v2398
        %v4447 = vpack.c.b16 %v2463, %v2431
        %v4448 = vpack.c.b16 %v2464, %v2432
        %v4449 = vpack.c.b16 %v2465, %v2433
        %v4450 = vpack.c.b16 %v2466, %v2434
        %v4451 = vpack.c.b16 %v2467, %v2435
        %v4452 = vpack.c.b16 %v2468, %v2436
        %v4453 = vpack.c.b16 %v2469, %v2437
        %v4454 = vpack.c.b16 %v2470, %v2438
        %v4455 = vpack.c.b16 %v2471, %v2439
        %v4456 = vpack.c.b16 %v2472, %v2440
        %v4457 = vpack.c.b16 %v2473, %v2441
        %v4458 = vpack.c.b16 %v2474, %v2442
        %v4459 = vpack.c.b16 %v2475, %v2443
        %v4460 = vpack.c.b16 %v2476, %v2444
        %v4461 = vpack.c.b16 %v2477, %v2445
        %v4462 = vpack.c.b16 %v2478, %v2446
        %v4463 = vpack.c.b16 %v2479, %v2447
        %v4464 = vpack.c.b16 %v2480, %v2448
        %v4465 = vpack.c.b16 %v2481, %v2449
        %v4466 = vpack.c.b16 %v2482, %v2450
        %v4467 = vpack.c.b16 %v2483, %v2451
        %v4468 = vpack.c.b16 %v2484, %v2452
        %v4469 = vpack.c.b16 %v2485, %v2453
        %v4470 = vpack.c.b16 %v2486, %v2454
        %v4471 = vpack.c.b16 %v2487, %v2455
        %v4472 = vpack.c.b16 %v2488, %v2456
        %v4473 = vpack.c.b16 %v2489, %v2457
        %v4474 = vpack.c.b16 %v2490, %v2458
        %v4475 = vpack.c.b16 %v2491, %v2459
        %v4476 = vpack.c.b16 %v2492, %v2460
        %v4477 = vpack.c.b16 %v2493, %v2461
        %v4478 = vpack.c.b16 %v2494, %v2462
        %v4479 = vpack.c.b16 %v2527, %v2495
        %v4480 = vpack.c.b16 %v2528, %v2496
        %v4481 = vpack.c.b16 %v2529, %v2497
        %v4482 = vpack.c.b16 %v2530, %v2498
        %v4483 = vpack.c.b16 %v2531, %v2499
        %v4484 = vpack.c.b16 %v2532, %v2500
        %v4485 = vpack.c.b16 %v2533, %v2501
        %v4486 = vpack.c.b16 %v2534, %v2502
        %v4487 = vpack.c.b16 %v2535, %v2503
        %v4488 = vpack.c.b16 %v2536, %v2504
        %v4489 = vpack.c.b16 %v2537, %v2505
        %v4490 = vpack.c.b16 %v2538, %v2506
        %v4491 = vpack.c.b16 %v2539, %v2507
        %v4492 = vpack.c.b16 %v2540, %v2508
        %v4493 = vpack.c.b16 %v2541, %v2509
        %v4494 = vpack.c.b16 %v2542, %v2510
        %v4495 = vpack.c.b16 %v2543, %v2511
        %v4496 = vpack.c.b16 %v2544, %v2512
        %v4497 = vpack.c.b16 %v2545, %v2513
        %v4498 = vpack.c.b16 %v2546, %v2514
        %v4499 = vpack.c.b16 %v2547, %v2515
        %v4500 = vpack.c.b16 %v2548, %v2516
        %v4501 = vpack.c.b16 %v2549, %v2517
        %v4502 = vpack.c.b16 %v2550, %v2518
        %v4503 = vpack.c.b16 %v2551, %v2519
        %v4504 = vpack.c.b16 %v2552, %v2520
        %v4505 = vpack.c.b16 %v2553, %v2521
        %v4506 = vpack.c.b16 %v2554, %v2522
        %v4507 = vpack.c.b16 %v2555, %v2523
        %v4508 = vpack.c.b16 %v2556, %v2524
        %v4509 = vpack.c.b16 %v2557, %v2525
        %v4510 = vpack.c.b16 %v2558, %v2526
        %v4511 = vpack.c.b16 %v2591, %v2559
        %v4512 = vpack.c.b16 %v2592, %v2560
        %v4513 = vpack.c.b16 %v2593, %v2561
        %v4514 = vpack.c.b16 %v2594, %v2562
        %v4515 = vpack.c.b16 %v2595, %v2563
        %v4516 = vpack.c.b16 %v2596, %v2564
        %v4517 = vpack.c.b16 %v2597, %v2565
        %v4518 = vpack.c.b16 %v2598, %v2566
        %v4519 = vpack.c.b16 %v2599, %v2567
        %v4520 = vpack.c.b16 %v2600, %v2568
        %v4521 = vpack.c.b16 %v2601, %v2569
        %v4522 = vpack.c.b16 %v2602, %v2570
        %v4523 = vpack.c.b16 %v2603, %v2571
        %v4524 = vpack.c.b16 %v2604, %v2572
        %v4525 = vpack.c.b16 %v2605, %v2573
        %v4526 = vpack.c.b16 %v2606, %v2574
        %v4527 = vpack.c.b16 %v2607, %v2575
        %v4528 = vpack.c.b16 %v2608, %v2576
        %v4529 = vpack.c.b16 %v2609, %v2577
        %v4530 = vpack.c.b16 %v2610, %v2578
        %v4531 = vpack.c.b16 %v2611, %v2579
        %v4532 = vpack.c.b16 %v2612, %v2580
        %v4533 = vpack.c.b16 %v2613, %v2581
        %v4534 = vpack.c.b16 %v2614, %v2582
        %v4535 = vpack.c.b16 %v2615, %v2583
        %v4536 = vpack.c.b16 %v2616, %v2584
        %v4537 = vpack.c.b16 %v2617, %v2585
        %v4538 = vpack.c.b16 %v2618, %v2586
        %v4539 = vpack.c.b16 %v2619, %v2587
        %v4540 = vpack.c.b16 %v2620, %v2588
        %v4541 = vpack.c.b16 %v2621, %v2589
        %v4542 = vpack.c.b16 %v2622, %v2590
        %v4543 = vpack.c.b16 %v2655, %v2623
        %v4544 = vpack.c.b16 %v2656, %v2624
        %v4545 = vpack.c.b16 %v2657, %v2625
        %v4546 = vpack.c.b16 %v2658, %v2626
        %v4547 = vpack.c.b16 %v2659, %v2627
        %v4548 = vpack.c.b16 %v2660, %v2628
        %v4549 = vpack.c.b16 %v2661, %v2629
        %v4550 = vpack.c.b16 %v2662, %v2630
        %v4551 = vpack.c.b16 %v2663, %v2631
        %v4552 = vpack.c.b16 %v2664, %v2632
        %v4553 = vpack.c.b16 %v2665, %v2633
        %v4554 = vpack.c.b16 %v2666, %v2634
        %v4555 = vpack.c.b16 %v2667, %v2635
        %v4556 = vpack.c.b16 %v2668, %v2636
        %v4557 = vpack.c.b16 %v2669, %v2637
        %v4558 = vpack.c.b16 %v2670, %v2638
        %v4559 = vpack.c.b16 %v2671, %v2639
        %v4560 = vpack.c.b16 %v2672, %v2640
        %v4561 = vpack.c.b16 %v2673, %v2641
        %v4562 = vpack.c.b16 %v2674, %v2642
        %v4563 = vpack.c.b16 %v2675, %v2643
        %v4564 = vpack.c.b16 %v2676, %v2644
        %v4565 = vpack.c.b16 %v2677, %v2645
        %v4566 = vpack.c.b16 %v2678, %v2646
        %v4567 = vpack.c.b16 %v2679, %v2647
        %v4568 = vpack.c.b16 %v2680, %v2648
        %v4569 = vpack.c.b16 %v2681, %v2649
        %v4570 = vpack.c.b16 %v2682, %v2650
        %v4571 = vpack.c.b16 %v2683, %v2651
        %v4572 = vpack.c.b16 %v2684, %v2652
        %v4573 = vpack.c.b16 %v2685, %v2653
        %v4574 = vpack.c.b16 %v2686, %v2654
        %v4575 = vpack.c.b16 %v2719, %v2687
        %v4576 = vpack.c.b16 %v2720, %v2688
        %v4577 = vpack.c.b16 %v2721, %v2689
        %v4578 = vpack.c.b16 %v2722, %v2690
        %v4579 = vpack.c.b16 %v2723, %v2691
        %v4580 = vpack.c.b16 %v2724, %v2692
        %v4581 = vpack.c.b16 %v2725, %v2693
        %v4582 = vpack.c.b16 %v2726, %v2694
        %v4583 = vpack.c.b16 %v2727, %v2695
        %v4584 = vpack.c.b16 %v2728, %v2696
        %v4585 = vpack.c.b16 %v2729, %v2697
        %v4586 = vpack.c.b16 %v2730, %v2698
        %v4587 = vpack.c.b16 %v2731, %v2699
        %v4588 = vpack.c.b16 %v2732, %v2700
        %v4589 = vpack.c.b16 %v2733, %v2701
        %v4590 = vpack.c.b16 %v2734, %v2702
        %v4591 = vpack.c.b16 %v2735, %v2703
        %v4592 = vpack.c.b16 %v2736, %v2704
        %v4593 = vpack.c.b16 %v2737, %v2705
        %v4594 = vpack.c.b16 %v2738, %v2706
        %v4595 = vpack.c.b16 %v2739, %v2707
        %v4596 = vpack.c.b16 %v2740, %v2708
        %v4597 = vpack.c.b16 %v2741, %v2709
        %v4598 = vpack.c.b16 %v2742, %v2710
        %v4599 = vpack.c.b16 %v2743, %v2711
        %v4600 = vpack.c.b16 %v2744, %v2712
        %v4601 = vpack.c.b16 %v2745, %v2713
        %v4602 = vpack.c.b16 %v2746, %v2714
        %v4603 = vpack.c.b16 %v2747, %v2715
        %v4604 = vpack.c.b16 %v2748, %v2716
        %v4605 = vpack.c.b16 %v2749, %v2717
        %v4606 = vpack.c.b16 %v2750, %v2718
        %v4607 = vpack.c.b16 %v2783, %v2751
        %v4608 = vpack.c.b16 %v2784, %v2752
        %v4609 = vpack.c.b16 %v2785, %v2753
        %v4610 = vpack.c.b16 %v2786, %v2754
        %v4611 = vpack.c.b16 %v2787, %v2755
        %v4612 = vpack.c.b16 %v2788, %v2756
        %v4613 = vpack.c.b16 %v2789, %v2757
        %v4614 = vpack.c.b16 %v2790, %v2758
        %v4615 = vpack.c.b16 %v2791, %v2759
        %v4616 = vpack.c.b16 %v2792, %v2760
        %v4617 = vpack.c.b16 %v2793, %v2761
        %v4618 = vpack.c.b16 %v2794, %v2762
        %v4619 = vpack.c.b16 %v2795, %v2763
        %v4620 = vpack.c.b16 %v2796, %v2764
        %v4621 = vpack.c.b16 %v2797, %v2765
        %v4622 = vpack.c.b16 %v2798, %v2766
        %v4623 = vpack.c.b16 %v2799, %v2767
        %v4624 = vpack.c.b16 %v2800, %v2768
        %v4625 = vpack.c.b16 %v2801, %v2769
        %v4626 = vpack.c.b16 %v2802, %v2770
        %v4627 = vpack.c.b16 %v2803, %v2771
        %v4628 = vpack.c.b16 %v2804, %v2772
        %v4629 = vpack.c.b16 %v2805, %v2773
        %v4630 = vpack.c.b16 %v2806, %v2774
        %v4631 = vpack.c.b16 %v2807, %v2775
        %v4632 = vpack.c.b16 %v2808, %v2776
        %v4633 = vpack.c.b16 %v2809, %v2777
        %v4634 = vpack.c.b16 %v2810, %v2778
        %v4635 = vpack.c.b16 %v2811, %v2779
        %v4636 = vpack.c.b16 %v2812, %v2780
        %v4637 = vpack.c.b16 %v2813, %v2781
        %v4638 = vpack.c.b16 %v2814, %v2782
        %v4639 = vpack.c.b16 %v2847, %v2815
        %v4640 = vpack.c.b16 %v2848, %v2816
        %v4641 = vpack.c.b16 %v2849, %v2817
        %v4642 = vpack.c.b16 %v2850, %v2818
        %v4643 = vpack.c.b16 %v2851, %v2819
        %v4644 = vpack.c.b16 %v2852, %v2820
        %v4645 = vpack.c.b16 %v2853, %v2821
        %v4646 = vpack.c.b16 %v2854, %v2822
        %v4647 = vpack.c.b16 %v2855, %v2823
        %v4648 = vpack.c.b16 %v2856, %v2824
        %v4649 = vpack.c.b16 %v2857, %v2825
        %v4650 = vpack.c.b16 %v2858, %v2826
        %v4651 = vpack.c.b16 %v2859, %v2827
        %v4652 = vpack.c.b16 %v2860, %v2828
        %v4653 = vpack.c.b16 %v2861, %v2829
        %v4654 = vpack.c.b16 %v2862, %v2830
        %v4655 = vpack.c.b16 %v2863, %v2831
        %v4656 = vpack.c.b16 %v2864, %v2832
        %v4657 = vpack.c.b16 %v2865, %v2833
        %v4658 = vpack.c.b16 %v2866, %v2834
        %v4659 = vpack.c.b16 %v2867, %v2835
        %v4660 = vpack.c.b16 %v2868, %v2836
        %v4661 = vpack.c.b16 %v2869, %v2837
        %v4662 = vpack.c.b16 %v2870, %v2838
        %v4663 = vpack.c.b16 %v2871, %v2839
        %v4664 = vpack.c.b16 %v2872, %v2840
        %v4665 = vpack.c.b16 %v2873, %v2841
        %v4666 = vpack.c.b16 %v2874, %v2842
        %v4667 = vpack.c.b16 %v2875, %v2843
        %v4668 = vpack.c.b16 %v2876, %v2844
        %v4669 = vpack.c.b16 %v2877, %v2845
        %v4670 = vpack.c.b16 %v2878, %v2846
        %v4671 = vpack.c.b16 %v2911, %v2879
        %v4672 = vpack.c.b16 %v2912, %v2880
        %v4673 = vpack.c.b16 %v2913, %v2881
        %v4674 = vpack.c.b16 %v2914, %v2882
        %v4675 = vpack.c.b16 %v2915, %v2883
        %v4676 = vpack.c.b16 %v2916, %v2884
        %v4677 = vpack.c.b16 %v2917, %v2885
        %v4678 = vpack.c.b16 %v2918, %v2886
        %v4679 = vpack.c.b16 %v2919, %v2887
        %v4680 = vpack.c.b16 %v2920, %v2888
        %v4681 = vpack.c.b16 %v2921, %v2889
        %v4682 = vpack.c.b16 %v2922, %v2890
        %v4683 = vpack.c.b16 %v2923, %v2891
        %v4684 = vpack.c.b16 %v2924, %v2892
        %v4685 = vpack.c.b16 %v2925, %v2893
        %v4686 = vpack.c.b16 %v2926, %v2894
        %v4687 = vpack.c.b16 %v2927, %v2895
        %v4688 = vpack.c.b16 %v2928, %v2896
        %v4689 = vpack.c.b16 %v2929, %v2897
        %v4690 = vpack.c.b16 %v2930, %v2898
        %v4691 = vpack.c.b16 %v2931, %v2899
        %v4692 = vpack.c.b16 %v2932, %v2900
        %v4693 = vpack.c.b16 %v2933, %v2901
        %v4694 = vpack.c.b16 %v2934, %v2902
        %v4695 = vpack.c.b16 %v2935, %v2903
        %v4696 = vpack.c.b16 %v2936, %v2904
        %v4697 = vpack.c.b16 %v2937, %v2905
        %v4698 = vpack.c.b16 %v2938, %v2906
        %v4699 = vpack.c.b16 %v2939, %v2907
        %v4700 = vpack.c.b16 %v2940, %v2908
        %v4701 = vpack.c.b16 %v2941, %v2909
        %v4702 = vpack.c.b16 %v2942, %v2910
        %v4703 = vpack.c.b16 %v2975, %v2943
        %v4704 = vpack.c.b16 %v2976, %v2944
        %v4705 = vpack.c.b16 %v2977, %v2945
        %v4706 = vpack.c.b16 %v2978, %v2946
        %v4707 = vpack.c.b16 %v2979, %v2947
        %v4708 = vpack.c.b16 %v2980, %v2948
        %v4709 = vpack.c.b16 %v2981, %v2949
        %v4710 = vpack.c.b16 %v2982, %v2950
        %v4711 = vpack.c.b16 %v2983, %v2951
        %v4712 = vpack.c.b16 %v2984, %v2952
        %v4713 = vpack.c.b16 %v2985, %v2953
        %v4714 = vpack.c.b16 %v2986, %v2954
        %v4715 = vpack.c.b16 %v2987, %v2955
        %v4716 = vpack.c.b16 %v2988, %v2956
        %v4717 = vpack.c.b16 %v2989, %v2957
        %v4718 = vpack.c.b16 %v2990, %v2958
        %v4719 = vpack.c.b16 %v2991, %v2959
        %v4720 = vpack.c.b16 %v2992, %v2960
        %v4721 = vpack.c.b16 %v2993, %v2961
        %v4722 = vpack.c.b16 %v2994, %v2962
        %v4723 = vpack.c.b16 %v2995, %v2963
        %v4724 = vpack.c.b16 %v2996, %v2964
        %v4725 = vpack.c.b16 %v2997, %v2965
        %v4726 = vpack.c.b16 %v2998, %v2966
        %v4727 = vpack.c.b16 %v2999, %v2967
        %v4728 = vpack.c.b16 %v3000, %v2968
        %v4729 = vpack.c.b16 %v3001, %v2969
        %v4730 = vpack.c.b16 %v3002, %v2970
        %v4731 = vpack.c.b16 %v3003, %v2971
        %v4732 = vpack.c.b16 %v3004, %v2972
        %v4733 = vpack.c.b16 %v3005, %v2973
        %v4734 = vpack.c.b16 %v3006, %v2974
        %v4735 = vpack.c.b16 %v3039, %v3007
        %v4736 = vpack.c.b16 %v3040, %v3008
        %v4737 = vpack.c.b16 %v3041, %v3009
        %v4738 = vpack.c.b16 %v3042, %v3010
        %v4739 = vpack.c.b16 %v3043, %v3011
        %v4740 = vpack.c.b16 %v3044, %v3012
        %v4741 = vpack.c.b16 %v3045, %v3013
        %v4742 = vpack.c.b16 %v3046, %v3014
        %v4743 = vpack.c.b16 %v3047, %v3015
        %v4744 = vpack.c.b16 %v3048, %v3016
        %v4745 = vpack.c.b16 %v3049, %v3017
        %v4746 = vpack.c.b16 %v3050, %v3018
        %v4747 = vpack.c.b16 %v3051, %v3019
        %v4748 = vpack.c.b16 %v3052, %v3020
        %v4749 = vpack.c.b16 %v3053, %v3021
        %v4750 = vpack.c.b16 %v3054, %v3022
        %v4751 = vpack.c.b16 %v3055, %v3023
        %v4752 = vpack.c.b16 %v3056, %v3024
        %v4753 = vpack.c.b16 %v3057, %v3025
        %v4754 = vpack.c.b16 %v3058, %v3026
        %v4755 = vpack.c.b16 %v3059, %v3027
        %v4756 = vpack.c.b16 %v3060, %v3028
        %v4757 = vpack.c.b16 %v3061, %v3029
        %v4758 = vpack.c.b16 %v3062, %v3030
        %v4759 = vpack.c.b16 %v3063, %v3031
        %v4760 = vpack.c.b16 %v3064, %v3032
        %v4761 = vpack.c.b16 %v3065, %v3033
        %v4762 = vpack.c.b16 %v3066, %v3034
        %v4763 = vpack.c.b16 %v3067, %v3035
        %v4764 = vpack.c.b16 %v3068, %v3036
        %v4765 = vpack.c.b16 %v3069, %v3037
        %v4766 = vpack.c.b16 %v3070, %v3038
        %v4767 = vpack.c.b16 %v3103, %v3071
        %v4768 = vpack.c.b16 %v3104, %v3072
        %v4769 = vpack.c.b16 %v3105, %v3073
        %v4770 = vpack.c.b16 %v3106, %v3074
        %v4771 = vpack.c.b16 %v3107, %v3075
        %v4772 = vpack.c.b16 %v3108, %v3076
        %v4773 = vpack.c.b16 %v3109, %v3077
        %v4774 = vpack.c.b16 %v3110, %v3078
        %v4775 = vpack.c.b16 %v3111, %v3079
        %v4776 = vpack.c.b16 %v3112, %v3080
        %v4777 = vpack.c.b16 %v3113, %v3081
        %v4778 = vpack.c.b16 %v3114, %v3082
        %v4779 = vpack.c.b16 %v3115, %v3083
        %v4780 = vpack.c.b16 %v3116, %v3084
        %v4781 = vpack.c.b16 %v3117, %v3085
        %v4782 = vpack.c.b16 %v3118, %v3086
        %v4783 = vpack.c.b16 %v3119, %v3087
        %v4784 = vpack.c.b16 %v3120, %v3088
        %v4785 = vpack.c.b16 %v3121, %v3089
        %v4786 = vpack.c.b16 %v3122, %v3090
        %v4787 = vpack.c.b16 %v3123, %v3091
        %v4788 = vpack.c.b16 %v3124, %v3092
        %v4789 = vpack.c.b16 %v3125, %v3093
        %v4790 = vpack.c.b16 %v3126, %v3094
        %v4791 = vpack.c.b16 %v3127, %v3095
        %v4792 = vpack.c.b16 %v3128, %v3096
        %v4793 = vpack.c.b16 %v3129, %v3097
        %v4794 = vpack.c.b16 %v3130, %v3098
        %v4795 = vpack.c.b16 %v3131, %v3099
        %v4796 = vpack.c.b16 %v3132, %v3100
        %v4797 = vpack.c.b16 %v3133, %v3101
        %v4798 = vpack.c.b16 %v3134, %v3102
        %v4799 = vpack.c.b16 %v3167, %v3135
        %v4800 = vpack.c.b16 %v3168, %v3136
        %v4801 = vpack.c.b16 %v3169, %v3137
        %v4802 = vpack.c.b16 %v3170, %v3138
        %v4803 = vpack.c.b16 %v3171, %v3139
        %v4804 = vpack.c.b16 %v3172, %v3140
        %v4805 = vpack.c.b16 %v3173, %v3141
        %v4806 = vpack.c.b16 %v3174, %v3142
        %v4807 = vpack.c.b16 %v3175, %v3143
        %v4808 = vpack.c.b16 %v3176, %v3144
        %v4809 = vpack.c.b16 %v3177, %v3145
        %v4810 = vpack.c.b16 %v3178, %v3146
        %v4811 = vpack.c.b16 %v3179, %v3147
        %v4812 = vpack.c.b16 %v3180, %v3148
        %v4813 = vpack.c.b16 %v3181, %v3149
        %v4814 = vpack.c.b16 %v3182, %v3150
        %v4815 = vpack.c.b16 %v3183, %v3151
        %v4816 = vpack.c.b16 %v3184, %v3152
        %v4817 = vpack.c.b16 %v3185, %v3153
        %v4818 = vpack.c.b16 %v3186, %v3154
        %v4819 = vpack.c.b16 %v3187, %v3155
        %v4820 = vpack.c.b16 %v3188, %v3156
        %v4821 = vpack.c.b16 %v3189, %v3157
        %v4822 = vpack.c.b16 %v3190, %v3158
        %v4823 = vpack.c.b16 %v3191, %v3159
        %v4824 = vpack.c.b16 %v3192, %v3160
        %v4825 = vpack.c.b16 %v3193, %v3161
        %v4826 = vpack.c.b16 %v3194, %v3162
        %v4827 = vpack.c.b16 %v3195, %v3163
        %v4828 = vpack.c.b16 %v3196, %v3164
        %v4829 = vpack.c.b16 %v3197, %v3165
        %v4830 = vpack.c.b16 %v3198, %v3166
        %v4831 = vpack.c.b16 %v3231, %v3199
        %v4832 = vpack.c.b16 %v3232, %v3200
        %v4833 = vpack.c.b16 %v3233, %v3201
        %v4834 = vpack.c.b16 %v3234, %v3202
        %v4835 = vpack.c.b16 %v3235, %v3203
        %v4836 = vpack.c.b16 %v3236, %v3204
        %v4837 = vpack.c.b16 %v3237, %v3205
        %v4838 = vpack.c.b16 %v3238, %v3206
        %v4839 = vpack.c.b16 %v3239, %v3207
        %v4840 = vpack.c.b16 %v3240, %v3208
        %v4841 = vpack.c.b16 %v3241, %v3209
        %v4842 = vpack.c.b16 %v3242, %v3210
        %v4843 = vpack.c.b16 %v3243, %v3211
        %v4844 = vpack.c.b16 %v3244, %v3212
        %v4845 = vpack.c.b16 %v3245, %v3213
        %v4846 = vpack.c.b16 %v3246, %v3214
        %v4847 = vpack.c.b16 %v3247, %v3215
        %v4848 = vpack.c.b16 %v3248, %v3216
        %v4849 = vpack.c.b16 %v3249, %v3217
        %v4850 = vpack.c.b16 %v3250, %v3218
        %v4851 = vpack.c.b16 %v3251, %v3219
        %v4852 = vpack.c.b16 %v3252, %v3220
        %v4853 = vpack.c.b16 %v3253, %v3221
        %v4854 = vpack.c.b16 %v3254, %v3222
        %v4855 = vpack.c.b16 %v3255, %v3223
        %v4856 = vpack.c.b16 %v3256, %v3224
        %v4857 = vpack.c.b16 %v3257, %v3225
        %v4858 = vpack.c.b16 %v3258, %v3226
        %v4859 = vpack.c.b16 %v3259, %v3227
        %v4860 = vpack.c.b16 %v3260, %v3228
        %v4861 = vpack.c.b16 %v3261, %v3229
        %v4862 = vpack.c.b16 %v3262, %v3230
        %v4863 = vpack.c.b16 %v3295, %v3263
        %v4864 = vpack.c.b16 %v3296, %v3264
        %v4865 = vpack.c.b16 %v3297, %v3265
        %v4866 = vpack.c.b16 %v3298, %v3266
        %v4867 = vpack.c.b16 %v3299, %v3267
        %v4868 = vpack.c.b16 %v3300, %v3268
        %v4869 = vpack.c.b16 %v3301, %v3269
        %v4870 = vpack.c.b16 %v3302, %v3270
        %v4871 = vpack.c.b16 %v3303, %v3271
        %v4872 = vpack.c.b16 %v3304, %v3272
        %v4873 = vpack.c.b16 %v3305, %v3273
        %v4874 = vpack.c.b16 %v3306, %v3274
        %v4875 = vpack.c.b16 %v3307, %v3275
        %v4876 = vpack.c.b16 %v3308, %v3276
        %v4877 = vpack.c.b16 %v3309, %v3277
        %v4878 = vpack.c.b16 %v3310, %v3278
        %v4879 = vpack.c.b16 %v3311, %v3279
        %v4880 = vpack.c.b16 %v3312, %v3280
        %v4881 = vpack.c.b16 %v3313, %v3281
        %v4882 = vpack.c.b16 %v3314, %v3282
        %v4883 = vpack.c.b16 %v3315, %v3283
        %v4884 = vpack.c.b16 %v3316, %v3284
        %v4885 = vpack.c.b16 %v3317, %v3285
        %v4886 = vpack.c.b16 %v3318, %v3286
        %v4887 = vpack.c.b16 %v3319, %v3287
        %v4888 = vpack.c.b16 %v3320, %v3288
        %v4889 = vpack.c.b16 %v3321, %v3289
        %v4890 = vpack.c.b16 %v3322, %v3290
        %v4891 = vpack.c.b16 %v3323, %v3291
        %v4892 = vpack.c.b16 %v3324, %v3292
        %v4893 = vpack.c.b16 %v3325, %v3293
        %v4894 = vpack.c.b16 %v3326, %v3294
        %v4895 = vpack.c.b16 %v3359, %v3327
        %v4896 = vpack.c.b16 %v3360, %v3328
        %v4897 = vpack.c.b16 %v3361, %v3329
        %v4898 = vpack.c.b16 %v3362, %v3330
        %v4899 = vpack.c.b16 %v3363, %v3331
        %v4900 = vpack.c.b16 %v3364, %v3332
        %v4901 = vpack.c.b16 %v3365, %v3333
        %v4902 = vpack.c.b16 %v3366, %v3334
        %v4903 = vpack.c.b16 %v3367, %v3335
        %v4904 = vpack.c.b16 %v3368, %v3336
        %v4905 = vpack.c.b16 %v3369, %v3337
        %v4906 = vpack.c.b16 %v3370, %v3338
        %v4907 = vpack.c.b16 %v3371, %v3339
        %v4908 = vpack.c.b16 %v3372, %v3340
        %v4909 = vpack.c.b16 %v3373, %v3341
        %v4910 = vpack.c.b16 %v3374, %v3342
        %v4911 = vpack.c.b16 %v3375, %v3343
        %v4912 = vpack.c.b16 %v3376, %v3344
        %v4913 = vpack.c.b16 %v3377, %v3345
        %v4914 = vpack.c.b16 %v3378, %v3346
        %v4915 = vpack.c.b16 %v3379, %v3347
        %v4916 = vpack.c.b16 %v3380, %v3348
        %v4917 = vpack.c.b16 %v3381, %v3349
        %v4918 = vpack.c.b16 %v3382, %v3350
        %v4919 = vpack.c.b16 %v3383, %v3351
        %v4920 = vpack.c.b16 %v3384, %v3352
        %v4921 = vpack.c.b16 %v3385, %v3353
        %v4922 = vpack.c.b16 %v3386, %v3354
        %v4923 = vpack.c.b16 %v3387, %v3355
        %v4924 = vpack.c.b16 %v3388, %v3356
        %v4925 = vpack.c.b16 %v3389, %v3357
        %v4926 = vpack.c.b16 %v3390, %v3358
        %v4927 = vpack.c.b16 %v3423, %v3391
        %v4928 = vpack.c.b16 %v3424, %v3392
        %v4929 = vpack.c.b16 %v3425, %v3393
        %v4930 = vpack.c.b16 %v3426, %v3394
        %v4931 = vpack.c.b16 %v3427, %v3395
        %v4932 = vpack.c.b16 %v3428, %v3396
        %v4933 = vpack.c.b16 %v3429, %v3397
        %v4934 = vpack.c.b16 %v3430, %v3398
        %v4935 = vpack.c.b16 %v3431, %v3399
        %v4936 = vpack.c.b16 %v3432, %v3400
        %v4937 = vpack.c.b16 %v3433, %v3401
        %v4938 = vpack.c.b16 %v3434, %v3402
        %v4939 = vpack.c.b16 %v3435, %v3403
        %v4940 = vpack.c.b16 %v3436, %v3404
        %v4941 = vpack.c.b16 %v3437, %v3405
        %v4942 = vpack.c.b16 %v3438, %v3406
        %v4943 = vpack.c.b16 %v3439, %v3407
        %v4944 = vpack.c.b16 %v3440, %v3408
        %v4945 = vpack.c.b16 %v3441, %v3409
        %v4946 = vpack.c.b16 %v3442, %v3410
        %v4947 = vpack.c.b16 %v3443, %v3411
        %v4948 = vpack.c.b16 %v3444, %v3412
        %v4949 = vpack.c.b16 %v3445, %v3413
        %v4950 = vpack.c.b16 %v3446, %v3414
        %v4951 = vpack.c.b16 %v3447, %v3415
        %v4952 = vpack.c.b16 %v3448, %v3416
        %v4953 = vpack.c.b16 %v3449, %v3417
        %v4954 = vpack.c.b16 %v3450, %v3418
        %v4955 = vpack.c.b16 %v3451, %v3419
        %v4956 = vpack.c.b16 %v3452, %v3420
        %v4957 = vpack.c.b16 %v3453, %v3421
        %v4958 = vpack.c.b16 %v3454, %v3422
        %v4959 = vpack.c.b16 %v3487, %v3455
        %v4960 = vpack.c.b16 %v3488, %v3456
        %v4961 = vpack.c.b16 %v3489, %v3457
        %v4962 = vpack.c.b16 %v3490, %v3458
        %v4963 = vpack.c.b16 %v3491, %v3459
        %v4964 = vpack.c.b16 %v3492, %v3460
        %v4965 = vpack.c.b16 %v3493, %v3461
        %v4966 = vpack.c.b16 %v3494, %v3462
        %v4967 = vpack.c.b16 %v3495, %v3463
        %v4968 = vpack.c.b16 %v3496, %v3464
        %v4969 = vpack.c.b16 %v3497, %v3465
        %v4970 = vpack.c.b16 %v3498, %v3466
        %v4971 = vpack.c.b16 %v3499, %v3467
        %v4972 = vpack.c.b16 %v3500, %v3468
        %v4973 = vpack.c.b16 %v3501, %v3469
        %v4974 = vpack.c.b16 %v3502, %v3470
        %v4975 = vpack.c.b16 %v3503, %v3471
        %v4976 = vpack.c.b16 %v3504, %v3472
        %v4977 = vpack.c.b16 %v3505, %v3473
        %v4978 = vpack.c.b16 %v3506, %v3474
        %v4979 = vpack.c.b16 %v3507, %v3475
        %v4980 = vpack.c.b16 %v3508, %v3476
        %v4981 = vpack.c.b16 %v3509, %v3477
        %v4982 = vpack.c.b16 %v3510, %v3478
        %v4983 = vpack.c.b16 %v3511, %v3479
        %v4984 = vpack.c.b16 %v3512, %v3480
        %v4985 = vpack.c.b16 %v3513, %v3481
        %v4986 = vpack.c.b16 %v3514, %v3482
        %v4987 = vpack.c.b16 %v3515, %v3483
        %v4988 = vpack.c.b16 %v3516, %v3484
        %v4989 = vpack.c.b16 %v3517, %v3485
        %v4990 = vpack.c.b16 %v3518, %v3486
        %v4991 = vpack.c.b16 %v3551, %v3519
        %v4992 = vpack.c.b16 %v3552, %v3520
        %v4993 = vpack.c.b16 %v3553, %v3521
        %v4994 = vpack.c.b16 %v3554, %v3522
        %v4995 = vpack.c.b16 %v3555, %v3523
        %v4996 = vpack.c.b16 %v3556, %v3524
        %v4997 = vpack.c.b16 %v3557, %v3525
        %v4998 = vpack.c.b16 %v3558, %v3526
        %v4999 = vpack.c.b16 %v3559, %v3527
        %v5000 = vpack.c.b16 %v3560, %v3528
        %v5001 = vpack.c.b16 %v3561, %v3529
        %v5002 = vpack.c.b16 %v3562, %v3530
        %v5003 = vpack.c.b16 %v3563, %v3531
        %v5004 = vpack.c.b16 %v3564, %v3532
        %v5005 = vpack.c.b16 %v3565, %v3533
        %v5006 = vpack.c.b16 %v3566, %v3534
        %v5007 = vpack.c.b16 %v3567, %v3535
        %v5008 = vpack.c.b16 %v3568, %v3536
        %v5009 = vpack.c.b16 %v3569, %v3537
        %v5010 = vpack.c.b16 %v3570, %v3538
        %v5011 = vpack.c.b16 %v3571, %v3539
        %v5012 = vpack.c.b16 %v3572, %v3540
        %v5013 = vpack.c.b16 %v3573, %v3541
        %v5014 = vpack.c.b16 %v3574, %v3542
        %v5015 = vpack.c.b16 %v3575, %v3543
        %v5016 = vpack.c.b16 %v3576, %v3544
        %v5017 = vpack.c.b16 %v3577, %v3545
        %v5018 = vpack.c.b16 %v3578, %v3546
        %v5019 = vpack.c.b16 %v3579, %v3547
        %v5020 = vpack.c.b16 %v3580, %v3548
        %v5021 = vpack.c.b16 %v3581, %v3549
        %v5022 = vpack.c.b16 %v3582, %v3550
        %v5023 = vpack.c.b16 %v3615, %v3583
        %v5024 = vpack.c.b16 %v3616, %v3584
        %v5025 = vpack.c.b16 %v3617, %v3585
        %v5026 = vpack.c.b16 %v3618, %v3586
        %v5027 = vpack.c.b16 %v3619, %v3587
        %v5028 = vpack.c.b16 %v3620, %v3588
        %v5029 = vpack.c.b16 %v3621, %v3589
        %v5030 = vpack.c.b16 %v3622, %v3590
        %v5031 = vpack.c.b16 %v3623, %v3591
        %v5032 = vpack.c.b16 %v3624, %v3592
        %v5033 = vpack.c.b16 %v3625, %v3593
        %v5034 = vpack.c.b16 %v3626, %v3594
        %v5035 = vpack.c.b16 %v3627, %v3595
        %v5036 = vpack.c.b16 %v3628, %v3596
        %v5037 = vpack.c.b16 %v3629, %v3597
        %v5038 = vpack.c.b16 %v3630, %v3598
        %v5039 = vpack.c.b16 %v3631, %v3599
        %v5040 = vpack.c.b16 %v3632, %v3600
        %v5041 = vpack.c.b16 %v3633, %v3601
        %v5042 = vpack.c.b16 %v3634, %v3602
        %v5043 = vpack.c.b16 %v3635, %v3603
        %v5044 = vpack.c.b16 %v3636, %v3604
        %v5045 = vpack.c.b16 %v3637, %v3605
        %v5046 = vpack.c.b16 %v3638, %v3606
        %v5047 = vpack.c.b16 %v3639, %v3607
        %v5048 = vpack.c.b16 %v3640, %v3608
        %v5049 = vpack.c.b16 %v3641, %v3609
        %v5050 = vpack.c.b16 %v3642, %v3610
        %v5051 = vpack.c.b16 %v3643, %v3611
        %v5052 = vpack.c.b16 %v3644, %v3612
        %v5053 = vpack.c.b16 %v3645, %v3613
        %v5054 = vpack.c.b16 %v3646, %v3614
        %v5055 = vpack.c.b16 %v3679, %v3647
        %v5056 = vpack.c.b16 %v3680, %v3648
        %v5057 = vpack.c.b16 %v3681, %v3649
        %v5058 = vpack.c.b16 %v3682, %v3650
        %v5059 = vpack.c.b16 %v3683, %v3651
        %v5060 = vpack.c.b16 %v3684, %v3652
        %v5061 = vpack.c.b16 %v3685, %v3653
        %v5062 = vpack.c.b16 %v3686, %v3654
        %v5063 = vpack.c.b16 %v3687, %v3655
        %v5064 = vpack.c.b16 %v3688, %v3656
        %v5065 = vpack.c.b16 %v3689, %v3657
        %v5066 = vpack.c.b16 %v3690, %v3658
        %v5067 = vpack.c.b16 %v3691, %v3659
        %v5068 = vpack.c.b16 %v3692, %v3660
        %v5069 = vpack.c.b16 %v3693, %v3661
        %v5070 = vpack.c.b16 %v3694, %v3662
        %v5071 = vpack.c.b16 %v3695, %v3663
        %v5072 = vpack.c.b16 %v3696, %v3664
        %v5073 = vpack.c.b16 %v3697, %v3665
        %v5074 = vpack.c.b16 %v3698, %v3666
        %v5075 = vpack.c.b16 %v3699, %v3667
        %v5076 = vpack.c.b16 %v3700, %v3668
        %v5077 = vpack.c.b16 %v3701, %v3669
        %v5078 = vpack.c.b16 %v3702, %v3670
        %v5079 = vpack.c.b16 %v3703, %v3671
        %v5080 = vpack.c.b16 %v3704, %v3672
        %v5081 = vpack.c.b16 %v3705, %v3673
        %v5082 = vpack.c.b16 %v3706, %v3674
        %v5083 = vpack.c.b16 %v3707, %v3675
        %v5084 = vpack.c.b16 %v3708, %v3676
        %v5085 = vpack.c.b16 %v3709, %v3677
        %v5086 = vpack.c.b16 %v3710, %v3678
        %v5087 = vpack.c.b16 %v3743, %v3711
        %v5088 = vpack.c.b16 %v3744, %v3712
        %v5089 = vpack.c.b16 %v3745, %v3713
        %v5090 = vpack.c.b16 %v3746, %v3714
        %v5091 = vpack.c.b16 %v3747, %v3715
        %v5092 = vpack.c.b16 %v3748, %v3716
        %v5093 = vpack.c.b16 %v3749, %v3717
        %v5094 = vpack.c.b16 %v3750, %v3718
        %v5095 = vpack.c.b16 %v3751, %v3719
        %v5096 = vpack.c.b16 %v3752, %v3720
        %v5097 = vpack.c.b16 %v3753, %v3721
        %v5098 = vpack.c.b16 %v3754, %v3722
        %v5099 = vpack.c.b16 %v3755, %v3723
        %v5100 = vpack.c.b16 %v3756, %v3724
        %v5101 = vpack.c.b16 %v3757, %v3725
        %v5102 = vpack.c.b16 %v3758, %v3726
        %v5103 = vpack.c.b16 %v3759, %v3727
        %v5104 = vpack.c.b16 %v3760, %v3728
        %v5105 = vpack.c.b16 %v3761, %v3729
        %v5106 = vpack.c.b16 %v3762, %v3730
        %v5107 = vpack.c.b16 %v3763, %v3731
        %v5108 = vpack.c.b16 %v3764, %v3732
        %v5109 = vpack.c.b16 %v3765, %v3733
        %v5110 = vpack.c.b16 %v3766, %v3734
        %v5111 = vpack.c.b16 %v3767, %v3735
        %v5112 = vpack.c.b16 %v3768, %v3736
        %v5113 = vpack.c.b16 %v3769, %v3737
        %v5114 = vpack.c.b16 %v3770, %v3738
        %v5115 = vpack.c.b16 %v3771, %v3739
        %v5116 = vpack.c.b16 %v3772, %v3740
        %v5117 = vpack.c.b16 %v3773, %v3741
        %v5118 = vpack.c.b16 %v3774, %v3742
        %v5119 = vpack.c.b16 %v3807, %v3775
        %v5120 = vpack.c.b16 %v3808, %v3776
        %v5121 = vpack.c.b16 %v3809, %v3777
        %v5122 = vpack.c.b16 %v3810, %v3778
        %v5123 = vpack.c.b16 %v3811, %v3779
        %v5124 = vpack.c.b16 %v3812, %v3780
        %v5125 = vpack.c.b16 %v3813, %v3781
        %v5126 = vpack.c.b16 %v3814, %v3782
        %v5127 = vpack.c.b16 %v3815, %v3783
        %v5128 = vpack.c.b16 %v3816, %v3784
        %v5129 = vpack.c.b16 %v3817, %v3785
        %v5130 = vpack.c.b16 %v3818, %v3786
        %v5131 = vpack.c.b16 %v3819, %v3787
        %v5132 = vpack.c.b16 %v3820, %v3788
        %v5133 = vpack.c.b16 %v3821, %v3789
        %v5134 = vpack.c.b16 %v3822, %v3790
        %v5135 = vpack.c.b16 %v3823, %v3791
        %v5136 = vpack.c.b16 %v3824, %v3792
        %v5137 = vpack.c.b16 %v3825, %v3793
        %v5138 = vpack.c.b16 %v3826, %v3794
        %v5139 = vpack.c.b16 %v3827, %v3795
        %v5140 = vpack.c.b16 %v3828, %v3796
        %v5141 = vpack.c.b16 %v3829, %v3797
        %v5142 = vpack.c.b16 %v3830, %v3798
        %v5143 = vpack.c.b16 %v3831, %v3799
        %v5144 = vpack.c.b16 %v3832, %v3800
        %v5145 = vpack.c.b16 %v3833, %v3801
        %v5146 = vpack.c.b16 %v3834, %v3802
        %v5147 = vpack.c.b16 %v3835, %v3803
        %v5148 = vpack.c.b16 %v3836, %v3804
        %v5149 = vpack.c.b16 %v3837, %v3805
        %v5150 = vpack.c.b16 %v3838, %v3806
        %v5151 = vpack.c.b16 %v3871, %v3839
        %v5152 = vpack.c.b16 %v3872, %v3840
        %v5153 = vpack.c.b16 %v3873, %v3841
        %v5154 = vpack.c.b16 %v3874, %v3842
        %v5155 = vpack.c.b16 %v3875, %v3843
        %v5156 = vpack.c.b16 %v3876, %v3844
        %v5157 = vpack.c.b16 %v3877, %v3845
        %v5158 = vpack.c.b16 %v3878, %v3846
        %v5159 = vpack.c.b16 %v3879, %v3847
        %v5160 = vpack.c.b16 %v3880, %v3848
        %v5161 = vpack.c.b16 %v3881, %v3849
        %v5162 = vpack.c.b16 %v3882, %v3850
        %v5163 = vpack.c.b16 %v3883, %v3851
        %v5164 = vpack.c.b16 %v3884, %v3852
        %v5165 = vpack.c.b16 %v3885, %v3853
        %v5166 = vpack.c.b16 %v3886, %v3854
        %v5167 = vpack.c.b16 %v3887, %v3855
        %v5168 = vpack.c.b16 %v3888, %v3856
        %v5169 = vpack.c.b16 %v3889, %v3857
        %v5170 = vpack.c.b16 %v3890, %v3858
        %v5171 = vpack.c.b16 %v3891, %v3859
        %v5172 = vpack.c.b16 %v3892, %v3860
        %v5173 = vpack.c.b16 %v3893, %v3861
        %v5174 = vpack.c.b16 %v3894, %v3862
        %v5175 = vpack.c.b16 %v3895, %v3863
        %v5176 = vpack.c.b16 %v3896, %v3864
        %v5177 = vpack.c.b16 %v3897, %v3865
        %v5178 = vpack.c.b16 %v3898, %v3866
        %v5179 = vpack.c.b16 %v3899, %v3867
        %v5180 = vpack.c.b16 %v3900, %v3868
        %v5181 = vpack.c.b16 %v3901, %v3869
        %v5182 = vpack.c.b16 %v3902, %v3870
        %v5183 = vpack.c.b16 %v3935, %v3903
        %v5184 = vpack.c.b16 %v3936, %v3904
        %v5185 = vpack.c.b16 %v3937, %v3905
        %v5186 = vpack.c.b16 %v3938, %v3906
        %v5187 = vpack.c.b16 %v3939, %v3907
        %v5188 = vpack.c.b16 %v3940, %v3908
        %v5189 = vpack.c.b16 %v3941, %v3909
        %v5190 = vpack.c.b16 %v3942, %v3910
        %v5191 = vpack.c.b16 %v3943, %v3911
        %v5192 = vpack.c.b16 %v3944, %v3912
        %v5193 = vpack.c.b16 %v3945, %v3913
        %v5194 = vpack.c.b16 %v3946, %v3914
        %v5195 = vpack.c.b16 %v3947, %v3915
        %v5196 = vpack.c.b16 %v3948, %v3916
        %v5197 = vpack.c.b16 %v3949, %v3917
        %v5198 = vpack.c.b16 %v3950, %v3918
        %v5199 = vpack.c.b16 %v3951, %v3919
        %v5200 = vpack.c.b16 %v3952, %v3920
        %v5201 = vpack.c.b16 %v3953, %v3921
        %v5202 = vpack.c.b16 %v3954, %v3922
        %v5203 = vpack.c.b16 %v3955, %v3923
        %v5204 = vpack.c.b16 %v3956, %v3924
        %v5205 = vpack.c.b16 %v3957, %v3925
        %v5206 = vpack.c.b16 %v3958, %v3926
        %v5207 = vpack.c.b16 %v3959, %v3927
        %v5208 = vpack.c.b16 %v3960, %v3928
        %v5209 = vpack.c.b16 %v3961, %v3929
        %v5210 = vpack.c.b16 %v3962, %v3930
        %v5211 = vpack.c.b16 %v3963, %v3931
        %v5212 = vpack.c.b16 %v3964, %v3932
        %v5213 = vpack.c.b16 %v3965, %v3933
        %v5214 = vpack.c.b16 %v3966, %v3934
        %v5215 = vpack.c.b16 %v3999, %v3967
        %v5216 = vpack.c.b16 %v4000, %v3968
        %v5217 = vpack.c.b16 %v4001, %v3969
        %v5218 = vpack.c.b16 %v4002, %v3970
        %v5219 = vpack.c.b16 %v4003, %v3971
        %v5220 = vpack.c.b16 %v4004, %v3972
        %v5221 = vpack.c.b16 %v4005, %v3973
        %v5222 = vpack.c.b16 %v4006, %v3974
        %v5223 = vpack.c.b16 %v4007, %v3975
        %v5224 = vpack.c.b16 %v4008, %v3976
        %v5225 = vpack.c.b16 %v4009, %v3977
        %v5226 = vpack.c.b16 %v4010, %v3978
        %v5227 = vpack.c.b16 %v4011, %v3979
        %v5228 = vpack.c.b16 %v4012, %v3980
        %v5229 = vpack.c.b16 %v4013, %v3981
        %v5230 = vpack.c.b16 %v4014, %v3982
        %v5231 = vpack.c.b16 %v4015, %v3983
        %v5232 = vpack.c.b16 %v4016, %v3984
        %v5233 = vpack.c.b16 %v4017, %v3985
        %v5234 = vpack.c.b16 %v4018, %v3986
        %v5235 = vpack.c.b16 %v4019, %v3987
        %v5236 = vpack.c.b16 %v4020, %v3988
        %v5237 = vpack.c.b16 %v4021, %v3989
        %v5238 = vpack.c.b16 %v4022, %v3990
        %v5239 = vpack.c.b16 %v4023, %v3991
        %v5240 = vpack.c.b16 %v4024, %v3992
        %v5241 = vpack.c.b16 %v4025, %v3993
        %v5242 = vpack.c.b16 %v4026, %v3994
        %v5243 = vpack.c.b16 %v4027, %v3995
        %v5244 = vpack.c.b16 %v4028, %v3996
        %v5245 = vpack.c.b16 %v4029, %v3997
        %v5246 = vpack.c.b16 %v4030, %v3998
        %v5247 = vpack.c.b16 %v4063, %v4031
        %v5248 = vpack.c.b16 %v4064, %v4032
        %v5249 = vpack.c.b16 %v4065, %v4033
        %v5250 = vpack.c.b16 %v4066, %v4034
        %v5251 = vpack.c.b16 %v4067, %v4035
        %v5252 = vpack.c.b16 %v4068, %v4036
        %v5253 = vpack.c.b16 %v4069, %v4037
        %v5254 = vpack.c.b16 %v4070, %v4038
        %v5255 = vpack.c.b16 %v4071, %v4039
        %v5256 = vpack.c.b16 %v4072, %v4040
        %v5257 = vpack.c.b16 %v4073, %v4041
        %v5258 = vpack.c.b16 %v4074, %v4042
        %v5259 = vpack.c.b16 %v4075, %v4043
        %v5260 = vpack.c.b16 %v4076, %v4044
        %v5261 = vpack.c.b16 %v4077, %v4045
        %v5262 = vpack.c.b16 %v4078, %v4046
        %v5263 = vpack.c.b16 %v4079, %v4047
        %v5264 = vpack.c.b16 %v4080, %v4048
        %v5265 = vpack.c.b16 %v4081, %v4049
        %v5266 = vpack.c.b16 %v4082, %v4050
        %v5267 = vpack.c.b16 %v4083, %v4051
        %v5268 = vpack.c.b16 %v4084, %v4052
        %v5269 = vpack.c.b16 %v4085, %v4053
        %v5270 = vpack.c.b16 %v4086, %v4054
        %v5271 = vpack.c.b16 %v4087, %v4055
        %v5272 = vpack.c.b16 %v4088, %v4056
        %v5273 = vpack.c.b16 %v4089, %v4057
        %v5274 = vpack.c.b16 %v4090, %v4058
        %v5275 = vpack.c.b16 %v4091, %v4059
        %v5276 = vpack.c.b16 %v4092, %v4060
        %v5277 = vpack.c.b16 %v4093, %v4061
        %v5278 = vpack.c.b16 %v4094, %v4062
        %v5279 = vpack.c.b16 %v4127, %v4095
        %v5280 = vpack.c.b16 %v4128, %v4096
        %v5281 = vpack.c.b16 %v4129, %v4097
        %v5282 = vpack.c.b16 %v4130, %v4098
        %v5283 = vpack.c.b16 %v4131, %v4099
        %v5284 = vpack.c.b16 %v4132, %v4100
        %v5285 = vpack.c.b16 %v4133, %v4101
        %v5286 = vpack.c.b16 %v4134, %v4102
        %v5287 = vpack.c.b16 %v4135, %v4103
        %v5288 = vpack.c.b16 %v4136, %v4104
        %v5289 = vpack.c.b16 %v4137, %v4105
        %v5290 = vpack.c.b16 %v4138, %v4106
        %v5291 = vpack.c.b16 %v4139, %v4107
        %v5292 = vpack.c.b16 %v4140, %v4108
        %v5293 = vpack.c.b16 %v4141, %v4109
        %v5294 = vpack.c.b16 %v4142, %v4110
        %v5295 = vpack.c.b16 %v4143, %v4111
        %v5296 = vpack.c.b16 %v4144, %v4112
        %v5297 = vpack.c.b16 %v4145, %v4113
        %v5298 = vpack.c.b16 %v4146, %v4114
        %v5299 = vpack.c.b16 %v4147, %v4115
        %v5300 = vpack.c.b16 %v4148, %v4116
        %v5301 = vpack.c.b16 %v4149, %v4117
        %v5302 = vpack.c.b16 %v4150, %v4118
        %v5303 = vpack.c.b16 %v4151, %v4119
        %v5304 = vpack.c.b16 %v4152, %v4120
        %v5305 = vpack.c.b16 %v4153, %v4121
        %v5306 = vpack.c.b16 %v4154, %v4122
        %v5307 = vpack.c.b16 %v4155, %v4123
        %v5308 = vpack.c.b16 %v4156, %v4124
        %v5309 = vpack.c.b16 %v4157, %v4125
        %v5310 = vpack.c.b16 %v4158, %v4126
        %v5311 = vpack.c.b16 %v4191, %v4159
        %v5312 = vpack.c.b16 %v4192, %v4160
        %v5313 = vpack.c.b16 %v4193, %v4161
        %v5314 = vpack.c.b16 %v4194, %v4162
        %v5315 = vpack.c.b16 %v4195, %v4163
        %v5316 = vpack.c.b16 %v4196, %v4164
        %v5317 = vpack.c.b16 %v4197, %v4165
        %v5318 = vpack.c.b16 %v4198, %v4166
        %v5319 = vpack.c.b16 %v4199, %v4167
        %v5320 = vpack.c.b16 %v4200, %v4168
        %v5321 = vpack.c.b16 %v4201, %v4169
        %v5322 = vpack.c.b16 %v4202, %v4170
        %v5323 = vpack.c.b16 %v4203, %v4171
        %v5324 = vpack.c.b16 %v4204, %v4172
        %v5325 = vpack.c.b16 %v4205, %v4173
        %v5326 = vpack.c.b16 %v4206, %v4174
        %v5327 = vpack.c.b16 %v4207, %v4175
        %v5328 = vpack.c.b16 %v4208, %v4176
        %v5329 = vpack.c.b16 %v4209, %v4177
        %v5330 = vpack.c.b16 %v4210, %v4178
        %v5331 = vpack.c.b16 %v4211, %v4179
        %v5332 = vpack.c.b16 %v4212, %v4180
        %v5333 = vpack.c.b16 %v4213, %v4181
        %v5334 = vpack.c.b16 %v4214, %v4182
        %v5335 = vpack.c.b16 %v4215, %v4183
        %v5336 = vpack.c.b16 %v4216, %v4184
        %v5337 = vpack.c.b16 %v4217, %v4185
        %v5338 = vpack.c.b16 %v4218, %v4186
        %v5339 = vpack.c.b16 %v4219, %v4187
        %v5340 = vpack.c.b16 %v4220, %v4188
        %v5341 = vpack.c.b16 %v4221, %v4189
        %v5342 = vpack.c.b16 %v4222, %v4190
        %v5343 = vpack.c.b16 %v4255, %v4223
        %v5344 = vpack.c.b16 %v4256, %v4224
        %v5345 = vpack.c.b16 %v4257, %v4225
        %v5346 = vpack.c.b16 %v4258, %v4226
        %v5347 = vpack.c.b16 %v4259, %v4227
        %v5348 = vpack.c.b16 %v4260, %v4228
        %v5349 = vpack.c.b16 %v4261, %v4229
        %v5350 = vpack.c.b16 %v4262, %v4230
        %v5351 = vpack.c.b16 %v4263, %v4231
        %v5352 = vpack.c.b16 %v4264, %v4232
        %v5353 = vpack.c.b16 %v4265, %v4233
        %v5354 = vpack.c.b16 %v4266, %v4234
        %v5355 = vpack.c.b16 %v4267, %v4235
        %v5356 = vpack.c.b16 %v4268, %v4236
        %v5357 = vpack.c.b16 %v4269, %v4237
        %v5358 = vpack.c.b16 %v4270, %v4238
        %v5359 = vpack.c.b16 %v4271, %v4239
        %v5360 = vpack.c.b16 %v4272, %v4240
        %v5361 = vpack.c.b16 %v4273, %v4241
        %v5362 = vpack.c.b16 %v4274, %v4242
        %v5363 = vpack.c.b16 %v4275, %v4243
        %v5364 = vpack.c.b16 %v4276, %v4244
        %v5365 = vpack.c.b16 %v4277, %v4245
        %v5366 = vpack.c.b16 %v4278, %v4246
        %v5367 = vpack.c.b16 %v4279, %v4247
        %v5368 = vpack.c.b16 %v4280, %v4248
        %v5369 = vpack.c.b16 %v4281, %v4249
        %v5370 = vpack.c.b16 %v4282, %v4250
        %v5371 = vpack.c.b16 %v4283, %v4251
        %v5372 = vpack.c.b16 %v4284, %v4252
        %v5373 = vpack.c.b16 %v4285, %v4253
        %v5374 = vpack.c.b16 %v4286, %v4254
        %v5375 = vpack.c.b16 %v4319, %v4287
        %v5376 = vpack.c.b16 %v4320, %v4288
        %v5377 = vpack.c.b16 %v4321, %v4289
        %v5378 = vpack.c.b16 %v4322, %v4290
        %v5379 = vpack.c.b16 %v4323, %v4291
        %v5380 = vpack.c.b16 %v4324, %v4292
        %v5381 = vpack.c.b16 %v4325, %v4293
        %v5382 = vpack.c.b16 %v4326, %v4294
        %v5383 = vpack.c.b16 %v4327, %v4295
        %v5384 = vpack.c.b16 %v4328, %v4296
        %v5385 = vpack.c.b16 %v4329, %v4297
        %v5386 = vpack.c.b16 %v4330, %v4298
        %v5387 = vpack.c.b16 %v4331, %v4299
        %v5388 = vpack.c.b16 %v4332, %v4300
        %v5389 = vpack.c.b16 %v4333, %v4301
        %v5390 = vpack.c.b16 %v4334, %v4302
        %v5391 = vpack.c.b16 %v4335, %v4303
        %v5392 = vpack.c.b16 %v4336, %v4304
        %v5393 = vpack.c.b16 %v4337, %v4305
        %v5394 = vpack.c.b16 %v4338, %v4306
        %v5395 = vpack.c.b16 %v4339, %v4307
        %v5396 = vpack.c.b16 %v4340, %v4308
        %v5397 = vpack.c.b16 %v4341, %v4309
        %v5398 = vpack.c.b16 %v4342, %v4310
        %v5399 = vpack.c.b16 %v4343, %v4311
        %v5400 = vpack.c.b16 %v4344, %v4312
        %v5401 = vpack.c.b16 %v4345, %v4313
        %v5402 = vpack.c.b16 %v4346, %v4314
        %v5403 = vpack.c.b16 %v4347, %v4315
        %v5404 = vpack.c.b16 %v4348, %v4316
        %v5405 = vpack.c.b16 %v4349, %v4317
        %v5406 = vpack.c.b16 %v4350, %v4318
        %v5407 = vpack.c.b16 %v4383, %v4351
        %v5408 = vpack.c.b16 %v4384, %v4352
        %v5409 = vpack.c.b16 %v4385, %v4353
        %v5410 = vpack.c.b16 %v4386, %v4354
        %v5411 = vpack.c.b16 %v4387, %v4355
        %v5412 = vpack.c.b16 %v4388, %v4356
        %v5413 = vpack.c.b16 %v4389, %v4357
        %v5414 = vpack.c.b16 %v4390, %v4358
        %v5415 = vpack.c.b16 %v4391, %v4359
        %v5416 = vpack.c.b16 %v4392, %v4360
        %v5417 = vpack.c.b16 %v4393, %v4361
        %v5418 = vpack.c.b16 %v4394, %v4362
        %v5419 = vpack.c.b16 %v4395, %v4363
        %v5420 = vpack.c.b16 %v4396, %v4364
        %v5421 = vpack.c.b16 %v4397, %v4365
        %v5422 = vpack.c.b16 %v4398, %v4366
        %v5423 = vpack.c.b16 %v4399, %v4367
        %v5424 = vpack.c.b16 %v4400, %v4368
        %v5425 = vpack.c.b16 %v4401, %v4369
        %v5426 = vpack.c.b16 %v4402, %v4370
        %v5427 = vpack.c.b16 %v4403, %v4371
        %v5428 = vpack.c.b16 %v4404, %v4372
        %v5429 = vpack.c.b16 %v4405, %v4373
        %v5430 = vpack.c.b16 %v4406, %v4374
        %v5431 = vpack.c.b16 %v4407, %v4375
        %v5432 = vpack.c.b16 %v4408, %v4376
        %v5433 = vpack.c.b16 %v4409, %v4377
        %v5434 = vpack.c.b16 %v4410, %v4378
        %v5435 = vpack.c.b16 %v4411, %v4379
        %v5436 = vpack.c.b16 %v4412, %v4380
        %v5437 = vpack.c.b16 %v4413, %v4381
        %v5438 = vpack.c.b16 %v4414, %v4382
        %6463 = vmatprep.subr.bf16.mxu0 %v4416
        %6464 = vmatpush1.bf16.msra.mxu0 %v4415
        %6465 = vmatprep.subr.bf16.mxu0 %v4448
        %6466 = vmatpush1.bf16.msra.mxu0 %v4447
        %6467 = vmatprep.subr.bf16.mxu0 %v4480
        %6468 = vmatpush1.bf16.msra.mxu0 %v4479
        %6469 = vmatprep.subr.bf16.mxu0 %v4512
        %6470 = vmatpush1.bf16.msra.mxu0 %v4511
        %6471 = vmatprep.subr.bf16.mxu0 %v4544
        %6472 = vmatpush1.bf16.msra.mxu0 %v4543
        %6473 = vmatprep.subr.bf16.mxu0 %v4576
        %6474 = vmatpush1.bf16.msra.mxu0 %v4575
        %6475 = vmatprep.subr.bf16.mxu0 %v4608
        %6476 = vmatpush1.bf16.msra.mxu0 %v4607
        %6477 = vmatprep.subr.bf16.mxu0 %v4640
        %6478 = vmatpush1.bf16.msra.mxu0 %v4639
        %6479 = vmatprep.subr.bf16.mxu0 %v4672
        %6480 = vmatpush1.bf16.msra.mxu0 %v4671
        %6481 = vmatprep.subr.bf16.mxu0 %v4704
        %6482 = vmatpush1.bf16.msra.mxu0 %v4703
        %6483 = vmatprep.subr.bf16.mxu0 %v4736
        %6484 = vmatpush1.bf16.msra.mxu0 %v4735
        %6485 = vmatprep.subr.bf16.mxu0 %v4768
        %6486 = vmatpush1.bf16.msra.mxu0 %v4767
        %6487 = vmatprep.subr.bf16.mxu0 %v4800
        %6488 = vmatpush1.bf16.msra.mxu0 %v4799
        %6489 = vmatprep.subr.bf16.mxu0 %v4832
        %6490 = vmatpush1.bf16.msra.mxu0 %v4831
        %6491 = vmatprep.subr.bf16.mxu0 %v4864
        %6492 = vmatpush1.bf16.msra.mxu0 %v4863
        %6493 = vmatprep.subr.bf16.mxu0 %v4896
        %6494 = vmatpush1.bf16.msra.mxu0 %v4895
        %6495 = vmatprep.mubr.bf16.mxu0 %v316
        %6496 = vmatmul.mubr.bf16.gmra.mrb[0].mxu0 %v315
        %v6497 = vpop.f32.mrb[0].mxu0
        %v6498 = vadd.f32 0.0, %v6497
        %v6499 = vpop.f32.mrb[0].mxu0
        %v6500 = vadd.f32 0.0, %v6499
        %v6501 = vpop.f32.mrb[0].mxu0
        %v6502 = vpop.f32.mrb[0].mxu0
        %6503 = vdwg.mxu0
        %6504 = vmatprep.subr.bf16.mxu0 %v4928
        %6505 = vmatpush1.bf16.msra.mxu0 %v4927
        %6506 = vmatprep.subr.bf16.mxu0 %v4960
        %6507 = vmatpush1.bf16.msra.mxu0 %v4959
        %6508 = vmatprep.subr.bf16.mxu0 %v4992
        %6509 = vmatpush1.bf16.msra.mxu0 %v4991
        %6510 = vmatprep.subr.bf16.mxu0 %v5024
        %6511 = vmatpush1.bf16.msra.mxu0 %v5023
        %6512 = vmatprep.subr.bf16.mxu0 %v5056
        %6513 = vmatpush1.bf16.msra.mxu0 %v5055
        %6514 = vmatprep.subr.bf16.mxu0 %v5088
        %6515 = vmatpush1.bf16.msra.mxu0 %v5087
        %6516 = vmatprep.subr.bf16.mxu0 %v5120
        %6517 = vmatpush1.bf16.msra.mxu0 %v5119
        %6518 = vmatprep.subr.bf16.mxu0 %v5152
        %6519 = vmatpush1.bf16.msra.mxu0 %v5151
        %6520 = vmatprep.subr.bf16.mxu0 %v5184
        %6521 = vmatpush1.bf16.msra.mxu0 %v5183
        %6522 = vmatprep.subr.bf16.mxu0 %v5216
        %6523 = vmatpush1.bf16.msra.mxu0 %v5215
        %6524 = vmatprep.subr.bf16.mxu0 %v5248
        %6525 = vmatpush1.bf16.msra.mxu0 %v5247
        %6526 = vmatprep.subr.bf16.mxu0 %v5280
        %6527 = vmatpush1.bf16.msra.mxu0 %v5279
        %6528 = vmatprep.subr.bf16.mxu0 %v5312
        %6529 = vmatpush1.bf16.msra.mxu0 %v5311
        %6530 = vmatprep.subr.bf16.mxu0 %v5344
        %6531 = vmatpush1.bf16.msra.mxu0 %v5343
        %6532 = vmatprep.subr.bf16.mxu0 %v5376
        %6533 = vmatpush1.bf16.msra.mxu0 %v5375
        %6534 = vmatprep.subr.bf16.mxu0 %v5408
        %6535 = vmatpush1.bf16.msra.mxu0 %v5407
        %6536 = vmatprep.mubr.bf16.mxu0 %v318
        %6537 = vmatmul.mubr.bf16.gmra.mrb[0].mxu0 %v317
        %v6538 = vpop.f32.mrb[0].mxu0
        %v6539 = vadd.f32 %v6498, %v6538
        %v6540 = vpop.f32.mrb[0].mxu0
        %v6541 = vadd.f32 %v6500, %v6540
        %v6542 = vpop.f32.mrb[0].mxu0
        %v6543 = vpop.f32.mrb[0].mxu0
        %6544 = vdwg.mxu0
        %6545 = vmatprep.subr.bf16.mxu0 %v4418
        %6546 = vmatpush1.bf16.msra.mxu0 %v4417
        %6547 = vmatprep.subr.bf16.mxu0 %v4450
        %6548 = vmatpush1.bf16.msra.mxu0 %v4449
        %6549 = vmatprep.subr.bf16.mxu0 %v4482
        %6550 = vmatpush1.bf16.msra.mxu0 %v4481
        %6551 = vmatprep.subr.bf16.mxu0 %v4514
        %6552 = vmatpush1.bf16.msra.mxu0 %v4513
        %6553 = vmatprep.subr.bf16.mxu0 %v4546
        %6554 = vmatpush1.bf16.msra.mxu0 %v4545
        %6555 = vmatprep.subr.bf16.mxu0 %v4578
        %6556 = vmatpush1.bf16.msra.mxu0 %v4577
        %6557 = vmatprep.subr.bf16.mxu0 %v4610
        %6558 = vmatpush1.bf16.msra.mxu0 %v4609
        %6559 = vmatprep.subr.bf16.mxu0 %v4642
        %6560 = vmatpush1.bf16.msra.mxu0 %v4641
        %6561 = vmatprep.subr.bf16.mxu0 %v4674
        %6562 = vmatpush1.bf16.msra.mxu0 %v4673
        %6563 = vmatprep.subr.bf16.mxu0 %v4706
        %6564 = vmatpush1.bf16.msra.mxu0 %v4705
        %6565 = vmatprep.subr.bf16.mxu0 %v4738
        %6566 = vmatpush1.bf16.msra.mxu0 %v4737
        %6567 = vmatprep.subr.bf16.mxu0 %v4770
        %6568 = vmatpush1.bf16.msra.mxu0 %v4769
        %6569 = vmatprep.subr.bf16.mxu0 %v4802
        %6570 = vmatpush1.bf16.msra.mxu0 %v4801
        %6571 = vmatprep.subr.bf16.mxu0 %v4834
        %6572 = vmatpush1.bf16.msra.mxu0 %v4833
        %6573 = vmatprep.subr.bf16.mxu0 %v4866
        %6574 = vmatpush1.bf16.msra.mxu0 %v4865
        %6575 = vmatprep.subr.bf16.mxu0 %v4898
        %6576 = vmatpush1.bf16.msra.mxu0 %v4897
        %6577 = vmatprep.mubr.bf16.mxu0 %v316
        %6578 = vmatmul.mubr.bf16.gmra.mrb[0].mxu0 %v315
        %v6579 = vpop.f32.mrb[0].mxu0
        %v6580 = vadd.f32 0.0, %v6579
        %v6581 = vpop.f32.mrb[0].mxu0
        %v6582 = vadd.f32 0.0, %v6581
        %v6583 = vpop.f32.mrb[0].mxu0
        %v6584 = vpop.f32.mrb[0].mxu0
        %6585 = vdwg.mxu0
        %6586 = vmatprep.subr.bf16.mxu0 %v4930
        %6587 = vmatpush1.bf16.msra.mxu0 %v4929
        %6588 = vmatprep.subr.bf16.mxu0 %v4962
        %6589 = vmatpush1.bf16.msra.mxu0 %v4961
        %6590 = vmatprep.subr.bf16.mxu0 %v4994
        %6591 = vmatpush1.bf16.msra.mxu0 %v4993
        %6592 = vmatprep.subr.bf16.mxu0 %v5026
        %6593 = vmatpush1.bf16.msra.mxu0 %v5025
        %6594 = vmatprep.subr.bf16.mxu0 %v5058
        %6595 = vmatpush1.bf16.msra.mxu0 %v5057
        %6596 = vmatprep.subr.bf16.mxu0 %v5090
        %6597 = vmatpush1.bf16.msra.mxu0 %v5089
        %6598 = vmatprep.subr.bf16.mxu0 %v5122
        %6599 = vmatpush1.bf16.msra.mxu0 %v5121
        %6600 = vmatprep.subr.bf16.mxu0 %v5154
        %6601 = vmatpush1.bf16.msra.mxu0 %v5153
        %6602 = vmatprep.subr.bf16.mxu0 %v5186
        %6603 = vmatpush1.bf16.msra.mxu0 %v5185
        %6604 = vmatprep.subr.bf16.mxu0 %v5218
        %6605 = vmatpush1.bf16.msra.mxu0 %v5217
        %6606 = vmatprep.subr.bf16.mxu0 %v5250
        %6607 = vmatpush1.bf16.msra.mxu0 %v5249
        %6608 = vmatprep.subr.bf16.mxu0 %v5282
        %6609 = vmatpush1.bf16.msra.mxu0 %v5281
        %6610 = vmatprep.subr.bf16.mxu0 %v5314
        %6611 = vmatpush1.bf16.msra.mxu0 %v5313
        %6612 = vmatprep.subr.bf16.mxu0 %v5346
        %6613 = vmatpush1.bf16.msra.mxu0 %v5345
        %6614 = vmatprep.subr.bf16.mxu0 %v5378
        %6615 = vmatpush1.bf16.msra.mxu0 %v5377
        %6616 = vmatprep.subr.bf16.mxu0 %v5410
        %6617 = vmatpush1.bf16.msra.mxu0 %v5409
        %6618 = vmatprep.mubr.bf16.mxu0 %v318
        %6619 = vmatmul.mubr.bf16.gmra.mrb[0].mxu0 %v317
        %v6620 = vpop.f32.mrb[0].mxu0
        %v6621 = vadd.f32 %v6580, %v6620
        %v6622 = vpop.f32.mrb[0].mxu0
        %v6623 = vadd.f32 %v6582, %v6622
        %v6624 = vpop.f32.mrb[0].mxu0
        %v6625 = vpop.f32.mrb[0].mxu0
        %6626 = vdwg.mxu0
        %6627 = vmatprep.subr.bf16.mxu0 %v4420
        %6628 = vmatpush1.bf16.msra.mxu0 %v4419
        %6629 = vmatprep.subr.bf16.mxu0 %v4452
        %6630 = vmatpush1.bf16.msra.mxu0 %v4451
        %6631 = vmatprep.subr.bf16.mxu0 %v4484
        %6632 = vmatpush1.bf16.msra.mxu0 %v4483
        %6633 = vmatprep.subr.bf16.mxu0 %v4516
        %6634 = vmatpush1.bf16.msra.mxu0 %v4515
        %6635 = vmatprep.subr.bf16.mxu0 %v4548
        %6636 = vmatpush1.bf16.msra.mxu0 %v4547
        %6637 = vmatprep.subr.bf16.mxu0 %v4580
        %6638 = vmatpush1.bf16.msra.mxu0 %v4579
        %6639 = vmatprep.subr.bf16.mxu0 %v4612
        %6640 = vmatpush1.bf16.msra.mxu0 %v4611
        %6641 = vmatprep.subr.bf16.mxu0 %v4644
        %6642 = vmatpush1.bf16.msra.mxu0 %v4643
        %6643 = vmatprep.subr.bf16.mxu0 %v4676
        %6644 = vmatpush1.bf16.msra.mxu0 %v4675
        %6645 = vmatprep.subr.bf16.mxu0 %v4708
        %6646 = vmatpush1.bf16.msra.mxu0 %v4707
        %6647 = vmatprep.subr.bf16.mxu0 %v4740
        %6648 = vmatpush1.bf16.msra.mxu0 %v4739
        %6649 = vmatprep.subr.bf16.mxu0 %v4772
        %6650 = vmatpush1.bf16.msra.mxu0 %v4771
        %6651 = vmatprep.subr.bf16.mxu0 %v4804
        %6652 = vmatpush1.bf16.msra.mxu0 %v4803
        %6653 = vmatprep.subr.bf16.mxu0 %v4836
        %6654 = vmatpush1.bf16.msra.mxu0 %v4835
        %6655 = vmatprep.subr.bf16.mxu0 %v4868
        %6656 = vmatpush1.bf16.msra.mxu0 %v4867
        %6657 = vmatprep.subr.bf16.mxu0 %v4900
        %6658 = vmatpush1.bf16.msra.mxu0 %v4899
        %6659 = vmatprep.mubr.bf16.mxu0 %v316
        %6660 = vmatmul.mubr.bf16.gmra.mrb[0].mxu0 %v315
        %v6661 = vpop.f32.mrb[0].mxu0
        %v6662 = vadd.f32 0.0, %v6661
        %v6663 = vpop.f32.mrb[0].mxu0
        %v6664 = vadd.f32 0.0, %v6663
        %v6665 = vpop.f32.mrb[0].mxu0
        %v6666 = vpop.f32.mrb[0].mxu0
        %6667 = vdwg.mxu0
        %6668 = vmatprep.subr.bf16.mxu0 %v4932
        %6669 = vmatpush1.bf16.msra.mxu0 %v4931
        %6670 = vmatprep.subr.bf16.mxu0 %v4964
        %6671 = vmatpush1.bf16.msra.mxu0 %v4963
        %6672 = vmatprep.subr.bf16.mxu0 %v4996
        %6673 = vmatpush1.bf16.msra.mxu0 %v4995
        %6674 = vmatprep.subr.bf16.mxu0 %v5028
        %6675 = vmatpush1.bf16.msra.mxu0 %v5027
        %6676 = vmatprep.subr.bf16.mxu0 %v5060
        %6677 = vmatpush1.bf16.msra.mxu0 %v5059
        %6678 = vmatprep.subr.bf16.mxu0 %v5092
        %6679 = vmatpush1.bf16.msra.mxu0 %v5091
        %6680 = vmatprep.subr.bf16.mxu0 %v5124
        %6681 = vmatpush1.bf16.msra.mxu0 %v5123
        %6682 = vmatprep.subr.bf16.mxu0 %v5156
        %6683 = vmatpush1.bf16.msra.mxu0 %v5155
        %6684 = vmatprep.subr.bf16.mxu0 %v5188
        %6685 = vmatpush1.bf16.msra.mxu0 %v5187
        %6686 = vmatprep.subr.bf16.mxu0 %v5220
        %6687 = vmatpush1.bf16.msra.mxu0 %v5219
        %6688 = vmatprep.subr.bf16.mxu0 %v5252
        %6689 = vmatpush1.bf16.msra.mxu0 %v5251
        %6690 = vmatprep.subr.bf16.mxu0 %v5284
        %6691 = vmatpush1.bf16.msra.mxu0 %v5283
        %6692 = vmatprep.subr.bf16.mxu0 %v5316
        %6693 = vmatpush1.bf16.msra.mxu0 %v5315
        %6694 = vmatprep.subr.bf16.mxu0 %v5348
        %6695 = vmatpush1.bf16.msra.mxu0 %v5347
        %6696 = vmatprep.subr.bf16.mxu0 %v5380
        %6697 = vmatpush1.bf16.msra.mxu0 %v5379
        %6698 = vmatprep.subr.bf16.mxu0 %v5412
        %6699 = vmatpush1.bf16.msra.mxu0 %v5411
        %6700 = vmatprep.mubr.bf16.mxu0 %v318
        %6701 = vmatmul.mubr.bf16.gmra.mrb[0].mxu0 %v317
        %v6702 = vpop.f32.mrb[0].mxu0
        %v6703 = vadd.f32 %v6662, %v6702
        %v6704 = vpop.f32.mrb[0].mxu0
        %v6705 = vadd.f32 %v6664, %v6704
        %v6706 = vpop.f32.mrb[0].mxu0
        %v6707 = vpop.f32.mrb[0].mxu0
        %6708 = vdwg.mxu0
        %6709 = vmatprep.subr.bf16.mxu0 %v4422
        %6710 = vmatpush1.bf16.msra.mxu0 %v4421
        %6711 = vmatprep.subr.bf16.mxu0 %v4454
        %6712 = vmatpush1.bf16.msra.mxu0 %v4453
        %6713 = vmatprep.subr.bf16.mxu0 %v4486
        %6714 = vmatpush1.bf16.msra.mxu0 %v4485
        %6715 = vmatprep.subr.bf16.mxu0 %v4518
        %6716 = vmatpush1.bf16.msra.mxu0 %v4517
        %6717 = vmatprep.subr.bf16.mxu0 %v4550
        %6718 = vmatpush1.bf16.msra.mxu0 %v4549
        %6719 = vmatprep.subr.bf16.mxu0 %v4582
        %6720 = vmatpush1.bf16.msra.mxu0 %v4581
        %6721 = vmatprep.subr.bf16.mxu0 %v4614
        %6722 = vmatpush1.bf16.msra.mxu0 %v4613
        %6723 = vmatprep.subr.bf16.mxu0 %v4646
        %6724 = vmatpush1.bf16.msra.mxu0 %v4645
        %6725 = vmatprep.subr.bf16.mxu0 %v4678
        %6726 = vmatpush1.bf16.msra.mxu0 %v4677
        %6727 = vmatprep.subr.bf16.mxu0 %v4710
        %6728 = vmatpush1.bf16.msra.mxu0 %v4709
        %6729 = vmatprep.subr.bf16.mxu0 %v4742
        %6730 = vmatpush1.bf16.msra.mxu0 %v4741
        %6731 = vmatprep.subr.bf16.mxu0 %v4774
        %6732 = vmatpush1.bf16.msra.mxu0 %v4773
        %6733 = vmatprep.subr.bf16.mxu0 %v4806
        %6734 = vmatpush1.bf16.msra.mxu0 %v4805
        %6735 = vmatprep.subr.bf16.mxu0 %v4838
        %6736 = vmatpush1.bf16.msra.mxu0 %v4837
        %6737 = vmatprep.subr.bf16.mxu0 %v4870
        %6738 = vmatpush1.bf16.msra.mxu0 %v4869
        %6739 = vmatprep.subr.bf16.mxu0 %v4902
        %6740 = vmatpush1.bf16.msra.mxu0 %v4901
        %6741 = vmatprep.mubr.bf16.mxu0 %v316
        %6742 = vmatmul.mubr.bf16.gmra.mrb[0].mxu0 %v315
        %v6743 = vpop.f32.mrb[0].mxu0
        %v6744 = vadd.f32 0.0, %v6743
        %v6745 = vpop.f32.mrb[0].mxu0
        %v6746 = vadd.f32 0.0, %v6745
        %v6747 = vpop.f32.mrb[0].mxu0
        %v6748 = vpop.f32.mrb[0].mxu0
        %6749 = vdwg.mxu0
        %6750 = vmatprep.subr.bf16.mxu0 %v4934
        %6751 = vmatpush1.bf16.msra.mxu0 %v4933
        %6752 = vmatprep.subr.bf16.mxu0 %v4966
        %6753 = vmatpush1.bf16.msra.mxu0 %v4965
        %6754 = vmatprep.subr.bf16.mxu0 %v4998
        %6755 = vmatpush1.bf16.msra.mxu0 %v4997
        %6756 = vmatprep.subr.bf16.mxu0 %v5030
        %6757 = vmatpush1.bf16.msra.mxu0 %v5029
        %6758 = vmatprep.subr.bf16.mxu0 %v5062
        %6759 = vmatpush1.bf16.msra.mxu0 %v5061
        %6760 = vmatprep.subr.bf16.mxu0 %v5094
        %6761 = vmatpush1.bf16.msra.mxu0 %v5093
        %6762 = vmatprep.subr.bf16.mxu0 %v5126
        %6763 = vmatpush1.bf16.msra.mxu0 %v5125
        %6764 = vmatprep.subr.bf16.mxu0 %v5158
        %6765 = vmatpush1.bf16.msra.mxu0 %v5157
        %6766 = vmatprep.subr.bf16.mxu0 %v5190
        %6767 = vmatpush1.bf16.msra.mxu0 %v5189
        %6768 = vmatprep.subr.bf16.mxu0 %v5222
        %6769 = vmatpush1.bf16.msra.mxu0 %v5221
        %6770 = vmatprep.subr.bf16.mxu0 %v5254
        %6771 = vmatpush1.bf16.msra.mxu0 %v5253
        %6772 = vmatprep.subr.bf16.mxu0 %v5286
        %6773 = vmatpush1.bf16.msra.mxu0 %v5285
        %6774 = vmatprep.subr.bf16.mxu0 %v5318
        %6775 = vmatpush1.bf16.msra.mxu0 %v5317
        %6776 = vmatprep.subr.bf16.mxu0 %v5350
        %6777 = vmatpush1.bf16.msra.mxu0 %v5349
        %6778 = vmatprep.subr.bf16.mxu0 %v5382
        %6779 = vmatpush1.bf16.msra.mxu0 %v5381
        %6780 = vmatprep.subr.bf16.mxu0 %v5414
        %6781 = vmatpush1.bf16.msra.mxu0 %v5413
        %6782 = vmatprep.mubr.bf16.mxu0 %v318
        %6783 = vmatmul.mubr.bf16.gmra.mrb[0].mxu0 %v317
        %v6784 = vpop.f32.mrb[0].mxu0
        %v6785 = vadd.f32 %v6744, %v6784
        %v6786 = vpop.f32.mrb[0].mxu0
        %v6787 = vadd.f32 %v6746, %v6786
        %v6788 = vpop.f32.mrb[0].mxu0
        %v6789 = vpop.f32.mrb[0].mxu0
        %6790 = vdwg.mxu0
        %6791 = vmatprep.subr.bf16.mxu0 %v4424
        %6792 = vmatpush1.bf16.msra.mxu0 %v4423
        %6793 = vmatprep.subr.bf16.mxu0 %v4456
        %6794 = vmatpush1.bf16.msra.mxu0 %v4455
        %6795 = vmatprep.subr.bf16.mxu0 %v4488
        %6796 = vmatpush1.bf16.msra.mxu0 %v4487
        %6797 = vmatprep.subr.bf16.mxu0 %v4520
        %6798 = vmatpush1.bf16.msra.mxu0 %v4519
        %6799 = vmatprep.subr.bf16.mxu0 %v4552
        %6800 = vmatpush1.bf16.msra.mxu0 %v4551
        %6801 = vmatprep.subr.bf16.mxu0 %v4584
        %6802 = vmatpush1.bf16.msra.mxu0 %v4583
        %6803 = vmatprep.subr.bf16.mxu0 %v4616
        %6804 = vmatpush1.bf16.msra.mxu0 %v4615
        %6805 = vmatprep.subr.bf16.mxu0 %v4648
        %6806 = vmatpush1.bf16.msra.mxu0 %v4647
        %6807 = vmatprep.subr.bf16.mxu0 %v4680
        %6808 = vmatpush1.bf16.msra.mxu0 %v4679
        %6809 = vmatprep.subr.bf16.mxu0 %v4712
        %6810 = vmatpush1.bf16.msra.mxu0 %v4711
        %6811 = vmatprep.subr.bf16.mxu0 %v4744
        %6812 = vmatpush1.bf16.msra.mxu0 %v4743
        %6813 = vmatprep.subr.bf16.mxu0 %v4776
        %6814 = vmatpush1.bf16.msra.mxu0 %v4775
        %6815 = vmatprep.subr.bf16.mxu0 %v4808
        %6816 = vmatpush1.bf16.msra.mxu0 %v4807
        %6817 = vmatprep.subr.bf16.mxu0 %v4840
        %6818 = vmatpush1.bf16.msra.mxu0 %v4839
        %6819 = vmatprep.subr.bf16.mxu0 %v4872
        %6820 = vmatpush1.bf16.msra.mxu0 %v4871
        %6821 = vmatprep.subr.bf16.mxu0 %v4904
        %6822 = vmatpush1.bf16.msra.mxu0 %v4903
        %6823 = vmatprep.mubr.bf16.mxu0 %v316
        %6824 = vmatmul.mubr.bf16.gmra.mrb[0].mxu0 %v315
        %v6825 = vpop.f32.mrb[0].mxu0
        %v6826 = vadd.f32 0.0, %v6825
        %v6827 = vpop.f32.mrb[0].mxu0
        %v6828 = vadd.f32 0.0, %v6827
        %v6829 = vpop.f32.mrb[0].mxu0
        %v6830 = vpop.f32.mrb[0].mxu0
        %6831 = vdwg.mxu0
        %6832 = vmatprep.subr.bf16.mxu0 %v4936
        %6833 = vmatpush1.bf16.msra.mxu0 %v4935
        %6834 = vmatprep.subr.bf16.mxu0 %v4968
        %6835 = vmatpush1.bf16.msra.mxu0 %v4967
        %6836 = vmatprep.subr.bf16.mxu0 %v5000
        %6837 = vmatpush1.bf16.msra.mxu0 %v4999
        %6838 = vmatprep.subr.bf16.mxu0 %v5032
        %6839 = vmatpush1.bf16.msra.mxu0 %v5031
        %6840 = vmatprep.subr.bf16.mxu0 %v5064
        %6841 = vmatpush1.bf16.msra.mxu0 %v5063
        %6842 = vmatprep.subr.bf16.mxu0 %v5096
        %6843 = vmatpush1.bf16.msra.mxu0 %v5095
        %6844 = vmatprep.subr.bf16.mxu0 %v5128
        %6845 = vmatpush1.bf16.msra.mxu0 %v5127
        %6846 = vmatprep.subr.bf16.mxu0 %v5160
        %6847 = vmatpush1.bf16.msra.mxu0 %v5159
        %6848 = vmatprep.subr.bf16.mxu0 %v5192
        %6849 = vmatpush1.bf16.msra.mxu0 %v5191
        %6850 = vmatprep.subr.bf16.mxu0 %v5224
        %6851 = vmatpush1.bf16.msra.mxu0 %v5223
        %6852 = vmatprep.subr.bf16.mxu0 %v5256
        %6853 = vmatpush1.bf16.msra.mxu0 %v5255
        %6854 = vmatprep.subr.bf16.mxu0 %v5288
        %6855 = vmatpush1.bf16.msra.mxu0 %v5287
        %6856 = vmatprep.subr.bf16.mxu0 %v5320
        %6857 = vmatpush1.bf16.msra.mxu0 %v5319
        %6858 = vmatprep.subr.bf16.mxu0 %v5352
        %6859 = vmatpush1.bf16.msra.mxu0 %v5351
        %6860 = vmatprep.subr.bf16.mxu0 %v5384
        %6861 = vmatpush1.bf16.msra.mxu0 %v5383
        %6862 = vmatprep.subr.bf16.mxu0 %v5416
        %6863 = vmatpush1.bf16.msra.mxu0 %v5415
        %6864 = vmatprep.mubr.bf16.mxu0 %v318
        %6865 = vmatmul.mubr.bf16.gmra.mrb[0].mxu0 %v317
        %v6866 = vpop.f32.mrb[0].mxu0
        %v6867 = vadd.f32 %v6826, %v6866
        %v6868 = vpop.f32.mrb[0].mxu0
        %v6869 = vadd.f32 %v6828, %v6868
        %v6870 = vpop.f32.mrb[0].mxu0
        %v6871 = vpop.f32.mrb[0].mxu0
        %6872 = vdwg.mxu0
        %6873 = vmatprep.subr.bf16.mxu0 %v4426
        %6874 = vmatpush1.bf16.msra.mxu0 %v4425
        %6875 = vmatprep.subr.bf16.mxu0 %v4458
        %6876 = vmatpush1.bf16.msra.mxu0 %v4457
        %6877 = vmatprep.subr.bf16.mxu0 %v4490
        %6878 = vmatpush1.bf16.msra.mxu0 %v4489
        %6879 = vmatprep.subr.bf16.mxu0 %v4522
        %6880 = vmatpush1.bf16.msra.mxu0 %v4521
        %6881 = vmatprep.subr.bf16.mxu0 %v4554
        %6882 = vmatpush1.bf16.msra.mxu0 %v4553
        %6883 = vmatprep.subr.bf16.mxu0 %v4586
        %6884 = vmatpush1.bf16.msra.mxu0 %v4585
        %6885 = vmatprep.subr.bf16.mxu0 %v4618
        %6886 = vmatpush1.bf16.msra.mxu0 %v4617
        %6887 = vmatprep.subr.bf16.mxu0 %v4650
        %6888 = vmatpush1.bf16.msra.mxu0 %v4649
        %6889 = vmatprep.subr.bf16.mxu0 %v4682
        %6890 = vmatpush1.bf16.msra.mxu0 %v4681
        %6891 = vmatprep.subr.bf16.mxu0 %v4714
        %6892 = vmatpush1.bf16.msra.mxu0 %v4713
        %6893 = vmatprep.subr.bf16.mxu0 %v4746
        %6894 = vmatpush1.bf16.msra.mxu0 %v4745
        %6895 = vmatprep.subr.bf16.mxu0 %v4778
        %6896 = vmatpush1.bf16.msra.mxu0 %v4777
        %6897 = vmatprep.subr.bf16.mxu0 %v4810
        %6898 = vmatpush1.bf16.msra.mxu0 %v4809
        %6899 = vmatprep.subr.bf16.mxu0 %v4842
        %6900 = vmatpush1.bf16.msra.mxu0 %v4841
        %6901 = vmatprep.subr.bf16.mxu0 %v4874
        %6902 = vmatpush1.bf16.msra.mxu0 %v4873
        %6903 = vmatprep.subr.bf16.mxu0 %v4906
        %6904 = vmatpush1.bf16.msra.mxu0 %v4905
        %6905 = vmatprep.mubr.bf16.mxu0 %v316
        %6906 = vmatmul.mubr.bf16.gmra.mrb[0].mxu0 %v315
        %v6907 = vpop.f32.mrb[0].mxu0
        %v6908 = vadd.f32 0.0, %v6907
        %v6909 = vpop.f32.mrb[0].mxu0
        %v6910 = vadd.f32 0.0, %v6909
        %v6911 = vpop.f32.mrb[0].mxu0
        %v6912 = vpop.f32.mrb[0].mxu0
        %6913 = vdwg.mxu0
        %6914 = vmatprep.subr.bf16.mxu0 %v4938
        %6915 = vmatpush1.bf16.msra.mxu0 %v4937
        %6916 = vmatprep.subr.bf16.mxu0 %v4970
        %6917 = vmatpush1.bf16.msra.mxu0 %v4969
        %6918 = vmatprep.subr.bf16.mxu0 %v5002
        %6919 = vmatpush1.bf16.msra.mxu0 %v5001
        %6920 = vmatprep.subr.bf16.mxu0 %v5034
        %6921 = vmatpush1.bf16.msra.mxu0 %v5033
        %6922 = vmatprep.subr.bf16.mxu0 %v5066
        %6923 = vmatpush1.bf16.msra.mxu0 %v5065
        %6924 = vmatprep.subr.bf16.mxu0 %v5098
        %6925 = vmatpush1.bf16.msra.mxu0 %v5097
        %6926 = vmatprep.subr.bf16.mxu0 %v5130
        %6927 = vmatpush1.bf16.msra.mxu0 %v5129
        %6928 = vmatprep.subr.bf16.mxu0 %v5162
        %6929 = vmatpush1.bf16.msra.mxu0 %v5161
        %6930 = vmatprep.subr.bf16.mxu0 %v5194
        %6931 = vmatpush1.bf16.msra.mxu0 %v5193
        %6932 = vmatprep.subr.bf16.mxu0 %v5226
        %6933 = vmatpush1.bf16.msra.mxu0 %v5225
        %6934 = vmatprep.subr.bf16.mxu0 %v5258
        %6935 = vmatpush1.bf16.msra.mxu0 %v5257
        %6936 = vmatprep.subr.bf16.mxu0 %v5290
        %6937 = vmatpush1.bf16.msra.mxu0 %v5289
        %6938 = vmatprep.subr.bf16.mxu0 %v5322
        %6939 = vmatpush1.bf16.msra.mxu0 %v5321
        %6940 = vmatprep.subr.bf16.mxu0 %v5354
        %6941 = vmatpush1.bf16.msra.mxu0 %v5353
        %6942 = vmatprep.subr.bf16.mxu0 %v5386
        %6943 = vmatpush1.bf16.msra.mxu0 %v5385
        %6944 = vmatprep.subr.bf16.mxu0 %v5418
        %6945 = vmatpush1.bf16.msra.mxu0 %v5417
        %6946 = vmatprep.mubr.bf16.mxu0 %v318
        %6947 = vmatmul.mubr.bf16.gmra.mrb[0].mxu0 %v317
        %v6948 = vpop.f32.mrb[0].mxu0
        %v6949 = vadd.f32 %v6908, %v6948
        %v6950 = vpop.f32.mrb[0].mxu0
        %v6951 = vadd.f32 %v6910, %v6950
        %v6952 = vpop.f32.mrb[0].mxu0
        %v6953 = vpop.f32.mrb[0].mxu0
        %6954 = vdwg.mxu0
        %6955 = vmatprep.subr.bf16.mxu0 %v4428
        %6956 = vmatpush1.bf16.msra.mxu0 %v4427
        %6957 = vmatprep.subr.bf16.mxu0 %v4460
        %6958 = vmatpush1.bf16.msra.mxu0 %v4459
        %6959 = vmatprep.subr.bf16.mxu0 %v4492
        %6960 = vmatpush1.bf16.msra.mxu0 %v4491
        %6961 = vmatprep.subr.bf16.mxu0 %v4524
        %6962 = vmatpush1.bf16.msra.mxu0 %v4523
        %6963 = vmatprep.subr.bf16.mxu0 %v4556
        %6964 = vmatpush1.bf16.msra.mxu0 %v4555
        %6965 = vmatprep.subr.bf16.mxu0 %v4588
        %6966 = vmatpush1.bf16.msra.mxu0 %v4587
        %6967 = vmatprep.subr.bf16.mxu0 %v4620
        %6968 = vmatpush1.bf16.msra.mxu0 %v4619
        %6969 = vmatprep.subr.bf16.mxu0 %v4652
        %6970 = vmatpush1.bf16.msra.mxu0 %v4651
        %6971 = vmatprep.subr.bf16.mxu0 %v4684
        %6972 = vmatpush1.bf16.msra.mxu0 %v4683
        %6973 = vmatprep.subr.bf16.mxu0 %v4716
        %6974 = vmatpush1.bf16.msra.mxu0 %v4715
        %6975 = vmatprep.subr.bf16.mxu0 %v4748
        %6976 = vmatpush1.bf16.msra.mxu0 %v4747
        %6977 = vmatprep.subr.bf16.mxu0 %v4780
        %6978 = vmatpush1.bf16.msra.mxu0 %v4779
        %6979 = vmatprep.subr.bf16.mxu0 %v4812
        %6980 = vmatpush1.bf16.msra.mxu0 %v4811
        %6981 = vmatprep.subr.bf16.mxu0 %v4844
        %6982 = vmatpush1.bf16.msra.mxu0 %v4843
        %6983 = vmatprep.subr.bf16.mxu0 %v4876
        %6984 = vmatpush1.bf16.msra.mxu0 %v4875
        %6985 = vmatprep.subr.bf16.mxu0 %v4908
        %6986 = vmatpush1.bf16.msra.mxu0 %v4907
        %6987 = vmatprep.mubr.bf16.mxu0 %v316
        %6988 = vmatmul.mubr.bf16.gmra.mrb[0].mxu0 %v315
        %v6989 = vpop.f32.mrb[0].mxu0
        %v6990 = vadd.f32 0.0, %v6989
        %v6991 = vpop.f32.mrb[0].mxu0
        %v6992 = vadd.f32 0.0, %v6991
        %v6993 = vpop.f32.mrb[0].mxu0
        %v6994 = vpop.f32.mrb[0].mxu0
        %6995 = vdwg.mxu0
        %6996 = vmatprep.subr.bf16.mxu0 %v4940
        %6997 = vmatpush1.bf16.msra.mxu0 %v4939
        %6998 = vmatprep.subr.bf16.mxu0 %v4972
        %6999 = vmatpush1.bf16.msra.mxu0 %v4971
        %7000 = vmatprep.subr.bf16.mxu0 %v5004
        %7001 = vmatpush1.bf16.msra.mxu0 %v5003
        %7002 = vmatprep.subr.bf16.mxu0 %v5036
        %7003 = vmatpush1.bf16.msra.mxu0 %v5035
        %7004 = vmatprep.subr.bf16.mxu0 %v5068
        %7005 = vmatpush1.bf16.msra.mxu0 %v5067
        %7006 = vmatprep.subr.bf16.mxu0 %v5100
        %7007 = vmatpush1.bf16.msra.mxu0 %v5099
        %7008 = vmatprep.subr.bf16.mxu0 %v5132
        %7009 = vmatpush1.bf16.msra.mxu0 %v5131
        %7010 = vmatprep.subr.bf16.mxu0 %v5164
        %7011 = vmatpush1.bf16.msra.mxu0 %v5163
        %7012 = vmatprep.subr.bf16.mxu0 %v5196
        %7013 = vmatpush1.bf16.msra.mxu0 %v5195
        %7014 = vmatprep.subr.bf16.mxu0 %v5228
        %7015 = vmatpush1.bf16.msra.mxu0 %v5227
        %7016 = vmatprep.subr.bf16.mxu0 %v5260
        %7017 = vmatpush1.bf16.msra.mxu0 %v5259
        %7018 = vmatprep.subr.bf16.mxu0 %v5292
        %7019 = vmatpush1.bf16.msra.mxu0 %v5291
        %7020 = vmatprep.subr.bf16.mxu0 %v5324
        %7021 = vmatpush1.bf16.msra.mxu0 %v5323
        %7022 = vmatprep.subr.bf16.mxu0 %v5356
        %7023 = vmatpush1.bf16.msra.mxu0 %v5355
        %7024 = vmatprep.subr.bf16.mxu0 %v5388
        %7025 = vmatpush1.bf16.msra.mxu0 %v5387
        %7026 = vmatprep.subr.bf16.mxu0 %v5420
        %7027 = vmatpush1.bf16.msra.mxu0 %v5419
        %7028 = vmatprep.mubr.bf16.mxu0 %v318
        %7029 = vmatmul.mubr.bf16.gmra.mrb[0].mxu0 %v317
        %v7030 = vpop.f32.mrb[0].mxu0
        %v7031 = vadd.f32 %v6990, %v7030
        %v7032 = vpop.f32.mrb[0].mxu0
        %v7033 = vadd.f32 %v6992, %v7032
        %v7034 = vpop.f32.mrb[0].mxu0
        %v7035 = vpop.f32.mrb[0].mxu0
        %7036 = vdwg.mxu0
        %7037 = vmatprep.subr.bf16.mxu0 %v4430
        %7038 = vmatpush1.bf16.msra.mxu0 %v4429
        %7039 = vmatprep.subr.bf16.mxu0 %v4462
        %7040 = vmatpush1.bf16.msra.mxu0 %v4461
        %7041 = vmatprep.subr.bf16.mxu0 %v4494
        %7042 = vmatpush1.bf16.msra.mxu0 %v4493
        %7043 = vmatprep.subr.bf16.mxu0 %v4526
        %7044 = vmatpush1.bf16.msra.mxu0 %v4525
        %7045 = vmatprep.subr.bf16.mxu0 %v4558
        %7046 = vmatpush1.bf16.msra.mxu0 %v4557
        %7047 = vmatprep.subr.bf16.mxu0 %v4590
        %7048 = vmatpush1.bf16.msra.mxu0 %v4589
        %7049 = vmatprep.subr.bf16.mxu0 %v4622
        %7050 = vmatpush1.bf16.msra.mxu0 %v4621
        %7051 = vmatprep.subr.bf16.mxu0 %v4654
        %7052 = vmatpush1.bf16.msra.mxu0 %v4653
        %7053 = vmatprep.subr.bf16.mxu0 %v4686
        %7054 = vmatpush1.bf16.msra.mxu0 %v4685
        %7055 = vmatprep.subr.bf16.mxu0 %v4718
        %7056 = vmatpush1.bf16.msra.mxu0 %v4717
        %7057 = vmatprep.subr.bf16.mxu0 %v4750
        %7058 = vmatpush1.bf16.msra.mxu0 %v4749
        %7059 = vmatprep.subr.bf16.mxu0 %v4782
        %7060 = vmatpush1.bf16.msra.mxu0 %v4781
        %7061 = vmatprep.subr.bf16.mxu0 %v4814
        %7062 = vmatpush1.bf16.msra.mxu0 %v4813
        %7063 = vmatprep.subr.bf16.mxu0 %v4846
        %7064 = vmatpush1.bf16.msra.mxu0 %v4845
        %7065 = vmatprep.subr.bf16.mxu0 %v4878
        %7066 = vmatpush1.bf16.msra.mxu0 %v4877
        %7067 = vmatprep.subr.bf16.mxu0 %v4910
        %7068 = vmatpush1.bf16.msra.mxu0 %v4909
        %7069 = vmatprep.mubr.bf16.mxu0 %v316
        %7070 = vmatmul.mubr.bf16.gmra.mrb[0].mxu0 %v315
        %v7071 = vpop.f32.mrb[0].mxu0
        %v7072 = vadd.f32 0.0, %v7071
        %v7073 = vpop.f32.mrb[0].mxu0
        %v7074 = vadd.f32 0.0, %v7073
        %v7075 = vpop.f32.mrb[0].mxu0
        %v7076 = vpop.f32.mrb[0].mxu0
        %7077 = vdwg.mxu0
        %7078 = vmatprep.subr.bf16.mxu0 %v4942
        %7079 = vmatpush1.bf16.msra.mxu0 %v4941
        %7080 = vmatprep.subr.bf16.mxu0 %v4974
        %7081 = vmatpush1.bf16.msra.mxu0 %v4973
        %7082 = vmatprep.subr.bf16.mxu0 %v5006
        %7083 = vmatpush1.bf16.msra.mxu0 %v5005
        %7084 = vmatprep.subr.bf16.mxu0 %v5038
        %7085 = vmatpush1.bf16.msra.mxu0 %v5037
        %7086 = vmatprep.subr.bf16.mxu0 %v5070
        %7087 = vmatpush1.bf16.msra.mxu0 %v5069
        %7088 = vmatprep.subr.bf16.mxu0 %v5102
        %7089 = vmatpush1.bf16.msra.mxu0 %v5101
        %7090 = vmatprep.subr.bf16.mxu0 %v5134
        %7091 = vmatpush1.bf16.msra.mxu0 %v5133
        %7092 = vmatprep.subr.bf16.mxu0 %v5166
        %7093 = vmatpush1.bf16.msra.mxu0 %v5165
        %7094 = vmatprep.subr.bf16.mxu0 %v5198
        %7095 = vmatpush1.bf16.msra.mxu0 %v5197
        %7096 = vmatprep.subr.bf16.mxu0 %v5230
        %7097 = vmatpush1.bf16.msra.mxu0 %v5229
        %7098 = vmatprep.subr.bf16.mxu0 %v5262
        %7099 = vmatpush1.bf16.msra.mxu0 %v5261
        %7100 = vmatprep.subr.bf16.mxu0 %v5294
        %7101 = vmatpush1.bf16.msra.mxu0 %v5293
        %7102 = vmatprep.subr.bf16.mxu0 %v5326
        %7103 = vmatpush1.bf16.msra.mxu0 %v5325
        %7104 = vmatprep.subr.bf16.mxu0 %v5358
        %7105 = vmatpush1.bf16.msra.mxu0 %v5357
        %7106 = vmatprep.subr.bf16.mxu0 %v5390
        %7107 = vmatpush1.bf16.msra.mxu0 %v5389
        %7108 = vmatprep.subr.bf16.mxu0 %v5422
        %7109 = vmatpush1.bf16.msra.mxu0 %v5421
        %7110 = vmatprep.mubr.bf16.mxu0 %v318
        %7111 = vmatmul.mubr.bf16.gmra.mrb[0].mxu0 %v317
        %v7112 = vpop.f32.mrb[0].mxu0
        %v7113 = vadd.f32 %v7072, %v7112
        %v7114 = vpop.f32.mrb[0].mxu0
        %v7115 = vadd.f32 %v7074, %v7114
        %v7116 = vpop.f32.mrb[0].mxu0
        %v7117 = vpop.f32.mrb[0].mxu0
        %7118 = vdwg.mxu0
        %7119 = vmatprep.subr.bf16.mxu0 %v4432
        %7120 = vmatpush1.bf16.msra.mxu0 %v4431
        %7121 = vmatprep.subr.bf16.mxu0 %v4464
        %7122 = vmatpush1.bf16.msra.mxu0 %v4463
        %7123 = vmatprep.subr.bf16.mxu0 %v4496
        %7124 = vmatpush1.bf16.msra.mxu0 %v4495
        %7125 = vmatprep.subr.bf16.mxu0 %v4528
        %7126 = vmatpush1.bf16.msra.mxu0 %v4527
        %7127 = vmatprep.subr.bf16.mxu0 %v4560
        %7128 = vmatpush1.bf16.msra.mxu0 %v4559
        %7129 = vmatprep.subr.bf16.mxu0 %v4592
        %7130 = vmatpush1.bf16.msra.mxu0 %v4591
        %7131 = vmatprep.subr.bf16.mxu0 %v4624
        %7132 = vmatpush1.bf16.msra.mxu0 %v4623
        %7133 = vmatprep.subr.bf16.mxu0 %v4656
        %7134 = vmatpush1.bf16.msra.mxu0 %v4655
        %7135 = vmatprep.subr.bf16.mxu0 %v4688
        %7136 = vmatpush1.bf16.msra.mxu0 %v4687
        %7137 = vmatprep.subr.bf16.mxu0 %v4720
        %7138 = vmatpush1.bf16.msra.mxu0 %v4719
        %7139 = vmatprep.subr.bf16.mxu0 %v4752
        %7140 = vmatpush1.bf16.msra.mxu0 %v4751
        %7141 = vmatprep.subr.bf16.mxu0 %v4784
        %7142 = vmatpush1.bf16.msra.mxu0 %v4783
        %7143 = vmatprep.subr.bf16.mxu0 %v4816
        %7144 = vmatpush1.bf16.msra.mxu0 %v4815
        %7145 = vmatprep.subr.bf16.mxu0 %v4848
        %7146 = vmatpush1.bf16.msra.mxu0 %v4847
        %7147 = vmatprep.subr.bf16.mxu0 %v4880
        %7148 = vmatpush1.bf16.msra.mxu0 %v4879
        %7149 = vmatprep.subr.bf16.mxu0 %v4912
        %7150 = vmatpush1.bf16.msra.mxu0 %v4911
        %7151 = vmatprep.mubr.bf16.mxu0 %v316
        %7152 = vmatmul.mubr.bf16.gmra.mrb[0].mxu0 %v315
        %v7153 = vpop.f32.mrb[0].mxu0
        %v7154 = vadd.f32 0.0, %v7153
        %v7155 = vpop.f32.mrb[0].mxu0
        %v7156 = vadd.f32 0.0, %v7155
        %v7157 = vpop.f32.mrb[0].mxu0
        %v7158 = vpop.f32.mrb[0].mxu0
        %7159 = vdwg.mxu0
        %7160 = vmatprep.subr.bf16.mxu0 %v4944
        %7161 = vmatpush1.bf16.msra.mxu0 %v4943
        %7162 = vmatprep.subr.bf16.mxu0 %v4976
        %7163 = vmatpush1.bf16.msra.mxu0 %v4975
        %7164 = vmatprep.subr.bf16.mxu0 %v5008
        %7165 = vmatpush1.bf16.msra.mxu0 %v5007
        %7166 = vmatprep.subr.bf16.mxu0 %v5040
        %7167 = vmatpush1.bf16.msra.mxu0 %v5039
        %7168 = vmatprep.subr.bf16.mxu0 %v5072
        %7169 = vmatpush1.bf16.msra.mxu0 %v5071
        %7170 = vmatprep.subr.bf16.mxu0 %v5104
        %7171 = vmatpush1.bf16.msra.mxu0 %v5103
        %7172 = vmatprep.subr.bf16.mxu0 %v5136
        %7173 = vmatpush1.bf16.msra.mxu0 %v5135
        %7174 = vmatprep.subr.bf16.mxu0 %v5168
        %7175 = vmatpush1.bf16.msra.mxu0 %v5167
        %7176 = vmatprep.subr.bf16.mxu0 %v5200
        %7177 = vmatpush1.bf16.msra.mxu0 %v5199
        %7178 = vmatprep.subr.bf16.mxu0 %v5232
        %7179 = vmatpush1.bf16.msra.mxu0 %v5231
        %7180 = vmatprep.subr.bf16.mxu0 %v5264
        %7181 = vmatpush1.bf16.msra.mxu0 %v5263
        %7182 = vmatprep.subr.bf16.mxu0 %v5296
        %7183 = vmatpush1.bf16.msra.mxu0 %v5295
        %7184 = vmatprep.subr.bf16.mxu0 %v5328
        %7185 = vmatpush1.bf16.msra.mxu0 %v5327
        %7186 = vmatprep.subr.bf16.mxu0 %v5360
        %7187 = vmatpush1.bf16.msra.mxu0 %v5359
        %7188 = vmatprep.subr.bf16.mxu0 %v5392
        %7189 = vmatpush1.bf16.msra.mxu0 %v5391
        %7190 = vmatprep.subr.bf16.mxu0 %v5424
        %7191 = vmatpush1.bf16.msra.mxu0 %v5423
        %7192 = vmatprep.mubr.bf16.mxu0 %v318
        %7193 = vmatmul.mubr.bf16.gmra.mrb[0].mxu0 %v317
        %v7194 = vpop.f32.mrb[0].mxu0
        %v7195 = vadd.f32 %v7154, %v7194
        %v7196 = vpop.f32.mrb[0].mxu0
        %v7197 = vadd.f32 %v7156, %v7196
        %v7198 = vpop.f32.mrb[0].mxu0
        %v7199 = vpop.f32.mrb[0].mxu0
        %7200 = vdwg.mxu0
        %7201 = vmatprep.subr.bf16.mxu0 %v4434
        %7202 = vmatpush1.bf16.msra.mxu0 %v4433
        %7203 = vmatprep.subr.bf16.mxu0 %v4466
        %7204 = vmatpush1.bf16.msra.mxu0 %v4465
        %7205 = vmatprep.subr.bf16.mxu0 %v4498
        %7206 = vmatpush1.bf16.msra.mxu0 %v4497
        %7207 = vmatprep.subr.bf16.mxu0 %v4530
        %7208 = vmatpush1.bf16.msra.mxu0 %v4529
        %7209 = vmatprep.subr.bf16.mxu0 %v4562
        %7210 = vmatpush1.bf16.msra.mxu0 %v4561
        %7211 = vmatprep.subr.bf16.mxu0 %v4594
        %7212 = vmatpush1.bf16.msra.mxu0 %v4593
        %7213 = vmatprep.subr.bf16.mxu0 %v4626
        %7214 = vmatpush1.bf16.msra.mxu0 %v4625
        %7215 = vmatprep.subr.bf16.mxu0 %v4658
        %7216 = vmatpush1.bf16.msra.mxu0 %v4657
        %7217 = vmatprep.subr.bf16.mxu0 %v4690
        %7218 = vmatpush1.bf16.msra.mxu0 %v4689
        %7219 = vmatprep.subr.bf16.mxu0 %v4722
        %7220 = vmatpush1.bf16.msra.mxu0 %v4721
        %7221 = vmatprep.subr.bf16.mxu0 %v4754
        %7222 = vmatpush1.bf16.msra.mxu0 %v4753
        %7223 = vmatprep.subr.bf16.mxu0 %v4786
        %7224 = vmatpush1.bf16.msra.mxu0 %v4785
        %7225 = vmatprep.subr.bf16.mxu0 %v4818
        %7226 = vmatpush1.bf16.msra.mxu0 %v4817
        %7227 = vmatprep.subr.bf16.mxu0 %v4850
        %7228 = vmatpush1.bf16.msra.mxu0 %v4849
        %7229 = vmatprep.subr.bf16.mxu0 %v4882
        %7230 = vmatpush1.bf16.msra.mxu0 %v4881
        %7231 = vmatprep.subr.bf16.mxu0 %v4914
        %7232 = vmatpush1.bf16.msra.mxu0 %v4913
        %7233 = vmatprep.mubr.bf16.mxu0 %v316
        %7234 = vmatmul.mubr.bf16.gmra.mrb[0].mxu0 %v315
        %v7235 = vpop.f32.mrb[0].mxu0
        %v7236 = vadd.f32 0.0, %v7235
        %v7237 = vpop.f32.mrb[0].mxu0
        %v7238 = vadd.f32 0.0, %v7237
        %v7239 = vpop.f32.mrb[0].mxu0
        %v7240 = vpop.f32.mrb[0].mxu0
        %7241 = vdwg.mxu0
        %7242 = vmatprep.subr.bf16.mxu0 %v4946
        %7243 = vmatpush1.bf16.msra.mxu0 %v4945
        %7244 = vmatprep.subr.bf16.mxu0 %v4978
        %7245 = vmatpush1.bf16.msra.mxu0 %v4977
        %7246 = vmatprep.subr.bf16.mxu0 %v5010
        %7247 = vmatpush1.bf16.msra.mxu0 %v5009
        %7248 = vmatprep.subr.bf16.mxu0 %v5042
        %7249 = vmatpush1.bf16.msra.mxu0 %v5041
        %7250 = vmatprep.subr.bf16.mxu0 %v5074
        %7251 = vmatpush1.bf16.msra.mxu0 %v5073
        %7252 = vmatprep.subr.bf16.mxu0 %v5106
        %7253 = vmatpush1.bf16.msra.mxu0 %v5105
        %7254 = vmatprep.subr.bf16.mxu0 %v5138
        %7255 = vmatpush1.bf16.msra.mxu0 %v5137
        %7256 = vmatprep.subr.bf16.mxu0 %v5170
        %7257 = vmatpush1.bf16.msra.mxu0 %v5169
        %7258 = vmatprep.subr.bf16.mxu0 %v5202
        %7259 = vmatpush1.bf16.msra.mxu0 %v5201
        %7260 = vmatprep.subr.bf16.mxu0 %v5234
        %7261 = vmatpush1.bf16.msra.mxu0 %v5233
        %7262 = vmatprep.subr.bf16.mxu0 %v5266
        %7263 = vmatpush1.bf16.msra.mxu0 %v5265
        %7264 = vmatprep.subr.bf16.mxu0 %v5298
        %7265 = vmatpush1.bf16.msra.mxu0 %v5297
        %7266 = vmatprep.subr.bf16.mxu0 %v5330
        %7267 = vmatpush1.bf16.msra.mxu0 %v5329
        %7268 = vmatprep.subr.bf16.mxu0 %v5362
        %7269 = vmatpush1.bf16.msra.mxu0 %v5361
        %7270 = vmatprep.subr.bf16.mxu0 %v5394
        %7271 = vmatpush1.bf16.msra.mxu0 %v5393
        %7272 = vmatprep.subr.bf16.mxu0 %v5426
        %7273 = vmatpush1.bf16.msra.mxu0 %v5425
        %7274 = vmatprep.mubr.bf16.mxu0 %v318
        %7275 = vmatmul.mubr.bf16.gmra.mrb[0].mxu0 %v317
        %v7276 = vpop.f32.mrb[0].mxu0
        %v7277 = vadd.f32 %v7236, %v7276
        %v7278 = vpop.f32.mrb[0].mxu0
        %v7279 = vadd.f32 %v7238, %v7278
        %v7280 = vpop.f32.mrb[0].mxu0
        %v7281 = vpop.f32.mrb[0].mxu0
        %7282 = vdwg.mxu0
        %7283 = vmatprep.subr.bf16.mxu0 %v4436
        %7284 = vmatpush1.bf16.msra.mxu0 %v4435
        %7285 = vmatprep.subr.bf16.mxu0 %v4468
        %7286 = vmatpush1.bf16.msra.mxu0 %v4467
        %7287 = vmatprep.subr.bf16.mxu0 %v4500
        %7288 = vmatpush1.bf16.msra.mxu0 %v4499
        %7289 = vmatprep.subr.bf16.mxu0 %v4532
        %7290 = vmatpush1.bf16.msra.mxu0 %v4531
        %7291 = vmatprep.subr.bf16.mxu0 %v4564
        %7292 = vmatpush1.bf16.msra.mxu0 %v4563
        %7293 = vmatprep.subr.bf16.mxu0 %v4596
        %7294 = vmatpush1.bf16.msra.mxu0 %v4595
        %7295 = vmatprep.subr.bf16.mxu0 %v4628
        %7296 = vmatpush1.bf16.msra.mxu0 %v4627
        %7297 = vmatprep.subr.bf16.mxu0 %v4660
        %7298 = vmatpush1.bf16.msra.mxu0 %v4659
        %7299 = vmatprep.subr.bf16.mxu0 %v4692
        %7300 = vmatpush1.bf16.msra.mxu0 %v4691
        %7301 = vmatprep.subr.bf16.mxu0 %v4724
        %7302 = vmatpush1.bf16.msra.mxu0 %v4723
        %7303 = vmatprep.subr.bf16.mxu0 %v4756
        %7304 = vmatpush1.bf16.msra.mxu0 %v4755
        %7305 = vmatprep.subr.bf16.mxu0 %v4788
        %7306 = vmatpush1.bf16.msra.mxu0 %v4787
        %7307 = vmatprep.subr.bf16.mxu0 %v4820
        %7308 = vmatpush1.bf16.msra.mxu0 %v4819
        %7309 = vmatprep.subr.bf16.mxu0 %v4852
        %7310 = vmatpush1.bf16.msra.mxu0 %v4851
        %7311 = vmatprep.subr.bf16.mxu0 %v4884
        %7312 = vmatpush1.bf16.msra.mxu0 %v4883
        %7313 = vmatprep.subr.bf16.mxu0 %v4916
        %7314 = vmatpush1.bf16.msra.mxu0 %v4915
        %7315 = vmatprep.mubr.bf16.mxu0 %v316
        %7316 = vmatmul.mubr.bf16.gmra.mrb[0].mxu0 %v315
        %v7317 = vpop.f32.mrb[0].mxu0
        %v7318 = vadd.f32 0.0, %v7317
        %v7319 = vpop.f32.mrb[0].mxu0
        %v7320 = vadd.f32 0.0, %v7319
        %v7321 = vpop.f32.mrb[0].mxu0
        %v7322 = vpop.f32.mrb[0].mxu0
        %7323 = vdwg.mxu0
        %7324 = vmatprep.subr.bf16.mxu0 %v4948
        %7325 = vmatpush1.bf16.msra.mxu0 %v4947
        %7326 = vmatprep.subr.bf16.mxu0 %v4980
        %7327 = vmatpush1.bf16.msra.mxu0 %v4979
        %7328 = vmatprep.subr.bf16.mxu0 %v5012
        %7329 = vmatpush1.bf16.msra.mxu0 %v5011
        %7330 = vmatprep.subr.bf16.mxu0 %v5044
        %7331 = vmatpush1.bf16.msra.mxu0 %v5043
        %7332 = vmatprep.subr.bf16.mxu0 %v5076
        %7333 = vmatpush1.bf16.msra.mxu0 %v5075
        %7334 = vmatprep.subr.bf16.mxu0 %v5108
        %7335 = vmatpush1.bf16.msra.mxu0 %v5107
        %7336 = vmatprep.subr.bf16.mxu0 %v5140
        %7337 = vmatpush1.bf16.msra.mxu0 %v5139
        %7338 = vmatprep.subr.bf16.mxu0 %v5172
        %7339 = vmatpush1.bf16.msra.mxu0 %v5171
        %7340 = vmatprep.subr.bf16.mxu0 %v5204
        %7341 = vmatpush1.bf16.msra.mxu0 %v5203
        %7342 = vmatprep.subr.bf16.mxu0 %v5236
        %7343 = vmatpush1.bf16.msra.mxu0 %v5235
        %7344 = vmatprep.subr.bf16.mxu0 %v5268
        %7345 = vmatpush1.bf16.msra.mxu0 %v5267
        %7346 = vmatprep.subr.bf16.mxu0 %v5300
        %7347 = vmatpush1.bf16.msra.mxu0 %v5299
        %7348 = vmatprep.subr.bf16.mxu0 %v5332
        %7349 = vmatpush1.bf16.msra.mxu0 %v5331
        %7350 = vmatprep.subr.bf16.mxu0 %v5364
        %7351 = vmatpush1.bf16.msra.mxu0 %v5363
        %7352 = vmatprep.subr.bf16.mxu0 %v5396
        %7353 = vmatpush1.bf16.msra.mxu0 %v5395
        %7354 = vmatprep.subr.bf16.mxu0 %v5428
        %7355 = vmatpush1.bf16.msra.mxu0 %v5427
        %7356 = vmatprep.mubr.bf16.mxu0 %v318
        %7357 = vmatmul.mubr.bf16.gmra.mrb[0].mxu0 %v317
        %v7358 = vpop.f32.mrb[0].mxu0
        %v7359 = vadd.f32 %v7318, %v7358
        %v7360 = vpop.f32.mrb[0].mxu0
        %v7361 = vadd.f32 %v7320, %v7360
        %v7362 = vpop.f32.mrb[0].mxu0
        %v7363 = vpop.f32.mrb[0].mxu0
        %7364 = vdwg.mxu0
        %7365 = vmatprep.subr.bf16.mxu0 %v4438
        %7366 = vmatpush1.bf16.msra.mxu0 %v4437
        %7367 = vmatprep.subr.bf16.mxu0 %v4470
        %7368 = vmatpush1.bf16.msra.mxu0 %v4469
        %7369 = vmatprep.subr.bf16.mxu0 %v4502
        %7370 = vmatpush1.bf16.msra.mxu0 %v4501
        %7371 = vmatprep.subr.bf16.mxu0 %v4534
        %7372 = vmatpush1.bf16.msra.mxu0 %v4533
        %7373 = vmatprep.subr.bf16.mxu0 %v4566
        %7374 = vmatpush1.bf16.msra.mxu0 %v4565
        %7375 = vmatprep.subr.bf16.mxu0 %v4598
        %7376 = vmatpush1.bf16.msra.mxu0 %v4597
        %7377 = vmatprep.subr.bf16.mxu0 %v4630
        %7378 = vmatpush1.bf16.msra.mxu0 %v4629
        %7379 = vmatprep.subr.bf16.mxu0 %v4662
        %7380 = vmatpush1.bf16.msra.mxu0 %v4661
        %7381 = vmatprep.subr.bf16.mxu0 %v4694
        %7382 = vmatpush1.bf16.msra.mxu0 %v4693
        %7383 = vmatprep.subr.bf16.mxu0 %v4726
        %7384 = vmatpush1.bf16.msra.mxu0 %v4725
        %7385 = vmatprep.subr.bf16.mxu0 %v4758
        %7386 = vmatpush1.bf16.msra.mxu0 %v4757
        %7387 = vmatprep.subr.bf16.mxu0 %v4790
        %7388 = vmatpush1.bf16.msra.mxu0 %v4789
        %7389 = vmatprep.subr.bf16.mxu0 %v4822
        %7390 = vmatpush1.bf16.msra.mxu0 %v4821
        %7391 = vmatprep.subr.bf16.mxu0 %v4854
        %7392 = vmatpush1.bf16.msra.mxu0 %v4853
        %7393 = vmatprep.subr.bf16.mxu0 %v4886
        %7394 = vmatpush1.bf16.msra.mxu0 %v4885
        %7395 = vmatprep.subr.bf16.mxu0 %v4918
        %7396 = vmatpush1.bf16.msra.mxu0 %v4917
        %7397 = vmatprep.mubr.bf16.mxu0 %v316
        %7398 = vmatmul.mubr.bf16.gmra.mrb[0].mxu0 %v315
        %v7399 = vpop.f32.mrb[0].mxu0
        %v7400 = vadd.f32 0.0, %v7399
        %v7401 = vpop.f32.mrb[0].mxu0
        %v7402 = vadd.f32 0.0, %v7401
        %v7403 = vpop.f32.mrb[0].mxu0
        %v7404 = vpop.f32.mrb[0].mxu0
        %7405 = vdwg.mxu0
        %7406 = vmatprep.subr.bf16.mxu0 %v4950
        %7407 = vmatpush1.bf16.msra.mxu0 %v4949
        %7408 = vmatprep.subr.bf16.mxu0 %v4982
        %7409 = vmatpush1.bf16.msra.mxu0 %v4981
        %7410 = vmatprep.subr.bf16.mxu0 %v5014
        %7411 = vmatpush1.bf16.msra.mxu0 %v5013
        %7412 = vmatprep.subr.bf16.mxu0 %v5046
        %7413 = vmatpush1.bf16.msra.mxu0 %v5045
        %7414 = vmatprep.subr.bf16.mxu0 %v5078
        %7415 = vmatpush1.bf16.msra.mxu0 %v5077
        %7416 = vmatprep.subr.bf16.mxu0 %v5110
        %7417 = vmatpush1.bf16.msra.mxu0 %v5109
        %7418 = vmatprep.subr.bf16.mxu0 %v5142
        %7419 = vmatpush1.bf16.msra.mxu0 %v5141
        %7420 = vmatprep.subr.bf16.mxu0 %v5174
        %7421 = vmatpush1.bf16.msra.mxu0 %v5173
        %7422 = vmatprep.subr.bf16.mxu0 %v5206
        %7423 = vmatpush1.bf16.msra.mxu0 %v5205
        %7424 = vmatprep.subr.bf16.mxu0 %v5238
        %7425 = vmatpush1.bf16.msra.mxu0 %v5237
        %7426 = vmatprep.subr.bf16.mxu0 %v5270
        %7427 = vmatpush1.bf16.msra.mxu0 %v5269
        %7428 = vmatprep.subr.bf16.mxu0 %v5302
        %7429 = vmatpush1.bf16.msra.mxu0 %v5301
        %7430 = vmatprep.subr.bf16.mxu0 %v5334
        %7431 = vmatpush1.bf16.msra.mxu0 %v5333
        %7432 = vmatprep.subr.bf16.mxu0 %v5366
        %7433 = vmatpush1.bf16.msra.mxu0 %v5365
        %7434 = vmatprep.subr.bf16.mxu0 %v5398
        %7435 = vmatpush1.bf16.msra.mxu0 %v5397
        %7436 = vmatprep.subr.bf16.mxu0 %v5430
        %7437 = vmatpush1.bf16.msra.mxu0 %v5429
        %7438 = vmatprep.mubr.bf16.mxu0 %v318
        %7439 = vmatmul.mubr.bf16.gmra.mrb[0].mxu0 %v317
        %v7440 = vpop.f32.mrb[0].mxu0
        %v7441 = vadd.f32 %v7400, %v7440
        %v7442 = vpop.f32.mrb[0].mxu0
        %v7443 = vadd.f32 %v7402, %v7442
        %v7444 = vpop.f32.mrb[0].mxu0
        %v7445 = vpop.f32.mrb[0].mxu0
        %7446 = vdwg.mxu0
        %7447 = vmatprep.subr.bf16.mxu0 %v4440
        %7448 = vmatpush1.bf16.msra.mxu0 %v4439
        %7449 = vmatprep.subr.bf16.mxu0 %v4472
        %7450 = vmatpush1.bf16.msra.mxu0 %v4471
        %7451 = vmatprep.subr.bf16.mxu0 %v4504
        %7452 = vmatpush1.bf16.msra.mxu0 %v4503
        %7453 = vmatprep.subr.bf16.mxu0 %v4536
        %7454 = vmatpush1.bf16.msra.mxu0 %v4535
        %7455 = vmatprep.subr.bf16.mxu0 %v4568
        %7456 = vmatpush1.bf16.msra.mxu0 %v4567
        %7457 = vmatprep.subr.bf16.mxu0 %v4600
        %7458 = vmatpush1.bf16.msra.mxu0 %v4599
        %7459 = vmatprep.subr.bf16.mxu0 %v4632
        %7460 = vmatpush1.bf16.msra.mxu0 %v4631
        %7461 = vmatprep.subr.bf16.mxu0 %v4664
        %7462 = vmatpush1.bf16.msra.mxu0 %v4663
        %7463 = vmatprep.subr.bf16.mxu0 %v4696
        %7464 = vmatpush1.bf16.msra.mxu0 %v4695
        %7465 = vmatprep.subr.bf16.mxu0 %v4728
        %7466 = vmatpush1.bf16.msra.mxu0 %v4727
        %7467 = vmatprep.subr.bf16.mxu0 %v4760
        %7468 = vmatpush1.bf16.msra.mxu0 %v4759
        %7469 = vmatprep.subr.bf16.mxu0 %v4792
        %7470 = vmatpush1.bf16.msra.mxu0 %v4791
        %7471 = vmatprep.subr.bf16.mxu0 %v4824
        %7472 = vmatpush1.bf16.msra.mxu0 %v4823
        %7473 = vmatprep.subr.bf16.mxu0 %v4856
        %7474 = vmatpush1.bf16.msra.mxu0 %v4855
        %7475 = vmatprep.subr.bf16.mxu0 %v4888
        %7476 = vmatpush1.bf16.msra.mxu0 %v4887
        %7477 = vmatprep.subr.bf16.mxu0 %v4920
        %7478 = vmatpush1.bf16.msra.mxu0 %v4919
        %7479 = vmatprep.mubr.bf16.mxu0 %v316
        %7480 = vmatmul.mubr.bf16.gmra.mrb[0].mxu0 %v315
        %v7481 = vpop.f32.mrb[0].mxu0
        %v7482 = vadd.f32 0.0, %v7481
        %v7483 = vpop.f32.mrb[0].mxu0
        %v7484 = vadd.f32 0.0, %v7483
        %v7485 = vpop.f32.mrb[0].mxu0
        %v7486 = vpop.f32.mrb[0].mxu0
        %7487 = vdwg.mxu0
        %7488 = vmatprep.subr.bf16.mxu0 %v4952
        %7489 = vmatpush1.bf16.msra.mxu0 %v4951
        %7490 = vmatprep.subr.bf16.mxu0 %v4984
        %7491 = vmatpush1.bf16.msra.mxu0 %v4983
        %7492 = vmatprep.subr.bf16.mxu0 %v5016
        %7493 = vmatpush1.bf16.msra.mxu0 %v5015
        %7494 = vmatprep.subr.bf16.mxu0 %v5048
        %7495 = vmatpush1.bf16.msra.mxu0 %v5047
        %7496 = vmatprep.subr.bf16.mxu0 %v5080
        %7497 = vmatpush1.bf16.msra.mxu0 %v5079
        %7498 = vmatprep.subr.bf16.mxu0 %v5112
        %7499 = vmatpush1.bf16.msra.mxu0 %v5111
        %7500 = vmatprep.subr.bf16.mxu0 %v5144
        %7501 = vmatpush1.bf16.msra.mxu0 %v5143
        %7502 = vmatprep.subr.bf16.mxu0 %v5176
        %7503 = vmatpush1.bf16.msra.mxu0 %v5175
        %7504 = vmatprep.subr.bf16.mxu0 %v5208
        %7505 = vmatpush1.bf16.msra.mxu0 %v5207
        %7506 = vmatprep.subr.bf16.mxu0 %v5240
        %7507 = vmatpush1.bf16.msra.mxu0 %v5239
        %7508 = vmatprep.subr.bf16.mxu0 %v5272
        %7509 = vmatpush1.bf16.msra.mxu0 %v5271
        %7510 = vmatprep.subr.bf16.mxu0 %v5304
        %7511 = vmatpush1.bf16.msra.mxu0 %v5303
        %7512 = vmatprep.subr.bf16.mxu0 %v5336
        %7513 = vmatpush1.bf16.msra.mxu0 %v5335
        %7514 = vmatprep.subr.bf16.mxu0 %v5368
        %7515 = vmatpush1.bf16.msra.mxu0 %v5367
        %7516 = vmatprep.subr.bf16.mxu0 %v5400
        %7517 = vmatpush1.bf16.msra.mxu0 %v5399
        %7518 = vmatprep.subr.bf16.mxu0 %v5432
        %7519 = vmatpush1.bf16.msra.mxu0 %v5431
        %7520 = vmatprep.mubr.bf16.mxu0 %v318
        %7521 = vmatmul.mubr.bf16.gmra.mrb[0].mxu0 %v317
        %v7522 = vpop.f32.mrb[0].mxu0
        %v7523 = vadd.f32 %v7482, %v7522
        %v7524 = vpop.f32.mrb[0].mxu0
        %v7525 = vadd.f32 %v7484, %v7524
        %v7526 = vpop.f32.mrb[0].mxu0
        %v7527 = vpop.f32.mrb[0].mxu0
        %7528 = vdwg.mxu0
        %7529 = vmatprep.subr.bf16.mxu0 %v4442
        %7530 = vmatpush1.bf16.msra.mxu0 %v4441
        %7531 = vmatprep.subr.bf16.mxu0 %v4474
        %7532 = vmatpush1.bf16.msra.mxu0 %v4473
        %7533 = vmatprep.subr.bf16.mxu0 %v4506
        %7534 = vmatpush1.bf16.msra.mxu0 %v4505
        %7535 = vmatprep.subr.bf16.mxu0 %v4538
        %7536 = vmatpush1.bf16.msra.mxu0 %v4537
        %7537 = vmatprep.subr.bf16.mxu0 %v4570
        %7538 = vmatpush1.bf16.msra.mxu0 %v4569
        %7539 = vmatprep.subr.bf16.mxu0 %v4602
        %7540 = vmatpush1.bf16.msra.mxu0 %v4601
        %7541 = vmatprep.subr.bf16.mxu0 %v4634
        %7542 = vmatpush1.bf16.msra.mxu0 %v4633
        %7543 = vmatprep.subr.bf16.mxu0 %v4666
        %7544 = vmatpush1.bf16.msra.mxu0 %v4665
        %7545 = vmatprep.subr.bf16.mxu0 %v4698
        %7546 = vmatpush1.bf16.msra.mxu0 %v4697
        %7547 = vmatprep.subr.bf16.mxu0 %v4730
        %7548 = vmatpush1.bf16.msra.mxu0 %v4729
        %7549 = vmatprep.subr.bf16.mxu0 %v4762
        %7550 = vmatpush1.bf16.msra.mxu0 %v4761
        %7551 = vmatprep.subr.bf16.mxu0 %v4794
        %7552 = vmatpush1.bf16.msra.mxu0 %v4793
        %7553 = vmatprep.subr.bf16.mxu0 %v4826
        %7554 = vmatpush1.bf16.msra.mxu0 %v4825
        %7555 = vmatprep.subr.bf16.mxu0 %v4858
        %7556 = vmatpush1.bf16.msra.mxu0 %v4857
        %7557 = vmatprep.subr.bf16.mxu0 %v4890
        %7558 = vmatpush1.bf16.msra.mxu0 %v4889
        %7559 = vmatprep.subr.bf16.mxu0 %v4922
        %7560 = vmatpush1.bf16.msra.mxu0 %v4921
        %7561 = vmatprep.mubr.bf16.mxu0 %v316
        %7562 = vmatmul.mubr.bf16.gmra.mrb[0].mxu0 %v315
        %v7563 = vpop.f32.mrb[0].mxu0
        %v7564 = vadd.f32 0.0, %v7563
        %v7565 = vpop.f32.mrb[0].mxu0
        %v7566 = vadd.f32 0.0, %v7565
        %v7567 = vpop.f32.mrb[0].mxu0
        %v7568 = vpop.f32.mrb[0].mxu0
        %7569 = vdwg.mxu0
        %7570 = vmatprep.subr.bf16.mxu0 %v4954
        %7571 = vmatpush1.bf16.msra.mxu0 %v4953
        %7572 = vmatprep.subr.bf16.mxu0 %v4986
        %7573 = vmatpush1.bf16.msra.mxu0 %v4985
        %7574 = vmatprep.subr.bf16.mxu0 %v5018
        %7575 = vmatpush1.bf16.msra.mxu0 %v5017
        %7576 = vmatprep.subr.bf16.mxu0 %v5050
        %7577 = vmatpush1.bf16.msra.mxu0 %v5049
        %7578 = vmatprep.subr.bf16.mxu0 %v5082
        %7579 = vmatpush1.bf16.msra.mxu0 %v5081
        %7580 = vmatprep.subr.bf16.mxu0 %v5114
        %7581 = vmatpush1.bf16.msra.mxu0 %v5113
        %7582 = vmatprep.subr.bf16.mxu0 %v5146
        %7583 = vmatpush1.bf16.msra.mxu0 %v5145
        %7584 = vmatprep.subr.bf16.mxu0 %v5178
        %7585 = vmatpush1.bf16.msra.mxu0 %v5177
        %7586 = vmatprep.subr.bf16.mxu0 %v5210
        %7587 = vmatpush1.bf16.msra.mxu0 %v5209
        %7588 = vmatprep.subr.bf16.mxu0 %v5242
        %7589 = vmatpush1.bf16.msra.mxu0 %v5241
        %7590 = vmatprep.subr.bf16.mxu0 %v5274
        %7591 = vmatpush1.bf16.msra.mxu0 %v5273
        %7592 = vmatprep.subr.bf16.mxu0 %v5306
        %7593 = vmatpush1.bf16.msra.mxu0 %v5305
        %7594 = vmatprep.subr.bf16.mxu0 %v5338
        %7595 = vmatpush1.bf16.msra.mxu0 %v5337
        %7596 = vmatprep.subr.bf16.mxu0 %v5370
        %7597 = vmatpush1.bf16.msra.mxu0 %v5369
        %7598 = vmatprep.subr.bf16.mxu0 %v5402
        %7599 = vmatpush1.bf16.msra.mxu0 %v5401
        %7600 = vmatprep.subr.bf16.mxu0 %v5434
        %7601 = vmatpush1.bf16.msra.mxu0 %v5433
        %7602 = vmatprep.mubr.bf16.mxu0 %v318
        %7603 = vmatmul.mubr.bf16.gmra.mrb[0].mxu0 %v317
        %v7604 = vpop.f32.mrb[0].mxu0
        %v7605 = vadd.f32 %v7564, %v7604
        %v7606 = vpop.f32.mrb[0].mxu0
        %v7607 = vadd.f32 %v7566, %v7606
        %v7608 = vpop.f32.mrb[0].mxu0
        %v7609 = vpop.f32.mrb[0].mxu0
        %7610 = vdwg.mxu0
        %7611 = vmatprep.subr.bf16.mxu0 %v4444
        %7612 = vmatpush1.bf16.msra.mxu0 %v4443
        %7613 = vmatprep.subr.bf16.mxu0 %v4476
        %7614 = vmatpush1.bf16.msra.mxu0 %v4475
        %7615 = vmatprep.subr.bf16.mxu0 %v4508
        %7616 = vmatpush1.bf16.msra.mxu0 %v4507
        %7617 = vmatprep.subr.bf16.mxu0 %v4540
        %7618 = vmatpush1.bf16.msra.mxu0 %v4539
        %7619 = vmatprep.subr.bf16.mxu0 %v4572
        %7620 = vmatpush1.bf16.msra.mxu0 %v4571
        %7621 = vmatprep.subr.bf16.mxu0 %v4604
        %7622 = vmatpush1.bf16.msra.mxu0 %v4603
        %7623 = vmatprep.subr.bf16.mxu0 %v4636
        %7624 = vmatpush1.bf16.msra.mxu0 %v4635
        %7625 = vmatprep.subr.bf16.mxu0 %v4668
        %7626 = vmatpush1.bf16.msra.mxu0 %v4667
        %7627 = vmatprep.subr.bf16.mxu0 %v4700
        %7628 = vmatpush1.bf16.msra.mxu0 %v4699
        %7629 = vmatprep.subr.bf16.mxu0 %v4732
        %7630 = vmatpush1.bf16.msra.mxu0 %v4731
        %7631 = vmatprep.subr.bf16.mxu0 %v4764
        %7632 = vmatpush1.bf16.msra.mxu0 %v4763
        %7633 = vmatprep.subr.bf16.mxu0 %v4796
        %7634 = vmatpush1.bf16.msra.mxu0 %v4795
        %7635 = vmatprep.subr.bf16.mxu0 %v4828
        %7636 = vmatpush1.bf16.msra.mxu0 %v4827
        %7637 = vmatprep.subr.bf16.mxu0 %v4860
        %7638 = vmatpush1.bf16.msra.mxu0 %v4859
        %7639 = vmatprep.subr.bf16.mxu0 %v4892
        %7640 = vmatpush1.bf16.msra.mxu0 %v4891
        %7641 = vmatprep.subr.bf16.mxu0 %v4924
        %7642 = vmatpush1.bf16.msra.mxu0 %v4923
        %7643 = vmatprep.mubr.bf16.mxu0 %v316
        %7644 = vmatmul.mubr.bf16.gmra.mrb[0].mxu0 %v315
        %v7645 = vpop.f32.mrb[0].mxu0
        %v7646 = vadd.f32 0.0, %v7645
        %v7647 = vpop.f32.mrb[0].mxu0
        %v7648 = vadd.f32 0.0, %v7647
        %v7649 = vpop.f32.mrb[0].mxu0
        %v7650 = vpop.f32.mrb[0].mxu0
        %7651 = vdwg.mxu0
        %7652 = vmatprep.subr.bf16.mxu0 %v4956
        %7653 = vmatpush1.bf16.msra.mxu0 %v4955
        %7654 = vmatprep.subr.bf16.mxu0 %v4988
        %7655 = vmatpush1.bf16.msra.mxu0 %v4987
        %7656 = vmatprep.subr.bf16.mxu0 %v5020
        %7657 = vmatpush1.bf16.msra.mxu0 %v5019
        %7658 = vmatprep.subr.bf16.mxu0 %v5052
        %7659 = vmatpush1.bf16.msra.mxu0 %v5051
        %7660 = vmatprep.subr.bf16.mxu0 %v5084
        %7661 = vmatpush1.bf16.msra.mxu0 %v5083
        %7662 = vmatprep.subr.bf16.mxu0 %v5116
        %7663 = vmatpush1.bf16.msra.mxu0 %v5115
        %7664 = vmatprep.subr.bf16.mxu0 %v5148
        %7665 = vmatpush1.bf16.msra.mxu0 %v5147
        %7666 = vmatprep.subr.bf16.mxu0 %v5180
        %7667 = vmatpush1.bf16.msra.mxu0 %v5179
        %7668 = vmatprep.subr.bf16.mxu0 %v5212
        %7669 = vmatpush1.bf16.msra.mxu0 %v5211
        %7670 = vmatprep.subr.bf16.mxu0 %v5244
        %7671 = vmatpush1.bf16.msra.mxu0 %v5243
        %7672 = vmatprep.subr.bf16.mxu0 %v5276
        %7673 = vmatpush1.bf16.msra.mxu0 %v5275
        %7674 = vmatprep.subr.bf16.mxu0 %v5308
        %7675 = vmatpush1.bf16.msra.mxu0 %v5307
        %7676 = vmatprep.subr.bf16.mxu0 %v5340
        %7677 = vmatpush1.bf16.msra.mxu0 %v5339
        %7678 = vmatprep.subr.bf16.mxu0 %v5372
        %7679 = vmatpush1.bf16.msra.mxu0 %v5371
        %7680 = vmatprep.subr.bf16.mxu0 %v5404
        %7681 = vmatpush1.bf16.msra.mxu0 %v5403
        %7682 = vmatprep.subr.bf16.mxu0 %v5436
        %7683 = vmatpush1.bf16.msra.mxu0 %v5435
        %7684 = vmatprep.mubr.bf16.mxu0 %v318
        %7685 = vmatmul.mubr.bf16.gmra.mrb[0].mxu0 %v317
        %v7686 = vpop.f32.mrb[0].mxu0
        %v7687 = vadd.f32 %v7646, %v7686
        %v7688 = vpop.f32.mrb[0].mxu0
        %v7689 = vadd.f32 %v7648, %v7688
        %v7690 = vpop.f32.mrb[0].mxu0
        %v7691 = vpop.f32.mrb[0].mxu0
        %7692 = vdwg.mxu0
        %7693 = vmatprep.subr.bf16.mxu0 %v4446
        %7694 = vmatpush1.bf16.msra.mxu0 %v4445
        %7695 = vmatprep.subr.bf16.mxu0 %v4478
        %7696 = vmatpush1.bf16.msra.mxu0 %v4477
        %7697 = vmatprep.subr.bf16.mxu0 %v4510
        %7698 = vmatpush1.bf16.msra.mxu0 %v4509
        %7699 = vmatprep.subr.bf16.mxu0 %v4542
        %7700 = vmatpush1.bf16.msra.mxu0 %v4541
        %7701 = vmatprep.subr.bf16.mxu0 %v4574
        %7702 = vmatpush1.bf16.msra.mxu0 %v4573
        %7703 = vmatprep.subr.bf16.mxu0 %v4606
        %7704 = vmatpush1.bf16.msra.mxu0 %v4605
        %7705 = vmatprep.subr.bf16.mxu0 %v4638
        %7706 = vmatpush1.bf16.msra.mxu0 %v4637
        %7707 = vmatprep.subr.bf16.mxu0 %v4670
        %7708 = vmatpush1.bf16.msra.mxu0 %v4669
        %7709 = vmatprep.subr.bf16.mxu0 %v4702
        %7710 = vmatpush1.bf16.msra.mxu0 %v4701
        %7711 = vmatprep.subr.bf16.mxu0 %v4734
        %7712 = vmatpush1.bf16.msra.mxu0 %v4733
        %7713 = vmatprep.subr.bf16.mxu0 %v4766
        %7714 = vmatpush1.bf16.msra.mxu0 %v4765
        %7715 = vmatprep.subr.bf16.mxu0 %v4798
        %7716 = vmatpush1.bf16.msra.mxu0 %v4797
        %7717 = vmatprep.subr.bf16.mxu0 %v4830
        %7718 = vmatpush1.bf16.msra.mxu0 %v4829
        %7719 = vmatprep.subr.bf16.mxu0 %v4862
        %7720 = vmatpush1.bf16.msra.mxu0 %v4861
        %7721 = vmatprep.subr.bf16.mxu0 %v4894
        %7722 = vmatpush1.bf16.msra.mxu0 %v4893
        %7723 = vmatprep.subr.bf16.mxu0 %v4926
        %7724 = vmatpush1.bf16.msra.mxu0 %v4925
        %7725 = vmatprep.mubr.bf16.mxu0 %v316
        %7726 = vmatmul.mubr.bf16.gmra.mrb[0].mxu0 %v315
        %v7727 = vpop.f32.mrb[0].mxu0
        %v7728 = vadd.f32 0.0, %v7727
        %v7729 = vpop.f32.mrb[0].mxu0
        %v7730 = vadd.f32 0.0, %v7729
        %v7731 = vpop.f32.mrb[0].mxu0
        %v7732 = vpop.f32.mrb[0].mxu0
        %7733 = vdwg.mxu0
        %7734 = vmatprep.subr.bf16.mxu0 %v4958
        %7735 = vmatpush1.bf16.msra.mxu0 %v4957
        %7736 = vmatprep.subr.bf16.mxu0 %v4990
        %7737 = vmatpush1.bf16.msra.mxu0 %v4989
        %7738 = vmatprep.subr.bf16.mxu0 %v5022
        %7739 = vmatpush1.bf16.msra.mxu0 %v5021
        %7740 = vmatprep.subr.bf16.mxu0 %v5054
        %7741 = vmatpush1.bf16.msra.mxu0 %v5053
        %7742 = vmatprep.subr.bf16.mxu0 %v5086
        %7743 = vmatpush1.bf16.msra.mxu0 %v5085
        %7744 = vmatprep.subr.bf16.mxu0 %v5118
        %7745 = vmatpush1.bf16.msra.mxu0 %v5117
        %7746 = vmatprep.subr.bf16.mxu0 %v5150
        %7747 = vmatpush1.bf16.msra.mxu0 %v5149
        %7748 = vmatprep.subr.bf16.mxu0 %v5182
        %7749 = vmatpush1.bf16.msra.mxu0 %v5181
        %7750 = vmatprep.subr.bf16.mxu0 %v5214
        %7751 = vmatpush1.bf16.msra.mxu0 %v5213
        %7752 = vmatprep.subr.bf16.mxu0 %v5246
        %7753 = vmatpush1.bf16.msra.mxu0 %v5245
        %7754 = vmatprep.subr.bf16.mxu0 %v5278
        %7755 = vmatpush1.bf16.msra.mxu0 %v5277
        %7756 = vmatprep.subr.bf16.mxu0 %v5310
        %7757 = vmatpush1.bf16.msra.mxu0 %v5309
        %7758 = vmatprep.subr.bf16.mxu0 %v5342
        %7759 = vmatpush1.bf16.msra.mxu0 %v5341
        %7760 = vmatprep.subr.bf16.mxu0 %v5374
        %7761 = vmatpush1.bf16.msra.mxu0 %v5373
        %7762 = vmatprep.subr.bf16.mxu0 %v5406
        %7763 = vmatpush1.bf16.msra.mxu0 %v5405
        %7764 = vmatprep.subr.bf16.mxu0 %v5438
        %7765 = vmatpush1.bf16.msra.mxu0 %v5437
        %7766 = vmatprep.mubr.bf16.mxu0 %v318
        %7767 = vmatmul.mubr.bf16.gmra.mrb[0].mxu0 %v317
        %v7768 = vpop.f32.mrb[0].mxu0
        %v7769 = vadd.f32 %v7728, %v7768
        %v7770 = vpop.f32.mrb[0].mxu0
        %v7771 = vadd.f32 %v7730, %v7770
        %v7772 = vpop.f32.mrb[0].mxu0
        %v7773 = vpop.f32.mrb[0].mxu0
        %7774 = vdwg.mxu0
        %v7807 = vcombine.low %v6539, %v6541
        %v7808 = vcombine.low %v6621, %v6623
        %v7810 = vunpack.c.l.s4 1983009808
        %v7811 = vunpack.c.0.s8 %v7810
        %v7812 = vlaneseq
        %v7813 = vshrl.u32 %v7812, 7
        %v7814 = vsub.s32 %v7811, %v7813
        %v7815 = vrot.slane %v7807, %v7814
        %v7817 = vunpack.c.l.s4 1983009808
        %v7818 = vunpack.c.0.s8 %v7817
        %v7819 = vlaneseq
        %v7820 = vshrl.u32 %v7819, 7
        %v7821 = vsub.s32 %v7818, %v7820
        %v7822 = vrot.slane %v7808, %v7821
        %v7823 = vcombine.low %v7815, %v7822
        %v7824 = vcombine.low %v6703, %v6705
        %v7825 = vcombine.low %v6785, %v6787
        %v7827 = vunpack.c.l.s4 1983009808
        %v7828 = vunpack.c.0.s8 %v7827
        %v7829 = vlaneseq
        %v7830 = vshrl.u32 %v7829, 7
        %v7831 = vsub.s32 %v7828, %v7830
        %v7832 = vrot.slane %v7824, %v7831
        %v7834 = vunpack.c.l.s4 1983009808
        %v7835 = vunpack.c.0.s8 %v7834
        %v7836 = vlaneseq
        %v7837 = vshrl.u32 %v7836, 7
        %v7838 = vsub.s32 %v7835, %v7837
        %v7839 = vrot.slane %v7825, %v7838
        %v7840 = vcombine.low %v7832, %v7839
        %v7841 = vcombine.low %v6867, %v6869
        %v7842 = vcombine.low %v6949, %v6951
        %v7844 = vunpack.c.l.s4 1983009808
        %v7845 = vunpack.c.0.s8 %v7844
        %v7846 = vlaneseq
        %v7847 = vshrl.u32 %v7846, 7
        %v7848 = vsub.s32 %v7845, %v7847
        %v7849 = vrot.slane %v7841, %v7848
        %v7851 = vunpack.c.l.s4 1983009808
        %v7852 = vunpack.c.0.s8 %v7851
        %v7853 = vlaneseq
        %v7854 = vshrl.u32 %v7853, 7
        %v7855 = vsub.s32 %v7852, %v7854
        %v7856 = vrot.slane %v7842, %v7855
        %v7857 = vcombine.low %v7849, %v7856
        %v7858 = vcombine.low %v7031, %v7033
        %v7859 = vcombine.low %v7113, %v7115
        %v7861 = vunpack.c.l.s4 1983009808
        %v7862 = vunpack.c.0.s8 %v7861
        %v7863 = vlaneseq
        %v7864 = vshrl.u32 %v7863, 7
        %v7865 = vsub.s32 %v7862, %v7864
        %v7866 = vrot.slane %v7858, %v7865
        %v7868 = vunpack.c.l.s4 1983009808
        %v7869 = vunpack.c.0.s8 %v7868
        %v7870 = vlaneseq
        %v7871 = vshrl.u32 %v7870, 7
        %v7872 = vsub.s32 %v7869, %v7871
        %v7873 = vrot.slane %v7859, %v7872
        %v7874 = vcombine.low %v7866, %v7873
        %v7875 = vcombine.low %v7195, %v7197
        %v7876 = vcombine.low %v7277, %v7279
        %v7878 = vunpack.c.l.s4 1983009808
        %v7879 = vunpack.c.0.s8 %v7878
        %v7880 = vlaneseq
        %v7881 = vshrl.u32 %v7880, 7
        %v7882 = vsub.s32 %v7879, %v7881
        %v7883 = vrot.slane %v7875, %v7882
        %v7885 = vunpack.c.l.s4 1983009808
        %v7886 = vunpack.c.0.s8 %v7885
        %v7887 = vlaneseq
        %v7888 = vshrl.u32 %v7887, 7
        %v7889 = vsub.s32 %v7886, %v7888
        %v7890 = vrot.slane %v7876, %v7889
        %v7891 = vcombine.low %v7883, %v7890
        %v7892 = vcombine.low %v7359, %v7361
        %v7893 = vcombine.low %v7441, %v7443
        %v7895 = vunpack.c.l.s4 1983009808
        %v7896 = vunpack.c.0.s8 %v7895
        %v7897 = vlaneseq
        %v7898 = vshrl.u32 %v7897, 7
        %v7899 = vsub.s32 %v7896, %v7898
        %v7900 = vrot.slane %v7892, %v7899
        %v7902 = vunpack.c.l.s4 1983009808
        %v7903 = vunpack.c.0.s8 %v7902
        %v7904 = vlaneseq
        %v7905 = vshrl.u32 %v7904, 7
        %v7906 = vsub.s32 %v7903, %v7905
        %v7907 = vrot.slane %v7893, %v7906
        %v7908 = vcombine.low %v7900, %v7907
        %v7909 = vcombine.low %v7523, %v7525
        %v7910 = vcombine.low %v7605, %v7607
        %v7912 = vunpack.c.l.s4 1983009808
        %v7913 = vunpack.c.0.s8 %v7912
        %v7914 = vlaneseq
        %v7915 = vshrl.u32 %v7914, 7
        %v7916 = vsub.s32 %v7913, %v7915
        %v7917 = vrot.slane %v7909, %v7916
        %v7919 = vunpack.c.l.s4 1983009808
        %v7920 = vunpack.c.0.s8 %v7919
        %v7921 = vlaneseq
        %v7922 = vshrl.u32 %v7921, 7
        %v7923 = vsub.s32 %v7920, %v7922
        %v7924 = vrot.slane %v7910, %v7923
        %v7925 = vcombine.low %v7917, %v7924
        %v7926 = vcombine.low %v7687, %v7689
        %v7927 = vcombine.low %v7769, %v7771
        %v7929 = vunpack.c.l.s4 1983009808
        %v7930 = vunpack.c.0.s8 %v7929
        %v7931 = vlaneseq
        %v7932 = vshrl.u32 %v7931, 7
        %v7933 = vsub.s32 %v7930, %v7932
        %v7934 = vrot.slane %v7926, %v7933
        %v7936 = vunpack.c.l.s4 1983009808
        %v7937 = vunpack.c.0.s8 %v7936
        %v7938 = vlaneseq
        %v7939 = vshrl.u32 %v7938, 7
        %v7940 = vsub.s32 %v7937, %v7939
        %v7941 = vrot.slane %v7927, %v7940
        %v7942 = vcombine.low %v7934, %v7941
        %v7951 = vadd.f32 %v284, %v7823
        %v7952 = vadd.f32 %v285, %v7840
        %v7953 = vadd.f32 %v286, %v7857
        %v7954 = vadd.f32 %v287, %v7874
        %v7955 = vadd.f32 %v288, %v7891
        %v7956 = vadd.f32 %v289, %v7908
        %v7957 = vadd.f32 %v290, %v7925
        %v7958 = vadd.f32 %v291, %v7942
        %7959 = vst [vmem:[#allocation2] sm:$0xff] %v7951
        %7960 = vst [vmem:[#allocation2 + $0x8] sm:$0xff] %v7952
        %7961 = vst [vmem:[#allocation2 + $0x10] sm:$0xff] %v7953
        %7962 = vst [vmem:[#allocation2 + $0x18] sm:$0xff] %v7954
        %7963 = vst [vmem:[#allocation2 + $0x20] sm:$0xff] %v7955
        %7964 = vst [vmem:[#allocation2 + $0x28] sm:$0xff] %v7956
        %7965 = vst [vmem:[#allocation2 + $0x30] sm:$0xff] %v7957
        %7966 = vst [vmem:[#allocation2 + $0x38] sm:$0xff] %v7958
        %p7967 = scmp.eq.s32.totalorder %s23, 1
        // Predicated region
        $region57: #{tpu_custom_call.1} parent=35 // pred_check
          %p7968 = pneg %p7967
        $region58: #{tpu_custom_call.1} parent=35 // pred_check_branch
          %7970 = sbr.rel (%p7968) target = $region60
        $region59: #{tpu_custom_call.1} parent=35 // pred_region
          %v7971 = vld [vmem:[#allocation2] sm:$0xff]
          %v7972 = vld [vmem:[#allocation2 + $0x8] sm:$0xff]
          %v7973 = vld [vmem:[#allocation2 + $0x10] sm:$0xff]
          %v7974 = vld [vmem:[#allocation2 + $0x18] sm:$0xff]
          %v7975 = vld [vmem:[#allocation2 + $0x20] sm:$0xff]
          %v7976 = vld [vmem:[#allocation2 + $0x28] sm:$0xff]
          %v7977 = vld [vmem:[#allocation2 + $0x30] sm:$0xff]
          %v7978 = vld [vmem:[#allocation2 + $0x38] sm:$0xff]
          %v7979 = vld [vmem:[#allocation8] sm:$0xff]
          %v7980 = vld [vmem:[#allocation8 + $0x8] sm:$0xff]
          %v7981 = vld [vmem:[#allocation8 + $0x10] sm:$0xff]
          %v7982 = vld [vmem:[#allocation8 + $0x18] sm:$0xff]
          %v7983 = vld [vmem:[#allocation8 + $0x20] sm:$0xff]
          %v7984 = vld [vmem:[#allocation8 + $0x28] sm:$0xff]
          %v7985 = vld [vmem:[#allocation8 + $0x30] sm:$0xff]
          %v7986 = vld [vmem:[#allocation8 + $0x38] sm:$0xff]
          %v7987 = vld [vmem:[#allocation8 + $0x40] sm:$0xff]
          %v7988 = vld [vmem:[#allocation8 + $0x48] sm:$0xff]
          %v7989 = vld [vmem:[#allocation8 + $0x50] sm:$0xff]
          %v7990 = vld [vmem:[#allocation8 + $0x58] sm:$0xff]
          %v7991 = vld [vmem:[#allocation8 + $0x60] sm:$0xff]
          %v7992 = vld [vmem:[#allocation8 + $0x68] sm:$0xff]
          %v7993 = vld [vmem:[#allocation8 + $0x70] sm:$0xff]
          %v7994 = vld [vmem:[#allocation8 + $0x78] sm:$0xff]
          %v7995 = vld [vmem:[#allocation8 + $0x80] sm:$0xff]
          %v7996 = vld [vmem:[#allocation8 + $0x88] sm:$0xff]
          %v7997 = vld [vmem:[#allocation8 + $0x90] sm:$0xff]
          %v7998 = vld [vmem:[#allocation8 + $0x98] sm:$0xff]
          %v7999 = vld [vmem:[#allocation8 + $0xa0] sm:$0xff]
          %v8000 = vld [vmem:[#allocation8 + $0xa8] sm:$0xff]
          %v8001 = vld [vmem:[#allocation8 + $0xb0] sm:$0xff]
          %v8002 = vld [vmem:[#allocation8 + $0xb8] sm:$0xff]
          %v8003 = vld [vmem:[#allocation8 + $0xc0] sm:$0xff]
          %v8004 = vld [vmem:[#allocation8 + $0xc8] sm:$0xff]
          %v8005 = vld [vmem:[#allocation8 + $0xd0] sm:$0xff]
          %v8006 = vld [vmem:[#allocation8 + $0xd8] sm:$0xff]
          %v8007 = vld [vmem:[#allocation8 + $0xe0] sm:$0xff]
          %v8008 = vld [vmem:[#allocation8 + $0xe8] sm:$0xff]
          %v8009 = vld [vmem:[#allocation8 + $0xf0] sm:$0xff]
          %v8010 = vld [vmem:[#allocation8 + $0xf8] sm:$0xff]
          %v8011 = vld [vmem:[#allocation8 + $0x100] sm:$0xff]
          %v8012 = vld [vmem:[#allocation8 + $0x108] sm:$0xff]
          %v8013 = vld [vmem:[#allocation8 + $0x110] sm:$0xff]
          %v8014 = vld [vmem:[#allocation8 + $0x118] sm:$0xff]
          %v8015 = vld [vmem:[#allocation8 + $0x120] sm:$0xff]
          %v8016 = vld [vmem:[#allocation8 + $0x128] sm:$0xff]
          %v8017 = vld [vmem:[#allocation8 + $0x130] sm:$0xff]
          %v8018 = vld [vmem:[#allocation8 + $0x138] sm:$0xff]
          %v8019 = vld [vmem:[#allocation8 + $0x140] sm:$0xff]
          %v8020 = vld [vmem:[#allocation8 + $0x148] sm:$0xff]
          %v8021 = vld [vmem:[#allocation8 + $0x150] sm:$0xff]
          %v8022 = vld [vmem:[#allocation8 + $0x158] sm:$0xff]
          %v8023 = vld [vmem:[#allocation8 + $0x160] sm:$0xff]
          %v8024 = vld [vmem:[#allocation8 + $0x168] sm:$0xff]
          %v8025 = vld [vmem:[#allocation8 + $0x170] sm:$0xff]
          %v8026 = vld [vmem:[#allocation8 + $0x178] sm:$0xff]
          %v8027 = vld [vmem:[#allocation8 + $0x180] sm:$0xff]
          %v8028 = vld [vmem:[#allocation8 + $0x188] sm:$0xff]
          %v8029 = vld [vmem:[#allocation8 + $0x190] sm:$0xff]
          %v8030 = vld [vmem:[#allocation8 + $0x198] sm:$0xff]
          %v8031 = vld [vmem:[#allocation8 + $0x1a0] sm:$0xff]
          %v8032 = vld [vmem:[#allocation8 + $0x1a8] sm:$0xff]
          %v8033 = vld [vmem:[#allocation8 + $0x1b0] sm:$0xff]
          %v8034 = vld [vmem:[#allocation8 + $0x1b8] sm:$0xff]
          %v8035 = vld [vmem:[#allocation8 + $0x1c0] sm:$0xff]
          %v8036 = vld [vmem:[#allocation8 + $0x1c8] sm:$0xff]
          %v8037 = vld [vmem:[#allocation8 + $0x1d0] sm:$0xff]
          %v8038 = vld [vmem:[#allocation8 + $0x1d8] sm:$0xff]
          %v8039 = vld [vmem:[#allocation8 + $0x1e0] sm:$0xff]
          %v8040 = vld [vmem:[#allocation8 + $0x1e8] sm:$0xff]
          %v8041 = vld [vmem:[#allocation8 + $0x1f0] sm:$0xff]
          %v8042 = vld [vmem:[#allocation8 + $0x1f8] sm:$0xff]
          %v8043 = vld [vmem:[#allocation8 + $0x200] sm:$0xff]
          %v8044 = vld [vmem:[#allocation8 + $0x208] sm:$0xff]
          %v8045 = vld [vmem:[#allocation8 + $0x210] sm:$0xff]
          %v8046 = vld [vmem:[#allocation8 + $0x218] sm:$0xff]
          %v8047 = vld [vmem:[#allocation8 + $0x220] sm:$0xff]
          %v8048 = vld [vmem:[#allocation8 + $0x228] sm:$0xff]
          %v8049 = vld [vmem:[#allocation8 + $0x230] sm:$0xff]
          %v8050 = vld [vmem:[#allocation8 + $0x238] sm:$0xff]
          %v8051 = vld [vmem:[#allocation8 + $0x240] sm:$0xff]
          %v8052 = vld [vmem:[#allocation8 + $0x248] sm:$0xff]
          %v8053 = vld [vmem:[#allocation8 + $0x250] sm:$0xff]
          %v8054 = vld [vmem:[#allocation8 + $0x258] sm:$0xff]
          %v8055 = vld [vmem:[#allocation8 + $0x260] sm:$0xff]
          %v8056 = vld [vmem:[#allocation8 + $0x268] sm:$0xff]
          %v8057 = vld [vmem:[#allocation8 + $0x270] sm:$0xff]
          %v8058 = vld [vmem:[#allocation8 + $0x278] sm:$0xff]
          %v8059 = vld [vmem:[#allocation8 + $0x280] sm:$0xff]
          %v8060 = vld [vmem:[#allocation8 + $0x288] sm:$0xff]
          %v8061 = vld [vmem:[#allocation8 + $0x290] sm:$0xff]
          %v8062 = vld [vmem:[#allocation8 + $0x298] sm:$0xff]
          %v8063 = vld [vmem:[#allocation8 + $0x2a0] sm:$0xff]
          %v8064 = vld [vmem:[#allocation8 + $0x2a8] sm:$0xff]
          %v8065 = vld [vmem:[#allocation8 + $0x2b0] sm:$0xff]
          %v8066 = vld [vmem:[#allocation8 + $0x2b8] sm:$0xff]
          %v8067 = vld [vmem:[#allocation8 + $0x2c0] sm:$0xff]
          %v8068 = vld [vmem:[#allocation8 + $0x2c8] sm:$0xff]
          %v8069 = vld [vmem:[#allocation8 + $0x2d0] sm:$0xff]
          %v8070 = vld [vmem:[#allocation8 + $0x2d8] sm:$0xff]
          %v8071 = vld [vmem:[#allocation8 + $0x2e0] sm:$0xff]
          %v8072 = vld [vmem:[#allocation8 + $0x2e8] sm:$0xff]
          %v8073 = vld [vmem:[#allocation8 + $0x2f0] sm:$0xff]
          %v8074 = vld [vmem:[#allocation8 + $0x2f8] sm:$0xff]
          %v8075 = vld [vmem:[#allocation8 + $0x300] sm:$0xff]
          %v8076 = vld [vmem:[#allocation8 + $0x308] sm:$0xff]
          %v8077 = vld [vmem:[#allocation8 + $0x310] sm:$0xff]
          %v8078 = vld [vmem:[#allocation8 + $0x318] sm:$0xff]
          %v8079 = vld [vmem:[#allocation8 + $0x320] sm:$0xff]
          %v8080 = vld [vmem:[#allocation8 + $0x328] sm:$0xff]
          %v8081 = vld [vmem:[#allocation8 + $0x330] sm:$0xff]
          %v8082 = vld [vmem:[#allocation8 + $0x338] sm:$0xff]
          %v8083 = vld [vmem:[#allocation8 + $0x340] sm:$0xff]
          %v8084 = vld [vmem:[#allocation8 + $0x348] sm:$0xff]
          %v8085 = vld [vmem:[#allocation8 + $0x350] sm:$0xff]
          %v8086 = vld [vmem:[#allocation8 + $0x358] sm:$0xff]
          %v8087 = vld [vmem:[#allocation8 + $0x360] sm:$0xff]
          %v8088 = vld [vmem:[#allocation8 + $0x368] sm:$0xff]
          %v8089 = vld [vmem:[#allocation8 + $0x370] sm:$0xff]
          %v8090 = vld [vmem:[#allocation8 + $0x378] sm:$0xff]
          %v8091 = vld [vmem:[#allocation8 + $0x380] sm:$0xff]
          %v8092 = vld [vmem:[#allocation8 + $0x388] sm:$0xff]
          %v8093 = vld [vmem:[#allocation8 + $0x390] sm:$0xff]
          %v8094 = vld [vmem:[#allocation8 + $0x398] sm:$0xff]
          %v8095 = vld [vmem:[#allocation8 + $0x3a0] sm:$0xff]
          %v8096 = vld [vmem:[#allocation8 + $0x3a8] sm:$0xff]
          %v8097 = vld [vmem:[#allocation8 + $0x3b0] sm:$0xff]
          %v8098 = vld [vmem:[#allocation8 + $0x3b8] sm:$0xff]
          %v8099 = vld [vmem:[#allocation8 + $0x3c0] sm:$0xff]
          %v8100 = vld [vmem:[#allocation8 + $0x3c8] sm:$0xff]
          %v8101 = vld [vmem:[#allocation8 + $0x3d0] sm:$0xff]
          %v8102 = vld [vmem:[#allocation8 + $0x3d8] sm:$0xff]
          %v8103 = vld [vmem:[#allocation8 + $0x3e0] sm:$0xff]
          %v8104 = vld [vmem:[#allocation8 + $0x3e8] sm:$0xff]
          %v8105 = vld [vmem:[#allocation8 + $0x3f0] sm:$0xff]
          %v8106 = vld [vmem:[#allocation8 + $0x3f8] sm:$0xff]
          %v8107 = vld [vmem:[#allocation8 + $0x400] sm:$0xff]
          %v8108 = vld [vmem:[#allocation8 + $0x408] sm:$0xff]
          %v8109 = vld [vmem:[#allocation8 + $0x410] sm:$0xff]
          %v8110 = vld [vmem:[#allocation8 + $0x418] sm:$0xff]
          %v8111 = vld [vmem:[#allocation8 + $0x420] sm:$0xff]
          %v8112 = vld [vmem:[#allocation8 + $0x428] sm:$0xff]
          %v8113 = vld [vmem:[#allocation8 + $0x430] sm:$0xff]
          %v8114 = vld [vmem:[#allocation8 + $0x438] sm:$0xff]
          %v8115 = vld [vmem:[#allocation8 + $0x440] sm:$0xff]
          %v8116 = vld [vmem:[#allocation8 + $0x448] sm:$0xff]
          %v8117 = vld [vmem:[#allocation8 + $0x450] sm:$0xff]
          %v8118 = vld [vmem:[#allocation8 + $0x458] sm:$0xff]
          %v8119 = vld [vmem:[#allocation8 + $0x460] sm:$0xff]
          %v8120 = vld [vmem:[#allocation8 + $0x468] sm:$0xff]
          %v8121 = vld [vmem:[#allocation8 + $0x470] sm:$0xff]
          %v8122 = vld [vmem:[#allocation8 + $0x478] sm:$0xff]
          %v8123 = vld [vmem:[#allocation8 + $0x480] sm:$0xff]
          %v8124 = vld [vmem:[#allocation8 + $0x488] sm:$0xff]
          %v8125 = vld [vmem:[#allocation8 + $0x490] sm:$0xff]
          %v8126 = vld [vmem:[#allocation8 + $0x498] sm:$0xff]
          %v8127 = vld [vmem:[#allocation8 + $0x4a0] sm:$0xff]
          %v8128 = vld [vmem:[#allocation8 + $0x4a8] sm:$0xff]
          %v8129 = vld [vmem:[#allocation8 + $0x4b0] sm:$0xff]
          %v8130 = vld [vmem:[#allocation8 + $0x4b8] sm:$0xff]
          %v8131 = vld [vmem:[#allocation8 + $0x4c0] sm:$0xff]
          %v8132 = vld [vmem:[#allocation8 + $0x4c8] sm:$0xff]
          %v8133 = vld [vmem:[#allocation8 + $0x4d0] sm:$0xff]
          %v8134 = vld [vmem:[#allocation8 + $0x4d8] sm:$0xff]
          %v8135 = vld [vmem:[#allocation8 + $0x4e0] sm:$0xff]
          %v8136 = vld [vmem:[#allocation8 + $0x4e8] sm:$0xff]
          %v8137 = vld [vmem:[#allocation8 + $0x4f0] sm:$0xff]
          %v8138 = vld [vmem:[#allocation8 + $0x4f8] sm:$0xff]
          %v8139 = vld [vmem:[#allocation8 + $0x500] sm:$0xff]
          %v8140 = vld [vmem:[#allocation8 + $0x508] sm:$0xff]
          %v8141 = vld [vmem:[#allocation8 + $0x510] sm:$0xff]
          %v8142 = vld [vmem:[#allocation8 + $0x518] sm:$0xff]
          %v8143 = vld [vmem:[#allocation8 + $0x520] sm:$0xff]
          %v8144 = vld [vmem:[#allocation8 + $0x528] sm:$0xff]
          %v8145 = vld [vmem:[#allocation8 + $0x530] sm:$0xff]
          %v8146 = vld [vmem:[#allocation8 + $0x538] sm:$0xff]
          %v8147 = vld [vmem:[#allocation8 + $0x540] sm:$0xff]
          %v8148 = vld [vmem:[#allocation8 + $0x548] sm:$0xff]
          %v8149 = vld [vmem:[#allocation8 + $0x550] sm:$0xff]
          %v8150 = vld [vmem:[#allocation8 + $0x558] sm:$0xff]
          %v8151 = vld [vmem:[#allocation8 + $0x560] sm:$0xff]
          %v8152 = vld [vmem:[#allocation8 + $0x568] sm:$0xff]
          %v8153 = vld [vmem:[#allocation8 + $0x570] sm:$0xff]
          %v8154 = vld [vmem:[#allocation8 + $0x578] sm:$0xff]
          %v8155 = vld [vmem:[#allocation8 + $0x580] sm:$0xff]
          %v8156 = vld [vmem:[#allocation8 + $0x588] sm:$0xff]
          %v8157 = vld [vmem:[#allocation8 + $0x590] sm:$0xff]
          %v8158 = vld [vmem:[#allocation8 + $0x598] sm:$0xff]
          %v8159 = vld [vmem:[#allocation8 + $0x5a0] sm:$0xff]
          %v8160 = vld [vmem:[#allocation8 + $0x5a8] sm:$0xff]
          %v8161 = vld [vmem:[#allocation8 + $0x5b0] sm:$0xff]
          %v8162 = vld [vmem:[#allocation8 + $0x5b8] sm:$0xff]
          %v8163 = vld [vmem:[#allocation8 + $0x5c0] sm:$0xff]
          %v8164 = vld [vmem:[#allocation8 + $0x5c8] sm:$0xff]
          %v8165 = vld [vmem:[#allocation8 + $0x5d0] sm:$0xff]
          %v8166 = vld [vmem:[#allocation8 + $0x5d8] sm:$0xff]
          %v8167 = vld [vmem:[#allocation8 + $0x5e0] sm:$0xff]
          %v8168 = vld [vmem:[#allocation8 + $0x5e8] sm:$0xff]
          %v8169 = vld [vmem:[#allocation8 + $0x5f0] sm:$0xff]
          %v8170 = vld [vmem:[#allocation8 + $0x5f8] sm:$0xff]
          %v8171 = vld [vmem:[#allocation8 + $0x600] sm:$0xff]
          %v8172 = vld [vmem:[#allocation8 + $0x608] sm:$0xff]
          %v8173 = vld [vmem:[#allocation8 + $0x610] sm:$0xff]
          %v8174 = vld [vmem:[#allocation8 + $0x618] sm:$0xff]
          %v8175 = vld [vmem:[#allocation8 + $0x620] sm:$0xff]
          %v8176 = vld [vmem:[#allocation8 + $0x628] sm:$0xff]
          %v8177 = vld [vmem:[#allocation8 + $0x630] sm:$0xff]
          %v8178 = vld [vmem:[#allocation8 + $0x638] sm:$0xff]
          %v8179 = vld [vmem:[#allocation8 + $0x640] sm:$0xff]
          %v8180 = vld [vmem:[#allocation8 + $0x648] sm:$0xff]
          %v8181 = vld [vmem:[#allocation8 + $0x650] sm:$0xff]
          %v8182 = vld [vmem:[#allocation8 + $0x658] sm:$0xff]
          %v8183 = vld [vmem:[#allocation8 + $0x660] sm:$0xff]
          %v8184 = vld [vmem:[#allocation8 + $0x668] sm:$0xff]
          %v8185 = vld [vmem:[#allocation8 + $0x670] sm:$0xff]
          %v8186 = vld [vmem:[#allocation8 + $0x678] sm:$0xff]
          %v8187 = vld [vmem:[#allocation8 + $0x680] sm:$0xff]
          %v8188 = vld [vmem:[#allocation8 + $0x688] sm:$0xff]
          %v8189 = vld [vmem:[#allocation8 + $0x690] sm:$0xff]
          %v8190 = vld [vmem:[#allocation8 + $0x698] sm:$0xff]
          %v8191 = vld [vmem:[#allocation8 + $0x6a0] sm:$0xff]
          %v8192 = vld [vmem:[#allocation8 + $0x6a8] sm:$0xff]
          %v8193 = vld [vmem:[#allocation8 + $0x6b0] sm:$0xff]
          %v8194 = vld [vmem:[#allocation8 + $0x6b8] sm:$0xff]
          %v8195 = vld [vmem:[#allocation8 + $0x6c0] sm:$0xff]
          %v8196 = vld [vmem:[#allocation8 + $0x6c8] sm:$0xff]
          %v8197 = vld [vmem:[#allocation8 + $0x6d0] sm:$0xff]
          %v8198 = vld [vmem:[#allocation8 + $0x6d8] sm:$0xff]
          %v8199 = vld [vmem:[#allocation8 + $0x6e0] sm:$0xff]
          %v8200 = vld [vmem:[#allocation8 + $0x6e8] sm:$0xff]
          %v8201 = vld [vmem:[#allocation8 + $0x6f0] sm:$0xff]
          %v8202 = vld [vmem:[#allocation8 + $0x6f8] sm:$0xff]
          %v8203 = vld [vmem:[#allocation8 + $0x700] sm:$0xff]
          %v8204 = vld [vmem:[#allocation8 + $0x708] sm:$0xff]
          %v8205 = vld [vmem:[#allocation8 + $0x710] sm:$0xff]
          %v8206 = vld [vmem:[#allocation8 + $0x718] sm:$0xff]
          %v8207 = vld [vmem:[#allocation8 + $0x720] sm:$0xff]
          %v8208 = vld [vmem:[#allocation8 + $0x728] sm:$0xff]
          %v8209 = vld [vmem:[#allocation8 + $0x730] sm:$0xff]
          %v8210 = vld [vmem:[#allocation8 + $0x738] sm:$0xff]
          %v8211 = vld [vmem:[#allocation8 + $0x740] sm:$0xff]
          %v8212 = vld [vmem:[#allocation8 + $0x748] sm:$0xff]
          %v8213 = vld [vmem:[#allocation8 + $0x750] sm:$0xff]
          %v8214 = vld [vmem:[#allocation8 + $0x758] sm:$0xff]
          %v8215 = vld [vmem:[#allocation8 + $0x760] sm:$0xff]
          %v8216 = vld [vmem:[#allocation8 + $0x768] sm:$0xff]
          %v8217 = vld [vmem:[#allocation8 + $0x770] sm:$0xff]
          %v8218 = vld [vmem:[#allocation8 + $0x778] sm:$0xff]
          %v8219 = vld [vmem:[#allocation8 + $0x780] sm:$0xff]
          %v8220 = vld [vmem:[#allocation8 + $0x788] sm:$0xff]
          %v8221 = vld [vmem:[#allocation8 + $0x790] sm:$0xff]
          %v8222 = vld [vmem:[#allocation8 + $0x798] sm:$0xff]
          %v8223 = vld [vmem:[#allocation8 + $0x7a0] sm:$0xff]
          %v8224 = vld [vmem:[#allocation8 + $0x7a8] sm:$0xff]
          %v8225 = vld [vmem:[#allocation8 + $0x7b0] sm:$0xff]
          %v8226 = vld [vmem:[#allocation8 + $0x7b8] sm:$0xff]
          %v8227 = vld [vmem:[#allocation8 + $0x7c0] sm:$0xff]
          %v8228 = vld [vmem:[#allocation8 + $0x7c8] sm:$0xff]
          %v8229 = vld [vmem:[#allocation8 + $0x7d0] sm:$0xff]
          %v8230 = vld [vmem:[#allocation8 + $0x7d8] sm:$0xff]
          %v8231 = vld [vmem:[#allocation8 + $0x7e0] sm:$0xff]
          %v8232 = vld [vmem:[#allocation8 + $0x7e8] sm:$0xff]
          %v8233 = vld [vmem:[#allocation8 + $0x7f0] sm:$0xff]
          %v8234 = vld [vmem:[#allocation8 + $0x7f8] sm:$0xff]
          %v8235 = vld [vmem:[#allocation8 + $0x800] sm:$0xff]
          %v8236 = vld [vmem:[#allocation8 + $0x808] sm:$0xff]
          %v8237 = vld [vmem:[#allocation8 + $0x810] sm:$0xff]
          %v8238 = vld [vmem:[#allocation8 + $0x818] sm:$0xff]
          %v8239 = vld [vmem:[#allocation8 + $0x820] sm:$0xff]
          %v8240 = vld [vmem:[#allocation8 + $0x828] sm:$0xff]
          %v8241 = vld [vmem:[#allocation8 + $0x830] sm:$0xff]
          %v8242 = vld [vmem:[#allocation8 + $0x838] sm:$0xff]
          %v8243 = vld [vmem:[#allocation8 + $0x840] sm:$0xff]
          %v8244 = vld [vmem:[#allocation8 + $0x848] sm:$0xff]
          %v8245 = vld [vmem:[#allocation8 + $0x850] sm:$0xff]
          %v8246 = vld [vmem:[#allocation8 + $0x858] sm:$0xff]
          %v8247 = vld [vmem:[#allocation8 + $0x860] sm:$0xff]
          %v8248 = vld [vmem:[#allocation8 + $0x868] sm:$0xff]
          %v8249 = vld [vmem:[#allocation8 + $0x870] sm:$0xff]
          %v8250 = vld [vmem:[#allocation8 + $0x878] sm:$0xff]
          %v8251 = vld [vmem:[#allocation8 + $0x880] sm:$0xff]
          %v8252 = vld [vmem:[#allocation8 + $0x888] sm:$0xff]
          %v8253 = vld [vmem:[#allocation8 + $0x890] sm:$0xff]
          %v8254 = vld [vmem:[#allocation8 + $0x898] sm:$0xff]
          %v8255 = vld [vmem:[#allocation8 + $0x8a0] sm:$0xff]
          %v8256 = vld [vmem:[#allocation8 + $0x8a8] sm:$0xff]
          %v8257 = vld [vmem:[#allocation8 + $0x8b0] sm:$0xff]
          %v8258 = vld [vmem:[#allocation8 + $0x8b8] sm:$0xff]
          %v8259 = vld [vmem:[#allocation8 + $0x8c0] sm:$0xff]
          %v8260 = vld [vmem:[#allocation8 + $0x8c8] sm:$0xff]
          %v8261 = vld [vmem:[#allocation8 + $0x8d0] sm:$0xff]
          %v8262 = vld [vmem:[#allocation8 + $0x8d8] sm:$0xff]
          %v8263 = vld [vmem:[#allocation8 + $0x8e0] sm:$0xff]
          %v8264 = vld [vmem:[#allocation8 + $0x8e8] sm:$0xff]
          %v8265 = vld [vmem:[#allocation8 + $0x8f0] sm:$0xff]
          %v8266 = vld [vmem:[#allocation8 + $0x8f8] sm:$0xff]
          %v8267 = vld [vmem:[#allocation8 + $0x900] sm:$0xff]
          %v8268 = vld [vmem:[#allocation8 + $0x908] sm:$0xff]
          %v8269 = vld [vmem:[#allocation8 + $0x910] sm:$0xff]
          %v8270 = vld [vmem:[#allocation8 + $0x918] sm:$0xff]
          %v8271 = vld [vmem:[#allocation8 + $0x920] sm:$0xff]
          %v8272 = vld [vmem:[#allocation8 + $0x928] sm:$0xff]
          %v8273 = vld [vmem:[#allocation8 + $0x930] sm:$0xff]
          %v8274 = vld [vmem:[#allocation8 + $0x938] sm:$0xff]
          %v8275 = vld [vmem:[#allocation8 + $0x940] sm:$0xff]
          %v8276 = vld [vmem:[#allocation8 + $0x948] sm:$0xff]
          %v8277 = vld [vmem:[#allocation8 + $0x950] sm:$0xff]
          %v8278 = vld [vmem:[#allocation8 + $0x958] sm:$0xff]
          %v8279 = vld [vmem:[#allocation8 + $0x960] sm:$0xff]
          %v8280 = vld [vmem:[#allocation8 + $0x968] sm:$0xff]
          %v8281 = vld [vmem:[#allocation8 + $0x970] sm:$0xff]
          %v8282 = vld [vmem:[#allocation8 + $0x978] sm:$0xff]
          %v8283 = vld [vmem:[#allocation8 + $0x980] sm:$0xff]
          %v8284 = vld [vmem:[#allocation8 + $0x988] sm:$0xff]
          %v8285 = vld [vmem:[#allocation8 + $0x990] sm:$0xff]
          %v8286 = vld [vmem:[#allocation8 + $0x998] sm:$0xff]
          %v8287 = vld [vmem:[#allocation8 + $0x9a0] sm:$0xff]
          %v8288 = vld [vmem:[#allocation8 + $0x9a8] sm:$0xff]
          %v8289 = vld [vmem:[#allocation8 + $0x9b0] sm:$0xff]
          %v8290 = vld [vmem:[#allocation8 + $0x9b8] sm:$0xff]
          %v8291 = vld [vmem:[#allocation8 + $0x9c0] sm:$0xff]
          %v8292 = vld [vmem:[#allocation8 + $0x9c8] sm:$0xff]
          %v8293 = vld [vmem:[#allocation8 + $0x9d0] sm:$0xff]
          %v8294 = vld [vmem:[#allocation8 + $0x9d8] sm:$0xff]
          %v8295 = vld [vmem:[#allocation8 + $0x9e0] sm:$0xff]
          %v8296 = vld [vmem:[#allocation8 + $0x9e8] sm:$0xff]
          %v8297 = vld [vmem:[#allocation8 + $0x9f0] sm:$0xff]
          %v8298 = vld [vmem:[#allocation8 + $0x9f8] sm:$0xff]
          %v8299 = vld [vmem:[#allocation8 + $0xa00] sm:$0xff]
          %v8300 = vld [vmem:[#allocation8 + $0xa08] sm:$0xff]
          %v8301 = vld [vmem:[#allocation8 + $0xa10] sm:$0xff]
          %v8302 = vld [vmem:[#allocation8 + $0xa18] sm:$0xff]
          %v8303 = vld [vmem:[#allocation8 + $0xa20] sm:$0xff]
          %v8304 = vld [vmem:[#allocation8 + $0xa28] sm:$0xff]
          %v8305 = vld [vmem:[#allocation8 + $0xa30] sm:$0xff]
          %v8306 = vld [vmem:[#allocation8 + $0xa38] sm:$0xff]
          %v8307 = vld [vmem:[#allocation8 + $0xa40] sm:$0xff]
          %v8308 = vld [vmem:[#allocation8 + $0xa48] sm:$0xff]
          %v8309 = vld [vmem:[#allocation8 + $0xa50] sm:$0xff]
          %v8310 = vld [vmem:[#allocation8 + $0xa58] sm:$0xff]
          %v8311 = vld [vmem:[#allocation8 + $0xa60] sm:$0xff]
          %v8312 = vld [vmem:[#allocation8 + $0xa68] sm:$0xff]
          %v8313 = vld [vmem:[#allocation8 + $0xa70] sm:$0xff]
          %v8314 = vld [vmem:[#allocation8 + $0xa78] sm:$0xff]
          %v8315 = vld [vmem:[#allocation8 + $0xa80] sm:$0xff]
          %v8316 = vld [vmem:[#allocation8 + $0xa88] sm:$0xff]
          %v8317 = vld [vmem:[#allocation8 + $0xa90] sm:$0xff]
          %v8318 = vld [vmem:[#allocation8 + $0xa98] sm:$0xff]
          %v8319 = vld [vmem:[#allocation8 + $0xaa0] sm:$0xff]
          %v8320 = vld [vmem:[#allocation8 + $0xaa8] sm:$0xff]
          %v8321 = vld [vmem:[#allocation8 + $0xab0] sm:$0xff]
          %v8322 = vld [vmem:[#allocation8 + $0xab8] sm:$0xff]
          %v8323 = vld [vmem:[#allocation8 + $0xac0] sm:$0xff]
          %v8324 = vld [vmem:[#allocation8 + $0xac8] sm:$0xff]
          %v8325 = vld [vmem:[#allocation8 + $0xad0] sm:$0xff]
          %v8326 = vld [vmem:[#allocation8 + $0xad8] sm:$0xff]
          %v8327 = vld [vmem:[#allocation8 + $0xae0] sm:$0xff]
          %v8328 = vld [vmem:[#allocation8 + $0xae8] sm:$0xff]
          %v8329 = vld [vmem:[#allocation8 + $0xaf0] sm:$0xff]
          %v8330 = vld [vmem:[#allocation8 + $0xaf8] sm:$0xff]
          %v8331 = vld [vmem:[#allocation8 + $0xb00] sm:$0xff]
          %v8332 = vld [vmem:[#allocation8 + $0xb08] sm:$0xff]
          %v8333 = vld [vmem:[#allocation8 + $0xb10] sm:$0xff]
          %v8334 = vld [vmem:[#allocation8 + $0xb18] sm:$0xff]
          %v8335 = vld [vmem:[#allocation8 + $0xb20] sm:$0xff]
          %v8336 = vld [vmem:[#allocation8 + $0xb28] sm:$0xff]
          %v8337 = vld [vmem:[#allocation8 + $0xb30] sm:$0xff]
          %v8338 = vld [vmem:[#allocation8 + $0xb38] sm:$0xff]
          %v8339 = vld [vmem:[#allocation8 + $0xb40] sm:$0xff]
          %v8340 = vld [vmem:[#allocation8 + $0xb48] sm:$0xff]
          %v8341 = vld [vmem:[#allocation8 + $0xb50] sm:$0xff]
          %v8342 = vld [vmem:[#allocation8 + $0xb58] sm:$0xff]
          %v8343 = vld [vmem:[#allocation8 + $0xb60] sm:$0xff]
          %v8344 = vld [vmem:[#allocation8 + $0xb68] sm:$0xff]
          %v8345 = vld [vmem:[#allocation8 + $0xb70] sm:$0xff]
          %v8346 = vld [vmem:[#allocation8 + $0xb78] sm:$0xff]
          %v8347 = vld [vmem:[#allocation8 + $0xb80] sm:$0xff]
          %v8348 = vld [vmem:[#allocation8 + $0xb88] sm:$0xff]
          %v8349 = vld [vmem:[#allocation8 + $0xb90] sm:$0xff]
          %v8350 = vld [vmem:[#allocation8 + $0xb98] sm:$0xff]
          %v8351 = vld [vmem:[#allocation8 + $0xba0] sm:$0xff]
          %v8352 = vld [vmem:[#allocation8 + $0xba8] sm:$0xff]
          %v8353 = vld [vmem:[#allocation8 + $0xbb0] sm:$0xff]
          %v8354 = vld [vmem:[#allocation8 + $0xbb8] sm:$0xff]
          %v8355 = vld [vmem:[#allocation8 + $0xbc0] sm:$0xff]
          %v8356 = vld [vmem:[#allocation8 + $0xbc8] sm:$0xff]
          %v8357 = vld [vmem:[#allocation8 + $0xbd0] sm:$0xff]
          %v8358 = vld [vmem:[#allocation8 + $0xbd8] sm:$0xff]
          %v8359 = vld [vmem:[#allocation8 + $0xbe0] sm:$0xff]
          %v8360 = vld [vmem:[#allocation8 + $0xbe8] sm:$0xff]
          %v8361 = vld [vmem:[#allocation8 + $0xbf0] sm:$0xff]
          %v8362 = vld [vmem:[#allocation8 + $0xbf8] sm:$0xff]
          %v8363 = vld [vmem:[#allocation8 + $0xc00] sm:$0xff]
          %v8364 = vld [vmem:[#allocation8 + $0xc08] sm:$0xff]
          %v8365 = vld [vmem:[#allocation8 + $0xc10] sm:$0xff]
          %v8366 = vld [vmem:[#allocation8 + $0xc18] sm:$0xff]
          %v8367 = vld [vmem:[#allocation8 + $0xc20] sm:$0xff]
          %v8368 = vld [vmem:[#allocation8 + $0xc28] sm:$0xff]
          %v8369 = vld [vmem:[#allocation8 + $0xc30] sm:$0xff]
          %v8370 = vld [vmem:[#allocation8 + $0xc38] sm:$0xff]
          %v8371 = vld [vmem:[#allocation8 + $0xc40] sm:$0xff]
          %v8372 = vld [vmem:[#allocation8 + $0xc48] sm:$0xff]
          %v8373 = vld [vmem:[#allocation8 + $0xc50] sm:$0xff]
          %v8374 = vld [vmem:[#allocation8 + $0xc58] sm:$0xff]
          %v8375 = vld [vmem:[#allocation8 + $0xc60] sm:$0xff]
          %v8376 = vld [vmem:[#allocation8 + $0xc68] sm:$0xff]
          %v8377 = vld [vmem:[#allocation8 + $0xc70] sm:$0xff]
          %v8378 = vld [vmem:[#allocation8 + $0xc78] sm:$0xff]
          %v8379 = vld [vmem:[#allocation8 + $0xc80] sm:$0xff]
          %v8380 = vld [vmem:[#allocation8 + $0xc88] sm:$0xff]
          %v8381 = vld [vmem:[#allocation8 + $0xc90] sm:$0xff]
          %v8382 = vld [vmem:[#allocation8 + $0xc98] sm:$0xff]
          %v8383 = vld [vmem:[#allocation8 + $0xca0] sm:$0xff]
          %v8384 = vld [vmem:[#allocation8 + $0xca8] sm:$0xff]
          %v8385 = vld [vmem:[#allocation8 + $0xcb0] sm:$0xff]
          %v8386 = vld [vmem:[#allocation8 + $0xcb8] sm:$0xff]
          %v8387 = vld [vmem:[#allocation8 + $0xcc0] sm:$0xff]
          %v8388 = vld [vmem:[#allocation8 + $0xcc8] sm:$0xff]
          %v8389 = vld [vmem:[#allocation8 + $0xcd0] sm:$0xff]
          %v8390 = vld [vmem:[#allocation8 + $0xcd8] sm:$0xff]
          %v8391 = vld [vmem:[#allocation8 + $0xce0] sm:$0xff]
          %v8392 = vld [vmem:[#allocation8 + $0xce8] sm:$0xff]
          %v8393 = vld [vmem:[#allocation8 + $0xcf0] sm:$0xff]
          %v8394 = vld [vmem:[#allocation8 + $0xcf8] sm:$0xff]
          %v8395 = vld [vmem:[#allocation8 + $0xd00] sm:$0xff]
          %v8396 = vld [vmem:[#allocation8 + $0xd08] sm:$0xff]
          %v8397 = vld [vmem:[#allocation8 + $0xd10] sm:$0xff]
          %v8398 = vld [vmem:[#allocation8 + $0xd18] sm:$0xff]
          %v8399 = vld [vmem:[#allocation8 + $0xd20] sm:$0xff]
          %v8400 = vld [vmem:[#allocation8 + $0xd28] sm:$0xff]
          %v8401 = vld [vmem:[#allocation8 + $0xd30] sm:$0xff]
          %v8402 = vld [vmem:[#allocation8 + $0xd38] sm:$0xff]
          %v8403 = vld [vmem:[#allocation8 + $0xd40] sm:$0xff]
          %v8404 = vld [vmem:[#allocation8 + $0xd48] sm:$0xff]
          %v8405 = vld [vmem:[#allocation8 + $0xd50] sm:$0xff]
          %v8406 = vld [vmem:[#allocation8 + $0xd58] sm:$0xff]
          %v8407 = vld [vmem:[#allocation8 + $0xd60] sm:$0xff]
          %v8408 = vld [vmem:[#allocation8 + $0xd68] sm:$0xff]
          %v8409 = vld [vmem:[#allocation8 + $0xd70] sm:$0xff]
          %v8410 = vld [vmem:[#allocation8 + $0xd78] sm:$0xff]
          %v8411 = vld [vmem:[#allocation8 + $0xd80] sm:$0xff]
          %v8412 = vld [vmem:[#allocation8 + $0xd88] sm:$0xff]
          %v8413 = vld [vmem:[#allocation8 + $0xd90] sm:$0xff]
          %v8414 = vld [vmem:[#allocation8 + $0xd98] sm:$0xff]
          %v8415 = vld [vmem:[#allocation8 + $0xda0] sm:$0xff]
          %v8416 = vld [vmem:[#allocation8 + $0xda8] sm:$0xff]
          %v8417 = vld [vmem:[#allocation8 + $0xdb0] sm:$0xff]
          %v8418 = vld [vmem:[#allocation8 + $0xdb8] sm:$0xff]
          %v8419 = vld [vmem:[#allocation8 + $0xdc0] sm:$0xff]
          %v8420 = vld [vmem:[#allocation8 + $0xdc8] sm:$0xff]
          %v8421 = vld [vmem:[#allocation8 + $0xdd0] sm:$0xff]
          %v8422 = vld [vmem:[#allocation8 + $0xdd8] sm:$0xff]
          %v8423 = vld [vmem:[#allocation8 + $0xde0] sm:$0xff]
          %v8424 = vld [vmem:[#allocation8 + $0xde8] sm:$0xff]
          %v8425 = vld [vmem:[#allocation8 + $0xdf0] sm:$0xff]
          %v8426 = vld [vmem:[#allocation8 + $0xdf8] sm:$0xff]
          %v8427 = vld [vmem:[#allocation8 + $0xe00] sm:$0xff]
          %v8428 = vld [vmem:[#allocation8 + $0xe08] sm:$0xff]
          %v8429 = vld [vmem:[#allocation8 + $0xe10] sm:$0xff]
          %v8430 = vld [vmem:[#allocation8 + $0xe18] sm:$0xff]
          %v8431 = vld [vmem:[#allocation8 + $0xe20] sm:$0xff]
          %v8432 = vld [vmem:[#allocation8 + $0xe28] sm:$0xff]
          %v8433 = vld [vmem:[#allocation8 + $0xe30] sm:$0xff]
          %v8434 = vld [vmem:[#allocation8 + $0xe38] sm:$0xff]
          %v8435 = vld [vmem:[#allocation8 + $0xe40] sm:$0xff]
          %v8436 = vld [vmem:[#allocation8 + $0xe48] sm:$0xff]
          %v8437 = vld [vmem:[#allocation8 + $0xe50] sm:$0xff]
          %v8438 = vld [vmem:[#allocation8 + $0xe58] sm:$0xff]
          %v8439 = vld [vmem:[#allocation8 + $0xe60] sm:$0xff]
          %v8440 = vld [vmem:[#allocation8 + $0xe68] sm:$0xff]
          %v8441 = vld [vmem:[#allocation8 + $0xe70] sm:$0xff]
          %v8442 = vld [vmem:[#allocation8 + $0xe78] sm:$0xff]
          %v8443 = vld [vmem:[#allocation8 + $0xe80] sm:$0xff]
          %v8444 = vld [vmem:[#allocation8 + $0xe88] sm:$0xff]
          %v8445 = vld [vmem:[#allocation8 + $0xe90] sm:$0xff]
          %v8446 = vld [vmem:[#allocation8 + $0xe98] sm:$0xff]
          %v8447 = vld [vmem:[#allocation8 + $0xea0] sm:$0xff]
          %v8448 = vld [vmem:[#allocation8 + $0xea8] sm:$0xff]
          %v8449 = vld [vmem:[#allocation8 + $0xeb0] sm:$0xff]
          %v8450 = vld [vmem:[#allocation8 + $0xeb8] sm:$0xff]
          %v8451 = vld [vmem:[#allocation8 + $0xec0] sm:$0xff]
          %v8452 = vld [vmem:[#allocation8 + $0xec8] sm:$0xff]
          %v8453 = vld [vmem:[#allocation8 + $0xed0] sm:$0xff]
          %v8454 = vld [vmem:[#allocation8 + $0xed8] sm:$0xff]
          %v8455 = vld [vmem:[#allocation8 + $0xee0] sm:$0xff]
          %v8456 = vld [vmem:[#allocation8 + $0xee8] sm:$0xff]
          %v8457 = vld [vmem:[#allocation8 + $0xef0] sm:$0xff]
          %v8458 = vld [vmem:[#allocation8 + $0xef8] sm:$0xff]
          %v8459 = vld [vmem:[#allocation8 + $0xf00] sm:$0xff]
          %v8460 = vld [vmem:[#allocation8 + $0xf08] sm:$0xff]
          %v8461 = vld [vmem:[#allocation8 + $0xf10] sm:$0xff]
          %v8462 = vld [vmem:[#allocation8 + $0xf18] sm:$0xff]
          %v8463 = vld [vmem:[#allocation8 + $0xf20] sm:$0xff]
          %v8464 = vld [vmem:[#allocation8 + $0xf28] sm:$0xff]
          %v8465 = vld [vmem:[#allocation8 + $0xf30] sm:$0xff]
          %v8466 = vld [vmem:[#allocation8 + $0xf38] sm:$0xff]
          %v8467 = vld [vmem:[#allocation8 + $0xf40] sm:$0xff]
          %v8468 = vld [vmem:[#allocation8 + $0xf48] sm:$0xff]
          %v8469 = vld [vmem:[#allocation8 + $0xf50] sm:$0xff]
          %v8470 = vld [vmem:[#allocation8 + $0xf58] sm:$0xff]
          %v8471 = vld [vmem:[#allocation8 + $0xf60] sm:$0xff]
          %v8472 = vld [vmem:[#allocation8 + $0xf68] sm:$0xff]
          %v8473 = vld [vmem:[#allocation8 + $0xf70] sm:$0xff]
          %v8474 = vld [vmem:[#allocation8 + $0xf78] sm:$0xff]
          %v8475 = vld [vmem:[#allocation8 + $0xf80] sm:$0xff]
          %v8476 = vld [vmem:[#allocation8 + $0xf88] sm:$0xff]
          %v8477 = vld [vmem:[#allocation8 + $0xf90] sm:$0xff]
          %v8478 = vld [vmem:[#allocation8 + $0xf98] sm:$0xff]
          %v8479 = vld [vmem:[#allocation8 + $0xfa0] sm:$0xff]
          %v8480 = vld [vmem:[#allocation8 + $0xfa8] sm:$0xff]
          %v8481 = vld [vmem:[#allocation8 + $0xfb0] sm:$0xff]
          %v8482 = vld [vmem:[#allocation8 + $0xfb8] sm:$0xff]
          %v8483 = vld [vmem:[#allocation8 + $0xfc0] sm:$0xff]
          %v8484 = vld [vmem:[#allocation8 + $0xfc8] sm:$0xff]
          %v8485 = vld [vmem:[#allocation8 + $0xfd0] sm:$0xff]
          %v8486 = vld [vmem:[#allocation8 + $0xfd8] sm:$0xff]
          %v8487 = vld [vmem:[#allocation8 + $0xfe0] sm:$0xff]
          %v8488 = vld [vmem:[#allocation8 + $0xfe8] sm:$0xff]
          %v8489 = vld [vmem:[#allocation8 + $0xff0] sm:$0xff]
          %v8490 = vld [vmem:[#allocation8 + $0xff8] sm:$0xff]
          %v8491 = vld [vmem:[#allocation9] sm:$0x1]
          %v8493 = vlaneseq
          %v8494 = vshrl.u32 %v8493, 7
          %v8495 = vsub.s32 0, %v8494
          %v8496 = vrot.slane %v8491, %v8495
          %v8506 = vcombine.high %v7971, %v7971
          %v8508 = vunpack.c.l.s4 1983009808
          %v8509 = vunpack.c.0.s8 %v8508
          %v8510 = vlaneseq
          %v8511 = vshrl.u32 %v8510, 7
          %v8512 = vsub.s32 %v8509, %v8511
          %v8513 = vrot.slane %v7971, %v8512
          %v8515 = vunpack.c.l.s4 1983009808
          %v8516 = vunpack.c.0.s8 %v8515
          %v8517 = vlaneseq
          %v8518 = vshrl.u32 %v8517, 7
          %v8519 = vsub.s32 %v8516, %v8518
          %v8520 = vrot.slane %v8506, %v8519
          %v8521 = vcombine.high %v8513, %v8513
          %v8522 = vcombine.high %v8520, %v8520
          %v8523 = vcombine.high %v7972, %v7972
          %v8525 = vunpack.c.l.s4 1983009808
          %v8526 = vunpack.c.0.s8 %v8525
          %v8527 = vlaneseq
          %v8528 = vshrl.u32 %v8527, 7
          %v8529 = vsub.s32 %v8526, %v8528
          %v8530 = vrot.slane %v7972, %v8529
          %v8532 = vunpack.c.l.s4 1983009808
          %v8533 = vunpack.c.0.s8 %v8532
          %v8534 = vlaneseq
          %v8535 = vshrl.u32 %v8534, 7
          %v8536 = vsub.s32 %v8533, %v8535
          %v8537 = vrot.slane %v8523, %v8536
          %v8538 = vcombine.high %v8530, %v8530
          %v8539 = vcombine.high %v8537, %v8537
          %v8540 = vcombine.high %v7973, %v7973
          %v8542 = vunpack.c.l.s4 1983009808
          %v8543 = vunpack.c.0.s8 %v8542
          %v8544 = vlaneseq
          %v8545 = vshrl.u32 %v8544, 7
          %v8546 = vsub.s32 %v8543, %v8545
          %v8547 = vrot.slane %v7973, %v8546
          %v8549 = vunpack.c.l.s4 1983009808
          %v8550 = vunpack.c.0.s8 %v8549
          %v8551 = vlaneseq
          %v8552 = vshrl.u32 %v8551, 7
          %v8553 = vsub.s32 %v8550, %v8552
          %v8554 = vrot.slane %v8540, %v8553
          %v8555 = vcombine.high %v8547, %v8547
          %v8556 = vcombine.high %v8554, %v8554
          %v8557 = vcombine.high %v7974, %v7974
          %v8559 = vunpack.c.l.s4 1983009808
          %v8560 = vunpack.c.0.s8 %v8559
          %v8561 = vlaneseq
          %v8562 = vshrl.u32 %v8561, 7
          %v8563 = vsub.s32 %v8560, %v8562
          %v8564 = vrot.slane %v7974, %v8563
          %v8566 = vunpack.c.l.s4 1983009808
          %v8567 = vunpack.c.0.s8 %v8566
          %v8568 = vlaneseq
          %v8569 = vshrl.u32 %v8568, 7
          %v8570 = vsub.s32 %v8567, %v8569
          %v8571 = vrot.slane %v8557, %v8570
          %v8572 = vcombine.high %v8564, %v8564
          %v8573 = vcombine.high %v8571, %v8571
          %v8574 = vcombine.high %v7975, %v7975
          %v8576 = vunpack.c.l.s4 1983009808
          %v8577 = vunpack.c.0.s8 %v8576
          %v8578 = vlaneseq
          %v8579 = vshrl.u32 %v8578, 7
          %v8580 = vsub.s32 %v8577, %v8579
          %v8581 = vrot.slane %v7975, %v8580
          %v8583 = vunpack.c.l.s4 1983009808
          %v8584 = vunpack.c.0.s8 %v8583
          %v8585 = vlaneseq
          %v8586 = vshrl.u32 %v8585, 7
          %v8587 = vsub.s32 %v8584, %v8586
          %v8588 = vrot.slane %v8574, %v8587
          %v8589 = vcombine.high %v8581, %v8581
          %v8590 = vcombine.high %v8588, %v8588
          %v8591 = vcombine.high %v7976, %v7976
          %v8593 = vunpack.c.l.s4 1983009808
          %v8594 = vunpack.c.0.s8 %v8593
          %v8595 = vlaneseq
          %v8596 = vshrl.u32 %v8595, 7
          %v8597 = vsub.s32 %v8594, %v8596
          %v8598 = vrot.slane %v7976, %v8597
          %v8600 = vunpack.c.l.s4 1983009808
          %v8601 = vunpack.c.0.s8 %v8600
          %v8602 = vlaneseq
          %v8603 = vshrl.u32 %v8602, 7
          %v8604 = vsub.s32 %v8601, %v8603
          %v8605 = vrot.slane %v8591, %v8604
          %v8606 = vcombine.high %v8598, %v8598
          %v8607 = vcombine.high %v8605, %v8605
          %v8608 = vcombine.high %v7977, %v7977
          %v8610 = vunpack.c.l.s4 1983009808
          %v8611 = vunpack.c.0.s8 %v8610
          %v8612 = vlaneseq
          %v8613 = vshrl.u32 %v8612, 7
          %v8614 = vsub.s32 %v8611, %v8613
          %v8615 = vrot.slane %v7977, %v8614
          %v8617 = vunpack.c.l.s4 1983009808
          %v8618 = vunpack.c.0.s8 %v8617
          %v8619 = vlaneseq
          %v8620 = vshrl.u32 %v8619, 7
          %v8621 = vsub.s32 %v8618, %v8620
          %v8622 = vrot.slane %v8608, %v8621
          %v8623 = vcombine.high %v8615, %v8615
          %v8624 = vcombine.high %v8622, %v8622
          %v8625 = vcombine.high %v7978, %v7978
          %v8627 = vunpack.c.l.s4 1983009808
          %v8628 = vunpack.c.0.s8 %v8627
          %v8629 = vlaneseq
          %v8630 = vshrl.u32 %v8629, 7
          %v8631 = vsub.s32 %v8628, %v8630
          %v8632 = vrot.slane %v7978, %v8631
          %v8634 = vunpack.c.l.s4 1983009808
          %v8635 = vunpack.c.0.s8 %v8634
          %v8636 = vlaneseq
          %v8637 = vshrl.u32 %v8636, 7
          %v8638 = vsub.s32 %v8635, %v8637
          %v8639 = vrot.slane %v8625, %v8638
          %v8640 = vcombine.high %v8632, %v8632
          %v8641 = vcombine.high %v8639, %v8639
          %8674 = vmatprep.subr.mxu0 0.0
          %8675 = vmatpush1.msra.mxu0 %v7979
          %8676 = vmatprep.subr.mxu0 0.0
          %8677 = vmatpush1.msra.mxu0 %v7980
          %8678 = vmatprep.subr.mxu0 0.0
          %8679 = vmatpush1.msra.mxu0 %v7981
          %8680 = vmatprep.subr.mxu0 0.0
          %8681 = vmatpush1.msra.mxu0 %v7982
          %8682 = vmatprep.subr.mxu0 0.0
          %8683 = vmatpush1.msra.mxu0 %v7983
          %8684 = vmatprep.subr.mxu0 0.0
          %8685 = vmatpush1.msra.mxu0 %v7984
          %8686 = vmatprep.subr.mxu0 0.0
          %8687 = vmatpush1.msra.mxu0 %v7985
          %8688 = vmatprep.subr.mxu0 0.0
          %8689 = vmatpush1.msra.mxu0 %v7986
          %8690 = vmatprep.subr.mxu0 0.0
          %8691 = vmatpush1.msra.mxu0 %v7987
          %8692 = vmatprep.subr.mxu0 0.0
          %8693 = vmatpush1.msra.mxu0 %v7988
          %8694 = vmatprep.subr.mxu0 0.0
          %8695 = vmatpush1.msra.mxu0 %v7989
          %8696 = vmatprep.subr.mxu0 0.0
          %8697 = vmatpush1.msra.mxu0 %v7990
          %8698 = vmatprep.subr.mxu0 0.0
          %8699 = vmatpush1.msra.mxu0 %v7991
          %8700 = vmatprep.subr.mxu0 0.0
          %8701 = vmatpush1.msra.mxu0 %v7992
          %8702 = vmatprep.subr.mxu0 0.0
          %8703 = vmatpush1.msra.mxu0 %v7993
          %8704 = vmatprep.subr.mxu0 0.0
          %8705 = vmatpush1.msra.mxu0 %v7994
          %8706 = vmatprep.subr.mxu0 0.0
          %8707 = vmatpush1.msra.mxu0 %v7995
          %8708 = vmatprep.subr.mxu0 0.0
          %8709 = vmatpush1.msra.mxu0 %v7996
          %8710 = vmatprep.subr.mxu0 0.0
          %8711 = vmatpush1.msra.mxu0 %v7997
          %8712 = vmatprep.subr.mxu0 0.0
          %8713 = vmatpush1.msra.mxu0 %v7998
          %8714 = vmatprep.subr.mxu0 0.0
          %8715 = vmatpush1.msra.mxu0 %v7999
          %8716 = vmatprep.subr.mxu0 0.0
          %8717 = vmatpush1.msra.mxu0 %v8000
          %8718 = vmatprep.subr.mxu0 0.0
          %8719 = vmatpush1.msra.mxu0 %v8001
          %8720 = vmatprep.subr.mxu0 0.0
          %8721 = vmatpush1.msra.mxu0 %v8002
          %8722 = vmatprep.subr.mxu0 0.0
          %8723 = vmatpush1.msra.mxu0 %v8003
          %8724 = vmatprep.subr.mxu0 0.0
          %8725 = vmatpush1.msra.mxu0 %v8004
          %8726 = vmatprep.subr.mxu0 0.0
          %8727 = vmatpush1.msra.mxu0 %v8005
          %8728 = vmatprep.subr.mxu0 0.0
          %8729 = vmatpush1.msra.mxu0 %v8006
          %8730 = vmatprep.subr.mxu0 0.0
          %8731 = vmatpush1.msra.mxu0 %v8007
          %8732 = vmatprep.subr.mxu0 0.0
          %8733 = vmatpush1.msra.mxu0 %v8008
          %8734 = vmatprep.subr.mxu0 0.0
          %8735 = vmatpush1.msra.mxu0 %v8009
          %8736 = vmatprep.subr.mxu0 0.0
          %8737 = vmatpush1.msra.mxu0 %v8010
          %8738 = vmatprep.mubr.f32.mxu0 %v8521
          %8739 = vmatmul.mubr.f32.gmra.mrb[0].mxu0 %v8513
          %v8740 = vpop.f32.mrb[0].mxu0
          %v8741 = vadd.f32 %v8496, %v8740
          %v8742 = vpop.f32.mrb[0].mxu0
          %8743 = vdwg.mxu0
          %8744 = vmatprep.subr.mxu0 0.0
          %8745 = vmatpush1.msra.mxu0 %v8011
          %8746 = vmatprep.subr.mxu0 0.0
          %8747 = vmatpush1.msra.mxu0 %v8012
          %8748 = vmatprep.subr.mxu0 0.0
          %8749 = vmatpush1.msra.mxu0 %v8013
          %8750 = vmatprep.subr.mxu0 0.0
          %8751 = vmatpush1.msra.mxu0 %v8014
          %8752 = vmatprep.subr.mxu0 0.0
          %8753 = vmatpush1.msra.mxu0 %v8015
          %8754 = vmatprep.subr.mxu0 0.0
          %8755 = vmatpush1.msra.mxu0 %v8016
          %8756 = vmatprep.subr.mxu0 0.0
          %8757 = vmatpush1.msra.mxu0 %v8017
          %8758 = vmatprep.subr.mxu0 0.0
          %8759 = vmatpush1.msra.mxu0 %v8018
          %8760 = vmatprep.subr.mxu0 0.0
          %8761 = vmatpush1.msra.mxu0 %v8019
          %8762 = vmatprep.subr.mxu0 0.0
          %8763 = vmatpush1.msra.mxu0 %v8020
          %8764 = vmatprep.subr.mxu0 0.0
          %8765 = vmatpush1.msra.mxu0 %v8021
          %8766 = vmatprep.subr.mxu0 0.0
          %8767 = vmatpush1.msra.mxu0 %v8022
          %8768 = vmatprep.subr.mxu0 0.0
          %8769 = vmatpush1.msra.mxu0 %v8023
          %8770 = vmatprep.subr.mxu0 0.0
          %8771 = vmatpush1.msra.mxu0 %v8024
          %8772 = vmatprep.subr.mxu0 0.0
          %8773 = vmatpush1.msra.mxu0 %v8025
          %8774 = vmatprep.subr.mxu0 0.0
          %8775 = vmatpush1.msra.mxu0 %v8026
          %8776 = vmatprep.subr.mxu0 0.0
          %8777 = vmatpush1.msra.mxu0 %v8027
          %8778 = vmatprep.subr.mxu0 0.0
          %8779 = vmatpush1.msra.mxu0 %v8028
          %8780 = vmatprep.subr.mxu0 0.0
          %8781 = vmatpush1.msra.mxu0 %v8029
          %8782 = vmatprep.subr.mxu0 0.0
          %8783 = vmatpush1.msra.mxu0 %v8030
          %8784 = vmatprep.subr.mxu0 0.0
          %8785 = vmatpush1.msra.mxu0 %v8031
          %8786 = vmatprep.subr.mxu0 0.0
          %8787 = vmatpush1.msra.mxu0 %v8032
          %8788 = vmatprep.subr.mxu0 0.0
          %8789 = vmatpush1.msra.mxu0 %v8033
          %8790 = vmatprep.subr.mxu0 0.0
          %8791 = vmatpush1.msra.mxu0 %v8034
          %8792 = vmatprep.subr.mxu0 0.0
          %8793 = vmatpush1.msra.mxu0 %v8035
          %8794 = vmatprep.subr.mxu0 0.0
          %8795 = vmatpush1.msra.mxu0 %v8036
          %8796 = vmatprep.subr.mxu0 0.0
          %8797 = vmatpush1.msra.mxu0 %v8037
          %8798 = vmatprep.subr.mxu0 0.0
          %8799 = vmatpush1.msra.mxu0 %v8038
          %8800 = vmatprep.subr.mxu0 0.0
          %8801 = vmatpush1.msra.mxu0 %v8039
          %8802 = vmatprep.subr.mxu0 0.0
          %8803 = vmatpush1.msra.mxu0 %v8040
          %8804 = vmatprep.subr.mxu0 0.0
          %8805 = vmatpush1.msra.mxu0 %v8041
          %8806 = vmatprep.subr.mxu0 0.0
          %8807 = vmatpush1.msra.mxu0 %v8042
          %8808 = vmatprep.mubr.f32.mxu0 %v8522
          %8809 = vmatmul.mubr.f32.gmra.mrb[0].mxu0 %v8520
          %v8810 = vpop.f32.mrb[0].mxu0
          %v8811 = vadd.f32 %v8741, %v8810
          %v8812 = vpop.f32.mrb[0].mxu0
          %8813 = vdwg.mxu0
          %8814 = vmatprep.subr.mxu0 0.0
          %8815 = vmatpush1.msra.mxu0 %v8043
          %8816 = vmatprep.subr.mxu0 0.0
          %8817 = vmatpush1.msra.mxu0 %v8044
          %8818 = vmatprep.subr.mxu0 0.0
          %8819 = vmatpush1.msra.mxu0 %v8045
          %8820 = vmatprep.subr.mxu0 0.0
          %8821 = vmatpush1.msra.mxu0 %v8046
          %8822 = vmatprep.subr.mxu0 0.0
          %8823 = vmatpush1.msra.mxu0 %v8047
          %8824 = vmatprep.subr.mxu0 0.0
          %8825 = vmatpush1.msra.mxu0 %v8048
          %8826 = vmatprep.subr.mxu0 0.0
          %8827 = vmatpush1.msra.mxu0 %v8049
          %8828 = vmatprep.subr.mxu0 0.0
          %8829 = vmatpush1.msra.mxu0 %v8050
          %8830 = vmatprep.subr.mxu0 0.0
          %8831 = vmatpush1.msra.mxu0 %v8051
          %8832 = vmatprep.subr.mxu0 0.0
          %8833 = vmatpush1.msra.mxu0 %v8052
          %8834 = vmatprep.subr.mxu0 0.0
          %8835 = vmatpush1.msra.mxu0 %v8053
          %8836 = vmatprep.subr.mxu0 0.0
          %8837 = vmatpush1.msra.mxu0 %v8054
          %8838 = vmatprep.subr.mxu0 0.0
          %8839 = vmatpush1.msra.mxu0 %v8055
          %8840 = vmatprep.subr.mxu0 0.0
          %8841 = vmatpush1.msra.mxu0 %v8056
          %8842 = vmatprep.subr.mxu0 0.0
          %8843 = vmatpush1.msra.mxu0 %v8057
          %8844 = vmatprep.subr.mxu0 0.0
          %8845 = vmatpush1.msra.mxu0 %v8058
          %8846 = vmatprep.subr.mxu0 0.0
          %8847 = vmatpush1.msra.mxu0 %v8059
          %8848 = vmatprep.subr.mxu0 0.0
          %8849 = vmatpush1.msra.mxu0 %v8060
          %8850 = vmatprep.subr.mxu0 0.0
          %8851 = vmatpush1.msra.mxu0 %v8061
          %8852 = vmatprep.subr.mxu0 0.0
          %8853 = vmatpush1.msra.mxu0 %v8062
          %8854 = vmatprep.subr.mxu0 0.0
          %8855 = vmatpush1.msra.mxu0 %v8063
          %8856 = vmatprep.subr.mxu0 0.0
          %8857 = vmatpush1.msra.mxu0 %v8064
          %8858 = vmatprep.subr.mxu0 0.0
          %8859 = vmatpush1.msra.mxu0 %v8065
          %8860 = vmatprep.subr.mxu0 0.0
          %8861 = vmatpush1.msra.mxu0 %v8066
          %8862 = vmatprep.subr.mxu0 0.0
          %8863 = vmatpush1.msra.mxu0 %v8067
          %8864 = vmatprep.subr.mxu0 0.0
          %8865 = vmatpush1.msra.mxu0 %v8068
          %8866 = vmatprep.subr.mxu0 0.0
          %8867 = vmatpush1.msra.mxu0 %v8069
          %8868 = vmatprep.subr.mxu0 0.0
          %8869 = vmatpush1.msra.mxu0 %v8070
          %8870 = vmatprep.subr.mxu0 0.0
          %8871 = vmatpush1.msra.mxu0 %v8071
          %8872 = vmatprep.subr.mxu0 0.0
          %8873 = vmatpush1.msra.mxu0 %v8072
          %8874 = vmatprep.subr.mxu0 0.0
          %8875 = vmatpush1.msra.mxu0 %v8073
          %8876 = vmatprep.subr.mxu0 0.0
          %8877 = vmatpush1.msra.mxu0 %v8074
          %8878 = vmatprep.mubr.f32.mxu0 %v8538
          %8879 = vmatmul.mubr.f32.gmra.mrb[0].mxu0 %v8530
          %v8880 = vpop.f32.mrb[0].mxu0
          %v8881 = vadd.f32 %v8811, %v8880
          %v8882 = vpop.f32.mrb[0].mxu0
          %8883 = vdwg.mxu0
          %8884 = vmatprep.subr.mxu0 0.0
          %8885 = vmatpush1.msra.mxu0 %v8075
          %8886 = vmatprep.subr.mxu0 0.0
          %8887 = vmatpush1.msra.mxu0 %v8076
          %8888 = vmatprep.subr.mxu0 0.0
          %8889 = vmatpush1.msra.mxu0 %v8077
          %8890 = vmatprep.subr.mxu0 0.0
          %8891 = vmatpush1.msra.mxu0 %v8078
          %8892 = vmatprep.subr.mxu0 0.0
          %8893 = vmatpush1.msra.mxu0 %v8079
          %8894 = vmatprep.subr.mxu0 0.0
          %8895 = vmatpush1.msra.mxu0 %v8080
          %8896 = vmatprep.subr.mxu0 0.0
          %8897 = vmatpush1.msra.mxu0 %v8081
          %8898 = vmatprep.subr.mxu0 0.0
          %8899 = vmatpush1.msra.mxu0 %v8082
          %8900 = vmatprep.subr.mxu0 0.0
          %8901 = vmatpush1.msra.mxu0 %v8083
          %8902 = vmatprep.subr.mxu0 0.0
          %8903 = vmatpush1.msra.mxu0 %v8084
          %8904 = vmatprep.subr.mxu0 0.0
          %8905 = vmatpush1.msra.mxu0 %v8085
          %8906 = vmatprep.subr.mxu0 0.0
          %8907 = vmatpush1.msra.mxu0 %v8086
          %8908 = vmatprep.subr.mxu0 0.0
          %8909 = vmatpush1.msra.mxu0 %v8087
          %8910 = vmatprep.subr.mxu0 0.0
          %8911 = vmatpush1.msra.mxu0 %v8088
          %8912 = vmatprep.subr.mxu0 0.0
          %8913 = vmatpush1.msra.mxu0 %v8089
          %8914 = vmatprep.subr.mxu0 0.0
          %8915 = vmatpush1.msra.mxu0 %v8090
          %8916 = vmatprep.subr.mxu0 0.0
          %8917 = vmatpush1.msra.mxu0 %v8091
          %8918 = vmatprep.subr.mxu0 0.0
          %8919 = vmatpush1.msra.mxu0 %v8092
          %8920 = vmatprep.subr.mxu0 0.0
          %8921 = vmatpush1.msra.mxu0 %v8093
          %8922 = vmatprep.subr.mxu0 0.0
          %8923 = vmatpush1.msra.mxu0 %v8094
          %8924 = vmatprep.subr.mxu0 0.0
          %8925 = vmatpush1.msra.mxu0 %v8095
          %8926 = vmatprep.subr.mxu0 0.0
          %8927 = vmatpush1.msra.mxu0 %v8096
          %8928 = vmatprep.subr.mxu0 0.0
          %8929 = vmatpush1.msra.mxu0 %v8097
          %8930 = vmatprep.subr.mxu0 0.0
          %8931 = vmatpush1.msra.mxu0 %v8098
          %8932 = vmatprep.subr.mxu0 0.0
          %8933 = vmatpush1.msra.mxu0 %v8099
          %8934 = vmatprep.subr.mxu0 0.0
          %8935 = vmatpush1.msra.mxu0 %v8100
          %8936 = vmatprep.subr.mxu0 0.0
          %8937 = vmatpush1.msra.mxu0 %v8101
          %8938 = vmatprep.subr.mxu0 0.0
          %8939 = vmatpush1.msra.mxu0 %v8102
          %8940 = vmatprep.subr.mxu0 0.0
          %8941 = vmatpush1.msra.mxu0 %v8103
          %8942 = vmatprep.subr.mxu0 0.0
          %8943 = vmatpush1.msra.mxu0 %v8104
          %8944 = vmatprep.subr.mxu0 0.0
          %8945 = vmatpush1.msra.mxu0 %v8105
          %8946 = vmatprep.subr.mxu0 0.0
          %8947 = vmatpush1.msra.mxu0 %v8106
          %8948 = vmatprep.mubr.f32.mxu0 %v8539
          %8949 = vmatmul.mubr.f32.gmra.mrb[0].mxu0 %v8537
          %v8950 = vpop.f32.mrb[0].mxu0
          %v8951 = vadd.f32 %v8881, %v8950
          %v8952 = vpop.f32.mrb[0].mxu0
          %8953 = vdwg.mxu0
          %8954 = vmatprep.subr.mxu0 0.0
          %8955 = vmatpush1.msra.mxu0 %v8107
          %8956 = vmatprep.subr.mxu0 0.0
          %8957 = vmatpush1.msra.mxu0 %v8108
          %8958 = vmatprep.subr.mxu0 0.0
          %8959 = vmatpush1.msra.mxu0 %v8109
          %8960 = vmatprep.subr.mxu0 0.0
          %8961 = vmatpush1.msra.mxu0 %v8110
          %8962 = vmatprep.subr.mxu0 0.0
          %8963 = vmatpush1.msra.mxu0 %v8111
          %8964 = vmatprep.subr.mxu0 0.0
          %8965 = vmatpush1.msra.mxu0 %v8112
          %8966 = vmatprep.subr.mxu0 0.0
          %8967 = vmatpush1.msra.mxu0 %v8113
          %8968 = vmatprep.subr.mxu0 0.0
          %8969 = vmatpush1.msra.mxu0 %v8114
          %8970 = vmatprep.subr.mxu0 0.0
          %8971 = vmatpush1.msra.mxu0 %v8115
          %8972 = vmatprep.subr.mxu0 0.0
          %8973 = vmatpush1.msra.mxu0 %v8116
          %8974 = vmatprep.subr.mxu0 0.0
          %8975 = vmatpush1.msra.mxu0 %v8117
          %8976 = vmatprep.subr.mxu0 0.0
          %8977 = vmatpush1.msra.mxu0 %v8118
          %8978 = vmatprep.subr.mxu0 0.0
          %8979 = vmatpush1.msra.mxu0 %v8119
          %8980 = vmatprep.subr.mxu0 0.0
          %8981 = vmatpush1.msra.mxu0 %v8120
          %8982 = vmatprep.subr.mxu0 0.0
          %8983 = vmatpush1.msra.mxu0 %v8121
          %8984 = vmatprep.subr.mxu0 0.0
          %8985 = vmatpush1.msra.mxu0 %v8122
          %8986 = vmatprep.subr.mxu0 0.0
          %8987 = vmatpush1.msra.mxu0 %v8123
          %8988 = vmatprep.subr.mxu0 0.0
          %8989 = vmatpush1.msra.mxu0 %v8124
          %8990 = vmatprep.subr.mxu0 0.0
          %8991 = vmatpush1.msra.mxu0 %v8125
          %8992 = vmatprep.subr.mxu0 0.0
          %8993 = vmatpush1.msra.mxu0 %v8126
          %8994 = vmatprep.subr.mxu0 0.0
          %8995 = vmatpush1.msra.mxu0 %v8127
          %8996 = vmatprep.subr.mxu0 0.0
          %8997 = vmatpush1.msra.mxu0 %v8128
          %8998 = vmatprep.subr.mxu0 0.0
          %8999 = vmatpush1.msra.mxu0 %v8129
          %9000 = vmatprep.subr.mxu0 0.0
          %9001 = vmatpush1.msra.mxu0 %v8130
          %9002 = vmatprep.subr.mxu0 0.0
          %9003 = vmatpush1.msra.mxu0 %v8131
          %9004 = vmatprep.subr.mxu0 0.0
          %9005 = vmatpush1.msra.mxu0 %v8132
          %9006 = vmatprep.subr.mxu0 0.0
          %9007 = vmatpush1.msra.mxu0 %v8133
          %9008 = vmatprep.subr.mxu0 0.0
          %9009 = vmatpush1.msra.mxu0 %v8134
          %9010 = vmatprep.subr.mxu0 0.0
          %9011 = vmatpush1.msra.mxu0 %v8135
          %9012 = vmatprep.subr.mxu0 0.0
          %9013 = vmatpush1.msra.mxu0 %v8136
          %9014 = vmatprep.subr.mxu0 0.0
          %9015 = vmatpush1.msra.mxu0 %v8137
          %9016 = vmatprep.subr.mxu0 0.0
          %9017 = vmatpush1.msra.mxu0 %v8138
          %9018 = vmatprep.mubr.f32.mxu0 %v8555
          %9019 = vmatmul.mubr.f32.gmra.mrb[0].mxu0 %v8547
          %v9020 = vpop.f32.mrb[0].mxu0
          %v9021 = vadd.f32 %v8951, %v9020
          %v9022 = vpop.f32.mrb[0].mxu0
          %9023 = vdwg.mxu0
          %9024 = vmatprep.subr.mxu0 0.0
          %9025 = vmatpush1.msra.mxu0 %v8139
          %9026 = vmatprep.subr.mxu0 0.0
          %9027 = vmatpush1.msra.mxu0 %v8140
          %9028 = vmatprep.subr.mxu0 0.0
          %9029 = vmatpush1.msra.mxu0 %v8141
          %9030 = vmatprep.subr.mxu0 0.0
          %9031 = vmatpush1.msra.mxu0 %v8142
          %9032 = vmatprep.subr.mxu0 0.0
          %9033 = vmatpush1.msra.mxu0 %v8143
          %9034 = vmatprep.subr.mxu0 0.0
          %9035 = vmatpush1.msra.mxu0 %v8144
          %9036 = vmatprep.subr.mxu0 0.0
          %9037 = vmatpush1.msra.mxu0 %v8145
          %9038 = vmatprep.subr.mxu0 0.0
          %9039 = vmatpush1.msra.mxu0 %v8146
          %9040 = vmatprep.subr.mxu0 0.0
          %9041 = vmatpush1.msra.mxu0 %v8147
          %9042 = vmatprep.subr.mxu0 0.0
          %9043 = vmatpush1.msra.mxu0 %v8148
          %9044 = vmatprep.subr.mxu0 0.0
          %9045 = vmatpush1.msra.mxu0 %v8149
          %9046 = vmatprep.subr.mxu0 0.0
          %9047 = vmatpush1.msra.mxu0 %v8150
          %9048 = vmatprep.subr.mxu0 0.0
          %9049 = vmatpush1.msra.mxu0 %v8151
          %9050 = vmatprep.subr.mxu0 0.0
          %9051 = vmatpush1.msra.mxu0 %v8152
          %9052 = vmatprep.subr.mxu0 0.0
          %9053 = vmatpush1.msra.mxu0 %v8153
          %9054 = vmatprep.subr.mxu0 0.0
          %9055 = vmatpush1.msra.mxu0 %v8154
          %9056 = vmatprep.subr.mxu0 0.0
          %9057 = vmatpush1.msra.mxu0 %v8155
          %9058 = vmatprep.subr.mxu0 0.0
          %9059 = vmatpush1.msra.mxu0 %v8156
          %9060 = vmatprep.subr.mxu0 0.0
          %9061 = vmatpush1.msra.mxu0 %v8157
          %9062 = vmatprep.subr.mxu0 0.0
          %9063 = vmatpush1.msra.mxu0 %v8158
          %9064 = vmatprep.subr.mxu0 0.0
          %9065 = vmatpush1.msra.mxu0 %v8159
          %9066 = vmatprep.subr.mxu0 0.0
          %9067 = vmatpush1.msra.mxu0 %v8160
          %9068 = vmatprep.subr.mxu0 0.0
          %9069 = vmatpush1.msra.mxu0 %v8161
          %9070 = vmatprep.subr.mxu0 0.0
          %9071 = vmatpush1.msra.mxu0 %v8162
          %9072 = vmatprep.subr.mxu0 0.0
          %9073 = vmatpush1.msra.mxu0 %v8163
          %9074 = vmatprep.subr.mxu0 0.0
          %9075 = vmatpush1.msra.mxu0 %v8164
          %9076 = vmatprep.subr.mxu0 0.0
          %9077 = vmatpush1.msra.mxu0 %v8165
          %9078 = vmatprep.subr.mxu0 0.0
          %9079 = vmatpush1.msra.mxu0 %v8166
          %9080 = vmatprep.subr.mxu0 0.0
          %9081 = vmatpush1.msra.mxu0 %v8167
          %9082 = vmatprep.subr.mxu0 0.0
          %9083 = vmatpush1.msra.mxu0 %v8168
          %9084 = vmatprep.subr.mxu0 0.0
          %9085 = vmatpush1.msra.mxu0 %v8169
          %9086 = vmatprep.subr.mxu0 0.0
          %9087 = vmatpush1.msra.mxu0 %v8170
          %9088 = vmatprep.mubr.f32.mxu0 %v8556
          %9089 = vmatmul.mubr.f32.gmra.mrb[0].mxu0 %v8554
          %v9090 = vpop.f32.mrb[0].mxu0
          %v9091 = vadd.f32 %v9021, %v9090
          %v9092 = vpop.f32.mrb[0].mxu0
          %9093 = vdwg.mxu0
          %9094 = vmatprep.subr.mxu0 0.0
          %9095 = vmatpush1.msra.mxu0 %v8171
          %9096 = vmatprep.subr.mxu0 0.0
          %9097 = vmatpush1.msra.mxu0 %v8172
          %9098 = vmatprep.subr.mxu0 0.0
          %9099 = vmatpush1.msra.mxu0 %v8173
          %9100 = vmatprep.subr.mxu0 0.0
          %9101 = vmatpush1.msra.mxu0 %v8174
          %9102 = vmatprep.subr.mxu0 0.0
          %9103 = vmatpush1.msra.mxu0 %v8175
          %9104 = vmatprep.subr.mxu0 0.0
          %9105 = vmatpush1.msra.mxu0 %v8176
          %9106 = vmatprep.subr.mxu0 0.0
          %9107 = vmatpush1.msra.mxu0 %v8177
          %9108 = vmatprep.subr.mxu0 0.0
          %9109 = vmatpush1.msra.mxu0 %v8178
          %9110 = vmatprep.subr.mxu0 0.0
          %9111 = vmatpush1.msra.mxu0 %v8179
          %9112 = vmatprep.subr.mxu0 0.0
          %9113 = vmatpush1.msra.mxu0 %v8180
          %9114 = vmatprep.subr.mxu0 0.0
          %9115 = vmatpush1.msra.mxu0 %v8181
          %9116 = vmatprep.subr.mxu0 0.0
          %9117 = vmatpush1.msra.mxu0 %v8182
          %9118 = vmatprep.subr.mxu0 0.0
          %9119 = vmatpush1.msra.mxu0 %v8183
          %9120 = vmatprep.subr.mxu0 0.0
          %9121 = vmatpush1.msra.mxu0 %v8184
          %9122 = vmatprep.subr.mxu0 0.0
          %9123 = vmatpush1.msra.mxu0 %v8185
          %9124 = vmatprep.subr.mxu0 0.0
          %9125 = vmatpush1.msra.mxu0 %v8186
          %9126 = vmatprep.subr.mxu0 0.0
          %9127 = vmatpush1.msra.mxu0 %v8187
          %9128 = vmatprep.subr.mxu0 0.0
          %9129 = vmatpush1.msra.mxu0 %v8188
          %9130 = vmatprep.subr.mxu0 0.0
          %9131 = vmatpush1.msra.mxu0 %v8189
          %9132 = vmatprep.subr.mxu0 0.0
          %9133 = vmatpush1.msra.mxu0 %v8190
          %9134 = vmatprep.subr.mxu0 0.0
          %9135 = vmatpush1.msra.mxu0 %v8191
          %9136 = vmatprep.subr.mxu0 0.0
          %9137 = vmatpush1.msra.mxu0 %v8192
          %9138 = vmatprep.subr.mxu0 0.0
          %9139 = vmatpush1.msra.mxu0 %v8193
          %9140 = vmatprep.subr.mxu0 0.0
          %9141 = vmatpush1.msra.mxu0 %v8194
          %9142 = vmatprep.subr.mxu0 0.0
          %9143 = vmatpush1.msra.mxu0 %v8195
          %9144 = vmatprep.subr.mxu0 0.0
          %9145 = vmatpush1.msra.mxu0 %v8196
          %9146 = vmatprep.subr.mxu0 0.0
          %9147 = vmatpush1.msra.mxu0 %v8197
          %9148 = vmatprep.subr.mxu0 0.0
          %9149 = vmatpush1.msra.mxu0 %v8198
          %9150 = vmatprep.subr.mxu0 0.0
          %9151 = vmatpush1.msra.mxu0 %v8199
          %9152 = vmatprep.subr.mxu0 0.0
          %9153 = vmatpush1.msra.mxu0 %v8200
          %9154 = vmatprep.subr.mxu0 0.0
          %9155 = vmatpush1.msra.mxu0 %v8201
          %9156 = vmatprep.subr.mxu0 0.0
          %9157 = vmatpush1.msra.mxu0 %v8202
          %9158 = vmatprep.mubr.f32.mxu0 %v8572
          %9159 = vmatmul.mubr.f32.gmra.mrb[0].mxu0 %v8564
          %v9160 = vpop.f32.mrb[0].mxu0
          %v9161 = vadd.f32 %v9091, %v9160
          %v9162 = vpop.f32.mrb[0].mxu0
          %9163 = vdwg.mxu0
          %9164 = vmatprep.subr.mxu0 0.0
          %9165 = vmatpush1.msra.mxu0 %v8203
          %9166 = vmatprep.subr.mxu0 0.0
          %9167 = vmatpush1.msra.mxu0 %v8204
          %9168 = vmatprep.subr.mxu0 0.0
          %9169 = vmatpush1.msra.mxu0 %v8205
          %9170 = vmatprep.subr.mxu0 0.0
          %9171 = vmatpush1.msra.mxu0 %v8206
          %9172 = vmatprep.subr.mxu0 0.0
          %9173 = vmatpush1.msra.mxu0 %v8207
          %9174 = vmatprep.subr.mxu0 0.0
          %9175 = vmatpush1.msra.mxu0 %v8208
          %9176 = vmatprep.subr.mxu0 0.0
          %9177 = vmatpush1.msra.mxu0 %v8209
          %9178 = vmatprep.subr.mxu0 0.0
          %9179 = vmatpush1.msra.mxu0 %v8210
          %9180 = vmatprep.subr.mxu0 0.0
          %9181 = vmatpush1.msra.mxu0 %v8211
          %9182 = vmatprep.subr.mxu0 0.0
          %9183 = vmatpush1.msra.mxu0 %v8212
          %9184 = vmatprep.subr.mxu0 0.0
          %9185 = vmatpush1.msra.mxu0 %v8213
          %9186 = vmatprep.subr.mxu0 0.0
          %9187 = vmatpush1.msra.mxu0 %v8214
          %9188 = vmatprep.subr.mxu0 0.0
          %9189 = vmatpush1.msra.mxu0 %v8215
          %9190 = vmatprep.subr.mxu0 0.0
          %9191 = vmatpush1.msra.mxu0 %v8216
          %9192 = vmatprep.subr.mxu0 0.0
          %9193 = vmatpush1.msra.mxu0 %v8217
          %9194 = vmatprep.subr.mxu0 0.0
          %9195 = vmatpush1.msra.mxu0 %v8218
          %9196 = vmatprep.subr.mxu0 0.0
          %9197 = vmatpush1.msra.mxu0 %v8219
          %9198 = vmatprep.subr.mxu0 0.0
          %9199 = vmatpush1.msra.mxu0 %v8220
          %9200 = vmatprep.subr.mxu0 0.0
          %9201 = vmatpush1.msra.mxu0 %v8221
          %9202 = vmatprep.subr.mxu0 0.0
          %9203 = vmatpush1.msra.mxu0 %v8222
          %9204 = vmatprep.subr.mxu0 0.0
          %9205 = vmatpush1.msra.mxu0 %v8223
          %9206 = vmatprep.subr.mxu0 0.0
          %9207 = vmatpush1.msra.mxu0 %v8224
          %9208 = vmatprep.subr.mxu0 0.0
          %9209 = vmatpush1.msra.mxu0 %v8225
          %9210 = vmatprep.subr.mxu0 0.0
          %9211 = vmatpush1.msra.mxu0 %v8226
          %9212 = vmatprep.subr.mxu0 0.0
          %9213 = vmatpush1.msra.mxu0 %v8227
          %9214 = vmatprep.subr.mxu0 0.0
          %9215 = vmatpush1.msra.mxu0 %v8228
          %9216 = vmatprep.subr.mxu0 0.0
          %9217 = vmatpush1.msra.mxu0 %v8229
          %9218 = vmatprep.subr.mxu0 0.0
          %9219 = vmatpush1.msra.mxu0 %v8230
          %9220 = vmatprep.subr.mxu0 0.0
          %9221 = vmatpush1.msra.mxu0 %v8231
          %9222 = vmatprep.subr.mxu0 0.0
          %9223 = vmatpush1.msra.mxu0 %v8232
          %9224 = vmatprep.subr.mxu0 0.0
          %9225 = vmatpush1.msra.mxu0 %v8233
          %9226 = vmatprep.subr.mxu0 0.0
          %9227 = vmatpush1.msra.mxu0 %v8234
          %9228 = vmatprep.mubr.f32.mxu0 %v8573
          %9229 = vmatmul.mubr.f32.gmra.mrb[0].mxu0 %v8571
          %v9230 = vpop.f32.mrb[0].mxu0
          %v9231 = vadd.f32 %v9161, %v9230
          %v9232 = vpop.f32.mrb[0].mxu0
          %9233 = vdwg.mxu0
          %9234 = vmatprep.subr.mxu0 0.0
          %9235 = vmatpush1.msra.mxu0 %v8235
          %9236 = vmatprep.subr.mxu0 0.0
          %9237 = vmatpush1.msra.mxu0 %v8236
          %9238 = vmatprep.subr.mxu0 0.0
          %9239 = vmatpush1.msra.mxu0 %v8237
          %9240 = vmatprep.subr.mxu0 0.0
          %9241 = vmatpush1.msra.mxu0 %v8238
          %9242 = vmatprep.subr.mxu0 0.0
          %9243 = vmatpush1.msra.mxu0 %v8239
          %9244 = vmatprep.subr.mxu0 0.0
          %9245 = vmatpush1.msra.mxu0 %v8240
          %9246 = vmatprep.subr.mxu0 0.0
          %9247 = vmatpush1.msra.mxu0 %v8241
          %9248 = vmatprep.subr.mxu0 0.0
          %9249 = vmatpush1.msra.mxu0 %v8242
          %9250 = vmatprep.subr.mxu0 0.0
          %9251 = vmatpush1.msra.mxu0 %v8243
          %9252 = vmatprep.subr.mxu0 0.0
          %9253 = vmatpush1.msra.mxu0 %v8244
          %9254 = vmatprep.subr.mxu0 0.0
          %9255 = vmatpush1.msra.mxu0 %v8245
          %9256 = vmatprep.subr.mxu0 0.0
          %9257 = vmatpush1.msra.mxu0 %v8246
          %9258 = vmatprep.subr.mxu0 0.0
          %9259 = vmatpush1.msra.mxu0 %v8247
          %9260 = vmatprep.subr.mxu0 0.0
          %9261 = vmatpush1.msra.mxu0 %v8248
          %9262 = vmatprep.subr.mxu0 0.0
          %9263 = vmatpush1.msra.mxu0 %v8249
          %9264 = vmatprep.subr.mxu0 0.0
          %9265 = vmatpush1.msra.mxu0 %v8250
          %9266 = vmatprep.subr.mxu0 0.0
          %9267 = vmatpush1.msra.mxu0 %v8251
          %9268 = vmatprep.subr.mxu0 0.0
          %9269 = vmatpush1.msra.mxu0 %v8252
          %9270 = vmatprep.subr.mxu0 0.0
          %9271 = vmatpush1.msra.mxu0 %v8253
          %9272 = vmatprep.subr.mxu0 0.0
          %9273 = vmatpush1.msra.mxu0 %v8254
          %9274 = vmatprep.subr.mxu0 0.0
          %9275 = vmatpush1.msra.mxu0 %v8255
          %9276 = vmatprep.subr.mxu0 0.0
          %9277 = vmatpush1.msra.mxu0 %v8256
          %9278 = vmatprep.subr.mxu0 0.0
          %9279 = vmatpush1.msra.mxu0 %v8257
          %9280 = vmatprep.subr.mxu0 0.0
          %9281 = vmatpush1.msra.mxu0 %v8258
          %9282 = vmatprep.subr.mxu0 0.0
          %9283 = vmatpush1.msra.mxu0 %v8259
          %9284 = vmatprep.subr.mxu0 0.0
          %9285 = vmatpush1.msra.mxu0 %v8260
          %9286 = vmatprep.subr.mxu0 0.0
          %9287 = vmatpush1.msra.mxu0 %v8261
          %9288 = vmatprep.subr.mxu0 0.0
          %9289 = vmatpush1.msra.mxu0 %v8262
          %9290 = vmatprep.subr.mxu0 0.0
          %9291 = vmatpush1.msra.mxu0 %v8263
          %9292 = vmatprep.subr.mxu0 0.0
          %9293 = vmatpush1.msra.mxu0 %v8264
          %9294 = vmatprep.subr.mxu0 0.0
          %9295 = vmatpush1.msra.mxu0 %v8265
          %9296 = vmatprep.subr.mxu0 0.0
          %9297 = vmatpush1.msra.mxu0 %v8266
          %9298 = vmatprep.mubr.f32.mxu0 %v8589
          %9299 = vmatmul.mubr.f32.gmra.mrb[0].mxu0 %v8581
          %v9300 = vpop.f32.mrb[0].mxu0
          %v9301 = vadd.f32 %v9231, %v9300
          %v9302 = vpop.f32.mrb[0].mxu0
          %9303 = vdwg.mxu0
          %9304 = vmatprep.subr.mxu0 0.0
          %9305 = vmatpush1.msra.mxu0 %v8267
          %9306 = vmatprep.subr.mxu0 0.0
          %9307 = vmatpush1.msra.mxu0 %v8268
          %9308 = vmatprep.subr.mxu0 0.0
          %9309 = vmatpush1.msra.mxu0 %v8269
          %9310 = vmatprep.subr.mxu0 0.0
          %9311 = vmatpush1.msra.mxu0 %v8270
          %9312 = vmatprep.subr.mxu0 0.0
          %9313 = vmatpush1.msra.mxu0 %v8271
          %9314 = vmatprep.subr.mxu0 0.0
          %9315 = vmatpush1.msra.mxu0 %v8272
          %9316 = vmatprep.subr.mxu0 0.0
          %9317 = vmatpush1.msra.mxu0 %v8273
          %9318 = vmatprep.subr.mxu0 0.0
          %9319 = vmatpush1.msra.mxu0 %v8274
          %9320 = vmatprep.subr.mxu0 0.0
          %9321 = vmatpush1.msra.mxu0 %v8275
          %9322 = vmatprep.subr.mxu0 0.0
          %9323 = vmatpush1.msra.mxu0 %v8276
          %9324 = vmatprep.subr.mxu0 0.0
          %9325 = vmatpush1.msra.mxu0 %v8277
          %9326 = vmatprep.subr.mxu0 0.0
          %9327 = vmatpush1.msra.mxu0 %v8278
          %9328 = vmatprep.subr.mxu0 0.0
          %9329 = vmatpush1.msra.mxu0 %v8279
          %9330 = vmatprep.subr.mxu0 0.0
          %9331 = vmatpush1.msra.mxu0 %v8280
          %9332 = vmatprep.subr.mxu0 0.0
          %9333 = vmatpush1.msra.mxu0 %v8281
          %9334 = vmatprep.subr.mxu0 0.0
          %9335 = vmatpush1.msra.mxu0 %v8282
          %9336 = vmatprep.subr.mxu0 0.0
          %9337 = vmatpush1.msra.mxu0 %v8283
          %9338 = vmatprep.subr.mxu0 0.0
          %9339 = vmatpush1.msra.mxu0 %v8284
          %9340 = vmatprep.subr.mxu0 0.0
          %9341 = vmatpush1.msra.mxu0 %v8285
          %9342 = vmatprep.subr.mxu0 0.0
          %9343 = vmatpush1.msra.mxu0 %v8286
          %9344 = vmatprep.subr.mxu0 0.0
          %9345 = vmatpush1.msra.mxu0 %v8287
          %9346 = vmatprep.subr.mxu0 0.0
          %9347 = vmatpush1.msra.mxu0 %v8288
          %9348 = vmatprep.subr.mxu0 0.0
          %9349 = vmatpush1.msra.mxu0 %v8289
          %9350 = vmatprep.subr.mxu0 0.0
          %9351 = vmatpush1.msra.mxu0 %v8290
          %9352 = vmatprep.subr.mxu0 0.0
          %9353 = vmatpush1.msra.mxu0 %v8291
          %9354 = vmatprep.subr.mxu0 0.0
          %9355 = vmatpush1.msra.mxu0 %v8292
          %9356 = vmatprep.subr.mxu0 0.0
          %9357 = vmatpush1.msra.mxu0 %v8293
          %9358 = vmatprep.subr.mxu0 0.0
          %9359 = vmatpush1.msra.mxu0 %v8294
          %9360 = vmatprep.subr.mxu0 0.0
          %9361 = vmatpush1.msra.mxu0 %v8295
          %9362 = vmatprep.subr.mxu0 0.0
          %9363 = vmatpush1.msra.mxu0 %v8296
          %9364 = vmatprep.subr.mxu0 0.0
          %9365 = vmatpush1.msra.mxu0 %v8297
          %9366 = vmatprep.subr.mxu0 0.0
          %9367 = vmatpush1.msra.mxu0 %v8298
          %9368 = vmatprep.mubr.f32.mxu0 %v8590
          %9369 = vmatmul.mubr.f32.gmra.mrb[0].mxu0 %v8588
          %v9370 = vpop.f32.mrb[0].mxu0
          %v9371 = vadd.f32 %v9301, %v9370
          %v9372 = vpop.f32.mrb[0].mxu0
          %9373 = vdwg.mxu0
          %9374 = vmatprep.subr.mxu0 0.0
          %9375 = vmatpush1.msra.mxu0 %v8299
          %9376 = vmatprep.subr.mxu0 0.0
          %9377 = vmatpush1.msra.mxu0 %v8300
          %9378 = vmatprep.subr.mxu0 0.0
          %9379 = vmatpush1.msra.mxu0 %v8301
          %9380 = vmatprep.subr.mxu0 0.0
          %9381 = vmatpush1.msra.mxu0 %v8302
          %9382 = vmatprep.subr.mxu0 0.0
          %9383 = vmatpush1.msra.mxu0 %v8303
          %9384 = vmatprep.subr.mxu0 0.0
          %9385 = vmatpush1.msra.mxu0 %v8304
          %9386 = vmatprep.subr.mxu0 0.0
          %9387 = vmatpush1.msra.mxu0 %v8305
          %9388 = vmatprep.subr.mxu0 0.0
          %9389 = vmatpush1.msra.mxu0 %v8306
          %9390 = vmatprep.subr.mxu0 0.0
          %9391 = vmatpush1.msra.mxu0 %v8307
          %9392 = vmatprep.subr.mxu0 0.0
          %9393 = vmatpush1.msra.mxu0 %v8308
          %9394 = vmatprep.subr.mxu0 0.0
          %9395 = vmatpush1.msra.mxu0 %v8309
          %9396 = vmatprep.subr.mxu0 0.0
          %9397 = vmatpush1.msra.mxu0 %v8310
          %9398 = vmatprep.subr.mxu0 0.0
          %9399 = vmatpush1.msra.mxu0 %v8311
          %9400 = vmatprep.subr.mxu0 0.0
          %9401 = vmatpush1.msra.mxu0 %v8312
          %9402 = vmatprep.subr.mxu0 0.0
          %9403 = vmatpush1.msra.mxu0 %v8313
          %9404 = vmatprep.subr.mxu0 0.0
          %9405 = vmatpush1.msra.mxu0 %v8314
          %9406 = vmatprep.subr.mxu0 0.0
          %9407 = vmatpush1.msra.mxu0 %v8315
          %9408 = vmatprep.subr.mxu0 0.0
          %9409 = vmatpush1.msra.mxu0 %v8316
          %9410 = vmatprep.subr.mxu0 0.0
          %9411 = vmatpush1.msra.mxu0 %v8317
          %9412 = vmatprep.subr.mxu0 0.0
          %9413 = vmatpush1.msra.mxu0 %v8318
          %9414 = vmatprep.subr.mxu0 0.0
          %9415 = vmatpush1.msra.mxu0 %v8319
          %9416 = vmatprep.subr.mxu0 0.0
          %9417 = vmatpush1.msra.mxu0 %v8320
          %9418 = vmatprep.subr.mxu0 0.0
          %9419 = vmatpush1.msra.mxu0 %v8321
          %9420 = vmatprep.subr.mxu0 0.0
          %9421 = vmatpush1.msra.mxu0 %v8322
          %9422 = vmatprep.subr.mxu0 0.0
          %9423 = vmatpush1.msra.mxu0 %v8323
          %9424 = vmatprep.subr.mxu0 0.0
          %9425 = vmatpush1.msra.mxu0 %v8324
          %9426 = vmatprep.subr.mxu0 0.0
          %9427 = vmatpush1.msra.mxu0 %v8325
          %9428 = vmatprep.subr.mxu0 0.0
          %9429 = vmatpush1.msra.mxu0 %v8326
          %9430 = vmatprep.subr.mxu0 0.0
          %9431 = vmatpush1.msra.mxu0 %v8327
          %9432 = vmatprep.subr.mxu0 0.0
          %9433 = vmatpush1.msra.mxu0 %v8328
          %9434 = vmatprep.subr.mxu0 0.0
          %9435 = vmatpush1.msra.mxu0 %v8329
          %9436 = vmatprep.subr.mxu0 0.0
          %9437 = vmatpush1.msra.mxu0 %v8330
          %9438 = vmatprep.mubr.f32.mxu0 %v8606
          %9439 = vmatmul.mubr.f32.gmra.mrb[0].mxu0 %v8598
          %v9440 = vpop.f32.mrb[0].mxu0
          %v9441 = vadd.f32 %v9371, %v9440
          %v9442 = vpop.f32.mrb[0].mxu0
          %9443 = vdwg.mxu0
          %9444 = vmatprep.subr.mxu0 0.0
          %9445 = vmatpush1.msra.mxu0 %v8331
          %9446 = vmatprep.subr.mxu0 0.0
          %9447 = vmatpush1.msra.mxu0 %v8332
          %9448 = vmatprep.subr.mxu0 0.0
          %9449 = vmatpush1.msra.mxu0 %v8333
          %9450 = vmatprep.subr.mxu0 0.0
          %9451 = vmatpush1.msra.mxu0 %v8334
          %9452 = vmatprep.subr.mxu0 0.0
          %9453 = vmatpush1.msra.mxu0 %v8335
          %9454 = vmatprep.subr.mxu0 0.0
          %9455 = vmatpush1.msra.mxu0 %v8336
          %9456 = vmatprep.subr.mxu0 0.0
          %9457 = vmatpush1.msra.mxu0 %v8337
          %9458 = vmatprep.subr.mxu0 0.0
          %9459 = vmatpush1.msra.mxu0 %v8338
          %9460 = vmatprep.subr.mxu0 0.0
          %9461 = vmatpush1.msra.mxu0 %v8339
          %9462 = vmatprep.subr.mxu0 0.0
          %9463 = vmatpush1.msra.mxu0 %v8340
          %9464 = vmatprep.subr.mxu0 0.0
          %9465 = vmatpush1.msra.mxu0 %v8341
          %9466 = vmatprep.subr.mxu0 0.0
          %9467 = vmatpush1.msra.mxu0 %v8342
          %9468 = vmatprep.subr.mxu0 0.0
          %9469 = vmatpush1.msra.mxu0 %v8343
          %9470 = vmatprep.subr.mxu0 0.0
          %9471 = vmatpush1.msra.mxu0 %v8344
          %9472 = vmatprep.subr.mxu0 0.0
          %9473 = vmatpush1.msra.mxu0 %v8345
          %9474 = vmatprep.subr.mxu0 0.0
          %9475 = vmatpush1.msra.mxu0 %v8346
          %9476 = vmatprep.subr.mxu0 0.0
          %9477 = vmatpush1.msra.mxu0 %v8347
          %9478 = vmatprep.subr.mxu0 0.0
          %9479 = vmatpush1.msra.mxu0 %v8348
          %9480 = vmatprep.subr.mxu0 0.0
          %9481 = vmatpush1.msra.mxu0 %v8349
          %9482 = vmatprep.subr.mxu0 0.0
          %9483 = vmatpush1.msra.mxu0 %v8350
          %9484 = vmatprep.subr.mxu0 0.0
          %9485 = vmatpush1.msra.mxu0 %v8351
          %9486 = vmatprep.subr.mxu0 0.0
          %9487 = vmatpush1.msra.mxu0 %v8352
          %9488 = vmatprep.subr.mxu0 0.0
          %9489 = vmatpush1.msra.mxu0 %v8353
          %9490 = vmatprep.subr.mxu0 0.0
          %9491 = vmatpush1.msra.mxu0 %v8354
          %9492 = vmatprep.subr.mxu0 0.0
          %9493 = vmatpush1.msra.mxu0 %v8355
          %9494 = vmatprep.subr.mxu0 0.0
          %9495 = vmatpush1.msra.mxu0 %v8356
          %9496 = vmatprep.subr.mxu0 0.0
          %9497 = vmatpush1.msra.mxu0 %v8357
          %9498 = vmatprep.subr.mxu0 0.0
          %9499 = vmatpush1.msra.mxu0 %v8358
          %9500 = vmatprep.subr.mxu0 0.0
          %9501 = vmatpush1.msra.mxu0 %v8359
          %9502 = vmatprep.subr.mxu0 0.0
          %9503 = vmatpush1.msra.mxu0 %v8360
          %9504 = vmatprep.subr.mxu0 0.0
          %9505 = vmatpush1.msra.mxu0 %v8361
          %9506 = vmatprep.subr.mxu0 0.0
          %9507 = vmatpush1.msra.mxu0 %v8362
          %9508 = vmatprep.mubr.f32.mxu0 %v8607
          %9509 = vmatmul.mubr.f32.gmra.mrb[0].mxu0 %v8605
          %v9510 = vpop.f32.mrb[0].mxu0
          %v9511 = vadd.f32 %v9441, %v9510
          %v9512 = vpop.f32.mrb[0].mxu0
          %9513 = vdwg.mxu0
          %9514 = vmatprep.subr.mxu0 0.0
          %9515 = vmatpush1.msra.mxu0 %v8363
          %9516 = vmatprep.subr.mxu0 0.0
          %9517 = vmatpush1.msra.mxu0 %v8364
          %9518 = vmatprep.subr.mxu0 0.0
          %9519 = vmatpush1.msra.mxu0 %v8365
          %9520 = vmatprep.subr.mxu0 0.0
          %9521 = vmatpush1.msra.mxu0 %v8366
          %9522 = vmatprep.subr.mxu0 0.0
          %9523 = vmatpush1.msra.mxu0 %v8367
          %9524 = vmatprep.subr.mxu0 0.0
          %9525 = vmatpush1.msra.mxu0 %v8368
          %9526 = vmatprep.subr.mxu0 0.0
          %9527 = vmatpush1.msra.mxu0 %v8369
          %9528 = vmatprep.subr.mxu0 0.0
          %9529 = vmatpush1.msra.mxu0 %v8370
          %9530 = vmatprep.subr.mxu0 0.0
          %9531 = vmatpush1.msra.mxu0 %v8371
          %9532 = vmatprep.subr.mxu0 0.0
          %9533 = vmatpush1.msra.mxu0 %v8372
          %9534 = vmatprep.subr.mxu0 0.0
          %9535 = vmatpush1.msra.mxu0 %v8373
          %9536 = vmatprep.subr.mxu0 0.0
          %9537 = vmatpush1.msra.mxu0 %v8374
          %9538 = vmatprep.subr.mxu0 0.0
          %9539 = vmatpush1.msra.mxu0 %v8375
          %9540 = vmatprep.subr.mxu0 0.0
          %9541 = vmatpush1.msra.mxu0 %v8376
          %9542 = vmatprep.subr.mxu0 0.0
          %9543 = vmatpush1.msra.mxu0 %v8377
          %9544 = vmatprep.subr.mxu0 0.0
          %9545 = vmatpush1.msra.mxu0 %v8378
          %9546 = vmatprep.subr.mxu0 0.0
          %9547 = vmatpush1.msra.mxu0 %v8379
          %9548 = vmatprep.subr.mxu0 0.0
          %9549 = vmatpush1.msra.mxu0 %v8380
          %9550 = vmatprep.subr.mxu0 0.0
          %9551 = vmatpush1.msra.mxu0 %v8381
          %9552 = vmatprep.subr.mxu0 0.0
          %9553 = vmatpush1.msra.mxu0 %v8382
          %9554 = vmatprep.subr.mxu0 0.0
          %9555 = vmatpush1.msra.mxu0 %v8383
          %9556 = vmatprep.subr.mxu0 0.0
          %9557 = vmatpush1.msra.mxu0 %v8384
          %9558 = vmatprep.subr.mxu0 0.0
          %9559 = vmatpush1.msra.mxu0 %v8385
          %9560 = vmatprep.subr.mxu0 0.0
          %9561 = vmatpush1.msra.mxu0 %v8386
          %9562 = vmatprep.subr.mxu0 0.0
          %9563 = vmatpush1.msra.mxu0 %v8387
          %9564 = vmatprep.subr.mxu0 0.0
          %9565 = vmatpush1.msra.mxu0 %v8388
          %9566 = vmatprep.subr.mxu0 0.0
          %9567 = vmatpush1.msra.mxu0 %v8389
          %9568 = vmatprep.subr.mxu0 0.0
          %9569 = vmatpush1.msra.mxu0 %v8390
          %9570 = vmatprep.subr.mxu0 0.0
          %9571 = vmatpush1.msra.mxu0 %v8391
          %9572 = vmatprep.subr.mxu0 0.0
          %9573 = vmatpush1.msra.mxu0 %v8392
          %9574 = vmatprep.subr.mxu0 0.0
          %9575 = vmatpush1.msra.mxu0 %v8393
          %9576 = vmatprep.subr.mxu0 0.0
          %9577 = vmatpush1.msra.mxu0 %v8394
          %9578 = vmatprep.mubr.f32.mxu0 %v8623
          %9579 = vmatmul.mubr.f32.gmra.mrb[0].mxu0 %v8615
          %v9580 = vpop.f32.mrb[0].mxu0
          %v9581 = vadd.f32 %v9511, %v9580
          %v9582 = vpop.f32.mrb[0].mxu0
          %9583 = vdwg.mxu0
          %9584 = vmatprep.subr.mxu0 0.0
          %9585 = vmatpush1.msra.mxu0 %v8395
          %9586 = vmatprep.subr.mxu0 0.0
          %9587 = vmatpush1.msra.mxu0 %v8396
          %9588 = vmatprep.subr.mxu0 0.0
          %9589 = vmatpush1.msra.mxu0 %v8397
          %9590 = vmatprep.subr.mxu0 0.0
          %9591 = vmatpush1.msra.mxu0 %v8398
          %9592 = vmatprep.subr.mxu0 0.0
          %9593 = vmatpush1.msra.mxu0 %v8399
          %9594 = vmatprep.subr.mxu0 0.0
          %9595 = vmatpush1.msra.mxu0 %v8400
          %9596 = vmatprep.subr.mxu0 0.0
          %9597 = vmatpush1.msra.mxu0 %v8401
          %9598 = vmatprep.subr.mxu0 0.0
          %9599 = vmatpush1.msra.mxu0 %v8402
          %9600 = vmatprep.subr.mxu0 0.0
          %9601 = vmatpush1.msra.mxu0 %v8403
          %9602 = vmatprep.subr.mxu0 0.0
          %9603 = vmatpush1.msra.mxu0 %v8404
          %9604 = vmatprep.subr.mxu0 0.0
          %9605 = vmatpush1.msra.mxu0 %v8405
          %9606 = vmatprep.subr.mxu0 0.0
          %9607 = vmatpush1.msra.mxu0 %v8406
          %9608 = vmatprep.subr.mxu0 0.0
          %9609 = vmatpush1.msra.mxu0 %v8407
          %9610 = vmatprep.subr.mxu0 0.0
          %9611 = vmatpush1.msra.mxu0 %v8408
          %9612 = vmatprep.subr.mxu0 0.0
          %9613 = vmatpush1.msra.mxu0 %v8409
          %9614 = vmatprep.subr.mxu0 0.0
          %9615 = vmatpush1.msra.mxu0 %v8410
          %9616 = vmatprep.subr.mxu0 0.0
          %9617 = vmatpush1.msra.mxu0 %v8411
          %9618 = vmatprep.subr.mxu0 0.0
          %9619 = vmatpush1.msra.mxu0 %v8412
          %9620 = vmatprep.subr.mxu0 0.0
          %9621 = vmatpush1.msra.mxu0 %v8413
          %9622 = vmatprep.subr.mxu0 0.0
          %9623 = vmatpush1.msra.mxu0 %v8414
          %9624 = vmatprep.subr.mxu0 0.0
          %9625 = vmatpush1.msra.mxu0 %v8415
          %9626 = vmatprep.subr.mxu0 0.0
          %9627 = vmatpush1.msra.mxu0 %v8416
          %9628 = vmatprep.subr.mxu0 0.0
          %9629 = vmatpush1.msra.mxu0 %v8417
          %9630 = vmatprep.subr.mxu0 0.0
          %9631 = vmatpush1.msra.mxu0 %v8418
          %9632 = vmatprep.subr.mxu0 0.0
          %9633 = vmatpush1.msra.mxu0 %v8419
          %9634 = vmatprep.subr.mxu0 0.0
          %9635 = vmatpush1.msra.mxu0 %v8420
          %9636 = vmatprep.subr.mxu0 0.0
          %9637 = vmatpush1.msra.mxu0 %v8421
          %9638 = vmatprep.subr.mxu0 0.0
          %9639 = vmatpush1.msra.mxu0 %v8422
          %9640 = vmatprep.subr.mxu0 0.0
          %9641 = vmatpush1.msra.mxu0 %v8423
          %9642 = vmatprep.subr.mxu0 0.0
          %9643 = vmatpush1.msra.mxu0 %v8424
          %9644 = vmatprep.subr.mxu0 0.0
          %9645 = vmatpush1.msra.mxu0 %v8425
          %9646 = vmatprep.subr.mxu0 0.0
          %9647 = vmatpush1.msra.mxu0 %v8426
          %9648 = vmatprep.mubr.f32.mxu0 %v8624
          %9649 = vmatmul.mubr.f32.gmra.mrb[0].mxu0 %v8622
          %v9650 = vpop.f32.mrb[0].mxu0
          %v9651 = vadd.f32 %v9581, %v9650
          %v9652 = vpop.f32.mrb[0].mxu0
          %9653 = vdwg.mxu0
          %9654 = vmatprep.subr.mxu0 0.0
          %9655 = vmatpush1.msra.mxu0 %v8427
          %9656 = vmatprep.subr.mxu0 0.0
          %9657 = vmatpush1.msra.mxu0 %v8428
          %9658 = vmatprep.subr.mxu0 0.0
          %9659 = vmatpush1.msra.mxu0 %v8429
          %9660 = vmatprep.subr.mxu0 0.0
          %9661 = vmatpush1.msra.mxu0 %v8430
          %9662 = vmatprep.subr.mxu0 0.0
          %9663 = vmatpush1.msra.mxu0 %v8431
          %9664 = vmatprep.subr.mxu0 0.0
          %9665 = vmatpush1.msra.mxu0 %v8432
          %9666 = vmatprep.subr.mxu0 0.0
          %9667 = vmatpush1.msra.mxu0 %v8433
          %9668 = vmatprep.subr.mxu0 0.0
          %9669 = vmatpush1.msra.mxu0 %v8434
          %9670 = vmatprep.subr.mxu0 0.0
          %9671 = vmatpush1.msra.mxu0 %v8435
          %9672 = vmatprep.subr.mxu0 0.0
          %9673 = vmatpush1.msra.mxu0 %v8436
          %9674 = vmatprep.subr.mxu0 0.0
          %9675 = vmatpush1.msra.mxu0 %v8437
          %9676 = vmatprep.subr.mxu0 0.0
          %9677 = vmatpush1.msra.mxu0 %v8438
          %9678 = vmatprep.subr.mxu0 0.0
          %9679 = vmatpush1.msra.mxu0 %v8439
          %9680 = vmatprep.subr.mxu0 0.0
          %9681 = vmatpush1.msra.mxu0 %v8440
          %9682 = vmatprep.subr.mxu0 0.0
          %9683 = vmatpush1.msra.mxu0 %v8441
          %9684 = vmatprep.subr.mxu0 0.0
          %9685 = vmatpush1.msra.mxu0 %v8442
          %9686 = vmatprep.subr.mxu0 0.0
          %9687 = vmatpush1.msra.mxu0 %v8443
          %9688 = vmatprep.subr.mxu0 0.0
          %9689 = vmatpush1.msra.mxu0 %v8444
          %9690 = vmatprep.subr.mxu0 0.0
          %9691 = vmatpush1.msra.mxu0 %v8445
          %9692 = vmatprep.subr.mxu0 0.0
          %9693 = vmatpush1.msra.mxu0 %v8446
          %9694 = vmatprep.subr.mxu0 0.0
          %9695 = vmatpush1.msra.mxu0 %v8447
          %9696 = vmatprep.subr.mxu0 0.0
          %9697 = vmatpush1.msra.mxu0 %v8448
          %9698 = vmatprep.subr.mxu0 0.0
          %9699 = vmatpush1.msra.mxu0 %v8449
          %9700 = vmatprep.subr.mxu0 0.0
          %9701 = vmatpush1.msra.mxu0 %v8450
          %9702 = vmatprep.subr.mxu0 0.0
          %9703 = vmatpush1.msra.mxu0 %v8451
          %9704 = vmatprep.subr.mxu0 0.0
          %9705 = vmatpush1.msra.mxu0 %v8452
          %9706 = vmatprep.subr.mxu0 0.0
          %9707 = vmatpush1.msra.mxu0 %v8453
          %9708 = vmatprep.subr.mxu0 0.0
          %9709 = vmatpush1.msra.mxu0 %v8454
          %9710 = vmatprep.subr.mxu0 0.0
          %9711 = vmatpush1.msra.mxu0 %v8455
          %9712 = vmatprep.subr.mxu0 0.0
          %9713 = vmatpush1.msra.mxu0 %v8456
          %9714 = vmatprep.subr.mxu0 0.0
          %9715 = vmatpush1.msra.mxu0 %v8457
          %9716 = vmatprep.subr.mxu0 0.0
          %9717 = vmatpush1.msra.mxu0 %v8458
          %9718 = vmatprep.mubr.f32.mxu0 %v8640
          %9719 = vmatmul.mubr.f32.gmra.mrb[0].mxu0 %v8632
          %v9720 = vpop.f32.mrb[0].mxu0
          %v9721 = vadd.f32 %v9651, %v9720
          %v9722 = vpop.f32.mrb[0].mxu0
          %9723 = vdwg.mxu0
          %9724 = vmatprep.subr.mxu0 0.0
          %9725 = vmatpush1.msra.mxu0 %v8459
          %9726 = vmatprep.subr.mxu0 0.0
          %9727 = vmatpush1.msra.mxu0 %v8460
          %9728 = vmatprep.subr.mxu0 0.0
          %9729 = vmatpush1.msra.mxu0 %v8461
          %9730 = vmatprep.subr.mxu0 0.0
          %9731 = vmatpush1.msra.mxu0 %v8462
          %9732 = vmatprep.subr.mxu0 0.0
          %9733 = vmatpush1.msra.mxu0 %v8463
          %9734 = vmatprep.subr.mxu0 0.0
          %9735 = vmatpush1.msra.mxu0 %v8464
          %9736 = vmatprep.subr.mxu0 0.0
          %9737 = vmatpush1.msra.mxu0 %v8465
          %9738 = vmatprep.subr.mxu0 0.0
          %9739 = vmatpush1.msra.mxu0 %v8466
          %9740 = vmatprep.subr.mxu0 0.0
          %9741 = vmatpush1.msra.mxu0 %v8467
          %9742 = vmatprep.subr.mxu0 0.0
          %9743 = vmatpush1.msra.mxu0 %v8468
          %9744 = vmatprep.subr.mxu0 0.0
          %9745 = vmatpush1.msra.mxu0 %v8469
          %9746 = vmatprep.subr.mxu0 0.0
          %9747 = vmatpush1.msra.mxu0 %v8470
          %9748 = vmatprep.subr.mxu0 0.0
          %9749 = vmatpush1.msra.mxu0 %v8471
          %9750 = vmatprep.subr.mxu0 0.0
          %9751 = vmatpush1.msra.mxu0 %v8472
          %9752 = vmatprep.subr.mxu0 0.0
          %9753 = vmatpush1.msra.mxu0 %v8473
          %9754 = vmatprep.subr.mxu0 0.0
          %9755 = vmatpush1.msra.mxu0 %v8474
          %9756 = vmatprep.subr.mxu0 0.0
          %9757 = vmatpush1.msra.mxu0 %v8475
          %9758 = vmatprep.subr.mxu0 0.0
          %9759 = vmatpush1.msra.mxu0 %v8476
          %9760 = vmatprep.subr.mxu0 0.0
          %9761 = vmatpush1.msra.mxu0 %v8477
          %9762 = vmatprep.subr.mxu0 0.0
          %9763 = vmatpush1.msra.mxu0 %v8478
          %9764 = vmatprep.subr.mxu0 0.0
          %9765 = vmatpush1.msra.mxu0 %v8479
          %9766 = vmatprep.subr.mxu0 0.0
          %9767 = vmatpush1.msra.mxu0 %v8480
          %9768 = vmatprep.subr.mxu0 0.0
          %9769 = vmatpush1.msra.mxu0 %v8481
          %9770 = vmatprep.subr.mxu0 0.0
          %9771 = vmatpush1.msra.mxu0 %v8482
          %9772 = vmatprep.subr.mxu0 0.0
          %9773 = vmatpush1.msra.mxu0 %v8483
          %9774 = vmatprep.subr.mxu0 0.0
          %9775 = vmatpush1.msra.mxu0 %v8484
          %9776 = vmatprep.subr.mxu0 0.0
          %9777 = vmatpush1.msra.mxu0 %v8485
          %9778 = vmatprep.subr.mxu0 0.0
          %9779 = vmatpush1.msra.mxu0 %v8486
          %9780 = vmatprep.subr.mxu0 0.0
          %9781 = vmatpush1.msra.mxu0 %v8487
          %9782 = vmatprep.subr.mxu0 0.0
          %9783 = vmatpush1.msra.mxu0 %v8488
          %9784 = vmatprep.subr.mxu0 0.0
          %9785 = vmatpush1.msra.mxu0 %v8489
          %9786 = vmatprep.subr.mxu0 0.0
          %9787 = vmatpush1.msra.mxu0 %v8490
          %9788 = vmatprep.mubr.f32.mxu0 %v8641
          %9789 = vmatmul.mubr.f32.gmra.mrb[0].mxu0 %v8639
          %v9790 = vpop.f32.mrb[0].mxu0
          %v9791 = vadd.f32 %v9721, %v9790
          %v9792 = vpop.f32.mrb[0].mxu0
          %9793 = vdwg.mxu0
          %9794 = vst [vmem:[#allocation11] sm:$0x3] %v9791
        $region60: #{tpu_custom_call.1} parent=35 // pred_fallthru
          _
        // Predicated region
        $region61: #{tpu_custom_call.1} parent=35 // pred_check
          %p9795 = pneg %p130
        $region62: #{tpu_custom_call.1} parent=35 // pred_check_branch
          %9797 = sbr.rel (%p9795) target = $region64
        $region63: #{tpu_custom_call.1} parent=35 // pred_region
          %s9799 = ssub.s32 32, 32
          %9800 = vsyncadd [#allocation5], %s9799
          %s9802 = sshll.u32 [#allocation11], 4
          %s9803 = int_to_ptr.vmem [resolvable:$true] %s9802
          %9805 = dma.vmem_to_hbm [thread:$0]  %s9803, 32, %s4, [#allocation5]
        $region64: #{tpu_custom_call.1} parent=35 // pred_fallthru
          _
        // Predicated region
        $region65: #{tpu_custom_call.1} parent=35 // pred_check
          %p9806 = pneg %p130
        $region66: #{tpu_custom_call.1} parent=35 // pred_check_branch
          %9808 = sbr.rel (%p9806) target = $region68
        $region67: #{tpu_custom_call.1} parent=35 // pred_region
          %9809 = dma.done [#allocation5], 32
        $region68: #{tpu_custom_call.1} parent=35 // pred_fallthru
          _
      $region36: #{tpu_custom_call.1} parent=5 // pred_fallthru
        _
      %p9810 = scmp.le.s32.totalorder 2, %s18
      // Predicated region
      $region69: #{tpu_custom_call.1} parent=5 // pred_check
        %p9811 = pneg %p9810
      $region70: #{tpu_custom_call.1} parent=5 // pred_check_branch
        %9813 = sbr.rel (%p9811) target = $region72
      $region71: #{tpu_custom_call.1} parent=5 // pred_region
        %s9814 = ssub.s32 %s18, 2
      $region72: #{tpu_custom_call.1} parent=5 // pred_fallthru
        _
    $region6: #{tpu_custom_call.1} parent=1 // loop_footer
      %s22 = sadd.s32 1, %s18
    $region7: #{tpu_custom_call.1} parent=1 // loop_footer_branch
      %17 = sbr.rel target = $region3
    $region8: #{tpu_custom_call.1} parent=1 // loop_exit
      _
    %9815 = vsyncpa [#allocation4], 1
    %s9816 = scalar_lea.sflag [#allocation4], 1
    %9817 = vsyncpa %s9816, 1
    %9818 = vsyncpa [#allocation7], 1
    %s9819 = scalar_lea.sflag [#allocation7], 1
    %9820 = vsyncpa %s9819, 1
    %9821 = vsyncpa [#allocation10], 1
    %9822 = vsyncpa [#allocation5], 1
    %s9823 = scalar_lea.sflag [#allocation5], 1
    %9824 = vsyncpa %s9823, 1

</llo_original>
